<compile_context>
chip_gen: v5e
topology: v5e:2x2
jax: 0.10.0
libtpu: 0.0.40
codegen_flags: <defaults>
</compile_context>

<pallas_src>
import functools

import jax
import jax.numpy as jnp
from jax import lax
from jax.experimental import pallas as pl
from jax.experimental.pallas import tpu as pltpu

_EPS = 1e-6
_KS = 7                    # depthwise kernel size
_PAD = 3                   # depthwise padding
_SQRT_2_OVER_PI = 0.7978845608028654


# ----------------------------------------------------------------------------
# Hardware-aware sizing helpers
# ----------------------------------------------------------------------------
def _vmem_limit_bytes():
    """Generation-aware VMEM budget: ~3/4 of physical VMEM (96 MiB on the
    128 MiB v5e/v6e, 48 MiB on the 64 MiB v7x); conservative fallback if the
    query is unavailable."""
    cap = 64 * 1024 * 1024
    try:
        cap = int(getattr(pltpu.get_tpu_info(), "vmem_capacity_bytes", cap))
    except Exception:
        pass
    return max(32 * 1024 * 1024, (cap * 3) // 4)


def _pick_batch_block(batch, n_pixels, per_pixel_f32, budget_bytes,
                      m_target=512):
    """How many images to process per grid step.

    Prefer the smallest divisor of `batch` whose matmul M = bb * n_pixels
    reaches `m_target` (keeps the grid long for pipelining / megacore),
    otherwise the largest divisor whose working set still fits the budget
    (maximizes MXU M and amortizes the ~0.35us per-step overhead)."""
    fitting = [bb for bb in range(1, batch + 1)
               if batch % bb == 0
               and bb * n_pixels * per_pixel_f32 * 4 <= budget_bytes]
    if not fitting:
        return 1
    for bb in fitting:
        if bb * n_pixels >= m_target:
            return bb
    return fitting[-1]


def _pick_mlp_chunk(c4):
    """Column-chunk width for the 4C hidden of the MLP (bounds the (M, 4C)
    f32 intermediate that otherwise dominates the per-step working set)."""
    if c4 <= 2048:
        return c4
    for cand in (2048, 1536, 1024, 768, 512, 384, 256, 128):
        if c4 % cand == 0:
            return cand
    return c4


def _gelu(x):
    # tanh-form GELU: one EUP tanh per element (an otherwise idle VLIW slot)
    # instead of a ~10-op erf polynomial on the VALU.
    # TODO(synk): nn.GELU() default is exact erf; the tanh form deviates by
    # <~1e-3 pre-layer-scale (suppressed by gamma=1e-6 in the block output).
    return 0.5 * x * (1.0 + jnp.tanh(_SQRT_2_OVER_PI * (x + 0.044715 * (x * x * x))))


# ----------------------------------------------------------------------------
# conv_in: dense 3x3 conv (stride 1, same padding), NHWC, batch-blocked grid
# ----------------------------------------------------------------------------
def _conv3x3_kernel(x_ref, w_ref, b_ref, out_ref, xwin_ref):
    BB, H, W, Cin = x_ref.shape
    Cout = out_ref.shape[-1]
    x = x_ref[...]

    # Zero-padded window built in VMEM (no jnp.pad HBM round trip).
    zt = jnp.zeros((BB, 1, W + 2, Cin), xwin_ref.dtype)
    zs = jnp.zeros((BB, H, 1, Cin), xwin_ref.dtype)
    xwin_ref[:, 0:1, :, :] = zt
    xwin_ref[:, H + 1:H + 2, :, :] = zt
    xwin_ref[:, 1:H + 1, 0:1, :] = zs
    xwin_ref[:, 1:H + 1, W + 1:W + 2, :] = zs
    xwin_ref[:, 1:H + 1, 1:W + 1, :] = x.astype(xwin_ref.dtype)
    xw = xwin_ref[...]                                   # (BB, H+2, W+2, Cin)

    # im2col: one (BB*H*W, 9*Cin) x (9*Cin, Cout) matmul -- K=9*Cin feeds the
    # 256-deep v6e/v7x MXU far better than nine K=Cin matmuls.  Column (dj)
    # shifts are hoisted: 3 sublane-offset slices; di slices are leading-dim.
    cols = []
    for dj in range(3):
        slab = xw[:, :, dj:dj + W, :]                    # (BB, H+2, W, Cin)
        for di in range(3):
            cols.append(slab[:, di:di + H, :, :].reshape(BB * H * W, Cin))
    patches = jnp.concatenate(cols, axis=-1)             # (BB*H*W, 9*Cin)

    acc = jnp.dot(patches.astype(w_ref.dtype), w_ref[...],
                  preferred_element_type=jnp.float32)
    acc = acc + b_ref[...].astype(jnp.float32)
    out_ref[...] = acc.reshape(BB, H, W, Cout).astype(out_ref.dtype)


def conv3x3_nhwc(x, w, b, *, batch_block=None):
    """3x3 same conv on an NHWC tensor.

    w: (9*Cin, Cout) where row block t = dj*3+di holds torch_w[:, :, di, dj].T
    b: (1, Cout).
    """
    B, H, W, Cin = x.shape
    Cout = w.shape[-1]
    vmem_limit = _vmem_limit_bytes()
    wbytes = int(w.size * w.dtype.itemsize + b.size * b.dtype.itemsize)
    budget = max(vmem_limit - 2 * wbytes, 4 * 1024 * 1024)
    if batch_block is None:
        # 2x-buffered in/out blocks + padded window + im2col patches + acc
        per_px = 13 * Cin + 4 * Cout
        batch_block = _pick_batch_block(B, H * W, per_px, budget)
    BB = batch_block
    assert B % BB == 0

    flops = 2 * B * H * W * 9 * Cin * Cout
    bytes_accessed = int(x.size * x.dtype.itemsize
                         + B * H * W * Cout * x.dtype.itemsize + wbytes)

    return pl.pallas_call(
        _conv3x3_kernel,
        out_shape=jax.ShapeDtypeStruct((B, H, W, Cout), x.dtype),
        grid=(B // BB,),
        in_specs=[
            pl.BlockSpec((BB, H, W, Cin), lambda bi: (bi, 0, 0, 0)),
            pl.BlockSpec(w.shape, lambda bi: (0, 0)),     # resident weights
            pl.BlockSpec(b.shape, lambda bi: (0, 0)),     # resident bias
        ],
        out_specs=pl.BlockSpec((BB, H, W, Cout), lambda bi: (bi, 0, 0, 0)),
        scratch_shapes=[pltpu.VMEM((BB, H + 2, W + 2, Cin), x.dtype)],
        compiler_params=pltpu.CompilerParams(
            dimension_semantics=("parallel",),
            vmem_limit_bytes=vmem_limit),
        cost_estimate=pl.CostEstimate(flops=int(flops), transcendentals=0,
                                      bytes_accessed=bytes_accessed),
    )(x, w, b)


# ----------------------------------------------------------------------------
# ConvNeXt block: dwconv7x7 + LN + MLP(GELU) + layer-scale + residual, fused
# ----------------------------------------------------------------------------
def _convnext_block_kernel(x_ref, dww_ref, dwb_ref, lnw_ref, lnb_ref,
                           w1_ref, b1_ref, w2_ref, b2_ref, gamma_ref,
                           out_ref, xwin_ref, *, mlp_chunk):
    BB, H, W, C = x_ref.shape
    tap_dt = xwin_ref.dtype            # bf16 on bf16 models (v6e/v7x), else f32
    x = x_ref[...]

    # ---- zero-padded window built in VMEM (no jnp.pad / extra HBM traffic) --
    zt = jnp.zeros((BB, _PAD, W + 2 * _PAD, C), tap_dt)
    zs = jnp.zeros((BB, H, _PAD, C), tap_dt)
    xwin_ref[:, 0:_PAD, :, :] = zt
    xwin_ref[:, _PAD + H:_PAD + H + _PAD, :, :] = zt
    xwin_ref[:, _PAD:_PAD + H, 0:_PAD, :] = zs
    xwin_ref[:, _PAD:_PAD + H, _PAD + W:_PAD + W + _PAD, :] = zs
    xwin_ref[:, _PAD:_PAD + H, _PAD:_PAD + W, :] = x.astype(tap_dt)
    xw = xwin_ref[...]                             # (BB, H+6, W+6, C), one load

    # ---- depthwise 7x7: dj (column) shifts hoisted out of the 49-tap loop ---
    wdw = dww_ref[...].astype(tap_dt)              # (49, C), loaded/cast once
    acc = jnp.zeros((BB, H, W, C), tap_dt)
    for dj in range(_KS):
        colslab = xw[:, :, dj:dj + W, :]           # 7 sublane-offset slices/step
        for di in range(_KS):
            acc = acc + colslab[:, di:di + H, :, :] * wdw[di * _KS + dj]
    acc = acc.astype(jnp.float32) + dwb_ref[...].astype(jnp.float32)

    # ---- LayerNorm over channels (channels_last, eps=1e-6, biased var) ------
    u = jnp.mean(acc, axis=-1, keepdims=True)
    xc = acc - u
    var = jnp.mean(xc * xc, axis=-1, keepdims=True)
    xn = xc * lax.rsqrt(var + _EPS)
    xn = xn * lnw_ref[...].astype(jnp.float32) + lnb_ref[...].astype(jnp.float32)

    # ---- pointwise MLP: Linear(C->4C) -> GELU -> Linear(4C->C), chunked -----
    M = BB * H * W
    C4 = w1_ref.shape[1]
    xn2 = xn.reshape(M, C).astype(w1_ref.dtype)
    y = jnp.zeros((M, C), jnp.float32)
    for c0 in range(0, C4, mlp_chunk):
        h = jnp.dot(xn2, w1_ref[:, c0:c0 + mlp_chunk],
                    preferred_element_type=jnp.float32)
        h = h + b1_ref[:, c0:c0 + mlp_chunk].astype(jnp.float32)
        h = _gelu(h)
        y = y + jnp.dot(h.astype(w2_ref.dtype), w2_ref[c0:c0 + mlp_chunk, :],
                        preferred_element_type=jnp.float32)
    y = y + b2_ref[...].astype(jnp.float32)

    # ---- layer scale + residual (residual is the aligned input block) -------
    y = y * gamma_ref[...].astype(jnp.float32)
    y = y.reshape(BB, H, W, C)
    out_ref[...] = (x.astype(jnp.float32) + y).astype(out_ref.dtype)


def convnext_block_nhwc(x, p, *, batch_block=None):
    """One ConvNeXt block on an NHWC tensor, batch-blocked grid, weights
    resident in VMEM via constant index maps."""
    B, H, W, C = x.shape
    C4 = p["w1"].shape[1]
    mlp_chunk = _pick_mlp_chunk(C4)

    weights = (p["dw_w"], p["dw_b"], p["ln_w"], p["ln_b"],
               p["w1"], p["b1"], p["w2"], p["b2"], p["gamma"])
    wbytes = sum(int(a.size) * a.dtype.itemsize for a in weights)

    vmem_limit = _vmem_limit_bytes()
    budget = max(vmem_limit - 2 * wbytes, 4 * 1024 * 1024)
    if batch_block is None:
        # 2x-buffered in/out blocks + window + acc + LN/MLP temps + hidden chunk
        per_px = 11 * C + mlp_chunk
        batch_block = _pick_batch_block(B, H * W, per_px, budget)
    BB = batch_block
    assert B % BB == 0
    # TODO(synk): for very large H*W*C a single image may not fit VMEM; that
    # regime needs row tiling with halo DMAs (not required at these sizes).

    tap_dtype = jnp.bfloat16 if x.dtype == jnp.bfloat16 else jnp.float32

    def _const_spec(a):
        nd = a.ndim
        return pl.BlockSpec(a.shape, lambda bi, _nd=nd: (0,) * _nd)

    flops = B * H * W * C * (2 * _KS * _KS + 16 * C + 12)
    transcendentals = B * H * W * (4 * C + 1)        # tanh per hidden + rsqrt
    bytes_accessed = int(2 * B * H * W * C * x.dtype.itemsize + wbytes)

    kernel = functools.partial(_convnext_block_kernel, mlp_chunk=mlp_chunk)
    return pl.pallas_call(
        kernel,
        out_shape=jax.ShapeDtypeStruct((B, H, W, C), x.dtype),
        grid=(B // BB,),
        in_specs=[pl.BlockSpec((BB, H, W, C), lambda bi: (bi, 0, 0, 0))]
                + [_const_spec(a) for a in weights],
        out_specs=pl.BlockSpec((BB, H, W, C), lambda bi: (bi, 0, 0, 0)),
        scratch_shapes=[
            pltpu.VMEM((BB, H + 2 * _PAD, W + 2 * _PAD, C), tap_dtype)],
        compiler_params=pltpu.CompilerParams(
            dimension_semantics=("parallel",),
            vmem_limit_bytes=vmem_limit),
        cost_estimate=pl.CostEstimate(flops=int(flops),
                                      transcendentals=int(transcendentals),
                                      bytes_accessed=bytes_accessed),
    )(x, *weights)


# ----------------------------------------------------------------------------
# Plain-JAX glue (layout reshapes and the unspecified DCAE channel downsample)
# ----------------------------------------------------------------------------
def L_to_P(zs, split=1):
    B, N, D = zs.shape
    pn = int(N ** 0.5)
    zs = zs.reshape(B, pn, pn, D).transpose(0, 3, 1, 2)
    sqrt_split = int(split ** 0.5)
    split_c = int(D // split)
    split_pn = pn * sqrt_split
    zs = zs.reshape(B, split_c, sqrt_split, sqrt_split, pn, pn)
    zs = zs.transpose(0, 1, 4, 2, 5, 3)
    return zs.reshape(B, split_c, split_pn, split_pn)


def P_to_L(zs, split=1):
    B, c, pn, _ = zs.shape
    aggregated_c = int(c * split)
    sqrt_split = int(split ** 0.5)
    split_pn = pn // sqrt_split
    zs = zs.reshape(B, c, split_pn, sqrt_split, split_pn, sqrt_split)
    zs = zs.transpose(0, 1, 3, 5, 2, 4)
    zs = zs.reshape(B, aggregated_c, split_pn, split_pn)
    zs = zs.transpose(0, 2, 3, 1)
    return zs.reshape(B, split_pn * split_pn, aggregated_c)


def dcae_channel_downsample_nhwc(x, factor):
    # TODO(synk): DCAE_ChannelDownsampleLayer's source was not provided; this
    # implements channel-group averaging, which is an exact identity for the
    # default downsample_factor == 1 configuration exercised below.
    if factor == 1:
        return x
    B, H, W, C = x.shape
    return x.reshape(B, H, W, C // factor, factor).mean(axis=-1).astype(x.dtype)


# ----------------------------------------------------------------------------
# Parameters + forward
# ----------------------------------------------------------------------------
def init_convnext_downsampler_params(key, in_channels, out_channels,
                                     layer_channels=None, stage_depths=None):
    """Deterministic synthetic parameters; shapes mirror the PyTorch module."""
    if layer_channels is None:
        layer_channels = [out_channels]
        stage_depths = [1]
    assert len(layer_channels) == len(stage_depths)
    k_conv, k_stage = jax.random.split(key)
    params = {
        # conv_in Conv2d(Cin, Cin, 3, padding=1) stored im2col-style as
        # (9*Cin, Cout): row block t = dj*3+di holds torch_weight[:, :, di, dj].T
        "conv_in_w": jax.random.normal(k_conv, (9 * in_channels, in_channels),
                                       jnp.float32) / (3.0 * in_channels ** 0.5),
        "conv_in_b": jax.random.normal(jax.random.fold_in(k_conv, 1),
                                       (1, in_channels), jnp.float32) * 0.02,
        "stages": [],
    }
    cur = in_channels
    for si, (dim, depth) in enumerate(zip(layer_channels, stage_depths)):
        assert cur % dim == 0
        blocks = []
        for d in range(depth):
            keys = jax.random.split(jax.random.fold_in(k_stage, si * 1000 + d), 6)
            blocks.append({
                # depthwise Conv2d(dim, dim, 7, groups=dim): (dim,1,7,7) -> (49,dim)
                # with dw_w[di*7+dj, c] == torch_weight[c, 0, di, dj]
                "dw_w": jax.random.normal(keys[0], (_KS * _KS, dim), jnp.float32) / 7.0,
                "dw_b": jax.random.normal(keys[1], (1, dim), jnp.float32) * 0.02,
                "ln_w": jnp.ones((1, dim), jnp.float32),
                "ln_b": jnp.zeros((1, dim), jnp.float32),
                # Linear layers stored as (in, out) = W^T
                "w1": jax.random.normal(keys[2], (dim, 4 * dim), jnp.float32) / dim ** 0.5,
                "b1": jax.random.normal(keys[3], (1, 4 * dim), jnp.float32) * 0.02,
                "w2": jax.random.normal(keys[4], (4 * dim, dim), jnp.float32) / (4 * dim) ** 0.5,
                "b2": jax.random.normal(keys[5], (1, dim), jnp.float32) * 0.02,
                "gamma": jnp.full((1, dim), 1e-6, jnp.float32),
            })
        params["stages"].append({"dim": dim, "factor": cur // dim, "blocks": blocks})
        cur = dim
    return params


def convnext_downsampler_forward(x, params):
    """ConvNextDownSampler.forward: x is (B, N, D) or NCHW, as in PyTorch."""
    need_transform = x.ndim == 3
    include_cls = False
    if need_transform:
        if x.shape[1] % 2 == 1:
            x = x[:, 1:]
            include_cls = True
        x = L_to_P(x)                                  # (B, C, pn, pn)
    x = jnp.transpose(x, (0, 2, 3, 1))                 # NCHW -> NHWC (lane = C)
    x = conv3x3_nhwc(x, params["conv_in_w"], params["conv_in_b"])
    for stage in params["stages"]:
        x = dcae_channel_downsample_nhwc(x, stage["factor"])
        for blk in stage["blocks"]:
            x = convnext_block_nhwc(x, blk)
    x = jnp.transpose(x, (0, 3, 1, 2))                 # NHWC -> NCHW
    if need_transform:
        x = P_to_L(x)
        if include_cls:
            x = jnp.concatenate([jnp.zeros_like(x[:, 0:1]), x], axis=1)
    return x


if __name__ == "__main__":
    # Small but lane-dense test: B=2, seq=64 (pn=8), hidden=128 (C maps densely
    # onto the 128-wide lane axis), in_channels == out_channels (factor 1).
    B, seq, hidden = 2, 64, 128
    key = jax.random.PRNGKey(0)
    kx, kp = jax.random.split(key)
    x = jax.random.normal(kx, (B, seq, hidden), dtype=jnp.float32)
    params = init_convnext_downsampler_params(kp, in_channels=hidden,
                                              out_channels=hidden)

    fwd = jax.jit(lambda xx: convnext_downsampler_forward(xx, params))
    out = fwd(x)
    jax.block_until_ready(out)
    assert out.shape == (B, seq, hidden) and out.dtype == jnp.float32
    assert bool(jnp.all(jnp.isfinite(out)))
    print("KERNEL_OK")
</pallas_src>

<mosaic_0001>
module attributes {stable_mosaic.version = 11 : i64} {
  func.func @_convnext_block_kernel(%arg0: i32, %arg1: memref<2x8x8x128xf32, #tpu.memory_space<vmem>>, %arg2: memref<49x128xf32, #tpu.memory_space<vmem>>, %arg3: memref<1x128xf32, #tpu.memory_space<vmem>>, %arg4: memref<1x128xf32, #tpu.memory_space<vmem>>, %arg5: memref<1x128xf32, #tpu.memory_space<vmem>>, %arg6: memref<128x512xf32, #tpu.memory_space<vmem>>, %arg7: memref<1x512xf32, #tpu.memory_space<vmem>>, %arg8: memref<512x128xf32, #tpu.memory_space<vmem>>, %arg9: memref<1x128xf32, #tpu.memory_space<vmem>>, %arg10: memref<1x128xf32, #tpu.memory_space<vmem>>, %arg11: memref<2x8x8x128xf32, #tpu.memory_space<vmem>>, %arg12: memref<2x14x14x128xf32, #tpu.memory_space<vmem>>) attributes {dimension_semantics = [#tpu.dimension_semantics<parallel>], iteration_bounds = array<i64: 1>, scalar_prefetch = 0 : i64, scratch_operands = 1 : i64, tpu.core_type = #tpu.core_type<tc>, window_params = [{transform_indices = @transform_0, window_bounds = array<i64: 2, 8, 8, 128>}, {pipeline_mode = #tpu.pipeline_mode<synchronous>, transform_indices = @transform_1, window_bounds = array<i64: 49, 128>}, {pipeline_mode = #tpu.pipeline_mode<synchronous>, transform_indices = @transform_2, window_bounds = array<i64: 1, 128>}, {pipeline_mode = #tpu.pipeline_mode<synchronous>, transform_indices = @transform_3, window_bounds = array<i64: 1, 128>}, {pipeline_mode = #tpu.pipeline_mode<synchronous>, transform_indices = @transform_4, window_bounds = array<i64: 1, 128>}, {pipeline_mode = #tpu.pipeline_mode<synchronous>, transform_indices = @transform_5, window_bounds = array<i64: 128, 512>}, {pipeline_mode = #tpu.pipeline_mode<synchronous>, transform_indices = @transform_6, window_bounds = array<i64: 1, 512>}, {pipeline_mode = #tpu.pipeline_mode<synchronous>, transform_indices = @transform_7, window_bounds = array<i64: 512, 128>}, {pipeline_mode = #tpu.pipeline_mode<synchronous>, transform_indices = @transform_8, window_bounds = array<i64: 1, 128>}, {pipeline_mode = #tpu.pipeline_mode<synchronous>, transform_indices = @transform_9, window_bounds = array<i64: 1, 128>}, {transform_indices = @transform_10, window_bounds = array<i64: 2, 8, 8, 128>}]} {
    %c0 = arith.constant 0 : index
    %c0_0 = arith.constant 0 : index
    %c0_1 = arith.constant 0 : index
    %c0_2 = arith.constant 0 : index
    %0 = vector.load %arg1[%c0, %c0_0, %c0_1, %c0_2] : memref<2x8x8x128xf32, #tpu.memory_space<vmem>>, vector<2x8x8x128xf32>
    %cst = arith.constant 0.000000e+00 : f32
    %1 = vector.broadcast %cst : f32 to vector<2x3x14x128xf32>
    %cst_3 = arith.constant 0.000000e+00 : f32
    %2 = vector.broadcast %cst_3 : f32 to vector<2x8x3x128xf32>
    %c0_4 = arith.constant 0 : index
    %c0_5 = arith.constant 0 : index
    %c0_6 = arith.constant 0 : index
    %c0_7 = arith.constant 0 : index
    %3 = vector.load %arg12[%c0_4, %c0_5, %c0_6, %c0_7] : memref<2x14x14x128xf32, #tpu.memory_space<vmem>>, vector<2x3x14x128xf32>
    tpu.vector_store %arg12[%c0_4, %c0_5, %c0_6, %c0_7], %1 {strides = array<i32>} : memref<2x14x14x128xf32, #tpu.memory_space<vmem>>, vector<2x3x14x128xf32>,
    %c0_8 = arith.constant 0 : index
    %c11 = arith.constant 11 : index
    %c0_9 = arith.constant 0 : index
    %c0_10 = arith.constant 0 : index
    %4 = vector.load %arg12[%c0_8, %c11, %c0_9, %c0_10] : memref<2x14x14x128xf32, #tpu.memory_space<vmem>>, vector<2x3x14x128xf32>
    tpu.vector_store %arg12[%c0_8, %c11, %c0_9, %c0_10], %1 {strides = array<i32>} : memref<2x14x14x128xf32, #tpu.memory_space<vmem>>, vector<2x3x14x128xf32>,
    %c0_11 = arith.constant 0 : index
    %c3 = arith.constant 3 : index
    %c0_12 = arith.constant 0 : index
    %c0_13 = arith.constant 0 : index
    %5 = vector.load %arg12[%c0_11, %c3, %c0_12, %c0_13] : memref<2x14x14x128xf32, #tpu.memory_space<vmem>>, vector<2x8x3x128xf32>
    tpu.vector_store %arg12[%c0_11, %c3, %c0_12, %c0_13], %2 {strides = array<i32>} : memref<2x14x14x128xf32, #tpu.memory_space<vmem>>, vector<2x8x3x128xf32>,
    %c0_14 = arith.constant 0 : index
    %c3_15 = arith.constant 3 : index
    %c11_16 = arith.constant 11 : index
    %c0_17 = arith.constant 0 : index
    %6 = vector.load %arg12[%c0_14, %c3_15, %c11_16, %c0_17] : memref<2x14x14x128xf32, #tpu.memory_space<vmem>>, vector<2x8x3x128xf32>
    tpu.vector_store %arg12[%c0_14, %c3_15, %c11_16, %c0_17], %2 {strides = array<i32>} : memref<2x14x14x128xf32, #tpu.memory_space<vmem>>, vector<2x8x3x128xf32>,
    %c0_18 = arith.constant 0 : index
    %c3_19 = arith.constant 3 : index
    %c3_20 = arith.constant 3 : index
    %c0_21 = arith.constant 0 : index
    %7 = vector.load %arg12[%c0_18, %c3_19, %c3_20, %c0_21] : memref<2x14x14x128xf32, #tpu.memory_space<vmem>>, vector<2x8x8x128xf32>
    tpu.vector_store %arg12[%c0_18, %c3_19, %c3_20, %c0_21], %0 {strides = array<i32>} : memref<2x14x14x128xf32, #tpu.memory_space<vmem>>, vector<2x8x8x128xf32>,
    %c0_22 = arith.constant 0 : index
    %c0_23 = arith.constant 0 : index
    %c0_24 = arith.constant 0 : index
    %c0_25 = arith.constant 0 : index
    %8 = vector.load %arg12[%c0_22, %c0_23, %c0_24, %c0_25] : memref<2x14x14x128xf32, #tpu.memory_space<vmem>>, vector<2x14x14x128xf32>
    %c0_26 = arith.constant 0 : index
    %c0_27 = arith.constant 0 : index
    %9 = vector.load %arg2[%c0_26, %c0_27] : memref<49x128xf32, #tpu.memory_space<vmem>>, vector<49x128xf32>
    %cst_28 = arith.constant 0.000000e+00 : f32
    %10 = vector.broadcast %cst_28 : f32 to vector<2x8x8x128xf32>
    %11 = vector.extract_strided_slice %8 {offsets = [0, 0, 0, 0], sizes = [2, 14, 8, 128], strides = [1, 1, 1, 1]} : vector<2x14x14x128xf32> to vector<2x14x8x128xf32>
    %12 = vector.extract_strided_slice %11 {offsets = [0, 0, 0, 0], sizes = [2, 8, 8, 128], strides = [1, 1, 1, 1]} : vector<2x14x8x128xf32> to vector<2x8x8x128xf32>
    %13 = vector.extract_strided_slice %9 {offsets = [0, 0], sizes = [1, 128], strides = [1, 1]} : vector<49x128xf32> to vector<1x128xf32>
    %14 = vector.shape_cast %13 : vector<1x128xf32> to vector<128xf32>
    %15 = vector.shape_cast %14 : vector<128xf32> to vector<1x1x1x128xf32>
    %16 = vector.broadcast %15 : vector<1x1x1x128xf32> to vector<2x8x8x128xf32>
    %17 = arith.mulf %12, %16 : vector<2x8x8x128xf32>
    %18 = arith.addf %10, %17 : vector<2x8x8x128xf32>
    %19 = vector.extract_strided_slice %11 {offsets = [0, 1, 0, 0], sizes = [2, 8, 8, 128], strides = [1, 1, 1, 1]} : vector<2x14x8x128xf32> to vector<2x8x8x128xf32>
    %20 = vector.extract_strided_slice %9 {offsets = [7, 0], sizes = [1, 128], strides = [1, 1]} : vector<49x128xf32> to vector<1x128xf32>
    %21 = vector.shape_cast %20 : vector<1x128xf32> to vector<128xf32>
    %22 = vector.shape_cast %21 : vector<128xf32> to vector<1x1x1x128xf32>
    %23 = vector.broadcast %22 : vector<1x1x1x128xf32> to vector<2x8x8x128xf32>
    %24 = arith.mulf %19, %23 : vector<2x8x8x128xf32>
    %25 = arith.addf %18, %24 : vector<2x8x8x128xf32>
    %26 = vector.extract_strided_slice %11 {offsets = [0, 2, 0, 0], sizes = [2, 8, 8, 128], strides = [1, 1, 1, 1]} : vector<2x14x8x128xf32> to vector<2x8x8x128xf32>
    %27 = vector.extract_strided_slice %9 {offsets = [14, 0], sizes = [1, 128], strides = [1, 1]} : vector<49x128xf32> to vector<1x128xf32>
    %28 = vector.shape_cast %27 : vector<1x128xf32> to vector<128xf32>
    %29 = vector.shape_cast %28 : vector<128xf32> to vector<1x1x1x128xf32>
    %30 = vector.broadcast %29 : vector<1x1x1x128xf32> to vector<2x8x8x128xf32>
    %31 = arith.mulf %26, %30 : vector<2x8x8x128xf32>
    %32 = arith.addf %25, %31 : vector<2x8x8x128xf32>
    %33 = vector.extract_strided_slice %11 {offsets = [0, 3, 0, 0], sizes = [2, 8, 8, 128], strides = [1, 1, 1, 1]} : vector<2x14x8x128xf32> to vector<2x8x8x128xf32>
    %34 = vector.extract_strided_slice %9 {offsets = [21, 0], sizes = [1, 128], strides = [1, 1]} : vector<49x128xf32> to vector<1x128xf32>
    %35 = vector.shape_cast %34 : vector<1x128xf32> to vector<128xf32>
    %36 = vector.shape_cast %35 : vector<128xf32> to vector<1x1x1x128xf32>
    %37 = vector.broadcast %36 : vector<1x1x1x128xf32> to vector<2x8x8x128xf32>
    %38 = arith.mulf %33, %37 : vector<2x8x8x128xf32>
    %39 = arith.addf %32, %38 : vector<2x8x8x128xf32>
    %40 = vector.extract_strided_slice %11 {offsets = [0, 4, 0, 0], sizes = [2, 8, 8, 128], strides = [1, 1, 1, 1]} : vector<2x14x8x128xf32> to vector<2x8x8x128xf32>
    %41 = vector.extract_strided_slice %9 {offsets = [28, 0], sizes = [1, 128], strides = [1, 1]} : vector<49x128xf32> to vector<1x128xf32>
    %42 = vector.shape_cast %41 : vector<1x128xf32> to vector<128xf32>
    %43 = vector.shape_cast %42 : vector<128xf32> to vector<1x1x1x128xf32>
    %44 = vector.broadcast %43 : vector<1x1x1x128xf32> to vector<2x8x8x128xf32>
    %45 = arith.mulf %40, %44 : vector<2x8x8x128xf32>
    %46 = arith.addf %39, %45 : vector<2x8x8x128xf32>
    %47 = vector.extract_strided_slice %11 {offsets = [0, 5, 0, 0], sizes = [2, 8, 8, 128], strides = [1, 1, 1, 1]} : vector<2x14x8x128xf32> to vector<2x8x8x128xf32>
    %48 = vector.extract_strided_slice %9 {offsets = [35, 0], sizes = [1, 128], strides = [1, 1]} : vector<49x128xf32> to vector<1x128xf32>
    %49 = vector.shape_cast %48 : vector<1x128xf32> to vector<128xf32>
    %50 = vector.shape_cast %49 : vector<128xf32> to vector<1x1x1x128xf32>
    %51 = vector.broadcast %50 : vector<1x1x1x128xf32> to vector<2x8x8x128xf32>
    %52 = arith.mulf %47, %51 : vector<2x8x8x128xf32>
    %53 = arith.addf %46, %52 : vector<2x8x8x128xf32>
    %54 = vector.extract_strided_slice %11 {offsets = [0, 6, 0, 0], sizes = [2, 8, 8, 128], strides = [1, 1, 1, 1]} : vector<2x14x8x128xf32> to vector<2x8x8x128xf32>
    %55 = vector.extract_strided_slice %9 {offsets = [42, 0], sizes = [1, 128], strides = [1, 1]} : vector<49x128xf32> to vector<1x128xf32>
    %56 = vector.shape_cast %55 : vector<1x128xf32> to vector<128xf32>
    %57 = vector.shape_cast %56 : vector<128xf32> to vector<1x1x1x128xf32>
    %58 = vector.broadcast %57 : vector<1x1x1x128xf32> to vector<2x8x8x128xf32>
    %59 = arith.mulf %54, %58 : vector<2x8x8x128xf32>
    %60 = arith.addf %53, %59 : vector<2x8x8x128xf32>
    %61 = vector.extract_strided_slice %8 {offsets = [0, 0, 1, 0], sizes = [2, 14, 8, 128], strides = [1, 1, 1, 1]} : vector<2x14x14x128xf32> to vector<2x14x8x128xf32>
    %62 = vector.extract_strided_slice %61 {offsets = [0, 0, 0, 0], sizes = [2, 8, 8, 128], strides = [1, 1, 1, 1]} : vector<2x14x8x128xf32> to vector<2x8x8x128xf32>
    %63 = vector.extract_strided_slice %9 {offsets = [1, 0], sizes = [1, 128], strides = [1, 1]} : vector<49x128xf32> to vector<1x128xf32>
    %64 = vector.shape_cast %63 : vector<1x128xf32> to vector<128xf32>
    %65 = vector.shape_cast %64 : vector<128xf32> to vector<1x1x1x128xf32>
    %66 = vector.broadcast %65 : vector<1x1x1x128xf32> to vector<2x8x8x128xf32>
    %67 = arith.mulf %62, %66 : vector<2x8x8x128xf32>
    %68 = arith.addf %60, %67 : vector<2x8x8x128xf32>
    %69 = vector.extract_strided_slice %61 {offsets = [0, 1, 0, 0], sizes = [2, 8, 8, 128], strides = [1, 1, 1, 1]} : vector<2x14x8x128xf32> to vector<2x8x8x128xf32>
    %70 = vector.extract_strided_slice %9 {offsets = [8, 0], sizes = [1, 128], strides = [1, 1]} : vector<49x128xf32> to vector<1x128xf32>
    %71 = vector.shape_cast %70 : vector<1x128xf32> to vector<128xf32>
    %72 = vector.shape_cast %71 : vector<128xf32> to vector<1x1x1x128xf32>
    %73 = vector.broadcast %72 : vector<1x1x1x128xf32> to vector<2x8x8x128xf32>
    %74 = arith.mulf %69, %73 : vector<2x8x8x128xf32>
    %75 = arith.addf %68, %74 : vector<2x8x8x128xf32>
    %76 = vector.extract_strided_slice %61 {offsets = [0, 2, 0, 0], sizes = [2, 8, 8, 128], strides = [1, 1, 1, 1]} : vector<2x14x8x128xf32> to vector<2x8x8x128xf32>
    %77 = vector.extract_strided_slice %9 {offsets = [15, 0], sizes = [1, 128], strides = [1, 1]} : vector<49x128xf32> to vector<1x128xf32>
    %78 = vector.shape_cast %77 : vector<1x128xf32> to vector<128xf32>
    %79 = vector.shape_cast %78 : vector<128xf32> to vector<1x1x1x128xf32>
    %80 = vector.broadcast %79 : vector<1x1x1x128xf32> to vector<2x8x8x128xf32>
    %81 = arith.mulf %76, %80 : vector<2x8x8x128xf32>
    %82 = arith.addf %75, %81 : vector<2x8x8x128xf32>
    %83 = vector.extract_strided_slice %61 {offsets = [0, 3, 0, 0], sizes = [2, 8, 8, 128], strides = [1, 1, 1, 1]} : vector<2x14x8x128xf32> to vector<2x8x8x128xf32>
    %84 = vector.extract_strided_slice %9 {offsets = [22, 0], sizes = [1, 128], strides = [1, 1]} : vector<49x128xf32> to vector<1x128xf32>
    %85 = vector.shape_cast %84 : vector<1x128xf32> to vector<128xf32>
    %86 = vector.shape_cast %85 : vector<128xf32> to vector<1x1x1x128xf32>
    %87 = vector.broadcast %86 : vector<1x1x1x128xf32> to vector<2x8x8x128xf32>
    %88 = arith.mulf %83, %87 : vector<2x8x8x128xf32>
    %89 = arith.addf %82, %88 : vector<2x8x8x128xf32>
    %90 = vector.extract_strided_slice %61 {offsets = [0, 4, 0, 0], sizes = [2, 8, 8, 128], strides = [1, 1, 1, 1]} : vector<2x14x8x128xf32> to vector<2x8x8x128xf32>
    %91 = vector.extract_strided_slice %9 {offsets = [29, 0], sizes = [1, 128], strides = [1, 1]} : vector<49x128xf32> to vector<1x128xf32>
    %92 = vector.shape_cast %91 : vector<1x128xf32> to vector<128xf32>
    %93 = vector.shape_cast %92 : vector<128xf32> to vector<1x1x1x128xf32>
    %94 = vector.broadcast %93 : vector<1x1x1x128xf32> to vector<2x8x8x128xf32>
    %95 = arith.mulf %90, %94 : vector<2x8x8x128xf32>
    %96 = arith.addf %89, %95 : vector<2x8x8x128xf32>
    %97 = vector.extract_strided_slice %61 {offsets = [0, 5, 0, 0], sizes = [2, 8, 8, 128], strides = [1, 1, 1, 1]} : vector<2x14x8x128xf32> to vector<2x8x8x128xf32>
    %98 = vector.extract_strided_slice %9 {offsets = [36, 0], sizes = [1, 128], strides = [1, 1]} : vector<49x128xf32> to vector<1x128xf32>
    %99 = vector.shape_cast %98 : vector<1x128xf32> to vector<128xf32>
    %100 = vector.shape_cast %99 : vector<128xf32> to vector<1x1x1x128xf32>
    %101 = vector.broadcast %100 : vector<1x1x1x128xf32> to vector<2x8x8x128xf32>
    %102 = arith.mulf %97, %101 : vector<2x8x8x128xf32>
    %103 = arith.addf %96, %102 : vector<2x8x8x128xf32>
    %104 = vector.extract_strided_slice %61 {offsets = [0, 6, 0, 0], sizes = [2, 8, 8, 128], strides = [1, 1, 1, 1]} : vector<2x14x8x128xf32> to vector<2x8x8x128xf32>
    %105 = vector.extract_strided_slice %9 {offsets = [43, 0], sizes = [1, 128], strides = [1, 1]} : vector<49x128xf32> to vector<1x128xf32>
    %106 = vector.shape_cast %105 : vector<1x128xf32> to vector<128xf32>
    %107 = vector.shape_cast %106 : vector<128xf32> to vector<1x1x1x128xf32>
    %108 = vector.broadcast %107 : vector<1x1x1x128xf32> to vector<2x8x8x128xf32>
    %109 = arith.mulf %104, %108 : vector<2x8x8x128xf32>
    %110 = arith.addf %103, %109 : vector<2x8x8x128xf32>
    %111 = vector.extract_strided_slice %8 {offsets = [0, 0, 2, 0], sizes = [2, 14, 8, 128], strides = [1, 1, 1, 1]} : vector<2x14x14x128xf32> to vector<2x14x8x128xf32>
    %112 = vector.extract_strided_slice %111 {offsets = [0, 0, 0, 0], sizes = [2, 8, 8, 128], strides = [1, 1, 1, 1]} : vector<2x14x8x128xf32> to vector<2x8x8x128xf32>
    %113 = vector.extract_strided_slice %9 {offsets = [2, 0], sizes = [1, 128], strides = [1, 1]} : vector<49x128xf32> to vector<1x128xf32>
    %114 = vector.shape_cast %113 : vector<1x128xf32> to vector<128xf32>
    %115 = vector.shape_cast %114 : vector<128xf32> to vector<1x1x1x128xf32>
    %116 = vector.broadcast %115 : vector<1x1x1x128xf32> to vector<2x8x8x128xf32>
    %117 = arith.mulf %112, %116 : vector<2x8x8x128xf32>
    %118 = arith.addf %110, %117 : vector<2x8x8x128xf32>
    %119 = vector.extract_strided_slice %111 {offsets = [0, 1, 0, 0], sizes = [2, 8, 8, 128], strides = [1, 1, 1, 1]} : vector<2x14x8x128xf32> to vector<2x8x8x128xf32>
    %120 = vector.extract_strided_slice %9 {offsets = [9, 0], sizes = [1, 128], strides = [1, 1]} : vector<49x128xf32> to vector<1x128xf32>
    %121 = vector.shape_cast %120 : vector<1x128xf32> to vector<128xf32>
    %122 = vector.shape_cast %121 : vector<128xf32> to vector<1x1x1x128xf32>
    %123 = vector.broadcast %122 : vector<1x1x1x128xf32> to vector<2x8x8x128xf32>
    %124 = arith.mulf %119, %123 : vector<2x8x8x128xf32>
    %125 = arith.addf %118, %124 : vector<2x8x8x128xf32>
    %126 = vector.extract_strided_slice %111 {offsets = [0, 2, 0, 0], sizes = [2, 8, 8, 128], strides = [1, 1, 1, 1]} : vector<2x14x8x128xf32> to vector<2x8x8x128xf32>
    %127 = vector.extract_strided_slice %9 {offsets = [16, 0], sizes = [1, 128], strides = [1, 1]} : vector<49x128xf32> to vector<1x128xf32>
    %128 = vector.shape_cast %127 : vector<1x128xf32> to vector<128xf32>
    %129 = vector.shape_cast %128 : vector<128xf32> to vector<1x1x1x128xf32>
    %130 = vector.broadcast %129 : vector<1x1x1x128xf32> to vector<2x8x8x128xf32>
    %131 = arith.mulf %126, %130 : vector<2x8x8x128xf32>
    %132 = arith.addf %125, %131 : vector<2x8x8x128xf32>
    %133 = vector.extract_strided_slice %111 {offsets = [0, 3, 0, 0], sizes = [2, 8, 8, 128], strides = [1, 1, 1, 1]} : vector<2x14x8x128xf32> to vector<2x8x8x128xf32>
    %134 = vector.extract_strided_slice %9 {offsets = [23, 0], sizes = [1, 128], strides = [1, 1]} : vector<49x128xf32> to vector<1x128xf32>
    %135 = vector.shape_cast %134 : vector<1x128xf32> to vector<128xf32>
    %136 = vector.shape_cast %135 : vector<128xf32> to vector<1x1x1x128xf32>
    %137 = vector.broadcast %136 : vector<1x1x1x128xf32> to vector<2x8x8x128xf32>
    %138 = arith.mulf %133, %137 : vector<2x8x8x128xf32>
    %139 = arith.addf %132, %138 : vector<2x8x8x128xf32>
    %140 = vector.extract_strided_slice %111 {offsets = [0, 4, 0, 0], sizes = [2, 8, 8, 128], strides = [1, 1, 1, 1]} : vector<2x14x8x128xf32> to vector<2x8x8x128xf32>
    %141 = vector.extract_strided_slice %9 {offsets = [30, 0], sizes = [1, 128], strides = [1, 1]} : vector<49x128xf32> to vector<1x128xf32>
    %142 = vector.shape_cast %141 : vector<1x128xf32> to vector<128xf32>
    %143 = vector.shape_cast %142 : vector<128xf32> to vector<1x1x1x128xf32>
    %144 = vector.broadcast %143 : vector<1x1x1x128xf32> to vector<2x8x8x128xf32>
    %145 = arith.mulf %140, %144 : vector<2x8x8x128xf32>
    %146 = arith.addf %139, %145 : vector<2x8x8x128xf32>
    %147 = vector.extract_strided_slice %111 {offsets = [0, 5, 0, 0], sizes = [2, 8, 8, 128], strides = [1, 1, 1, 1]} : vector<2x14x8x128xf32> to vector<2x8x8x128xf32>
    %148 = vector.extract_strided_slice %9 {offsets = [37, 0], sizes = [1, 128], strides = [1, 1]} : vector<49x128xf32> to vector<1x128xf32>
    %149 = vector.shape_cast %148 : vector<1x128xf32> to vector<128xf32>
    %150 = vector.shape_cast %149 : vector<128xf32> to vector<1x1x1x128xf32>
    %151 = vector.broadcast %150 : vector<1x1x1x128xf32> to vector<2x8x8x128xf32>
    %152 = arith.mulf %147, %151 : vector<2x8x8x128xf32>
    %153 = arith.addf %146, %152 : vector<2x8x8x128xf32>
    %154 = vector.extract_strided_slice %111 {offsets = [0, 6, 0, 0], sizes = [2, 8, 8, 128], strides = [1, 1, 1, 1]} : vector<2x14x8x128xf32> to vector<2x8x8x128xf32>
    %155 = vector.extract_strided_slice %9 {offsets = [44, 0], sizes = [1, 128], strides = [1, 1]} : vector<49x128xf32> to vector<1x128xf32>
    %156 = vector.shape_cast %155 : vector<1x128xf32> to vector<128xf32>
    %157 = vector.shape_cast %156 : vector<128xf32> to vector<1x1x1x128xf32>
    %158 = vector.broadcast %157 : vector<1x1x1x128xf32> to vector<2x8x8x128xf32>
    %159 = arith.mulf %154, %158 : vector<2x8x8x128xf32>
    %160 = arith.addf %153, %159 : vector<2x8x8x128xf32>
    %161 = vector.extract_strided_slice %8 {offsets = [0, 0, 3, 0], sizes = [2, 14, 8, 128], strides = [1, 1, 1, 1]} : vector<2x14x14x128xf32> to vector<2x14x8x128xf32>
    %162 = vector.extract_strided_slice %161 {offsets = [0, 0, 0, 0], sizes = [2, 8, 8, 128], strides = [1, 1, 1, 1]} : vector<2x14x8x128xf32> to vector<2x8x8x128xf32>
    %163 = vector.extract_strided_slice %9 {offsets = [3, 0], sizes = [1, 128], strides = [1, 1]} : vector<49x128xf32> to vector<1x128xf32>
    %164 = vector.shape_cast %163 : vector<1x128xf32> to vector<128xf32>
    %165 = vector.shape_cast %164 : vector<128xf32> to vector<1x1x1x128xf32>
    %166 = vector.broadcast %165 : vector<1x1x1x128xf32> to vector<2x8x8x128xf32>
    %167 = arith.mulf %162, %166 : vector<2x8x8x128xf32>
    %168 = arith.addf %160, %167 : vector<2x8x8x128xf32>
    %169 = vector.extract_strided_slice %161 {offsets = [0, 1, 0, 0], sizes = [2, 8, 8, 128], strides = [1, 1, 1, 1]} : vector<2x14x8x128xf32> to vector<2x8x8x128xf32>
    %170 = vector.extract_strided_slice %9 {offsets = [10, 0], sizes = [1, 128], strides = [1, 1]} : vector<49x128xf32> to vector<1x128xf32>
    %171 = vector.shape_cast %170 : vector<1x128xf32> to vector<128xf32>
    %172 = vector.shape_cast %171 : vector<128xf32> to vector<1x1x1x128xf32>
    %173 = vector.broadcast %172 : vector<1x1x1x128xf32> to vector<2x8x8x128xf32>
    %174 = arith.mulf %169, %173 : vector<2x8x8x128xf32>
    %175 = arith.addf %168, %174 : vector<2x8x8x128xf32>
    %176 = vector.extract_strided_slice %161 {offsets = [0, 2, 0, 0], sizes = [2, 8, 8, 128], strides = [1, 1, 1, 1]} : vector<2x14x8x128xf32> to vector<2x8x8x128xf32>
    %177 = vector.extract_strided_slice %9 {offsets = [17, 0], sizes = [1, 128], strides = [1, 1]} : vector<49x128xf32> to vector<1x128xf32>
    %178 = vector.shape_cast %177 : vector<1x128xf32> to vector<128xf32>
    %179 = vector.shape_cast %178 : vector<128xf32> to vector<1x1x1x128xf32>
    %180 = vector.broadcast %179 : vector<1x1x1x128xf32> to vector<2x8x8x128xf32>
    %181 = arith.mulf %176, %180 : vector<2x8x8x128xf32>
    %182 = arith.addf %175, %181 : vector<2x8x8x128xf32>
    %183 = vector.extract_strided_slice %161 {offsets = [0, 3, 0, 0], sizes = [2, 8, 8, 128], strides = [1, 1, 1, 1]} : vector<2x14x8x128xf32> to vector<2x8x8x128xf32>
    %184 = vector.extract_strided_slice %9 {offsets = [24, 0], sizes = [1, 128], strides = [1, 1]} : vector<49x128xf32> to vector<1x128xf32>
    %185 = vector.shape_cast %184 : vector<1x128xf32> to vector<128xf32>
    %186 = vector.shape_cast %185 : vector<128xf32> to vector<1x1x1x128xf32>
    %187 = vector.broadcast %186 : vector<1x1x1x128xf32> to vector<2x8x8x128xf32>
    %188 = arith.mulf %183, %187 : vector<2x8x8x128xf32>
    %189 = arith.addf %182, %188 : vector<2x8x8x128xf32>
    %190 = vector.extract_strided_slice %161 {offsets = [0, 4, 0, 0], sizes = [2, 8, 8, 128], strides = [1, 1, 1, 1]} : vector<2x14x8x128xf32> to vector<2x8x8x128xf32>
    %191 = vector.extract_strided_slice %9 {offsets = [31, 0], sizes = [1, 128], strides = [1, 1]} : vector<49x128xf32> to vector<1x128xf32>
    %192 = vector.shape_cast %191 : vector<1x128xf32> to vector<128xf32>
    %193 = vector.shape_cast %192 : vector<128xf32> to vector<1x1x1x128xf32>
    %194 = vector.broadcast %193 : vector<1x1x1x128xf32> to vector<2x8x8x128xf32>
    %195 = arith.mulf %190, %194 : vector<2x8x8x128xf32>
    %196 = arith.addf %189, %195 : vector<2x8x8x128xf32>
    %197 = vector.extract_strided_slice %161 {offsets = [0, 5, 0, 0], sizes = [2, 8, 8, 128], strides = [1, 1, 1, 1]} : vector<2x14x8x128xf32> to vector<2x8x8x128xf32>
    %198 = vector.extract_strided_slice %9 {offsets = [38, 0], sizes = [1, 128], strides = [1, 1]} : vector<49x128xf32> to vector<1x128xf32>
    %199 = vector.shape_cast %198 : vector<1x128xf32> to vector<128xf32>
    %200 = vector.shape_cast %199 : vector<128xf32> to vector<1x1x1x128xf32>
    %201 = vector.broadcast %200 : vector<1x1x1x128xf32> to vector<2x8x8x128xf32>
    %202 = arith.mulf %197, %201 : vector<2x8x8x128xf32>
    %203 = arith.addf %196, %202 : vector<2x8x8x128xf32>
    %204 = vector.extract_strided_slice %161 {offsets = [0, 6, 0, 0], sizes = [2, 8, 8, 128], strides = [1, 1, 1, 1]} : vector<2x14x8x128xf32> to vector<2x8x8x128xf32>
    %205 = vector.extract_strided_slice %9 {offsets = [45, 0], sizes = [1, 128], strides = [1, 1]} : vector<49x128xf32> to vector<1x128xf32>
    %206 = vector.shape_cast %205 : vector<1x128xf32> to vector<128xf32>
    %207 = vector.shape_cast %206 : vector<128xf32> to vector<1x1x1x128xf32>
    %208 = vector.broadcast %207 : vector<1x1x1x128xf32> to vector<2x8x8x128xf32>
    %209 = arith.mulf %204, %208 : vector<2x8x8x128xf32>
    %210 = arith.addf %203, %209 : vector<2x8x8x128xf32>
    %211 = vector.extract_strided_slice %8 {offsets = [0, 0, 4, 0], sizes = [2, 14, 8, 128], strides = [1, 1, 1, 1]} : vector<2x14x14x128xf32> to vector<2x14x8x128xf32>
    %212 = vector.extract_strided_slice %211 {offsets = [0, 0, 0, 0], sizes = [2, 8, 8, 128], strides = [1, 1, 1, 1]} : vector<2x14x8x128xf32> to vector<2x8x8x128xf32>
    %213 = vector.extract_strided_slice %9 {offsets = [4, 0], sizes = [1, 128], strides = [1, 1]} : vector<49x128xf32> to vector<1x128xf32>
    %214 = vector.shape_cast %213 : vector<1x128xf32> to vector<128xf32>
    %215 = vector.shape_cast %214 : vector<128xf32> to vector<1x1x1x128xf32>
    %216 = vector.broadcast %215 : vector<1x1x1x128xf32> to vector<2x8x8x128xf32>
    %217 = arith.mulf %212, %216 : vector<2x8x8x128xf32>
    %218 = arith.addf %210, %217 : vector<2x8x8x128xf32>
    %219 = vector.extract_strided_slice %211 {offsets = [0, 1, 0, 0], sizes = [2, 8, 8, 128], strides = [1, 1, 1, 1]} : vector<2x14x8x128xf32> to vector<2x8x8x128xf32>
    %220 = vector.extract_strided_slice %9 {offsets = [11, 0], sizes = [1, 128], strides = [1, 1]} : vector<49x128xf32> to vector<1x128xf32>
    %221 = vector.shape_cast %220 : vector<1x128xf32> to vector<128xf32>
    %222 = vector.shape_cast %221 : vector<128xf32> to vector<1x1x1x128xf32>
    %223 = vector.broadcast %222 : vector<1x1x1x128xf32> to vector<2x8x8x128xf32>
    %224 = arith.mulf %219, %223 : vector<2x8x8x128xf32>
    %225 = arith.addf %218, %224 : vector<2x8x8x128xf32>
    %226 = vector.extract_strided_slice %211 {offsets = [0, 2, 0, 0], sizes = [2, 8, 8, 128], strides = [1, 1, 1, 1]} : vector<2x14x8x128xf32> to vector<2x8x8x128xf32>
    %227 = vector.extract_strided_slice %9 {offsets = [18, 0], sizes = [1, 128], strides = [1, 1]} : vector<49x128xf32> to vector<1x128xf32>
    %228 = vector.shape_cast %227 : vector<1x128xf32> to vector<128xf32>
    %229 = vector.shape_cast %228 : vector<128xf32> to vector<1x1x1x128xf32>
    %230 = vector.broadcast %229 : vector<1x1x1x128xf32> to vector<2x8x8x128xf32>
    %231 = arith.mulf %226, %230 : vector<2x8x8x128xf32>
    %232 = arith.addf %225, %231 : vector<2x8x8x128xf32>
    %233 = vector.extract_strided_slice %211 {offsets = [0, 3, 0, 0], sizes = [2, 8, 8, 128], strides = [1, 1, 1, 1]} : vector<2x14x8x128xf32> to vector<2x8x8x128xf32>
    %234 = vector.extract_strided_slice %9 {offsets = [25, 0], sizes = [1, 128], strides = [1, 1]} : vector<49x128xf32> to vector<1x128xf32>
    %235 = vector.shape_cast %234 : vector<1x128xf32> to vector<128xf32>
    %236 = vector.shape_cast %235 : vector<128xf32> to vector<1x1x1x128xf32>
    %237 = vector.broadcast %236 : vector<1x1x1x128xf32> to vector<2x8x8x128xf32>
    %238 = arith.mulf %233, %237 : vector<2x8x8x128xf32>
    %239 = arith.addf %232, %238 : vector<2x8x8x128xf32>
    %240 = vector.extract_strided_slice %211 {offsets = [0, 4, 0, 0], sizes = [2, 8, 8, 128], strides = [1, 1, 1, 1]} : vector<2x14x8x128xf32> to vector<2x8x8x128xf32>
    %241 = vector.extract_strided_slice %9 {offsets = [32, 0], sizes = [1, 128], strides = [1, 1]} : vector<49x128xf32> to vector<1x128xf32>
    %242 = vector.shape_cast %241 : vector<1x128xf32> to vector<128xf32>
    %243 = vector.shape_cast %242 : vector<128xf32> to vector<1x1x1x128xf32>
    %244 = vector.broadcast %243 : vector<1x1x1x128xf32> to vector<2x8x8x128xf32>
    %245 = arith.mulf %240, %244 : vector<2x8x8x128xf32>
    %246 = arith.addf %239, %245 : vector<2x8x8x128xf32>
    %247 = vector.extract_strided_slice %211 {offsets = [0, 5, 0, 0], sizes = [2, 8, 8, 128], strides = [1, 1, 1, 1]} : vector<2x14x8x128xf32> to vector<2x8x8x128xf32>
    %248 = vector.extract_strided_slice %9 {offsets = [39, 0], sizes = [1, 128], strides = [1, 1]} : vector<49x128xf32> to vector<1x128xf32>
    %249 = vector.shape_cast %248 : vector<1x128xf32> to vector<128xf32>
    %250 = vector.shape_cast %249 : vector<128xf32> to vector<1x1x1x128xf32>
    %251 = vector.broadcast %250 : vector<1x1x1x128xf32> to vector<2x8x8x128xf32>
    %252 = arith.mulf %247, %251 : vector<2x8x8x128xf32>
    %253 = arith.addf %246, %252 : vector<2x8x8x128xf32>
    %254 = vector.extract_strided_slice %211 {offsets = [0, 6, 0, 0], sizes = [2, 8, 8, 128], strides = [1, 1, 1, 1]} : vector<2x14x8x128xf32> to vector<2x8x8x128xf32>
    %255 = vector.extract_strided_slice %9 {offsets = [46, 0], sizes = [1, 128], strides = [1, 1]} : vector<49x128xf32> to vector<1x128xf32>
    %256 = vector.shape_cast %255 : vector<1x128xf32> to vector<128xf32>
    %257 = vector.shape_cast %256 : vector<128xf32> to vector<1x1x1x128xf32>
    %258 = vector.broadcast %257 : vector<1x1x1x128xf32> to vector<2x8x8x128xf32>
    %259 = arith.mulf %254, %258 : vector<2x8x8x128xf32>
    %260 = arith.addf %253, %259 : vector<2x8x8x128xf32>
    %261 = vector.extract_strided_slice %8 {offsets = [0, 0, 5, 0], sizes = [2, 14, 8, 128], strides = [1, 1, 1, 1]} : vector<2x14x14x128xf32> to vector<2x14x8x128xf32>
    %262 = vector.extract_strided_slice %261 {offsets = [0, 0, 0, 0], sizes = [2, 8, 8, 128], strides = [1, 1, 1, 1]} : vector<2x14x8x128xf32> to vector<2x8x8x128xf32>
    %263 = vector.extract_strided_slice %9 {offsets = [5, 0], sizes = [1, 128], strides = [1, 1]} : vector<49x128xf32> to vector<1x128xf32>
    %264 = vector.shape_cast %263 : vector<1x128xf32> to vector<128xf32>
    %265 = vector.shape_cast %264 : vector<128xf32> to vector<1x1x1x128xf32>
    %266 = vector.broadcast %265 : vector<1x1x1x128xf32> to vector<2x8x8x128xf32>
    %267 = arith.mulf %262, %266 : vector<2x8x8x128xf32>
    %268 = arith.addf %260, %267 : vector<2x8x8x128xf32>
    %269 = vector.extract_strided_slice %261 {offsets = [0, 1, 0, 0], sizes = [2, 8, 8, 128], strides = [1, 1, 1, 1]} : vector<2x14x8x128xf32> to vector<2x8x8x128xf32>
    %270 = vector.extract_strided_slice %9 {offsets = [12, 0], sizes = [1, 128], strides = [1, 1]} : vector<49x128xf32> to vector<1x128xf32>
    %271 = vector.shape_cast %270 : vector<1x128xf32> to vector<128xf32>
    %272 = vector.shape_cast %271 : vector<128xf32> to vector<1x1x1x128xf32>
    %273 = vector.broadcast %272 : vector<1x1x1x128xf32> to vector<2x8x8x128xf32>
    %274 = arith.mulf %269, %273 : vector<2x8x8x128xf32>
    %275 = arith.addf %268, %274 : vector<2x8x8x128xf32>
    %276 = vector.extract_strided_slice %261 {offsets = [0, 2, 0, 0], sizes = [2, 8, 8, 128], strides = [1, 1, 1, 1]} : vector<2x14x8x128xf32> to vector<2x8x8x128xf32>
    %277 = vector.extract_strided_slice %9 {offsets = [19, 0], sizes = [1, 128], strides = [1, 1]} : vector<49x128xf32> to vector<1x128xf32>
    %278 = vector.shape_cast %277 : vector<1x128xf32> to vector<128xf32>
    %279 = vector.shape_cast %278 : vector<128xf32> to vector<1x1x1x128xf32>
    %280 = vector.broadcast %279 : vector<1x1x1x128xf32> to vector<2x8x8x128xf32>
    %281 = arith.mulf %276, %280 : vector<2x8x8x128xf32>
    %282 = arith.addf %275, %281 : vector<2x8x8x128xf32>
    %283 = vector.extract_strided_slice %261 {offsets = [0, 3, 0, 0], sizes = [2, 8, 8, 128], strides = [1, 1, 1, 1]} : vector<2x14x8x128xf32> to vector<2x8x8x128xf32>
    %284 = vector.extract_strided_slice %9 {offsets = [26, 0], sizes = [1, 128], strides = [1, 1]} : vector<49x128xf32> to vector<1x128xf32>
    %285 = vector.shape_cast %284 : vector<1x128xf32> to vector<128xf32>
    %286 = vector.shape_cast %285 : vector<128xf32> to vector<1x1x1x128xf32>
    %287 = vector.broadcast %286 : vector<1x1x1x128xf32> to vector<2x8x8x128xf32>
    %288 = arith.mulf %283, %287 : vector<2x8x8x128xf32>
    %289 = arith.addf %282, %288 : vector<2x8x8x128xf32>
    %290 = vector.extract_strided_slice %261 {offsets = [0, 4, 0, 0], sizes = [2, 8, 8, 128], strides = [1, 1, 1, 1]} : vector<2x14x8x128xf32> to vector<2x8x8x128xf32>
    %291 = vector.extract_strided_slice %9 {offsets = [33, 0], sizes = [1, 128], strides = [1, 1]} : vector<49x128xf32> to vector<1x128xf32>
    %292 = vector.shape_cast %291 : vector<1x128xf32> to vector<128xf32>
    %293 = vector.shape_cast %292 : vector<128xf32> to vector<1x1x1x128xf32>
    %294 = vector.broadcast %293 : vector<1x1x1x128xf32> to vector<2x8x8x128xf32>
    %295 = arith.mulf %290, %294 : vector<2x8x8x128xf32>
    %296 = arith.addf %289, %295 : vector<2x8x8x128xf32>
    %297 = vector.extract_strided_slice %261 {offsets = [0, 5, 0, 0], sizes = [2, 8, 8, 128], strides = [1, 1, 1, 1]} : vector<2x14x8x128xf32> to vector<2x8x8x128xf32>
    %298 = vector.extract_strided_slice %9 {offsets = [40, 0], sizes = [1, 128], strides = [1, 1]} : vector<49x128xf32> to vector<1x128xf32>
    %299 = vector.shape_cast %298 : vector<1x128xf32> to vector<128xf32>
    %300 = vector.shape_cast %299 : vector<128xf32> to vector<1x1x1x128xf32>
    %301 = vector.broadcast %300 : vector<1x1x1x128xf32> to vector<2x8x8x128xf32>
    %302 = arith.mulf %297, %301 : vector<2x8x8x128xf32>
    %303 = arith.addf %296, %302 : vector<2x8x8x128xf32>
    %304 = vector.extract_strided_slice %261 {offsets = [0, 6, 0, 0], sizes = [2, 8, 8, 128], strides = [1, 1, 1, 1]} : vector<2x14x8x128xf32> to vector<2x8x8x128xf32>
    %305 = vector.extract_strided_slice %9 {offsets = [47, 0], sizes = [1, 128], strides = [1, 1]} : vector<49x128xf32> to vector<1x128xf32>
    %306 = vector.shape_cast %305 : vector<1x128xf32> to vector<128xf32>
    %307 = vector.shape_cast %306 : vector<128xf32> to vector<1x1x1x128xf32>
    %308 = vector.broadcast %307 : vector<1x1x1x128xf32> to vector<2x8x8x128xf32>
    %309 = arith.mulf %304, %308 : vector<2x8x8x128xf32>
    %310 = arith.addf %303, %309 : vector<2x8x8x128xf32>
    %311 = vector.extract_strided_slice %8 {offsets = [0, 0, 6, 0], sizes = [2, 14, 8, 128], strides = [1, 1, 1, 1]} : vector<2x14x14x128xf32> to vector<2x14x8x128xf32>
    %312 = vector.extract_strided_slice %311 {offsets = [0, 0, 0, 0], sizes = [2, 8, 8, 128], strides = [1, 1, 1, 1]} : vector<2x14x8x128xf32> to vector<2x8x8x128xf32>
    %313 = vector.extract_strided_slice %9 {offsets = [6, 0], sizes = [1, 128], strides = [1, 1]} : vector<49x128xf32> to vector<1x128xf32>
    %314 = vector.shape_cast %313 : vector<1x128xf32> to vector<128xf32>
    %315 = vector.shape_cast %314 : vector<128xf32> to vector<1x1x1x128xf32>
    %316 = vector.broadcast %315 : vector<1x1x1x128xf32> to vector<2x8x8x128xf32>
    %317 = arith.mulf %312, %316 : vector<2x8x8x128xf32>
    %318 = arith.addf %310, %317 : vector<2x8x8x128xf32>
    %319 = vector.extract_strided_slice %311 {offsets = [0, 1, 0, 0], sizes = [2, 8, 8, 128], strides = [1, 1, 1, 1]} : vector<2x14x8x128xf32> to vector<2x8x8x128xf32>
    %320 = vector.extract_strided_slice %9 {offsets = [13, 0], sizes = [1, 128], strides = [1, 1]} : vector<49x128xf32> to vector<1x128xf32>
    %321 = vector.shape_cast %320 : vector<1x128xf32> to vector<128xf32>
    %322 = vector.shape_cast %321 : vector<128xf32> to vector<1x1x1x128xf32>
    %323 = vector.broadcast %322 : vector<1x1x1x128xf32> to vector<2x8x8x128xf32>
    %324 = arith.mulf %319, %323 : vector<2x8x8x128xf32>
    %325 = arith.addf %318, %324 : vector<2x8x8x128xf32>
    %326 = vector.extract_strided_slice %311 {offsets = [0, 2, 0, 0], sizes = [2, 8, 8, 128], strides = [1, 1, 1, 1]} : vector<2x14x8x128xf32> to vector<2x8x8x128xf32>
    %327 = vector.extract_strided_slice %9 {offsets = [20, 0], sizes = [1, 128], strides = [1, 1]} : vector<49x128xf32> to vector<1x128xf32>
    %328 = vector.shape_cast %327 : vector<1x128xf32> to vector<128xf32>
    %329 = vector.shape_cast %328 : vector<128xf32> to vector<1x1x1x128xf32>
    %330 = vector.broadcast %329 : vector<1x1x1x128xf32> to vector<2x8x8x128xf32>
    %331 = arith.mulf %326, %330 : vector<2x8x8x128xf32>
    %332 = arith.addf %325, %331 : vector<2x8x8x128xf32>
    %333 = vector.extract_strided_slice %311 {offsets = [0, 3, 0, 0], sizes = [2, 8, 8, 128], strides = [1, 1, 1, 1]} : vector<2x14x8x128xf32> to vector<2x8x8x128xf32>
    %334 = vector.extract_strided_slice %9 {offsets = [27, 0], sizes = [1, 128], strides = [1, 1]} : vector<49x128xf32> to vector<1x128xf32>
    %335 = vector.shape_cast %334 : vector<1x128xf32> to vector<128xf32>
    %336 = vector.shape_cast %335 : vector<128xf32> to vector<1x1x1x128xf32>
    %337 = vector.broadcast %336 : vector<1x1x1x128xf32> to vector<2x8x8x128xf32>
    %338 = arith.mulf %333, %337 : vector<2x8x8x128xf32>
    %339 = arith.addf %332, %338 : vector<2x8x8x128xf32>
    %340 = vector.extract_strided_slice %311 {offsets = [0, 4, 0, 0], sizes = [2, 8, 8, 128], strides = [1, 1, 1, 1]} : vector<2x14x8x128xf32> to vector<2x8x8x128xf32>
    %341 = vector.extract_strided_slice %9 {offsets = [34, 0], sizes = [1, 128], strides = [1, 1]} : vector<49x128xf32> to vector<1x128xf32>
    %342 = vector.shape_cast %341 : vector<1x128xf32> to vector<128xf32>
    %343 = vector.shape_cast %342 : vector<128xf32> to vector<1x1x1x128xf32>
    %344 = vector.broadcast %343 : vector<1x1x1x128xf32> to vector<2x8x8x128xf32>
    %345 = arith.mulf %340, %344 : vector<2x8x8x128xf32>
    %346 = arith.addf %339, %345 : vector<2x8x8x128xf32>
    %347 = vector.extract_strided_slice %311 {offsets = [0, 5, 0, 0], sizes = [2, 8, 8, 128], strides = [1, 1, 1, 1]} : vector<2x14x8x128xf32> to vector<2x8x8x128xf32>
    %348 = vector.extract_strided_slice %9 {offsets = [41, 0], sizes = [1, 128], strides = [1, 1]} : vector<49x128xf32> to vector<1x128xf32>
    %349 = vector.shape_cast %348 : vector<1x128xf32> to vector<128xf32>
    %350 = vector.shape_cast %349 : vector<128xf32> to vector<1x1x1x128xf32>
    %351 = vector.broadcast %350 : vector<1x1x1x128xf32> to vector<2x8x8x128xf32>
    %352 = arith.mulf %347, %351 : vector<2x8x8x128xf32>
    %353 = arith.addf %346, %352 : vector<2x8x8x128xf32>
    %354 = vector.extract_strided_slice %311 {offsets = [0, 6, 0, 0], sizes = [2, 8, 8, 128], strides = [1, 1, 1, 1]} : vector<2x14x8x128xf32> to vector<2x8x8x128xf32>
    %355 = vector.extract_strided_slice %9 {offsets = [48, 0], sizes = [1, 128], strides = [1, 1]} : vector<49x128xf32> to vector<1x128xf32>
    %356 = vector.shape_cast %355 : vector<1x128xf32> to vector<128xf32>
    %357 = vector.shape_cast %356 : vector<128xf32> to vector<1x1x1x128xf32>
    %358 = vector.broadcast %357 : vector<1x1x1x128xf32> to vector<2x8x8x128xf32>
    %359 = arith.mulf %354, %358 : vector<2x8x8x128xf32>
    %360 = arith.addf %353, %359 : vector<2x8x8x128xf32>
    %c0_29 = arith.constant 0 : index
    %c0_30 = arith.constant 0 : index
    %361 = vector.load %arg3[%c0_29, %c0_30] : memref<1x128xf32, #tpu.memory_space<vmem>>, vector<1x128xf32>
    %362 = vector.shape_cast %361 : vector<1x128xf32> to vector<1x1x1x128xf32>
    %363 = vector.broadcast %362 : vector<1x1x1x128xf32> to vector<2x8x8x128xf32>
    %364 = arith.addf %360, %363 : vector<2x8x8x128xf32>
    %cst_31 = arith.constant dense<0.000000e+00> : vector<2x8x8xf32>
    %365 = vector.multi_reduction <add>, %364, %cst_31 [3] : vector<2x8x8x128xf32> to vector<2x8x8xf32>
    %366 = vector.shape_cast %365 : vector<2x8x8xf32> to vector<2x8x8x1xf32>
    %cst_32 = arith.constant 1.280000e+02 : f32
    %367 = vector.broadcast %cst_32 : f32 to vector<2x8x8x1xf32>
    %368 = arith.divf %366, %367 : vector<2x8x8x1xf32>
    %369 = vector.broadcast %368 : vector<2x8x8x1xf32> to vector<2x8x8x128xf32>
    %370 = arith.subf %364, %369 : vector<2x8x8x128xf32>
    %371 = arith.mulf %370, %370 : vector<2x8x8x128xf32>
    %cst_33 = arith.constant dense<0.000000e+00> : vector<2x8x8xf32>
    %372 = vector.multi_reduction <add>, %371, %cst_33 [3] : vector<2x8x8x128xf32> to vector<2x8x8xf32>
    %373 = vector.shape_cast %372 : vector<2x8x8xf32> to vector<2x8x8x1xf32>
    %cst_34 = arith.constant 1.280000e+02 : f32
    %374 = vector.broadcast %cst_34 : f32 to vector<2x8x8x1xf32>
    %375 = arith.divf %373, %374 : vector<2x8x8x1xf32>
    %cst_35 = arith.constant 9.99999997E-7 : f32
    %376 = vector.broadcast %cst_35 : f32 to vector<2x8x8x1xf32>
    %377 = arith.addf %375, %376 : vector<2x8x8x1xf32>
    %378 = math.rsqrt %377 : vector<2x8x8x1xf32>
    %379 = vector.broadcast %378 : vector<2x8x8x1xf32> to vector<2x8x8x128xf32>
    %380 = arith.mulf %370, %379 : vector<2x8x8x128xf32>
    %c0_36 = arith.constant 0 : index
    %c0_37 = arith.constant 0 : index
    %381 = vector.load %arg4[%c0_36, %c0_37] : memref<1x128xf32, #tpu.memory_space<vmem>>, vector<1x128xf32>
    %382 = vector.shape_cast %381 : vector<1x128xf32> to vector<1x1x1x128xf32>
    %383 = vector.broadcast %382 : vector<1x1x1x128xf32> to vector<2x8x8x128xf32>
    %384 = arith.mulf %380, %383 : vector<2x8x8x128xf32>
    %c0_38 = arith.constant 0 : index
    %c0_39 = arith.constant 0 : index
    %385 = vector.load %arg5[%c0_38, %c0_39] : memref<1x128xf32, #tpu.memory_space<vmem>>, vector<1x128xf32>
    %386 = vector.shape_cast %385 : vector<1x128xf32> to vector<1x1x1x128xf32>
    %387 = vector.broadcast %386 : vector<1x1x1x128xf32> to vector<2x8x8x128xf32>
    %388 = arith.addf %384, %387 : vector<2x8x8x128xf32>
    %389 = vector.shape_cast %388 : vector<2x8x8x128xf32> to vector<128x128xf32>
    %cst_40 = arith.constant 0.000000e+00 : f32
    %390 = vector.broadcast %cst_40 : f32 to vector<128x128xf32>
    %c0_41 = arith.constant 0 : index
    %c0_42 = arith.constant 0 : index
    %391 = vector.load %arg6[%c0_41, %c0_42] : memref<128x512xf32, #tpu.memory_space<vmem>>, vector<128x512xf32>
    %cst_43 = arith.constant dense<0.000000e+00> : vector<128x512xf32>
    %392 = tpu.matmul %389, %391, %cst_43 {dimension_numbers = #tpu.dot_dimension_numbers<[1], [0], [0], [1], [0, 0, 1, 1], [], []>} : vector<128x128xf32>, vector<128x512xf32>, vector<128x512xf32> -> vector<128x512xf32>
    %c0_44 = arith.constant 0 : index
    %c0_45 = arith.constant 0 : index
    %393 = vector.load %arg7[%c0_44, %c0_45] : memref<1x512xf32, #tpu.memory_space<vmem>>, vector<1x512xf32>
    %394 = vector.broadcast %393 : vector<1x512xf32> to vector<128x512xf32>
    %395 = arith.addf %392, %394 : vector<128x512xf32>
    %cst_46 = arith.constant 5.000000e-01 : f32
    %396 = vector.broadcast %cst_46 : f32 to vector<128x512xf32>
    %397 = arith.mulf %396, %395 : vector<128x512xf32>
    %398 = arith.mulf %395, %395 : vector<128x512xf32>
    %399 = arith.mulf %398, %395 : vector<128x512xf32>
    %cst_47 = arith.constant 4.471500e-02 : f32
    %400 = vector.broadcast %cst_47 : f32 to vector<128x512xf32>
    %401 = arith.mulf %400, %399 : vector<128x512xf32>
    %402 = arith.addf %395, %401 : vector<128x512xf32>
    %cst_48 = arith.constant 0.797884583 : f32
    %403 = vector.broadcast %cst_48 : f32 to vector<128x512xf32>
    %404 = arith.mulf %403, %402 : vector<128x512xf32>
    %405 = math.tanh %404 : vector<128x512xf32>
    %cst_49 = arith.constant 1.000000e+00 : f32
    %406 = vector.broadcast %cst_49 : f32 to vector<128x512xf32>
    %407 = arith.addf %406, %405 : vector<128x512xf32>
    %408 = arith.mulf %397, %407 : vector<128x512xf32>
    %c0_50 = arith.constant 0 : index
    %c0_51 = arith.constant 0 : index
    %409 = vector.load %arg8[%c0_50, %c0_51] : memref<512x128xf32, #tpu.memory_space<vmem>>, vector<512x128xf32>
    %cst_52 = arith.constant dense<0.000000e+00> : vector<128x128xf32>
    %410 = tpu.matmul %408, %409, %cst_52 {dimension_numbers = #tpu.dot_dimension_numbers<[1], [0], [0], [1], [0, 0, 1, 1], [], []>} : vector<128x512xf32>, vector<512x128xf32>, vector<128x128xf32> -> vector<128x128xf32>
    %411 = arith.addf %390, %410 : vector<128x128xf32>
    %c0_53 = arith.constant 0 : index
    %c0_54 = arith.constant 0 : index
    %412 = vector.load %arg9[%c0_53, %c0_54] : memref<1x128xf32, #tpu.memory_space<vmem>>, vector<1x128xf32>
    %413 = vector.broadcast %412 : vector<1x128xf32> to vector<128x128xf32>
    %414 = arith.addf %411, %413 : vector<128x128xf32>
    %c0_55 = arith.constant 0 : index
    %c0_56 = arith.constant 0 : index
    %415 = vector.load %arg10[%c0_55, %c0_56] : memref<1x128xf32, #tpu.memory_space<vmem>>, vector<1x128xf32>
    %416 = vector.broadcast %415 : vector<1x128xf32> to vector<128x128xf32>
    %417 = arith.mulf %414, %416 : vector<128x128xf32>
    %418 = vector.shape_cast %417 : vector<128x128xf32> to vector<2x8x8x128xf32>
    %419 = arith.addf %0, %418 : vector<2x8x8x128xf32>
    %c0_57 = arith.constant 0 : index
    %c0_58 = arith.constant 0 : index
    %c0_59 = arith.constant 0 : index
    %c0_60 = arith.constant 0 : index
    %420 = vector.load %arg11[%c0_57, %c0_58, %c0_59, %c0_60] : memref<2x8x8x128xf32, #tpu.memory_space<vmem>>, vector<2x8x8x128xf32>
    tpu.vector_store %arg11[%c0_57, %c0_58, %c0_59, %c0_60], %419 {strides = array<i32>} : memref<2x8x8x128xf32, #tpu.memory_space<vmem>>, vector<2x8x8x128xf32>,
    return
  }
  func.func @transform_0(%arg0: i32) -> (i32, i32, i32, i32) {
    %c0_i32 = arith.constant 0 : i32
    %c0_i32_0 = arith.constant 0 : i32
    %c0_i32_1 = arith.constant 0 : i32
    %c0_i32_2 = arith.constant 0 : i32
    return %arg0, %c0_i32, %c0_i32_0, %c0_i32_1 : i32, i32, i32, i32
  }
  func.func @transform_1(%arg0: i32) -> (i32, i32) {
    %c0_i32 = arith.constant 0 : i32
    %c0_i32_0 = arith.constant 0 : i32
    %c0_i32_1 = arith.constant 0 : i32
    return %c0_i32, %c0_i32_0 : i32, i32
  }
  func.func @transform_2(%arg0: i32) -> (i32, i32) {
    %c0_i32 = arith.constant 0 : i32
    %c0_i32_0 = arith.constant 0 : i32
    %c0_i32_1 = arith.constant 0 : i32
    return %c0_i32, %c0_i32_0 : i32, i32
  }
  func.func @transform_3(%arg0: i32) -> (i32, i32) {
    %c0_i32 = arith.constant 0 : i32
    %c0_i32_0 = arith.constant 0 : i32
    %c0_i32_1 = arith.constant 0 : i32
    return %c0_i32, %c0_i32_0 : i32, i32
  }
  func.func @transform_4(%arg0: i32) -> (i32, i32) {
    %c0_i32 = arith.constant 0 : i32
    %c0_i32_0 = arith.constant 0 : i32
    %c0_i32_1 = arith.constant 0 : i32
    return %c0_i32, %c0_i32_0 : i32, i32
  }
  func.func @transform_5(%arg0: i32) -> (i32, i32) {
    %c0_i32 = arith.constant 0 : i32
    %c0_i32_0 = arith.constant 0 : i32
    %c0_i32_1 = arith.constant 0 : i32
    return %c0_i32, %c0_i32_0 : i32, i32
  }
  func.func @transform_6(%arg0: i32) -> (i32, i32) {
    %c0_i32 = arith.constant 0 : i32
    %c0_i32_0 = arith.constant 0 : i32
    %c0_i32_1 = arith.constant 0 : i32
    return %c0_i32, %c0_i32_0 : i32, i32
  }
  func.func @transform_7(%arg0: i32) -> (i32, i32) {
    %c0_i32 = arith.constant 0 : i32
    %c0_i32_0 = arith.constant 0 : i32
    %c0_i32_1 = arith.constant 0 : i32
    return %c0_i32, %c0_i32_0 : i32, i32
  }
  func.func @transform_8(%arg0: i32) -> (i32, i32) {
    %c0_i32 = arith.constant 0 : i32
    %c0_i32_0 = arith.constant 0 : i32
    %c0_i32_1 = arith.constant 0 : i32
    return %c0_i32, %c0_i32_0 : i32, i32
  }
  func.func @transform_9(%arg0: i32) -> (i32, i32) {
    %c0_i32 = arith.constant 0 : i32
    %c0_i32_0 = arith.constant 0 : i32
    %c0_i32_1 = arith.constant 0 : i32
    return %c0_i32, %c0_i32_0 : i32, i32
  }
  func.func @transform_10(%arg0: i32) -> (i32, i32, i32, i32) {
    %c0_i32 = arith.constant 0 : i32
    %c0_i32_0 = arith.constant 0 : i32
    %c0_i32_1 = arith.constant 0 : i32
    %c0_i32_2 = arith.constant 0 : i32
    return %arg0, %c0_i32, %c0_i32_0, %c0_i32_1 : i32, i32, i32, i32
  }
}

module attributes {stable_mosaic.version = 11 : i64} {
  func.func @_conv3x3_kernel(%arg0: i32, %arg1: memref<2x8x8x128xf32, #tpu.memory_space<vmem>>, %arg2: memref<1152x128xf32, #tpu.memory_space<vmem>>, %arg3: memref<1x128xf32, #tpu.memory_space<vmem>>, %arg4: memref<2x8x8x128xf32, #tpu.memory_space<vmem>>, %arg5: memref<2x10x10x128xf32, #tpu.memory_space<vmem>>) attributes {dimension_semantics = [#tpu.dimension_semantics<parallel>], iteration_bounds = array<i64: 1>, scalar_prefetch = 0 : i64, scratch_operands = 1 : i64, tpu.core_type = #tpu.core_type<tc>, window_params = [{transform_indices = @transform_0, window_bounds = array<i64: 2, 8, 8, 128>}, {pipeline_mode = #tpu.pipeline_mode<synchronous>, transform_indices = @transform_1, window_bounds = array<i64: 1152, 128>}, {pipeline_mode = #tpu.pipeline_mode<synchronous>, transform_indices = @transform_2, window_bounds = array<i64: 1, 128>}, {transform_indices = @transform_3, window_bounds = array<i64: 2, 8, 8, 128>}]} {
    %c0 = arith.constant 0 : index
    %c0_0 = arith.constant 0 : index
    %c0_1 = arith.constant 0 : index
    %c0_2 = arith.constant 0 : index
    %0 = vector.load %arg1[%c0, %c0_0, %c0_1, %c0_2] : memref<2x8x8x128xf32, #tpu.memory_space<vmem>>, vector<2x8x8x128xf32>
    %cst = arith.constant 0.000000e+00 : f32
    %1 = vector.broadcast %cst : f32 to vector<2x1x10x128xf32>
    %cst_3 = arith.constant 0.000000e+00 : f32
    %2 = vector.broadcast %cst_3 : f32 to vector<2x8x1x128xf32>
    %c0_4 = arith.constant 0 : index
    %c0_5 = arith.constant 0 : index
    %c0_6 = arith.constant 0 : index
    %c0_7 = arith.constant 0 : index
    %3 = vector.load %arg5[%c0_4, %c0_5, %c0_6, %c0_7] : memref<2x10x10x128xf32, #tpu.memory_space<vmem>>, vector<2x1x10x128xf32>
    tpu.vector_store %arg5[%c0_4, %c0_5, %c0_6, %c0_7], %1 {strides = array<i32>} : memref<2x10x10x128xf32, #tpu.memory_space<vmem>>, vector<2x1x10x128xf32>,
    %c0_8 = arith.constant 0 : index
    %c9 = arith.constant 9 : index
    %c0_9 = arith.constant 0 : index
    %c0_10 = arith.constant 0 : index
    %4 = vector.load %arg5[%c0_8, %c9, %c0_9, %c0_10] : memref<2x10x10x128xf32, #tpu.memory_space<vmem>>, vector<2x1x10x128xf32>
    tpu.vector_store %arg5[%c0_8, %c9, %c0_9, %c0_10], %1 {strides = array<i32>} : memref<2x10x10x128xf32, #tpu.memory_space<vmem>>, vector<2x1x10x128xf32>,
    %c0_11 = arith.constant 0 : index
    %c1 = arith.constant 1 : index
    %c0_12 = arith.constant 0 : index
    %c0_13 = arith.constant 0 : index
    %5 = vector.load %arg5[%c0_11, %c1, %c0_12, %c0_13] : memref<2x10x10x128xf32, #tpu.memory_space<vmem>>, vector<2x8x1x128xf32>
    tpu.vector_store %arg5[%c0_11, %c1, %c0_12, %c0_13], %2 {strides = array<i32>} : memref<2x10x10x128xf32, #tpu.memory_space<vmem>>, vector<2x8x1x128xf32>,
    %c0_14 = arith.constant 0 : index
    %c1_15 = arith.constant 1 : index
    %c9_16 = arith.constant 9 : index
    %c0_17 = arith.constant 0 : index
    %6 = vector.load %arg5[%c0_14, %c1_15, %c9_16, %c0_17] : memref<2x10x10x128xf32, #tpu.memory_space<vmem>>, vector<2x8x1x128xf32>
    tpu.vector_store %arg5[%c0_14, %c1_15, %c9_16, %c0_17], %2 {strides = array<i32>} : memref<2x10x10x128xf32, #tpu.memory_space<vmem>>, vector<2x8x1x128xf32>,
    %c0_18 = arith.constant 0 : index
    %c1_19 = arith.constant 1 : index
    %c1_20 = arith.constant 1 : index
    %c0_21 = arith.constant 0 : index
    %7 = vector.load %arg5[%c0_18, %c1_19, %c1_20, %c0_21] : memref<2x10x10x128xf32, #tpu.memory_space<vmem>>, vector<2x8x8x128xf32>
    tpu.vector_store %arg5[%c0_18, %c1_19, %c1_20, %c0_21], %0 {strides = array<i32>} : memref<2x10x10x128xf32, #tpu.memory_space<vmem>>, vector<2x8x8x128xf32>,
    %c0_22 = arith.constant 0 : index
    %c0_23 = arith.constant 0 : index
    %c0_24 = arith.constant 0 : index
    %c0_25 = arith.constant 0 : index
    %8 = vector.load %arg5[%c0_22, %c0_23, %c0_24, %c0_25] : memref<2x10x10x128xf32, #tpu.memory_space<vmem>>, vector<2x10x10x128xf32>
    %9 = vector.extract_strided_slice %8 {offsets = [0, 0, 0, 0], sizes = [2, 10, 8, 128], strides = [1, 1, 1, 1]} : vector<2x10x10x128xf32> to vector<2x10x8x128xf32>
    %10 = vector.extract_strided_slice %9 {offsets = [0, 0, 0, 0], sizes = [2, 8, 8, 128], strides = [1, 1, 1, 1]} : vector<2x10x8x128xf32> to vector<2x8x8x128xf32>
    %11 = vector.shape_cast %10 : vector<2x8x8x128xf32> to vector<128x128xf32>
    %12 = vector.extract_strided_slice %9 {offsets = [0, 1, 0, 0], sizes = [2, 8, 8, 128], strides = [1, 1, 1, 1]} : vector<2x10x8x128xf32> to vector<2x8x8x128xf32>
    %13 = vector.shape_cast %12 : vector<2x8x8x128xf32> to vector<128x128xf32>
    %14 = vector.extract_strided_slice %9 {offsets = [0, 2, 0, 0], sizes = [2, 8, 8, 128], strides = [1, 1, 1, 1]} : vector<2x10x8x128xf32> to vector<2x8x8x128xf32>
    %15 = vector.shape_cast %14 : vector<2x8x8x128xf32> to vector<128x128xf32>
    %16 = vector.extract_strided_slice %8 {offsets = [0, 0, 1, 0], sizes = [2, 10, 8, 128], strides = [1, 1, 1, 1]} : vector<2x10x10x128xf32> to vector<2x10x8x128xf32>
    %17 = vector.extract_strided_slice %16 {offsets = [0, 0, 0, 0], sizes = [2, 8, 8, 128], strides = [1, 1, 1, 1]} : vector<2x10x8x128xf32> to vector<2x8x8x128xf32>
    %18 = vector.shape_cast %17 : vector<2x8x8x128xf32> to vector<128x128xf32>
    %19 = vector.extract_strided_slice %16 {offsets = [0, 1, 0, 0], sizes = [2, 8, 8, 128], strides = [1, 1, 1, 1]} : vector<2x10x8x128xf32> to vector<2x8x8x128xf32>
    %20 = vector.shape_cast %19 : vector<2x8x8x128xf32> to vector<128x128xf32>
    %21 = vector.extract_strided_slice %16 {offsets = [0, 2, 0, 0], sizes = [2, 8, 8, 128], strides = [1, 1, 1, 1]} : vector<2x10x8x128xf32> to vector<2x8x8x128xf32>
    %22 = vector.shape_cast %21 : vector<2x8x8x128xf32> to vector<128x128xf32>
    %23 = vector.extract_strided_slice %8 {offsets = [0, 0, 2, 0], sizes = [2, 10, 8, 128], strides = [1, 1, 1, 1]} : vector<2x10x10x128xf32> to vector<2x10x8x128xf32>
    %24 = vector.extract_strided_slice %23 {offsets = [0, 0, 0, 0], sizes = [2, 8, 8, 128], strides = [1, 1, 1, 1]} : vector<2x10x8x128xf32> to vector<2x8x8x128xf32>
    %25 = vector.shape_cast %24 : vector<2x8x8x128xf32> to vector<128x128xf32>
    %26 = vector.extract_strided_slice %23 {offsets = [0, 1, 0, 0], sizes = [2, 8, 8, 128], strides = [1, 1, 1, 1]} : vector<2x10x8x128xf32> to vector<2x8x8x128xf32>
    %27 = vector.shape_cast %26 : vector<2x8x8x128xf32> to vector<128x128xf32>
    %28 = vector.extract_strided_slice %23 {offsets = [0, 2, 0, 0], sizes = [2, 8, 8, 128], strides = [1, 1, 1, 1]} : vector<2x10x8x128xf32> to vector<2x8x8x128xf32>
    %29 = vector.shape_cast %28 : vector<2x8x8x128xf32> to vector<128x128xf32>
    %30 = tpu.concatenate %11, %13, %15, %18, %20, %22, %25, %27, %29 in 1 : vector<128x128xf32>, vector<128x128xf32>, vector<128x128xf32>, vector<128x128xf32>, vector<128x128xf32>, vector<128x128xf32>, vector<128x128xf32>, vector<128x128xf32>, vector<128x128xf32> -> vector<128x1152xf32>
    %c0_26 = arith.constant 0 : index
    %c0_27 = arith.constant 0 : index
    %31 = vector.load %arg2[%c0_26, %c0_27] : memref<1152x128xf32, #tpu.memory_space<vmem>>, vector<1152x128xf32>
    %cst_28 = arith.constant dense<0.000000e+00> : vector<128x128xf32>
    %32 = tpu.matmul %30, %31, %cst_28 {dimension_numbers = #tpu.dot_dimension_numbers<[1], [0], [0], [1], [0, 0, 1, 1], [], []>} : vector<128x1152xf32>, vector<1152x128xf32>, vector<128x128xf32> -> vector<128x128xf32>
    %c0_29 = arith.constant 0 : index
    %c0_30 = arith.constant 0 : index
    %33 = vector.load %arg3[%c0_29, %c0_30] : memref<1x128xf32, #tpu.memory_space<vmem>>, vector<1x128xf32>
    %34 = vector.broadcast %33 : vector<1x128xf32> to vector<128x128xf32>
    %35 = arith.addf %32, %34 : vector<128x128xf32>
    %36 = vector.shape_cast %35 : vector<128x128xf32> to vector<2x8x8x128xf32>
    %c0_31 = arith.constant 0 : index
    %c0_32 = arith.constant 0 : index
    %c0_33 = arith.constant 0 : index
    %c0_34 = arith.constant 0 : index
    %37 = vector.load %arg4[%c0_31, %c0_32, %c0_33, %c0_34] : memref<2x8x8x128xf32, #tpu.memory_space<vmem>>, vector<2x8x8x128xf32>
    tpu.vector_store %arg4[%c0_31, %c0_32, %c0_33, %c0_34], %36 {strides = array<i32>} : memref<2x8x8x128xf32, #tpu.memory_space<vmem>>, vector<2x8x8x128xf32>,
    return
  }
  func.func @transform_0(%arg0: i32) -> (i32, i32, i32, i32) {
    %c0_i32 = arith.constant 0 : i32
    %c0_i32_0 = arith.constant 0 : i32
    %c0_i32_1 = arith.constant 0 : i32
    %c0_i32_2 = arith.constant 0 : i32
    return %arg0, %c0_i32, %c0_i32_0, %c0_i32_1 : i32, i32, i32, i32
  }
  func.func @transform_1(%arg0: i32) -> (i32, i32) {
    %c0_i32 = arith.constant 0 : i32
    %c0_i32_0 = arith.constant 0 : i32
    %c0_i32_1 = arith.constant 0 : i32
    return %c0_i32, %c0_i32_0 : i32, i32
  }
  func.func @transform_2(%arg0: i32) -> (i32, i32) {
    %c0_i32 = arith.constant 0 : i32
    %c0_i32_0 = arith.constant 0 : i32
    %c0_i32_1 = arith.constant 0 : i32
    return %c0_i32, %c0_i32_0 : i32, i32
  }
  func.func @transform_3(%arg0: i32) -> (i32, i32, i32, i32) {
    %c0_i32 = arith.constant 0 : i32
    %c0_i32_0 = arith.constant 0 : i32
    %c0_i32_1 = arith.constant 0 : i32
    %c0_i32_2 = arith.constant 0 : i32
    return %arg0, %c0_i32, %c0_i32_0, %c0_i32_1 : i32, i32, i32, i32
  }
}

</mosaic_0001>

<llo_original>
// kernel: _lambda_.2
$region0: #{_lambda_.2}
  #allocation0 [shape = 'u32[]', space=smem, size = 0x4, offset = 0x4, fixed_abs, tag = 'smem constant byte address 0x4 - core index']
  #allocation1 [shape = 'u32[72,128]{1,0:T(1,128)}', space=vmem, size = 0x9000, scoped, tag = 'internal scratch']
  #allocation2 [shape = 'f32[2,10,10,128]{3,2,1,0:T(8,128)}', space=vmem, size = 0x28000, scoped, tag = 'scratch operand']
  %s0 = inlined_call_operand.hbm [shape: f32[2,8,8,128], index: 0, kind: input, shape index: {}]
  %s1 = inlined_call_operand.hbm [shape: f32[1152,128], index: 1, kind: input, shape index: {}]
  %s2 = inlined_call_operand.vmem [shape: f32[1,128], index: 2, kind: input, shape index: {}]
  %s3 = inlined_call_operand.vmem [shape: f32[2,8,8,128], index: 3, kind: output, shape index: {}]
  %s4 = sld [smem:[#allocation0]]
  $region30: #{_lambda_.2} parent=0
    _
  %s6 = ssub.s32 1, %s4
  %s7 = scalar_select 0, %s6, %s4
  $region1: #{_lambda_.2} parent=0
    #allocation3 [shape = 'u8[65536]{0}', space=vmem, size = 0x10000, scoped, tag = 'input window, operand 0, single buffered']
    #allocation4 [shape = 's32[1]{0}', space=sflag, size = 0x4, scoped, tag = 'scoped memory for _lambda_.2']
    #allocation5 [shape = 'u8[589824]{0}', space=vmem, size = 0x90000, scoped, tag = 'input window, operand 1, single buffered']
    #allocation6 [shape = 's32[1]{0}', space=sflag, size = 0x4, scoped, tag = 'scoped memory for _lambda_.2']
    %8 = vsyncpa [#allocation4], 0
    %9 = vsyncpa [#allocation6], 0
    // Predicated region
    $region2: #{_lambda_.2} parent=1 // pred_check
      _
    $region3: #{_lambda_.2} parent=1 // pred_check_branch
      %11 = sbr.rel (0) target = $region5
    $region4: #{_lambda_.2} parent=1 // pred_region
      %13 = vsyncadd [#allocation4], 0
      %s14 = sshll.u32 %s0, 4
      %s15 = int_to_ptr.hbm [resolvable:$true] %s14
      %s16 = sshll.u32 [#allocation3], 4
      %s17 = int_to_ptr.vmem [resolvable:$true] %s16
      %22 = dma.hbm_to_vmem [thread:$0]  %s15, 2048, %s17, [#allocation4], 128, 128, 8
    $region5: #{_lambda_.2} parent=1 // pred_fallthru
      _
    // Predicated region
    $region6: #{_lambda_.2} parent=1 // pred_check
      _
    $region7: #{_lambda_.2} parent=1 // pred_check_branch
      %24 = sbr.rel (0) target = $region9
    $region8: #{_lambda_.2} parent=1 // pred_region
      %26 = vsyncadd [#allocation6], 0
      %s27 = sshll.u32 %s1, 4
      %s28 = int_to_ptr.hbm [resolvable:$true] %s27
      %s29 = sshll.u32 [#allocation5], 4
      %s30 = int_to_ptr.vmem [resolvable:$true] %s29
      %35 = dma.hbm_to_vmem [thread:$0]  %s28, 18432, %s30, [#allocation6], 128, 128, 8
    $region9: #{_lambda_.2} parent=1 // pred_fallthru
      _
    // Predicated region
    $region10: #{_lambda_.2} parent=1 // pred_check
      _
    $region11: #{_lambda_.2} parent=1 // pred_check_branch
      %37 = sbr.rel (0) target = $region13
    $region12: #{_lambda_.2} parent=1 // pred_region
      _
    $region13: #{_lambda_.2} parent=1 // pred_fallthru
      _
    // Predicated region
    $region14: #{_lambda_.2} parent=1 // pred_check
      _
    $region15: #{_lambda_.2} parent=1 // pred_check_branch
      %39 = sbr.rel (0) target = $region17
    $region16: #{_lambda_.2} parent=1 // pred_region
      %41 = dma.done [#allocation4], 2048
    $region17: #{_lambda_.2} parent=1 // pred_fallthru
      _
    // Predicated region
    $region18: #{_lambda_.2} parent=1 // pred_check
      _
    $region19: #{_lambda_.2} parent=1 // pred_check_branch
      %43 = sbr.rel (0) target = $region21
    $region20: #{_lambda_.2} parent=1 // pred_region
      %45 = dma.done [#allocation6], 18432
    $region21: #{_lambda_.2} parent=1 // pred_fallthru
      _
    %v46 = vld [vmem:[#allocation3] sm:$0xff]
    %v47 = vld [vmem:[#allocation3 + $0x8] sm:$0xff]
    %v48 = vld [vmem:[#allocation3 + $0x10] sm:$0xff]
    %v49 = vld [vmem:[#allocation3 + $0x18] sm:$0xff]
    %v50 = vld [vmem:[#allocation3 + $0x20] sm:$0xff]
    %v51 = vld [vmem:[#allocation3 + $0x28] sm:$0xff]
    %v52 = vld [vmem:[#allocation3 + $0x30] sm:$0xff]
    %v53 = vld [vmem:[#allocation3 + $0x38] sm:$0xff]
    %v54 = vld [vmem:[#allocation3 + $0x40] sm:$0xff]
    %v55 = vld [vmem:[#allocation3 + $0x48] sm:$0xff]
    %v56 = vld [vmem:[#allocation3 + $0x50] sm:$0xff]
    %v57 = vld [vmem:[#allocation3 + $0x58] sm:$0xff]
    %v58 = vld [vmem:[#allocation3 + $0x60] sm:$0xff]
    %v59 = vld [vmem:[#allocation3 + $0x68] sm:$0xff]
    %v60 = vld [vmem:[#allocation3 + $0x70] sm:$0xff]
    %v61 = vld [vmem:[#allocation3 + $0x78] sm:$0xff]
    %62 = vst [vmem:[#allocation2] sm:$0xff] 0.0
    %63 = vst [vmem:[#allocation2 + $0x8] sm:$0x3] 0.0
    %64 = vst [vmem:[#allocation2 + $0xa0] sm:$0xff] 0.0
    %65 = vst [vmem:[#allocation2 + $0xa8] sm:$0x3] 0.0
    %s66 = scalar_lea.vmem [#allocation2], 144
    %67 = vst [vmem:[%s66] sm:$0xff] 0.0
    %68 = vst [vmem:[%s66 + $0x8] sm:$0x3] 0.0
    %69 = vst [vmem:[%s66 + $0xa0] sm:$0xff] 0.0
    %70 = vst [vmem:[%s66 + $0xa8] sm:$0x3] 0.0
    %s71 = scalar_lea.vmem [#allocation2], 16
    %72 = vst [vmem:[%s71] sm:$0x1] 0.0
    %73 = vst [vmem:[%s71 + $0x10] sm:$0x1] 0.0
    %74 = vst [vmem:[%s71 + $0x20] sm:$0x1] 0.0
    %75 = vst [vmem:[%s71 + $0x30] sm:$0x1] 0.0
    %76 = vst [vmem:[%s71 + $0x40] sm:$0x1] 0.0
    %77 = vst [vmem:[%s71 + $0x50] sm:$0x1] 0.0
    %78 = vst [vmem:[%s71 + $0x60] sm:$0x1] 0.0
    %79 = vst [vmem:[%s71 + $0x70] sm:$0x1] 0.0
    %80 = vst [vmem:[%s71 + $0xa0] sm:$0x1] 0.0
    %81 = vst [vmem:[%s71 + $0xb0] sm:$0x1] 0.0
    %82 = vst [vmem:[%s71 + $0xc0] sm:$0x1] 0.0
    %83 = vst [vmem:[%s71 + $0xd0] sm:$0x1] 0.0
    %84 = vst [vmem:[%s71 + $0xe0] sm:$0x1] 0.0
    %85 = vst [vmem:[%s71 + $0xf0] sm:$0x1] 0.0
    %86 = vst [vmem:[%s71 + $0x100] sm:$0x1] 0.0
    %87 = vst [vmem:[%s71 + $0x110] sm:$0x1] 0.0
    %88 = vst [vmem:[%s71 + $0x9] sm:$0x1] 0.0
    %89 = vst [vmem:[%s71 + $0x19] sm:$0x1] 0.0
    %90 = vst [vmem:[%s71 + $0x29] sm:$0x1] 0.0
    %91 = vst [vmem:[%s71 + $0x39] sm:$0x1] 0.0
    %92 = vst [vmem:[%s71 + $0x49] sm:$0x1] 0.0
    %93 = vst [vmem:[%s71 + $0x59] sm:$0x1] 0.0
    %94 = vst [vmem:[%s71 + $0x69] sm:$0x1] 0.0
    %95 = vst [vmem:[%s71 + $0x79] sm:$0x1] 0.0
    %96 = vst [vmem:[%s71 + $0xa9] sm:$0x1] 0.0
    %97 = vst [vmem:[%s71 + $0xb9] sm:$0x1] 0.0
    %98 = vst [vmem:[%s71 + $0xc9] sm:$0x1] 0.0
    %99 = vst [vmem:[%s71 + $0xd9] sm:$0x1] 0.0
    %100 = vst [vmem:[%s71 + $0xe9] sm:$0x1] 0.0
    %101 = vst [vmem:[%s71 + $0xf9] sm:$0x1] 0.0
    %102 = vst [vmem:[%s71 + $0x109] sm:$0x1] 0.0
    %103 = vst [vmem:[%s71 + $0x119] sm:$0x1] 0.0
    %104 = vst [vmem:[%s71 + $0x1] sm:$0xff] %v46
    %105 = vst [vmem:[%s71 + $0x11] sm:$0xff] %v47
    %106 = vst [vmem:[%s71 + $0x21] sm:$0xff] %v48
    %107 = vst [vmem:[%s71 + $0x31] sm:$0xff] %v49
    %108 = vst [vmem:[%s71 + $0x41] sm:$0xff] %v50
    %109 = vst [vmem:[%s71 + $0x51] sm:$0xff] %v51
    %110 = vst [vmem:[%s71 + $0x61] sm:$0xff] %v52
    %111 = vst [vmem:[%s71 + $0x71] sm:$0xff] %v53
    %112 = vst [vmem:[%s71 + $0xa1] sm:$0xff] %v54
    %113 = vst [vmem:[%s71 + $0xb1] sm:$0xff] %v55
    %114 = vst [vmem:[%s71 + $0xc1] sm:$0xff] %v56
    %115 = vst [vmem:[%s71 + $0xd1] sm:$0xff] %v57
    %116 = vst [vmem:[%s71 + $0xe1] sm:$0xff] %v58
    %117 = vst [vmem:[%s71 + $0xf1] sm:$0xff] %v59
    %118 = vst [vmem:[%s71 + $0x101] sm:$0xff] %v60
    %119 = vst [vmem:[%s71 + $0x111] sm:$0xff] %v61
    %v120 = vld [vmem:[#allocation2] sm:$0xff]
    %v121 = vld [vmem:[#allocation2 + $0x8] sm:$0x3]
    %v122 = vld [vmem:[#allocation2 + $0x10] sm:$0xff]
    %v123 = vld [vmem:[#allocation2 + $0x18] sm:$0x3]
    %v124 = vld [vmem:[#allocation2 + $0x20] sm:$0xff]
    %v125 = vld [vmem:[#allocation2 + $0x28] sm:$0x3]
    %v126 = vld [vmem:[#allocation2 + $0x30] sm:$0xff]
    %v127 = vld [vmem:[#allocation2 + $0x38] sm:$0x3]
    %v128 = vld [vmem:[#allocation2 + $0x40] sm:$0xff]
    %v129 = vld [vmem:[#allocation2 + $0x48] sm:$0x3]
    %v130 = vld [vmem:[#allocation2 + $0x50] sm:$0xff]
    %v131 = vld [vmem:[#allocation2 + $0x58] sm:$0x3]
    %v132 = vld [vmem:[#allocation2 + $0x60] sm:$0xff]
    %v133 = vld [vmem:[#allocation2 + $0x68] sm:$0x3]
    %v134 = vld [vmem:[#allocation2 + $0x70] sm:$0xff]
    %v135 = vld [vmem:[#allocation2 + $0x78] sm:$0x3]
    %v136 = vld [vmem:[#allocation2 + $0x80] sm:$0xff]
    %v137 = vld [vmem:[#allocation2 + $0x88] sm:$0x3]
    %v138 = vld [vmem:[#allocation2 + $0x90] sm:$0xff]
    %v139 = vld [vmem:[#allocation2 + $0x98] sm:$0x3]
    %v140 = vld [vmem:[#allocation2 + $0xa0] sm:$0xff]
    %v141 = vld [vmem:[#allocation2 + $0xa8] sm:$0x3]
    %v142 = vld [vmem:[#allocation2 + $0xb0] sm:$0xff]
    %v143 = vld [vmem:[#allocation2 + $0xb8] sm:$0x3]
    %v144 = vld [vmem:[#allocation2 + $0xc0] sm:$0xff]
    %v145 = vld [vmem:[#allocation2 + $0xc8] sm:$0x3]
    %v146 = vld [vmem:[#allocation2 + $0xd0] sm:$0xff]
    %v147 = vld [vmem:[#allocation2 + $0xd8] sm:$0x3]
    %v148 = vld [vmem:[#allocation2 + $0xe0] sm:$0xff]
    %v149 = vld [vmem:[#allocation2 + $0xe8] sm:$0x3]
    %v150 = vld [vmem:[#allocation2 + $0xf0] sm:$0xff]
    %v151 = vld [vmem:[#allocation2 + $0xf8] sm:$0x3]
    %v152 = vld [vmem:[#allocation2 + $0x100] sm:$0xff]
    %v153 = vld [vmem:[#allocation2 + $0x108] sm:$0x3]
    %v154 = vld [vmem:[#allocation2 + $0x110] sm:$0xff]
    %v155 = vld [vmem:[#allocation2 + $0x118] sm:$0x3]
    %v156 = vld [vmem:[#allocation2 + $0x120] sm:$0xff]
    %v157 = vld [vmem:[#allocation2 + $0x128] sm:$0x3]
    %v158 = vld [vmem:[#allocation2 + $0x130] sm:$0xff]
    %v159 = vld [vmem:[#allocation2 + $0x138] sm:$0x3]
    %vm192 = vcmask 1046528
    %v193 = vrot.slane %v120, 1
    %v194 = vrot.slane %v121, 1
    %v195 = vsel %vm192, %v193, %v194
    %v196 = vrot.slane %v122, 1
    %v197 = vrot.slane %v123, 1
    %v198 = vsel %vm192, %v196, %v197
    %v199 = vrot.slane %v124, 1
    %v200 = vrot.slane %v125, 1
    %v201 = vsel %vm192, %v199, %v200
    %v202 = vrot.slane %v126, 1
    %v203 = vrot.slane %v127, 1
    %v204 = vsel %vm192, %v202, %v203
    %v205 = vrot.slane %v128, 1
    %v206 = vrot.slane %v129, 1
    %v207 = vsel %vm192, %v205, %v206
    %v208 = vrot.slane %v130, 1
    %v209 = vrot.slane %v131, 1
    %v210 = vsel %vm192, %v208, %v209
    %v211 = vrot.slane %v132, 1
    %v212 = vrot.slane %v133, 1
    %v213 = vsel %vm192, %v211, %v212
    %v214 = vrot.slane %v134, 1
    %v215 = vrot.slane %v135, 1
    %v216 = vsel %vm192, %v214, %v215
    %v217 = vrot.slane %v140, 1
    %v218 = vrot.slane %v141, 1
    %v219 = vsel %vm192, %v217, %v218
    %v220 = vrot.slane %v142, 1
    %v221 = vrot.slane %v143, 1
    %v222 = vsel %vm192, %v220, %v221
    %v223 = vrot.slane %v144, 1
    %v224 = vrot.slane %v145, 1
    %v225 = vsel %vm192, %v223, %v224
    %v226 = vrot.slane %v146, 1
    %v227 = vrot.slane %v147, 1
    %v228 = vsel %vm192, %v226, %v227
    %v229 = vrot.slane %v148, 1
    %v230 = vrot.slane %v149, 1
    %v231 = vsel %vm192, %v229, %v230
    %v232 = vrot.slane %v150, 1
    %v233 = vrot.slane %v151, 1
    %v234 = vsel %vm192, %v232, %v233
    %v235 = vrot.slane %v152, 1
    %v236 = vrot.slane %v153, 1
    %v237 = vsel %vm192, %v235, %v236
    %v238 = vrot.slane %v154, 1
    %v239 = vrot.slane %v155, 1
    %v240 = vsel %vm192, %v238, %v239
    %v261 = vrot.slane %v136, 1
    %v262 = vrot.slane %v137, 1
    %v263 = vsel %vm192, %v261, %v262
    %v264 = vrot.slane %v156, 1
    %v265 = vrot.slane %v157, 1
    %v266 = vsel %vm192, %v264, %v265
    %v273 = vrot.slane %v138, 1
    %v274 = vrot.slane %v139, 1
    %v275 = vsel %vm192, %v273, %v274
    %v276 = vrot.slane %v158, 1
    %v277 = vrot.slane %v159, 1
    %v278 = vsel %vm192, %v276, %v277
    %vm281 = vcmask 1045504
    %v282 = vrot.slane %v120, 2
    %v283 = vrot.slane %v121, 2
    %v284 = vsel %vm281, %v282, %v283
    %v285 = vrot.slane %v122, 2
    %v286 = vrot.slane %v123, 2
    %v287 = vsel %vm281, %v285, %v286
    %v288 = vrot.slane %v124, 2
    %v289 = vrot.slane %v125, 2
    %v290 = vsel %vm281, %v288, %v289
    %v291 = vrot.slane %v126, 2
    %v292 = vrot.slane %v127, 2
    %v293 = vsel %vm281, %v291, %v292
    %v294 = vrot.slane %v128, 2
    %v295 = vrot.slane %v129, 2
    %v296 = vsel %vm281, %v294, %v295
    %v297 = vrot.slane %v130, 2
    %v298 = vrot.slane %v131, 2
    %v299 = vsel %vm281, %v297, %v298
    %v300 = vrot.slane %v132, 2
    %v301 = vrot.slane %v133, 2
    %v302 = vsel %vm281, %v300, %v301
    %v303 = vrot.slane %v134, 2
    %v304 = vrot.slane %v135, 2
    %v305 = vsel %vm281, %v303, %v304
    %v306 = vrot.slane %v140, 2
    %v307 = vrot.slane %v141, 2
    %v308 = vsel %vm281, %v306, %v307
    %v309 = vrot.slane %v142, 2
    %v310 = vrot.slane %v143, 2
    %v311 = vsel %vm281, %v309, %v310
    %v312 = vrot.slane %v144, 2
    %v313 = vrot.slane %v145, 2
    %v314 = vsel %vm281, %v312, %v313
    %v315 = vrot.slane %v146, 2
    %v316 = vrot.slane %v147, 2
    %v317 = vsel %vm281, %v315, %v316
    %v318 = vrot.slane %v148, 2
    %v319 = vrot.slane %v149, 2
    %v320 = vsel %vm281, %v318, %v319
    %v321 = vrot.slane %v150, 2
    %v322 = vrot.slane %v151, 2
    %v323 = vsel %vm281, %v321, %v322
    %v324 = vrot.slane %v152, 2
    %v325 = vrot.slane %v153, 2
    %v326 = vsel %vm281, %v324, %v325
    %v327 = vrot.slane %v154, 2
    %v328 = vrot.slane %v155, 2
    %v329 = vsel %vm281, %v327, %v328
    %v346 = vrot.slane %v136, 2
    %v347 = vrot.slane %v137, 2
    %v348 = vsel %vm281, %v346, %v347
    %v349 = vrot.slane %v156, 2
    %v350 = vrot.slane %v157, 2
    %v351 = vsel %vm281, %v349, %v350
    %v354 = vrot.slane %v138, 2
    %v355 = vrot.slane %v139, 2
    %v356 = vsel %vm281, %v354, %v355
    %v357 = vrot.slane %v158, 2
    %v358 = vrot.slane %v159, 2
    %v359 = vsel %vm281, %v357, %v358
    %v362 = vld [vmem:[#allocation5] sm:$0xff]
    %v363 = vld [vmem:[#allocation5 + $0x8] sm:$0xff]
    %v364 = vld [vmem:[#allocation5 + $0x10] sm:$0xff]
    %v365 = vld [vmem:[#allocation5 + $0x18] sm:$0xff]
    %v366 = vld [vmem:[#allocation5 + $0x20] sm:$0xff]
    %v367 = vld [vmem:[#allocation5 + $0x28] sm:$0xff]
    %v368 = vld [vmem:[#allocation5 + $0x30] sm:$0xff]
    %v369 = vld [vmem:[#allocation5 + $0x38] sm:$0xff]
    %v370 = vld [vmem:[#allocation5 + $0x40] sm:$0xff]
    %v371 = vld [vmem:[#allocation5 + $0x48] sm:$0xff]
    %v372 = vld [vmem:[#allocation5 + $0x50] sm:$0xff]
    %v373 = vld [vmem:[#allocation5 + $0x58] sm:$0xff]
    %v374 = vld [vmem:[#allocation5 + $0x60] sm:$0xff]
    %v375 = vld [vmem:[#allocation5 + $0x68] sm:$0xff]
    %v376 = vld [vmem:[#allocation5 + $0x70] sm:$0xff]
    %v377 = vld [vmem:[#allocation5 + $0x78] sm:$0xff]
    %v378 = vld [vmem:[#allocation5 + $0x80] sm:$0xff]
    %v379 = vld [vmem:[#allocation5 + $0x88] sm:$0xff]
    %v380 = vld [vmem:[#allocation5 + $0x90] sm:$0xff]
    %v381 = vld [vmem:[#allocation5 + $0x98] sm:$0xff]
    %v382 = vld [vmem:[#allocation5 + $0xa0] sm:$0xff]
    %v383 = vld [vmem:[#allocation5 + $0xa8] sm:$0xff]
    %v384 = vld [vmem:[#allocation5 + $0xb0] sm:$0xff]
    %v385 = vld [vmem:[#allocation5 + $0xb8] sm:$0xff]
    %v386 = vld [vmem:[#allocation5 + $0xc0] sm:$0xff]
    %v387 = vld [vmem:[#allocation5 + $0xc8] sm:$0xff]
    %v388 = vld [vmem:[#allocation5 + $0xd0] sm:$0xff]
    %v389 = vld [vmem:[#allocation5 + $0xd8] sm:$0xff]
    %v390 = vld [vmem:[#allocation5 + $0xe0] sm:$0xff]
    %v391 = vld [vmem:[#allocation5 + $0xe8] sm:$0xff]
    %v392 = vld [vmem:[#allocation5 + $0xf0] sm:$0xff]
    %v393 = vld [vmem:[#allocation5 + $0xf8] sm:$0xff]
    %v394 = vld [vmem:[#allocation5 + $0x100] sm:$0xff]
    %v395 = vld [vmem:[#allocation5 + $0x108] sm:$0xff]
    %v396 = vld [vmem:[#allocation5 + $0x110] sm:$0xff]
    %v397 = vld [vmem:[#allocation5 + $0x118] sm:$0xff]
    %v398 = vld [vmem:[#allocation5 + $0x120] sm:$0xff]
    %v399 = vld [vmem:[#allocation5 + $0x128] sm:$0xff]
    %v400 = vld [vmem:[#allocation5 + $0x130] sm:$0xff]
    %v401 = vld [vmem:[#allocation5 + $0x138] sm:$0xff]
    %v402 = vld [vmem:[#allocation5 + $0x140] sm:$0xff]
    %v403 = vld [vmem:[#allocation5 + $0x148] sm:$0xff]
    %v404 = vld [vmem:[#allocation5 + $0x150] sm:$0xff]
    %v405 = vld [vmem:[#allocation5 + $0x158] sm:$0xff]
    %v406 = vld [vmem:[#allocation5 + $0x160] sm:$0xff]
    %v407 = vld [vmem:[#allocation5 + $0x168] sm:$0xff]
    %v408 = vld [vmem:[#allocation5 + $0x170] sm:$0xff]
    %v409 = vld [vmem:[#allocation5 + $0x178] sm:$0xff]
    %v410 = vld [vmem:[#allocation5 + $0x180] sm:$0xff]
    %v411 = vld [vmem:[#allocation5 + $0x188] sm:$0xff]
    %v412 = vld [vmem:[#allocation5 + $0x190] sm:$0xff]
    %v413 = vld [vmem:[#allocation5 + $0x198] sm:$0xff]
    %v414 = vld [vmem:[#allocation5 + $0x1a0] sm:$0xff]
    %v415 = vld [vmem:[#allocation5 + $0x1a8] sm:$0xff]
    %v416 = vld [vmem:[#allocation5 + $0x1b0] sm:$0xff]
    %v417 = vld [vmem:[#allocation5 + $0x1b8] sm:$0xff]
    %v418 = vld [vmem:[#allocation5 + $0x1c0] sm:$0xff]
    %v419 = vld [vmem:[#allocation5 + $0x1c8] sm:$0xff]
    %v420 = vld [vmem:[#allocation5 + $0x1d0] sm:$0xff]
    %v421 = vld [vmem:[#allocation5 + $0x1d8] sm:$0xff]
    %v422 = vld [vmem:[#allocation5 + $0x1e0] sm:$0xff]
    %v423 = vld [vmem:[#allocation5 + $0x1e8] sm:$0xff]
    %v424 = vld [vmem:[#allocation5 + $0x1f0] sm:$0xff]
    %v425 = vld [vmem:[#allocation5 + $0x1f8] sm:$0xff]
    %v426 = vld [vmem:[#allocation5 + $0x200] sm:$0xff]
    %v427 = vld [vmem:[#allocation5 + $0x208] sm:$0xff]
    %v428 = vld [vmem:[#allocation5 + $0x210] sm:$0xff]
    %v429 = vld [vmem:[#allocation5 + $0x218] sm:$0xff]
    %v430 = vld [vmem:[#allocation5 + $0x220] sm:$0xff]
    %v431 = vld [vmem:[#allocation5 + $0x228] sm:$0xff]
    %v432 = vld [vmem:[#allocation5 + $0x230] sm:$0xff]
    %v433 = vld [vmem:[#allocation5 + $0x238] sm:$0xff]
    %v434 = vld [vmem:[#allocation5 + $0x240] sm:$0xff]
    %v435 = vld [vmem:[#allocation5 + $0x248] sm:$0xff]
    %v436 = vld [vmem:[#allocation5 + $0x250] sm:$0xff]
    %v437 = vld [vmem:[#allocation5 + $0x258] sm:$0xff]
    %v438 = vld [vmem:[#allocation5 + $0x260] sm:$0xff]
    %v439 = vld [vmem:[#allocation5 + $0x268] sm:$0xff]
    %v440 = vld [vmem:[#allocation5 + $0x270] sm:$0xff]
    %v441 = vld [vmem:[#allocation5 + $0x278] sm:$0xff]
    %v442 = vld [vmem:[#allocation5 + $0x280] sm:$0xff]
    %v443 = vld [vmem:[#allocation5 + $0x288] sm:$0xff]
    %v444 = vld [vmem:[#allocation5 + $0x290] sm:$0xff]
    %v445 = vld [vmem:[#allocation5 + $0x298] sm:$0xff]
    %v446 = vld [vmem:[#allocation5 + $0x2a0] sm:$0xff]
    %v447 = vld [vmem:[#allocation5 + $0x2a8] sm:$0xff]
    %v448 = vld [vmem:[#allocation5 + $0x2b0] sm:$0xff]
    %v449 = vld [vmem:[#allocation5 + $0x2b8] sm:$0xff]
    %v450 = vld [vmem:[#allocation5 + $0x2c0] sm:$0xff]
    %v451 = vld [vmem:[#allocation5 + $0x2c8] sm:$0xff]
    %v452 = vld [vmem:[#allocation5 + $0x2d0] sm:$0xff]
    %v453 = vld [vmem:[#allocation5 + $0x2d8] sm:$0xff]
    %v454 = vld [vmem:[#allocation5 + $0x2e0] sm:$0xff]
    %v455 = vld [vmem:[#allocation5 + $0x2e8] sm:$0xff]
    %v456 = vld [vmem:[#allocation5 + $0x2f0] sm:$0xff]
    %v457 = vld [vmem:[#allocation5 + $0x2f8] sm:$0xff]
    %v458 = vld [vmem:[#allocation5 + $0x300] sm:$0xff]
    %v459 = vld [vmem:[#allocation5 + $0x308] sm:$0xff]
    %v460 = vld [vmem:[#allocation5 + $0x310] sm:$0xff]
    %v461 = vld [vmem:[#allocation5 + $0x318] sm:$0xff]
    %v462 = vld [vmem:[#allocation5 + $0x320] sm:$0xff]
    %v463 = vld [vmem:[#allocation5 + $0x328] sm:$0xff]
    %v464 = vld [vmem:[#allocation5 + $0x330] sm:$0xff]
    %v465 = vld [vmem:[#allocation5 + $0x338] sm:$0xff]
    %v466 = vld [vmem:[#allocation5 + $0x340] sm:$0xff]
    %v467 = vld [vmem:[#allocation5 + $0x348] sm:$0xff]
    %v468 = vld [vmem:[#allocation5 + $0x350] sm:$0xff]
    %v469 = vld [vmem:[#allocation5 + $0x358] sm:$0xff]
    %v470 = vld [vmem:[#allocation5 + $0x360] sm:$0xff]
    %v471 = vld [vmem:[#allocation5 + $0x368] sm:$0xff]
    %v472 = vld [vmem:[#allocation5 + $0x370] sm:$0xff]
    %v473 = vld [vmem:[#allocation5 + $0x378] sm:$0xff]
    %v474 = vld [vmem:[#allocation5 + $0x380] sm:$0xff]
    %v475 = vld [vmem:[#allocation5 + $0x388] sm:$0xff]
    %v476 = vld [vmem:[#allocation5 + $0x390] sm:$0xff]
    %v477 = vld [vmem:[#allocation5 + $0x398] sm:$0xff]
    %v478 = vld [vmem:[#allocation5 + $0x3a0] sm:$0xff]
    %v479 = vld [vmem:[#allocation5 + $0x3a8] sm:$0xff]
    %v480 = vld [vmem:[#allocation5 + $0x3b0] sm:$0xff]
    %v481 = vld [vmem:[#allocation5 + $0x3b8] sm:$0xff]
    %v482 = vld [vmem:[#allocation5 + $0x3c0] sm:$0xff]
    %v483 = vld [vmem:[#allocation5 + $0x3c8] sm:$0xff]
    %v484 = vld [vmem:[#allocation5 + $0x3d0] sm:$0xff]
    %v485 = vld [vmem:[#allocation5 + $0x3d8] sm:$0xff]
    %v486 = vld [vmem:[#allocation5 + $0x3e0] sm:$0xff]
    %v487 = vld [vmem:[#allocation5 + $0x3e8] sm:$0xff]
    %v488 = vld [vmem:[#allocation5 + $0x3f0] sm:$0xff]
    %v489 = vld [vmem:[#allocation5 + $0x3f8] sm:$0xff]
    %v490 = vld [vmem:[#allocation5 + $0x400] sm:$0xff]
    %v491 = vld [vmem:[#allocation5 + $0x408] sm:$0xff]
    %v492 = vld [vmem:[#allocation5 + $0x410] sm:$0xff]
    %v493 = vld [vmem:[#allocation5 + $0x418] sm:$0xff]
    %v494 = vld [vmem:[#allocation5 + $0x420] sm:$0xff]
    %v495 = vld [vmem:[#allocation5 + $0x428] sm:$0xff]
    %v496 = vld [vmem:[#allocation5 + $0x430] sm:$0xff]
    %v497 = vld [vmem:[#allocation5 + $0x438] sm:$0xff]
    %v498 = vld [vmem:[#allocation5 + $0x440] sm:$0xff]
    %v499 = vld [vmem:[#allocation5 + $0x448] sm:$0xff]
    %v500 = vld [vmem:[#allocation5 + $0x450] sm:$0xff]
    %v501 = vld [vmem:[#allocation5 + $0x458] sm:$0xff]
    %v502 = vld [vmem:[#allocation5 + $0x460] sm:$0xff]
    %v503 = vld [vmem:[#allocation5 + $0x468] sm:$0xff]
    %v504 = vld [vmem:[#allocation5 + $0x470] sm:$0xff]
    %v505 = vld [vmem:[#allocation5 + $0x478] sm:$0xff]
    %v506 = vld [vmem:[%s2] sm:$0x1]
    %v508 = vperm.slane %v506, 0
    %510 = vmatpush.msra.mxu0 %v377
    %511 = vmatpush.msra.mxu0 %v376
    %512 = vmatpush.msra.mxu0 %v375
    %513 = vmatpush.msra.mxu0 %v374
    %514 = vmatpush.msra.mxu0 %v373
    %515 = vmatpush.msra.mxu0 %v372
    %516 = vmatpush.msra.mxu0 %v371
    %517 = vmatpush.msra.mxu0 %v370
    %518 = vmatpush.msra.mxu0 %v369
    %519 = vmatpush.msra.mxu0 %v368
    %520 = vmatpush.msra.mxu0 %v367
    %521 = vmatpush.msra.mxu0 %v366
    %522 = vmatpush.msra.mxu0 %v365
    %523 = vmatpush.msra.mxu0 %v364
    %524 = vmatpush.msra.mxu0 %v363
    %525 = vmatpush.msra.mxu0 %v362
    %526 = vmatmul.f32.gmra.mxu0 %v120
    %v527 = vpop.f32.mrf.mxu0
    %v528 = vadd.f32 %v508, %v527
    %529 = vmatmul.f32.gmra.mxu0 %v122
    %v530 = vpop.f32.mrf.mxu0
    %v531 = vadd.f32 %v508, %v530
    %532 = vmatmul.f32.gmra.mxu0 %v124
    %v533 = vpop.f32.mrf.mxu0
    %v534 = vadd.f32 %v508, %v533
    %535 = vmatmul.f32.gmra.mxu0 %v126
    %v536 = vpop.f32.mrf.mxu0
    %v537 = vadd.f32 %v508, %v536
    %538 = vmatmul.f32.gmra.mxu0 %v128
    %v539 = vpop.f32.mrf.mxu0
    %v540 = vadd.f32 %v508, %v539
    %541 = vmatmul.f32.gmra.mxu0 %v130
    %v542 = vpop.f32.mrf.mxu0
    %v543 = vadd.f32 %v508, %v542
    %544 = vmatmul.f32.gmra.mxu0 %v132
    %v545 = vpop.f32.mrf.mxu0
    %v546 = vadd.f32 %v508, %v545
    %547 = vmatmul.f32.gmra.mxu0 %v134
    %v548 = vpop.f32.mrf.mxu0
    %v549 = vadd.f32 %v508, %v548
    %550 = vmatmul.f32.gmra.mxu0 %v140
    %v551 = vpop.f32.mrf.mxu0
    %v552 = vadd.f32 %v508, %v551
    %553 = vmatmul.f32.gmra.mxu0 %v142
    %v554 = vpop.f32.mrf.mxu0
    %v555 = vadd.f32 %v508, %v554
    %556 = vmatmul.f32.gmra.mxu0 %v144
    %v557 = vpop.f32.mrf.mxu0
    %v558 = vadd.f32 %v508, %v557
    %559 = vmatmul.f32.gmra.mxu0 %v146
    %v560 = vpop.f32.mrf.mxu0
    %v561 = vadd.f32 %v508, %v560
    %562 = vmatmul.f32.gmra.mxu0 %v148
    %v563 = vpop.f32.mrf.mxu0
    %v564 = vadd.f32 %v508, %v563
    %565 = vmatmul.f32.gmra.mxu0 %v150
    %v566 = vpop.f32.mrf.mxu0
    %v567 = vadd.f32 %v508, %v566
    %568 = vmatmul.f32.gmra.mxu0 %v152
    %v569 = vpop.f32.mrf.mxu0
    %v570 = vadd.f32 %v508, %v569
    %571 = vmatmul.f32.gmra.mxu0 %v154
    %v572 = vpop.f32.mrf.mxu0
    %v573 = vadd.f32 %v508, %v572
    %574 = vdwg.mxu0
    %575 = vmatpush.msra.mxu0 %v393
    %576 = vmatpush.msra.mxu0 %v392
    %577 = vmatpush.msra.mxu0 %v391
    %578 = vmatpush.msra.mxu0 %v390
    %579 = vmatpush.msra.mxu0 %v389
    %580 = vmatpush.msra.mxu0 %v388
    %581 = vmatpush.msra.mxu0 %v387
    %582 = vmatpush.msra.mxu0 %v386
    %583 = vmatpush.msra.mxu0 %v385
    %584 = vmatpush.msra.mxu0 %v384
    %585 = vmatpush.msra.mxu0 %v383
    %586 = vmatpush.msra.mxu0 %v382
    %587 = vmatpush.msra.mxu0 %v381
    %588 = vmatpush.msra.mxu0 %v380
    %589 = vmatpush.msra.mxu0 %v379
    %590 = vmatpush.msra.mxu0 %v378
    %591 = vmatmul.f32.gmra.mxu0 %v122
    %v592 = vpop.f32.mrf.mxu0
    %v593 = vadd.f32 %v528, %v592
    %594 = vmatmul.f32.gmra.mxu0 %v124
    %v595 = vpop.f32.mrf.mxu0
    %v596 = vadd.f32 %v531, %v595
    %597 = vmatmul.f32.gmra.mxu0 %v126
    %v598 = vpop.f32.mrf.mxu0
    %v599 = vadd.f32 %v534, %v598
    %600 = vmatmul.f32.gmra.mxu0 %v128
    %v601 = vpop.f32.mrf.mxu0
    %v602 = vadd.f32 %v537, %v601
    %603 = vmatmul.f32.gmra.mxu0 %v130
    %v604 = vpop.f32.mrf.mxu0
    %v605 = vadd.f32 %v540, %v604
    %606 = vmatmul.f32.gmra.mxu0 %v132
    %v607 = vpop.f32.mrf.mxu0
    %v608 = vadd.f32 %v543, %v607
    %609 = vmatmul.f32.gmra.mxu0 %v134
    %v610 = vpop.f32.mrf.mxu0
    %v611 = vadd.f32 %v546, %v610
    %612 = vmatmul.f32.gmra.mxu0 %v136
    %v613 = vpop.f32.mrf.mxu0
    %v614 = vadd.f32 %v549, %v613
    %615 = vmatmul.f32.gmra.mxu0 %v142
    %v616 = vpop.f32.mrf.mxu0
    %v617 = vadd.f32 %v552, %v616
    %618 = vmatmul.f32.gmra.mxu0 %v144
    %v619 = vpop.f32.mrf.mxu0
    %v620 = vadd.f32 %v555, %v619
    %621 = vmatmul.f32.gmra.mxu0 %v146
    %v622 = vpop.f32.mrf.mxu0
    %v623 = vadd.f32 %v558, %v622
    %624 = vmatmul.f32.gmra.mxu0 %v148
    %v625 = vpop.f32.mrf.mxu0
    %v626 = vadd.f32 %v561, %v625
    %627 = vmatmul.f32.gmra.mxu0 %v150
    %v628 = vpop.f32.mrf.mxu0
    %v629 = vadd.f32 %v564, %v628
    %630 = vmatmul.f32.gmra.mxu0 %v152
    %v631 = vpop.f32.mrf.mxu0
    %v632 = vadd.f32 %v567, %v631
    %633 = vmatmul.f32.gmra.mxu0 %v154
    %v634 = vpop.f32.mrf.mxu0
    %v635 = vadd.f32 %v570, %v634
    %636 = vmatmul.f32.gmra.mxu0 %v156
    %v637 = vpop.f32.mrf.mxu0
    %v638 = vadd.f32 %v573, %v637
    %639 = vdwg.mxu0
    %640 = vmatpush.msra.mxu0 %v409
    %641 = vmatpush.msra.mxu0 %v408
    %642 = vmatpush.msra.mxu0 %v407
    %643 = vmatpush.msra.mxu0 %v406
    %644 = vmatpush.msra.mxu0 %v405
    %645 = vmatpush.msra.mxu0 %v404
    %646 = vmatpush.msra.mxu0 %v403
    %647 = vmatpush.msra.mxu0 %v402
    %648 = vmatpush.msra.mxu0 %v401
    %649 = vmatpush.msra.mxu0 %v400
    %650 = vmatpush.msra.mxu0 %v399
    %651 = vmatpush.msra.mxu0 %v398
    %652 = vmatpush.msra.mxu0 %v397
    %653 = vmatpush.msra.mxu0 %v396
    %654 = vmatpush.msra.mxu0 %v395
    %655 = vmatpush.msra.mxu0 %v394
    %656 = vmatmul.f32.gmra.mxu0 %v124
    %v657 = vpop.f32.mrf.mxu0
    %v658 = vadd.f32 %v593, %v657
    %659 = vmatmul.f32.gmra.mxu0 %v126
    %v660 = vpop.f32.mrf.mxu0
    %v661 = vadd.f32 %v596, %v660
    %662 = vmatmul.f32.gmra.mxu0 %v128
    %v663 = vpop.f32.mrf.mxu0
    %v664 = vadd.f32 %v599, %v663
    %665 = vmatmul.f32.gmra.mxu0 %v130
    %v666 = vpop.f32.mrf.mxu0
    %v667 = vadd.f32 %v602, %v666
    %668 = vmatmul.f32.gmra.mxu0 %v132
    %v669 = vpop.f32.mrf.mxu0
    %v670 = vadd.f32 %v605, %v669
    %671 = vmatmul.f32.gmra.mxu0 %v134
    %v672 = vpop.f32.mrf.mxu0
    %v673 = vadd.f32 %v608, %v672
    %674 = vmatmul.f32.gmra.mxu0 %v136
    %v675 = vpop.f32.mrf.mxu0
    %v676 = vadd.f32 %v611, %v675
    %677 = vmatmul.f32.gmra.mxu0 %v138
    %v678 = vpop.f32.mrf.mxu0
    %v679 = vadd.f32 %v614, %v678
    %680 = vmatmul.f32.gmra.mxu0 %v144
    %v681 = vpop.f32.mrf.mxu0
    %v682 = vadd.f32 %v617, %v681
    %683 = vmatmul.f32.gmra.mxu0 %v146
    %v684 = vpop.f32.mrf.mxu0
    %v685 = vadd.f32 %v620, %v684
    %686 = vmatmul.f32.gmra.mxu0 %v148
    %v687 = vpop.f32.mrf.mxu0
    %v688 = vadd.f32 %v623, %v687
    %689 = vmatmul.f32.gmra.mxu0 %v150
    %v690 = vpop.f32.mrf.mxu0
    %v691 = vadd.f32 %v626, %v690
    %692 = vmatmul.f32.gmra.mxu0 %v152
    %v693 = vpop.f32.mrf.mxu0
    %v694 = vadd.f32 %v629, %v693
    %695 = vmatmul.f32.gmra.mxu0 %v154
    %v696 = vpop.f32.mrf.mxu0
    %v697 = vadd.f32 %v632, %v696
    %698 = vmatmul.f32.gmra.mxu0 %v156
    %v699 = vpop.f32.mrf.mxu0
    %v700 = vadd.f32 %v635, %v699
    %701 = vmatmul.f32.gmra.mxu0 %v158
    %v702 = vpop.f32.mrf.mxu0
    %v703 = vadd.f32 %v638, %v702
    %704 = vdwg.mxu0
    %705 = vmatpush.msra.mxu0 %v425
    %706 = vmatpush.msra.mxu0 %v424
    %707 = vmatpush.msra.mxu0 %v423
    %708 = vmatpush.msra.mxu0 %v422
    %709 = vmatpush.msra.mxu0 %v421
    %710 = vmatpush.msra.mxu0 %v420
    %711 = vmatpush.msra.mxu0 %v419
    %712 = vmatpush.msra.mxu0 %v418
    %713 = vmatpush.msra.mxu0 %v417
    %714 = vmatpush.msra.mxu0 %v416
    %715 = vmatpush.msra.mxu0 %v415
    %716 = vmatpush.msra.mxu0 %v414
    %717 = vmatpush.msra.mxu0 %v413
    %718 = vmatpush.msra.mxu0 %v412
    %719 = vmatpush.msra.mxu0 %v411
    %720 = vmatpush.msra.mxu0 %v410
    %721 = vmatmul.f32.gmra.mxu0 %v195
    %v722 = vpop.f32.mrf.mxu0
    %v723 = vadd.f32 %v658, %v722
    %724 = vmatmul.f32.gmra.mxu0 %v198
    %v725 = vpop.f32.mrf.mxu0
    %v726 = vadd.f32 %v661, %v725
    %727 = vmatmul.f32.gmra.mxu0 %v201
    %v728 = vpop.f32.mrf.mxu0
    %v729 = vadd.f32 %v664, %v728
    %730 = vmatmul.f32.gmra.mxu0 %v204
    %v731 = vpop.f32.mrf.mxu0
    %v732 = vadd.f32 %v667, %v731
    %733 = vmatmul.f32.gmra.mxu0 %v207
    %v734 = vpop.f32.mrf.mxu0
    %v735 = vadd.f32 %v670, %v734
    %736 = vmatmul.f32.gmra.mxu0 %v210
    %v737 = vpop.f32.mrf.mxu0
    %v738 = vadd.f32 %v673, %v737
    %739 = vmatmul.f32.gmra.mxu0 %v213
    %v740 = vpop.f32.mrf.mxu0
    %v741 = vadd.f32 %v676, %v740
    %742 = vmatmul.f32.gmra.mxu0 %v216
    %v743 = vpop.f32.mrf.mxu0
    %v744 = vadd.f32 %v679, %v743
    %745 = vmatmul.f32.gmra.mxu0 %v219
    %v746 = vpop.f32.mrf.mxu0
    %v747 = vadd.f32 %v682, %v746
    %748 = vmatmul.f32.gmra.mxu0 %v222
    %v749 = vpop.f32.mrf.mxu0
    %v750 = vadd.f32 %v685, %v749
    %751 = vmatmul.f32.gmra.mxu0 %v225
    %v752 = vpop.f32.mrf.mxu0
    %v753 = vadd.f32 %v688, %v752
    %754 = vmatmul.f32.gmra.mxu0 %v228
    %v755 = vpop.f32.mrf.mxu0
    %v756 = vadd.f32 %v691, %v755
    %757 = vmatmul.f32.gmra.mxu0 %v231
    %v758 = vpop.f32.mrf.mxu0
    %v759 = vadd.f32 %v694, %v758
    %760 = vmatmul.f32.gmra.mxu0 %v234
    %v761 = vpop.f32.mrf.mxu0
    %v762 = vadd.f32 %v697, %v761
    %763 = vmatmul.f32.gmra.mxu0 %v237
    %v764 = vpop.f32.mrf.mxu0
    %v765 = vadd.f32 %v700, %v764
    %766 = vmatmul.f32.gmra.mxu0 %v240
    %v767 = vpop.f32.mrf.mxu0
    %v768 = vadd.f32 %v703, %v767
    %769 = vdwg.mxu0
    %770 = vmatpush.msra.mxu0 %v441
    %771 = vmatpush.msra.mxu0 %v440
    %772 = vmatpush.msra.mxu0 %v439
    %773 = vmatpush.msra.mxu0 %v438
    %774 = vmatpush.msra.mxu0 %v437
    %775 = vmatpush.msra.mxu0 %v436
    %776 = vmatpush.msra.mxu0 %v435
    %777 = vmatpush.msra.mxu0 %v434
    %778 = vmatpush.msra.mxu0 %v433
    %779 = vmatpush.msra.mxu0 %v432
    %780 = vmatpush.msra.mxu0 %v431
    %781 = vmatpush.msra.mxu0 %v430
    %782 = vmatpush.msra.mxu0 %v429
    %783 = vmatpush.msra.mxu0 %v428
    %784 = vmatpush.msra.mxu0 %v427
    %785 = vmatpush.msra.mxu0 %v426
    %786 = vmatmul.f32.gmra.mxu0 %v198
    %v787 = vpop.f32.mrf.mxu0
    %v788 = vadd.f32 %v723, %v787
    %789 = vmatmul.f32.gmra.mxu0 %v201
    %v790 = vpop.f32.mrf.mxu0
    %v791 = vadd.f32 %v726, %v790
    %792 = vmatmul.f32.gmra.mxu0 %v204
    %v793 = vpop.f32.mrf.mxu0
    %v794 = vadd.f32 %v729, %v793
    %795 = vmatmul.f32.gmra.mxu0 %v207
    %v796 = vpop.f32.mrf.mxu0
    %v797 = vadd.f32 %v732, %v796
    %798 = vmatmul.f32.gmra.mxu0 %v210
    %v799 = vpop.f32.mrf.mxu0
    %v800 = vadd.f32 %v735, %v799
    %801 = vmatmul.f32.gmra.mxu0 %v213
    %v802 = vpop.f32.mrf.mxu0
    %v803 = vadd.f32 %v738, %v802
    %804 = vmatmul.f32.gmra.mxu0 %v216
    %v805 = vpop.f32.mrf.mxu0
    %v806 = vadd.f32 %v741, %v805
    %807 = vmatmul.f32.gmra.mxu0 %v263
    %v808 = vpop.f32.mrf.mxu0
    %v809 = vadd.f32 %v744, %v808
    %810 = vmatmul.f32.gmra.mxu0 %v222
    %v811 = vpop.f32.mrf.mxu0
    %v812 = vadd.f32 %v747, %v811
    %813 = vmatmul.f32.gmra.mxu0 %v225
    %v814 = vpop.f32.mrf.mxu0
    %v815 = vadd.f32 %v750, %v814
    %816 = vmatmul.f32.gmra.mxu0 %v228
    %v817 = vpop.f32.mrf.mxu0
    %v818 = vadd.f32 %v753, %v817
    %819 = vmatmul.f32.gmra.mxu0 %v231
    %v820 = vpop.f32.mrf.mxu0
    %v821 = vadd.f32 %v756, %v820
    %822 = vmatmul.f32.gmra.mxu0 %v234
    %v823 = vpop.f32.mrf.mxu0
    %v824 = vadd.f32 %v759, %v823
    %825 = vmatmul.f32.gmra.mxu0 %v237
    %v826 = vpop.f32.mrf.mxu0
    %v827 = vadd.f32 %v762, %v826
    %828 = vmatmul.f32.gmra.mxu0 %v240
    %v829 = vpop.f32.mrf.mxu0
    %v830 = vadd.f32 %v765, %v829
    %831 = vmatmul.f32.gmra.mxu0 %v266
    %v832 = vpop.f32.mrf.mxu0
    %v833 = vadd.f32 %v768, %v832
    %834 = vdwg.mxu0
    %835 = vmatpush.msra.mxu0 %v457
    %836 = vmatpush.msra.mxu0 %v456
    %837 = vmatpush.msra.mxu0 %v455
    %838 = vmatpush.msra.mxu0 %v454
    %839 = vmatpush.msra.mxu0 %v453
    %840 = vmatpush.msra.mxu0 %v452
    %841 = vmatpush.msra.mxu0 %v451
    %842 = vmatpush.msra.mxu0 %v450
    %843 = vmatpush.msra.mxu0 %v449
    %844 = vmatpush.msra.mxu0 %v448
    %845 = vmatpush.msra.mxu0 %v447
    %846 = vmatpush.msra.mxu0 %v446
    %847 = vmatpush.msra.mxu0 %v445
    %848 = vmatpush.msra.mxu0 %v444
    %849 = vmatpush.msra.mxu0 %v443
    %850 = vmatpush.msra.mxu0 %v442
    %851 = vmatmul.f32.gmra.mxu0 %v201
    %v852 = vpop.f32.mrf.mxu0
    %v853 = vadd.f32 %v788, %v852
    %854 = vmatmul.f32.gmra.mxu0 %v204
    %v855 = vpop.f32.mrf.mxu0
    %v856 = vadd.f32 %v791, %v855
    %857 = vmatmul.f32.gmra.mxu0 %v207
    %v858 = vpop.f32.mrf.mxu0
    %v859 = vadd.f32 %v794, %v858
    %860 = vmatmul.f32.gmra.mxu0 %v210
    %v861 = vpop.f32.mrf.mxu0
    %v862 = vadd.f32 %v797, %v861
    %863 = vmatmul.f32.gmra.mxu0 %v213
    %v864 = vpop.f32.mrf.mxu0
    %v865 = vadd.f32 %v800, %v864
    %866 = vmatmul.f32.gmra.mxu0 %v216
    %v867 = vpop.f32.mrf.mxu0
    %v868 = vadd.f32 %v803, %v867
    %869 = vmatmul.f32.gmra.mxu0 %v263
    %v870 = vpop.f32.mrf.mxu0
    %v871 = vadd.f32 %v806, %v870
    %872 = vmatmul.f32.gmra.mxu0 %v275
    %v873 = vpop.f32.mrf.mxu0
    %v874 = vadd.f32 %v809, %v873
    %875 = vmatmul.f32.gmra.mxu0 %v225
    %v876 = vpop.f32.mrf.mxu0
    %v877 = vadd.f32 %v812, %v876
    %878 = vmatmul.f32.gmra.mxu0 %v228
    %v879 = vpop.f32.mrf.mxu0
    %v880 = vadd.f32 %v815, %v879
    %881 = vmatmul.f32.gmra.mxu0 %v231
    %v882 = vpop.f32.mrf.mxu0
    %v883 = vadd.f32 %v818, %v882
    %884 = vmatmul.f32.gmra.mxu0 %v234
    %v885 = vpop.f32.mrf.mxu0
    %v886 = vadd.f32 %v821, %v885
    %887 = vmatmul.f32.gmra.mxu0 %v237
    %v888 = vpop.f32.mrf.mxu0
    %v889 = vadd.f32 %v824, %v888
    %890 = vmatmul.f32.gmra.mxu0 %v240
    %v891 = vpop.f32.mrf.mxu0
    %v892 = vadd.f32 %v827, %v891
    %893 = vmatmul.f32.gmra.mxu0 %v266
    %v894 = vpop.f32.mrf.mxu0
    %v895 = vadd.f32 %v830, %v894
    %896 = vmatmul.f32.gmra.mxu0 %v278
    %v897 = vpop.f32.mrf.mxu0
    %v898 = vadd.f32 %v833, %v897
    %899 = vdwg.mxu0
    %900 = vmatpush.msra.mxu0 %v473
    %901 = vmatpush.msra.mxu0 %v472
    %902 = vmatpush.msra.mxu0 %v471
    %903 = vmatpush.msra.mxu0 %v470
    %904 = vmatpush.msra.mxu0 %v469
    %905 = vmatpush.msra.mxu0 %v468
    %906 = vmatpush.msra.mxu0 %v467
    %907 = vmatpush.msra.mxu0 %v466
    %908 = vmatpush.msra.mxu0 %v465
    %909 = vmatpush.msra.mxu0 %v464
    %910 = vmatpush.msra.mxu0 %v463
    %911 = vmatpush.msra.mxu0 %v462
    %912 = vmatpush.msra.mxu0 %v461
    %913 = vmatpush.msra.mxu0 %v460
    %914 = vmatpush.msra.mxu0 %v459
    %915 = vmatpush.msra.mxu0 %v458
    %916 = vmatmul.f32.gmra.mxu0 %v284
    %v917 = vpop.f32.mrf.mxu0
    %v918 = vadd.f32 %v853, %v917
    %919 = vmatmul.f32.gmra.mxu0 %v287
    %v920 = vpop.f32.mrf.mxu0
    %v921 = vadd.f32 %v856, %v920
    %922 = vmatmul.f32.gmra.mxu0 %v290
    %v923 = vpop.f32.mrf.mxu0
    %v924 = vadd.f32 %v859, %v923
    %925 = vmatmul.f32.gmra.mxu0 %v293
    %v926 = vpop.f32.mrf.mxu0
    %v927 = vadd.f32 %v862, %v926
    %928 = vmatmul.f32.gmra.mxu0 %v296
    %v929 = vpop.f32.mrf.mxu0
    %v930 = vadd.f32 %v865, %v929
    %931 = vmatmul.f32.gmra.mxu0 %v299
    %v932 = vpop.f32.mrf.mxu0
    %v933 = vadd.f32 %v868, %v932
    %934 = vmatmul.f32.gmra.mxu0 %v302
    %v935 = vpop.f32.mrf.mxu0
    %v936 = vadd.f32 %v871, %v935
    %937 = vmatmul.f32.gmra.mxu0 %v305
    %v938 = vpop.f32.mrf.mxu0
    %v939 = vadd.f32 %v874, %v938
    %940 = vmatmul.f32.gmra.mxu0 %v308
    %v941 = vpop.f32.mrf.mxu0
    %v942 = vadd.f32 %v877, %v941
    %943 = vmatmul.f32.gmra.mxu0 %v311
    %v944 = vpop.f32.mrf.mxu0
    %v945 = vadd.f32 %v880, %v944
    %946 = vmatmul.f32.gmra.mxu0 %v314
    %v947 = vpop.f32.mrf.mxu0
    %v948 = vadd.f32 %v883, %v947
    %949 = vmatmul.f32.gmra.mxu0 %v317
    %v950 = vpop.f32.mrf.mxu0
    %v951 = vadd.f32 %v886, %v950
    %952 = vmatmul.f32.gmra.mxu0 %v320
    %v953 = vpop.f32.mrf.mxu0
    %v954 = vadd.f32 %v889, %v953
    %955 = vmatmul.f32.gmra.mxu0 %v323
    %v956 = vpop.f32.mrf.mxu0
    %v957 = vadd.f32 %v892, %v956
    %958 = vmatmul.f32.gmra.mxu0 %v326
    %v959 = vpop.f32.mrf.mxu0
    %v960 = vadd.f32 %v895, %v959
    %961 = vmatmul.f32.gmra.mxu0 %v329
    %v962 = vpop.f32.mrf.mxu0
    %v963 = vadd.f32 %v898, %v962
    %964 = vdwg.mxu0
    %965 = vmatpush.msra.mxu0 %v489
    %966 = vmatpush.msra.mxu0 %v488
    %967 = vmatpush.msra.mxu0 %v487
    %968 = vmatpush.msra.mxu0 %v486
    %969 = vmatpush.msra.mxu0 %v485
    %970 = vmatpush.msra.mxu0 %v484
    %971 = vmatpush.msra.mxu0 %v483
    %972 = vmatpush.msra.mxu0 %v482
    %973 = vmatpush.msra.mxu0 %v481
    %974 = vmatpush.msra.mxu0 %v480
    %975 = vmatpush.msra.mxu0 %v479
    %976 = vmatpush.msra.mxu0 %v478
    %977 = vmatpush.msra.mxu0 %v477
    %978 = vmatpush.msra.mxu0 %v476
    %979 = vmatpush.msra.mxu0 %v475
    %980 = vmatpush.msra.mxu0 %v474
    %981 = vmatmul.f32.gmra.mxu0 %v287
    %v982 = vpop.f32.mrf.mxu0
    %v983 = vadd.f32 %v918, %v982
    %984 = vmatmul.f32.gmra.mxu0 %v290
    %v985 = vpop.f32.mrf.mxu0
    %v986 = vadd.f32 %v921, %v985
    %987 = vmatmul.f32.gmra.mxu0 %v293
    %v988 = vpop.f32.mrf.mxu0
    %v989 = vadd.f32 %v924, %v988
    %990 = vmatmul.f32.gmra.mxu0 %v296
    %v991 = vpop.f32.mrf.mxu0
    %v992 = vadd.f32 %v927, %v991
    %993 = vmatmul.f32.gmra.mxu0 %v299
    %v994 = vpop.f32.mrf.mxu0
    %v995 = vadd.f32 %v930, %v994
    %996 = vmatmul.f32.gmra.mxu0 %v302
    %v997 = vpop.f32.mrf.mxu0
    %v998 = vadd.f32 %v933, %v997
    %999 = vmatmul.f32.gmra.mxu0 %v305
    %v1000 = vpop.f32.mrf.mxu0
    %v1001 = vadd.f32 %v936, %v1000
    %1002 = vmatmul.f32.gmra.mxu0 %v348
    %v1003 = vpop.f32.mrf.mxu0
    %v1004 = vadd.f32 %v939, %v1003
    %1005 = vmatmul.f32.gmra.mxu0 %v311
    %v1006 = vpop.f32.mrf.mxu0
    %v1007 = vadd.f32 %v942, %v1006
    %1008 = vmatmul.f32.gmra.mxu0 %v314
    %v1009 = vpop.f32.mrf.mxu0
    %v1010 = vadd.f32 %v945, %v1009
    %1011 = vmatmul.f32.gmra.mxu0 %v317
    %v1012 = vpop.f32.mrf.mxu0
    %v1013 = vadd.f32 %v948, %v1012
    %1014 = vmatmul.f32.gmra.mxu0 %v320
    %v1015 = vpop.f32.mrf.mxu0
    %v1016 = vadd.f32 %v951, %v1015
    %1017 = vmatmul.f32.gmra.mxu0 %v323
    %v1018 = vpop.f32.mrf.mxu0
    %v1019 = vadd.f32 %v954, %v1018
    %1020 = vmatmul.f32.gmra.mxu0 %v326
    %v1021 = vpop.f32.mrf.mxu0
    %v1022 = vadd.f32 %v957, %v1021
    %1023 = vmatmul.f32.gmra.mxu0 %v329
    %v1024 = vpop.f32.mrf.mxu0
    %v1025 = vadd.f32 %v960, %v1024
    %1026 = vmatmul.f32.gmra.mxu0 %v351
    %v1027 = vpop.f32.mrf.mxu0
    %v1028 = vadd.f32 %v963, %v1027
    %1029 = vdwg.mxu0
    %1030 = vmatpush.msra.mxu0 %v505
    %1031 = vmatpush.msra.mxu0 %v504
    %1032 = vmatpush.msra.mxu0 %v503
    %1033 = vmatpush.msra.mxu0 %v502
    %1034 = vmatpush.msra.mxu0 %v501
    %1035 = vmatpush.msra.mxu0 %v500
    %1036 = vmatpush.msra.mxu0 %v499
    %1037 = vmatpush.msra.mxu0 %v498
    %1038 = vmatpush.msra.mxu0 %v497
    %1039 = vmatpush.msra.mxu0 %v496
    %1040 = vmatpush.msra.mxu0 %v495
    %1041 = vmatpush.msra.mxu0 %v494
    %1042 = vmatpush.msra.mxu0 %v493
    %1043 = vmatpush.msra.mxu0 %v492
    %1044 = vmatpush.msra.mxu0 %v491
    %1045 = vmatpush.msra.mxu0 %v490
    %1046 = vmatmul.f32.gmra.mxu0 %v290
    %v1047 = vpop.f32.mrf.mxu0
    %v1048 = vadd.f32 %v983, %v1047
    %1049 = vmatmul.f32.gmra.mxu0 %v293
    %v1050 = vpop.f32.mrf.mxu0
    %v1051 = vadd.f32 %v986, %v1050
    %1052 = vmatmul.f32.gmra.mxu0 %v296
    %v1053 = vpop.f32.mrf.mxu0
    %v1054 = vadd.f32 %v989, %v1053
    %1055 = vmatmul.f32.gmra.mxu0 %v299
    %v1056 = vpop.f32.mrf.mxu0
    %v1057 = vadd.f32 %v992, %v1056
    %1058 = vmatmul.f32.gmra.mxu0 %v302
    %v1059 = vpop.f32.mrf.mxu0
    %v1060 = vadd.f32 %v995, %v1059
    %1061 = vmatmul.f32.gmra.mxu0 %v305
    %v1062 = vpop.f32.mrf.mxu0
    %v1063 = vadd.f32 %v998, %v1062
    %1064 = vmatmul.f32.gmra.mxu0 %v348
    %v1065 = vpop.f32.mrf.mxu0
    %v1066 = vadd.f32 %v1001, %v1065
    %1067 = vmatmul.f32.gmra.mxu0 %v356
    %v1068 = vpop.f32.mrf.mxu0
    %v1069 = vadd.f32 %v1004, %v1068
    %1070 = vmatmul.f32.gmra.mxu0 %v314
    %v1071 = vpop.f32.mrf.mxu0
    %v1072 = vadd.f32 %v1007, %v1071
    %1073 = vmatmul.f32.gmra.mxu0 %v317
    %v1074 = vpop.f32.mrf.mxu0
    %v1075 = vadd.f32 %v1010, %v1074
    %1076 = vmatmul.f32.gmra.mxu0 %v320
    %v1077 = vpop.f32.mrf.mxu0
    %v1078 = vadd.f32 %v1013, %v1077
    %1079 = vmatmul.f32.gmra.mxu0 %v323
    %v1080 = vpop.f32.mrf.mxu0
    %v1081 = vadd.f32 %v1016, %v1080
    %1082 = vmatmul.f32.gmra.mxu0 %v326
    %v1083 = vpop.f32.mrf.mxu0
    %v1084 = vadd.f32 %v1019, %v1083
    %1085 = vmatmul.f32.gmra.mxu0 %v329
    %v1086 = vpop.f32.mrf.mxu0
    %v1087 = vadd.f32 %v1022, %v1086
    %1088 = vmatmul.f32.gmra.mxu0 %v351
    %v1089 = vpop.f32.mrf.mxu0
    %v1090 = vadd.f32 %v1025, %v1089
    %1091 = vmatmul.f32.gmra.mxu0 %v359
    %v1092 = vpop.f32.mrf.mxu0
    %v1093 = vadd.f32 %v1028, %v1092
    %1094 = vdwg.mxu0
    %1095 = vst [vmem:[%s3] sm:$0xff] %v1048
    %1096 = vst [vmem:[%s3 + $0x8] sm:$0xff] %v1051
    %1097 = vst [vmem:[%s3 + $0x10] sm:$0xff] %v1054
    %1098 = vst [vmem:[%s3 + $0x18] sm:$0xff] %v1057
    %1099 = vst [vmem:[%s3 + $0x20] sm:$0xff] %v1060
    %1100 = vst [vmem:[%s3 + $0x28] sm:$0xff] %v1063
    %1101 = vst [vmem:[%s3 + $0x30] sm:$0xff] %v1066
    %1102 = vst [vmem:[%s3 + $0x38] sm:$0xff] %v1069
    %1103 = vst [vmem:[%s3 + $0x40] sm:$0xff] %v1072
    %1104 = vst [vmem:[%s3 + $0x48] sm:$0xff] %v1075
    %1105 = vst [vmem:[%s3 + $0x50] sm:$0xff] %v1078
    %1106 = vst [vmem:[%s3 + $0x58] sm:$0xff] %v1081
    %1107 = vst [vmem:[%s3 + $0x60] sm:$0xff] %v1084
    %1108 = vst [vmem:[%s3 + $0x68] sm:$0xff] %v1087
    %1109 = vst [vmem:[%s3 + $0x70] sm:$0xff] %v1090
    %1110 = vst [vmem:[%s3 + $0x78] sm:$0xff] %v1093
    // Predicated region
    $region22: #{_lambda_.2} parent=1 // pred_check
      _
    $region23: #{_lambda_.2} parent=1 // pred_check_branch
      %1112 = sbr.rel (0) target = $region25
    $region24: #{_lambda_.2} parent=1 // pred_region
      _
    $region25: #{_lambda_.2} parent=1 // pred_fallthru
      _
    // Predicated region
    $region26: #{_lambda_.2} parent=1 // pred_check
      _
    $region27: #{_lambda_.2} parent=1 // pred_check_branch
      %1114 = sbr.rel (0) target = $region29
    $region28: #{_lambda_.2} parent=1 // pred_region
      _
    $region29: #{_lambda_.2} parent=1 // pred_fallthru
      _
    %1115 = vsyncpa [#allocation4], 1
    %1116 = vsyncpa [#allocation6], 1

// kernel: _lambda_.3
$region0: #{_lambda_.3}
  #allocation0 [shape = 'u32[]', space=smem, size = 0x4, offset = 0x4, fixed_abs, tag = 'smem constant byte address 0x4 - core index']
  #allocation1 [shape = 'u32[72,128]{1,0:T(1,128)}', space=vmem, size = 0x9000, scoped, tag = 'internal scratch']
  #allocation2 [shape = 'f32[2,14,14,128]{3,2,1,0:T(8,128)}', space=vmem, size = 0x38000, scoped, tag = 'scratch operand']
  %s0 = inlined_call_operand.vmem [shape: f32[2,8,8,128], index: 0, kind: input, shape index: {}]
  %s1 = inlined_call_operand.vmem [shape: f32[49,128], index: 1, kind: input, shape index: {}]
  %s2 = inlined_call_operand.vmem [shape: f32[1,128], index: 2, kind: input, shape index: {}]
  %s3 = inlined_call_operand.vmem [shape: f32[1,128], index: 3, kind: input, shape index: {}]
  %s4 = inlined_call_operand.vmem [shape: f32[1,128], index: 4, kind: input, shape index: {}]
  %s5 = inlined_call_operand.vmem [shape: f32[128,512], index: 5, kind: input, shape index: {}]
  %s6 = inlined_call_operand.vmem [shape: f32[1,512], index: 6, kind: input, shape index: {}]
  %s7 = inlined_call_operand.vmem [shape: f32[512,128], index: 7, kind: input, shape index: {}]
  %s8 = inlined_call_operand.vmem [shape: f32[1,128], index: 8, kind: input, shape index: {}]
  %s9 = inlined_call_operand.vmem [shape: f32[1,128], index: 9, kind: input, shape index: {}]
  %s10 = inlined_call_operand.hbm [shape: f32[2,8,8,128], index: 10, kind: output, shape index: {}]
  %s11 = sld [smem:[#allocation0]]
  $region50: #{_lambda_.3} parent=0
    _
  %s13 = ssub.s32 1, %s11
  %s14 = scalar_select 0, %s13, %s11
  $region1: #{_lambda_.3} parent=0
    #allocation3 [shape = 'u8[65536]{0}', space=vmem, size = 0x10000, scoped, tag = 'output window, operand 0, single buffered']
    #allocation4 [shape = 's32[1]{0}', space=sflag, size = 0x4, scoped, tag = 'scoped memory for _lambda_.3']
    %15 = vsyncpa [#allocation4], 0
    // Predicated region
    $region2: #{_lambda_.3} parent=1 // pred_check
      _
    $region3: #{_lambda_.3} parent=1 // pred_check_branch
      %17 = sbr.rel (0) target = $region5
    $region4: #{_lambda_.3} parent=1 // pred_region
      _
    $region5: #{_lambda_.3} parent=1 // pred_fallthru
      _
    // Predicated region
    $region6: #{_lambda_.3} parent=1 // pred_check
      _
    $region7: #{_lambda_.3} parent=1 // pred_check_branch
      %19 = sbr.rel (0) target = $region9
    $region8: #{_lambda_.3} parent=1 // pred_region
      _
    $region9: #{_lambda_.3} parent=1 // pred_fallthru
      _
    // Predicated region
    $region10: #{_lambda_.3} parent=1 // pred_check
      _
    $region11: #{_lambda_.3} parent=1 // pred_check_branch
      %21 = sbr.rel (0) target = $region13
    $region12: #{_lambda_.3} parent=1 // pred_region
      _
    $region13: #{_lambda_.3} parent=1 // pred_fallthru
      _
    // Predicated region
    $region14: #{_lambda_.3} parent=1 // pred_check
      _
    $region15: #{_lambda_.3} parent=1 // pred_check_branch
      %23 = sbr.rel (0) target = $region17
    $region16: #{_lambda_.3} parent=1 // pred_region
      _
    $region17: #{_lambda_.3} parent=1 // pred_fallthru
      _
    // Predicated region
    $region18: #{_lambda_.3} parent=1 // pred_check
      _
    $region19: #{_lambda_.3} parent=1 // pred_check_branch
      %25 = sbr.rel (0) target = $region21
    $region20: #{_lambda_.3} parent=1 // pred_region
      _
    $region21: #{_lambda_.3} parent=1 // pred_fallthru
      _
    // Predicated region
    $region22: #{_lambda_.3} parent=1 // pred_check
      _
    $region23: #{_lambda_.3} parent=1 // pred_check_branch
      %27 = sbr.rel (0) target = $region25
    $region24: #{_lambda_.3} parent=1 // pred_region
      _
    $region25: #{_lambda_.3} parent=1 // pred_fallthru
      _
    // Predicated region
    $region26: #{_lambda_.3} parent=1 // pred_check
      _
    $region27: #{_lambda_.3} parent=1 // pred_check_branch
      %29 = sbr.rel (0) target = $region29
    $region28: #{_lambda_.3} parent=1 // pred_region
      _
    $region29: #{_lambda_.3} parent=1 // pred_fallthru
      _
    // Predicated region
    $region30: #{_lambda_.3} parent=1 // pred_check
      _
    $region31: #{_lambda_.3} parent=1 // pred_check_branch
      %31 = sbr.rel (0) target = $region33
    $region32: #{_lambda_.3} parent=1 // pred_region
      _
    $region33: #{_lambda_.3} parent=1 // pred_fallthru
      _
    // Predicated region
    $region34: #{_lambda_.3} parent=1 // pred_check
      _
    $region35: #{_lambda_.3} parent=1 // pred_check_branch
      %33 = sbr.rel (0) target = $region37
    $region36: #{_lambda_.3} parent=1 // pred_region
      _
    $region37: #{_lambda_.3} parent=1 // pred_fallthru
      _
    // Predicated region
    $region38: #{_lambda_.3} parent=1 // pred_check
      _
    $region39: #{_lambda_.3} parent=1 // pred_check_branch
      %35 = sbr.rel (0) target = $region41
    $region40: #{_lambda_.3} parent=1 // pred_region
      _
    $region41: #{_lambda_.3} parent=1 // pred_fallthru
      _
    %v36 = vld [vmem:[%s0] sm:$0xff]
    %v37 = vld [vmem:[%s0 + $0x8] sm:$0xff]
    %v38 = vld [vmem:[%s0 + $0x10] sm:$0xff]
    %v39 = vld [vmem:[%s0 + $0x18] sm:$0xff]
    %v40 = vld [vmem:[%s0 + $0x20] sm:$0xff]
    %v41 = vld [vmem:[%s0 + $0x28] sm:$0xff]
    %v42 = vld [vmem:[%s0 + $0x30] sm:$0xff]
    %v43 = vld [vmem:[%s0 + $0x38] sm:$0xff]
    %v44 = vld [vmem:[%s0 + $0x40] sm:$0xff]
    %v45 = vld [vmem:[%s0 + $0x48] sm:$0xff]
    %v46 = vld [vmem:[%s0 + $0x50] sm:$0xff]
    %v47 = vld [vmem:[%s0 + $0x58] sm:$0xff]
    %v48 = vld [vmem:[%s0 + $0x60] sm:$0xff]
    %v49 = vld [vmem:[%s0 + $0x68] sm:$0xff]
    %v50 = vld [vmem:[%s0 + $0x70] sm:$0xff]
    %v51 = vld [vmem:[%s0 + $0x78] sm:$0xff]
    %52 = vst [vmem:[#allocation2] sm:$0xff] 0.0
    %53 = vst [vmem:[#allocation2 + $0x8] sm:$0x3f] 0.0
    %54 = vst [vmem:[#allocation2 + $0x10] sm:$0xff] 0.0
    %55 = vst [vmem:[#allocation2 + $0x18] sm:$0x3f] 0.0
    %56 = vst [vmem:[#allocation2 + $0x20] sm:$0xff] 0.0
    %57 = vst [vmem:[#allocation2 + $0x28] sm:$0x3f] 0.0
    %58 = vst [vmem:[#allocation2 + $0xe0] sm:$0xff] 0.0
    %59 = vst [vmem:[#allocation2 + $0xe8] sm:$0x3f] 0.0
    %60 = vst [vmem:[#allocation2 + $0xf0] sm:$0xff] 0.0
    %61 = vst [vmem:[#allocation2 + $0xf8] sm:$0x3f] 0.0
    %62 = vst [vmem:[#allocation2 + $0x100] sm:$0xff] 0.0
    %63 = vst [vmem:[#allocation2 + $0x108] sm:$0x3f] 0.0
    %s64 = scalar_lea.vmem [#allocation2], 176
    %65 = vst [vmem:[%s64] sm:$0xff] 0.0
    %66 = vst [vmem:[%s64 + $0x8] sm:$0x3f] 0.0
    %67 = vst [vmem:[%s64 + $0x10] sm:$0xff] 0.0
    %68 = vst [vmem:[%s64 + $0x18] sm:$0x3f] 0.0
    %69 = vst [vmem:[%s64 + $0x20] sm:$0xff] 0.0
    %70 = vst [vmem:[%s64 + $0x28] sm:$0x3f] 0.0
    %71 = vst [vmem:[%s64 + $0xe0] sm:$0xff] 0.0
    %72 = vst [vmem:[%s64 + $0xe8] sm:$0x3f] 0.0
    %73 = vst [vmem:[%s64 + $0xf0] sm:$0xff] 0.0
    %74 = vst [vmem:[%s64 + $0xf8] sm:$0x3f] 0.0
    %75 = vst [vmem:[%s64 + $0x100] sm:$0xff] 0.0
    %76 = vst [vmem:[%s64 + $0x108] sm:$0x3f] 0.0
    %s77 = scalar_lea.vmem [#allocation2], 48
    %78 = vst [vmem:[%s77] sm:$0x7] 0.0
    %79 = vst [vmem:[%s77 + $0x10] sm:$0x7] 0.0
    %80 = vst [vmem:[%s77 + $0x20] sm:$0x7] 0.0
    %81 = vst [vmem:[%s77 + $0x30] sm:$0x7] 0.0
    %82 = vst [vmem:[%s77 + $0x40] sm:$0x7] 0.0
    %83 = vst [vmem:[%s77 + $0x50] sm:$0x7] 0.0
    %84 = vst [vmem:[%s77 + $0x60] sm:$0x7] 0.0
    %85 = vst [vmem:[%s77 + $0x70] sm:$0x7] 0.0
    %86 = vst [vmem:[%s77 + $0xe0] sm:$0x7] 0.0
    %87 = vst [vmem:[%s77 + $0xf0] sm:$0x7] 0.0
    %88 = vst [vmem:[%s77 + $0x100] sm:$0x7] 0.0
    %89 = vst [vmem:[%s77 + $0x110] sm:$0x7] 0.0
    %90 = vst [vmem:[%s77 + $0x120] sm:$0x7] 0.0
    %91 = vst [vmem:[%s77 + $0x130] sm:$0x7] 0.0
    %92 = vst [vmem:[%s77 + $0x140] sm:$0x7] 0.0
    %93 = vst [vmem:[%s77 + $0x150] sm:$0x7] 0.0
    %94 = vst [vmem:[%s77 + $0xb] sm:$0x7] 0.0
    %95 = vst [vmem:[%s77 + $0x1b] sm:$0x7] 0.0
    %96 = vst [vmem:[%s77 + $0x2b] sm:$0x7] 0.0
    %97 = vst [vmem:[%s77 + $0x3b] sm:$0x7] 0.0
    %98 = vst [vmem:[%s77 + $0x4b] sm:$0x7] 0.0
    %99 = vst [vmem:[%s77 + $0x5b] sm:$0x7] 0.0
    %100 = vst [vmem:[%s77 + $0x6b] sm:$0x7] 0.0
    %101 = vst [vmem:[%s77 + $0x7b] sm:$0x7] 0.0
    %102 = vst [vmem:[%s77 + $0xeb] sm:$0x7] 0.0
    %103 = vst [vmem:[%s77 + $0xfb] sm:$0x7] 0.0
    %104 = vst [vmem:[%s77 + $0x10b] sm:$0x7] 0.0
    %105 = vst [vmem:[%s77 + $0x11b] sm:$0x7] 0.0
    %106 = vst [vmem:[%s77 + $0x12b] sm:$0x7] 0.0
    %107 = vst [vmem:[%s77 + $0x13b] sm:$0x7] 0.0
    %108 = vst [vmem:[%s77 + $0x14b] sm:$0x7] 0.0
    %109 = vst [vmem:[%s77 + $0x15b] sm:$0x7] 0.0
    %110 = vst [vmem:[%s77 + $0x3] sm:$0xff] %v36
    %111 = vst [vmem:[%s77 + $0x13] sm:$0xff] %v37
    %112 = vst [vmem:[%s77 + $0x23] sm:$0xff] %v38
    %113 = vst [vmem:[%s77 + $0x33] sm:$0xff] %v39
    %114 = vst [vmem:[%s77 + $0x43] sm:$0xff] %v40
    %115 = vst [vmem:[%s77 + $0x53] sm:$0xff] %v41
    %116 = vst [vmem:[%s77 + $0x63] sm:$0xff] %v42
    %117 = vst [vmem:[%s77 + $0x73] sm:$0xff] %v43
    %118 = vst [vmem:[%s77 + $0xe3] sm:$0xff] %v44
    %119 = vst [vmem:[%s77 + $0xf3] sm:$0xff] %v45
    %120 = vst [vmem:[%s77 + $0x103] sm:$0xff] %v46
    %121 = vst [vmem:[%s77 + $0x113] sm:$0xff] %v47
    %122 = vst [vmem:[%s77 + $0x123] sm:$0xff] %v48
    %123 = vst [vmem:[%s77 + $0x133] sm:$0xff] %v49
    %124 = vst [vmem:[%s77 + $0x143] sm:$0xff] %v50
    %125 = vst [vmem:[%s77 + $0x153] sm:$0xff] %v51
    %v126 = vld [vmem:[#allocation2] sm:$0xff]
    %v127 = vld [vmem:[#allocation2 + $0x8] sm:$0x3f]
    %v128 = vld [vmem:[#allocation2 + $0x10] sm:$0xff]
    %v129 = vld [vmem:[#allocation2 + $0x18] sm:$0x3f]
    %v130 = vld [vmem:[#allocation2 + $0x20] sm:$0xff]
    %v131 = vld [vmem:[#allocation2 + $0x28] sm:$0x3f]
    %v132 = vld [vmem:[#allocation2 + $0x30] sm:$0xff]
    %v133 = vld [vmem:[#allocation2 + $0x38] sm:$0x3f]
    %v134 = vld [vmem:[#allocation2 + $0x40] sm:$0xff]
    %v135 = vld [vmem:[#allocation2 + $0x48] sm:$0x3f]
    %v136 = vld [vmem:[#allocation2 + $0x50] sm:$0xff]
    %v137 = vld [vmem:[#allocation2 + $0x58] sm:$0x3f]
    %v138 = vld [vmem:[#allocation2 + $0x60] sm:$0xff]
    %v139 = vld [vmem:[#allocation2 + $0x68] sm:$0x3f]
    %v140 = vld [vmem:[#allocation2 + $0x70] sm:$0xff]
    %v141 = vld [vmem:[#allocation2 + $0x78] sm:$0x3f]
    %v142 = vld [vmem:[#allocation2 + $0x80] sm:$0xff]
    %v143 = vld [vmem:[#allocation2 + $0x88] sm:$0x3f]
    %v144 = vld [vmem:[#allocation2 + $0x90] sm:$0xff]
    %v145 = vld [vmem:[#allocation2 + $0x98] sm:$0x3f]
    %v146 = vld [vmem:[#allocation2 + $0xa0] sm:$0xff]
    %v147 = vld [vmem:[#allocation2 + $0xa8] sm:$0x3f]
    %v148 = vld [vmem:[#allocation2 + $0xb0] sm:$0xff]
    %v149 = vld [vmem:[#allocation2 + $0xb8] sm:$0x3f]
    %v150 = vld [vmem:[#allocation2 + $0xc0] sm:$0xff]
    %v151 = vld [vmem:[#allocation2 + $0xc8] sm:$0x3f]
    %v152 = vld [vmem:[#allocation2 + $0xd0] sm:$0xff]
    %v153 = vld [vmem:[#allocation2 + $0xd8] sm:$0x3f]
    %v154 = vld [vmem:[#allocation2 + $0xe0] sm:$0xff]
    %v155 = vld [vmem:[#allocation2 + $0xe8] sm:$0x3f]
    %v156 = vld [vmem:[#allocation2 + $0xf0] sm:$0xff]
    %v157 = vld [vmem:[#allocation2 + $0xf8] sm:$0x3f]
    %v158 = vld [vmem:[#allocation2 + $0x100] sm:$0xff]
    %v159 = vld [vmem:[#allocation2 + $0x108] sm:$0x3f]
    %v160 = vld [vmem:[#allocation2 + $0x110] sm:$0xff]
    %v161 = vld [vmem:[#allocation2 + $0x118] sm:$0x3f]
    %v162 = vld [vmem:[#allocation2 + $0x120] sm:$0xff]
    %v163 = vld [vmem:[#allocation2 + $0x128] sm:$0x3f]
    %v164 = vld [vmem:[#allocation2 + $0x130] sm:$0xff]
    %v165 = vld [vmem:[#allocation2 + $0x138] sm:$0x3f]
    %v166 = vld [vmem:[#allocation2 + $0x140] sm:$0xff]
    %v167 = vld [vmem:[#allocation2 + $0x148] sm:$0x3f]
    %v168 = vld [vmem:[#allocation2 + $0x150] sm:$0xff]
    %v169 = vld [vmem:[#allocation2 + $0x158] sm:$0x3f]
    %v170 = vld [vmem:[#allocation2 + $0x160] sm:$0xff]
    %v171 = vld [vmem:[#allocation2 + $0x168] sm:$0x3f]
    %v172 = vld [vmem:[#allocation2 + $0x170] sm:$0xff]
    %v173 = vld [vmem:[#allocation2 + $0x178] sm:$0x3f]
    %v174 = vld [vmem:[#allocation2 + $0x180] sm:$0xff]
    %v175 = vld [vmem:[#allocation2 + $0x188] sm:$0x3f]
    %v176 = vld [vmem:[#allocation2 + $0x190] sm:$0xff]
    %v177 = vld [vmem:[#allocation2 + $0x198] sm:$0x3f]
    %v178 = vld [vmem:[#allocation2 + $0x1a0] sm:$0xff]
    %v179 = vld [vmem:[#allocation2 + $0x1a8] sm:$0x3f]
    %v180 = vld [vmem:[#allocation2 + $0x1b0] sm:$0xff]
    %v181 = vld [vmem:[#allocation2 + $0x1b8] sm:$0x3f]
    %v182 = vld [vmem:[%s1] sm:$0xff]
    %v183 = vld [vmem:[%s1 + $0x8] sm:$0xff]
    %v184 = vld [vmem:[%s1 + $0x10] sm:$0xff]
    %v185 = vld [vmem:[%s1 + $0x18] sm:$0xff]
    %v186 = vld [vmem:[%s1 + $0x20] sm:$0xff]
    %v187 = vld [vmem:[%s1 + $0x28] sm:$0xff]
    %v188 = vld [vmem:[%s1 + $0x30] sm:$0x1]
    %v189 = vperm.slane %v182, 0
    %v190 = vmul.f32 %v126, %v189
    %v191 = vmul.f32 %v128, %v189
    %v192 = vmul.f32 %v130, %v189
    %v193 = vmul.f32 %v132, %v189
    %v194 = vmul.f32 %v134, %v189
    %v195 = vmul.f32 %v136, %v189
    %v196 = vmul.f32 %v138, %v189
    %v197 = vmul.f32 %v140, %v189
    %v198 = vmul.f32 %v154, %v189
    %v199 = vmul.f32 %v156, %v189
    %v200 = vmul.f32 %v158, %v189
    %v201 = vmul.f32 %v160, %v189
    %v202 = vmul.f32 %v162, %v189
    %v203 = vmul.f32 %v164, %v189
    %v204 = vmul.f32 %v166, %v189
    %v205 = vmul.f32 %v168, %v189
    %v206 = vadd.f32 %v190, 0.0
    %v207 = vadd.f32 %v191, 0.0
    %v208 = vadd.f32 %v192, 0.0
    %v209 = vadd.f32 %v193, 0.0
    %v210 = vadd.f32 %v194, 0.0
    %v211 = vadd.f32 %v195, 0.0
    %v212 = vadd.f32 %v196, 0.0
    %v213 = vadd.f32 %v197, 0.0
    %v214 = vadd.f32 %v198, 0.0
    %v215 = vadd.f32 %v199, 0.0
    %v216 = vadd.f32 %v200, 0.0
    %v217 = vadd.f32 %v201, 0.0
    %v218 = vadd.f32 %v202, 0.0
    %v219 = vadd.f32 %v203, 0.0
    %v220 = vadd.f32 %v204, 0.0
    %v221 = vadd.f32 %v205, 0.0
    %v222 = vperm.slane %v182, 7
    %v223 = vmul.f32 %v128, %v222
    %v224 = vmul.f32 %v130, %v222
    %v225 = vmul.f32 %v132, %v222
    %v226 = vmul.f32 %v134, %v222
    %v227 = vmul.f32 %v136, %v222
    %v228 = vmul.f32 %v138, %v222
    %v229 = vmul.f32 %v140, %v222
    %v230 = vmul.f32 %v142, %v222
    %v231 = vmul.f32 %v156, %v222
    %v232 = vmul.f32 %v158, %v222
    %v233 = vmul.f32 %v160, %v222
    %v234 = vmul.f32 %v162, %v222
    %v235 = vmul.f32 %v164, %v222
    %v236 = vmul.f32 %v166, %v222
    %v237 = vmul.f32 %v168, %v222
    %v238 = vmul.f32 %v170, %v222
    %v239 = vadd.f32 %v206, %v223
    %v240 = vadd.f32 %v207, %v224
    %v241 = vadd.f32 %v208, %v225
    %v242 = vadd.f32 %v209, %v226
    %v243 = vadd.f32 %v210, %v227
    %v244 = vadd.f32 %v211, %v228
    %v245 = vadd.f32 %v212, %v229
    %v246 = vadd.f32 %v213, %v230
    %v247 = vadd.f32 %v214, %v231
    %v248 = vadd.f32 %v215, %v232
    %v249 = vadd.f32 %v216, %v233
    %v250 = vadd.f32 %v217, %v234
    %v251 = vadd.f32 %v218, %v235
    %v252 = vadd.f32 %v219, %v236
    %v253 = vadd.f32 %v220, %v237
    %v254 = vadd.f32 %v221, %v238
    %v255 = vperm.slane %v183, 6
    %v256 = vmul.f32 %v130, %v255
    %v257 = vmul.f32 %v132, %v255
    %v258 = vmul.f32 %v134, %v255
    %v259 = vmul.f32 %v136, %v255
    %v260 = vmul.f32 %v138, %v255
    %v261 = vmul.f32 %v140, %v255
    %v262 = vmul.f32 %v142, %v255
    %v263 = vmul.f32 %v144, %v255
    %v264 = vmul.f32 %v158, %v255
    %v265 = vmul.f32 %v160, %v255
    %v266 = vmul.f32 %v162, %v255
    %v267 = vmul.f32 %v164, %v255
    %v268 = vmul.f32 %v166, %v255
    %v269 = vmul.f32 %v168, %v255
    %v270 = vmul.f32 %v170, %v255
    %v271 = vmul.f32 %v172, %v255
    %v272 = vadd.f32 %v239, %v256
    %v273 = vadd.f32 %v240, %v257
    %v274 = vadd.f32 %v241, %v258
    %v275 = vadd.f32 %v242, %v259
    %v276 = vadd.f32 %v243, %v260
    %v277 = vadd.f32 %v244, %v261
    %v278 = vadd.f32 %v245, %v262
    %v279 = vadd.f32 %v246, %v263
    %v280 = vadd.f32 %v247, %v264
    %v281 = vadd.f32 %v248, %v265
    %v282 = vadd.f32 %v249, %v266
    %v283 = vadd.f32 %v250, %v267
    %v284 = vadd.f32 %v251, %v268
    %v285 = vadd.f32 %v252, %v269
    %v286 = vadd.f32 %v253, %v270
    %v287 = vadd.f32 %v254, %v271
    %v288 = vperm.slane %v184, 5
    %v289 = vmul.f32 %v132, %v288
    %v290 = vmul.f32 %v134, %v288
    %v291 = vmul.f32 %v136, %v288
    %v292 = vmul.f32 %v138, %v288
    %v293 = vmul.f32 %v140, %v288
    %v294 = vmul.f32 %v142, %v288
    %v295 = vmul.f32 %v144, %v288
    %v296 = vmul.f32 %v146, %v288
    %v297 = vmul.f32 %v160, %v288
    %v298 = vmul.f32 %v162, %v288
    %v299 = vmul.f32 %v164, %v288
    %v300 = vmul.f32 %v166, %v288
    %v301 = vmul.f32 %v168, %v288
    %v302 = vmul.f32 %v170, %v288
    %v303 = vmul.f32 %v172, %v288
    %v304 = vmul.f32 %v174, %v288
    %v305 = vadd.f32 %v272, %v289
    %v306 = vadd.f32 %v273, %v290
    %v307 = vadd.f32 %v274, %v291
    %v308 = vadd.f32 %v275, %v292
    %v309 = vadd.f32 %v276, %v293
    %v310 = vadd.f32 %v277, %v294
    %v311 = vadd.f32 %v278, %v295
    %v312 = vadd.f32 %v279, %v296
    %v313 = vadd.f32 %v280, %v297
    %v314 = vadd.f32 %v281, %v298
    %v315 = vadd.f32 %v282, %v299
    %v316 = vadd.f32 %v283, %v300
    %v317 = vadd.f32 %v284, %v301
    %v318 = vadd.f32 %v285, %v302
    %v319 = vadd.f32 %v286, %v303
    %v320 = vadd.f32 %v287, %v304
    %v321 = vperm.slane %v185, 4
    %v322 = vmul.f32 %v134, %v321
    %v323 = vmul.f32 %v136, %v321
    %v324 = vmul.f32 %v138, %v321
    %v325 = vmul.f32 %v140, %v321
    %v326 = vmul.f32 %v142, %v321
    %v327 = vmul.f32 %v144, %v321
    %v328 = vmul.f32 %v146, %v321
    %v329 = vmul.f32 %v148, %v321
    %v330 = vmul.f32 %v162, %v321
    %v331 = vmul.f32 %v164, %v321
    %v332 = vmul.f32 %v166, %v321
    %v333 = vmul.f32 %v168, %v321
    %v334 = vmul.f32 %v170, %v321
    %v335 = vmul.f32 %v172, %v321
    %v336 = vmul.f32 %v174, %v321
    %v337 = vmul.f32 %v176, %v321
    %v338 = vadd.f32 %v305, %v322
    %v339 = vadd.f32 %v306, %v323
    %v340 = vadd.f32 %v307, %v324
    %v341 = vadd.f32 %v308, %v325
    %v342 = vadd.f32 %v309, %v326
    %v343 = vadd.f32 %v310, %v327
    %v344 = vadd.f32 %v311, %v328
    %v345 = vadd.f32 %v312, %v329
    %v346 = vadd.f32 %v313, %v330
    %v347 = vadd.f32 %v314, %v331
    %v348 = vadd.f32 %v315, %v332
    %v349 = vadd.f32 %v316, %v333
    %v350 = vadd.f32 %v317, %v334
    %v351 = vadd.f32 %v318, %v335
    %v352 = vadd.f32 %v319, %v336
    %v353 = vadd.f32 %v320, %v337
    %v354 = vperm.slane %v186, 3
    %v355 = vmul.f32 %v136, %v354
    %v356 = vmul.f32 %v138, %v354
    %v357 = vmul.f32 %v140, %v354
    %v358 = vmul.f32 %v142, %v354
    %v359 = vmul.f32 %v144, %v354
    %v360 = vmul.f32 %v146, %v354
    %v361 = vmul.f32 %v148, %v354
    %v362 = vmul.f32 %v150, %v354
    %v363 = vmul.f32 %v164, %v354
    %v364 = vmul.f32 %v166, %v354
    %v365 = vmul.f32 %v168, %v354
    %v366 = vmul.f32 %v170, %v354
    %v367 = vmul.f32 %v172, %v354
    %v368 = vmul.f32 %v174, %v354
    %v369 = vmul.f32 %v176, %v354
    %v370 = vmul.f32 %v178, %v354
    %v371 = vadd.f32 %v338, %v355
    %v372 = vadd.f32 %v339, %v356
    %v373 = vadd.f32 %v340, %v357
    %v374 = vadd.f32 %v341, %v358
    %v375 = vadd.f32 %v342, %v359
    %v376 = vadd.f32 %v343, %v360
    %v377 = vadd.f32 %v344, %v361
    %v378 = vadd.f32 %v345, %v362
    %v379 = vadd.f32 %v346, %v363
    %v380 = vadd.f32 %v347, %v364
    %v381 = vadd.f32 %v348, %v365
    %v382 = vadd.f32 %v349, %v366
    %v383 = vadd.f32 %v350, %v367
    %v384 = vadd.f32 %v351, %v368
    %v385 = vadd.f32 %v352, %v369
    %v386 = vadd.f32 %v353, %v370
    %v387 = vperm.slane %v187, 2
    %v388 = vmul.f32 %v138, %v387
    %v389 = vmul.f32 %v140, %v387
    %v390 = vmul.f32 %v142, %v387
    %v391 = vmul.f32 %v144, %v387
    %v392 = vmul.f32 %v146, %v387
    %v393 = vmul.f32 %v148, %v387
    %v394 = vmul.f32 %v150, %v387
    %v395 = vmul.f32 %v152, %v387
    %v396 = vmul.f32 %v166, %v387
    %v397 = vmul.f32 %v168, %v387
    %v398 = vmul.f32 %v170, %v387
    %v399 = vmul.f32 %v172, %v387
    %v400 = vmul.f32 %v174, %v387
    %v401 = vmul.f32 %v176, %v387
    %v402 = vmul.f32 %v178, %v387
    %v403 = vmul.f32 %v180, %v387
    %v404 = vadd.f32 %v371, %v388
    %v405 = vadd.f32 %v372, %v389
    %v406 = vadd.f32 %v373, %v390
    %v407 = vadd.f32 %v374, %v391
    %v408 = vadd.f32 %v375, %v392
    %v409 = vadd.f32 %v376, %v393
    %v410 = vadd.f32 %v377, %v394
    %v411 = vadd.f32 %v378, %v395
    %v412 = vadd.f32 %v379, %v396
    %v413 = vadd.f32 %v380, %v397
    %v414 = vadd.f32 %v381, %v398
    %v415 = vadd.f32 %v382, %v399
    %v416 = vadd.f32 %v383, %v400
    %v417 = vadd.f32 %v384, %v401
    %v418 = vadd.f32 %v385, %v402
    %v419 = vadd.f32 %v386, %v403
    %v420 = vperm.slane %v182, 1
    %v421 = vmul.f32 %v126, %v420
    %v422 = vmul.f32 %v127, %v420
    %v423 = vmul.f32 %v128, %v420
    %v424 = vmul.f32 %v129, %v420
    %v425 = vmul.f32 %v130, %v420
    %v426 = vmul.f32 %v131, %v420
    %v427 = vmul.f32 %v132, %v420
    %v428 = vmul.f32 %v133, %v420
    %v429 = vmul.f32 %v134, %v420
    %v430 = vmul.f32 %v135, %v420
    %v431 = vmul.f32 %v136, %v420
    %v432 = vmul.f32 %v137, %v420
    %v433 = vmul.f32 %v138, %v420
    %v434 = vmul.f32 %v139, %v420
    %v435 = vmul.f32 %v140, %v420
    %v436 = vmul.f32 %v141, %v420
    %v437 = vmul.f32 %v154, %v420
    %v438 = vmul.f32 %v155, %v420
    %v439 = vmul.f32 %v156, %v420
    %v440 = vmul.f32 %v157, %v420
    %v441 = vmul.f32 %v158, %v420
    %v442 = vmul.f32 %v159, %v420
    %v443 = vmul.f32 %v160, %v420
    %v444 = vmul.f32 %v161, %v420
    %v445 = vmul.f32 %v162, %v420
    %v446 = vmul.f32 %v163, %v420
    %v447 = vmul.f32 %v164, %v420
    %v448 = vmul.f32 %v165, %v420
    %v449 = vmul.f32 %v166, %v420
    %v450 = vmul.f32 %v167, %v420
    %v451 = vmul.f32 %v168, %v420
    %v452 = vmul.f32 %v169, %v420
    %vm485 = vcmask 1046528
    %v486 = vrot.slane %v421, 1
    %v487 = vrot.slane %v422, 1
    %v488 = vsel %vm485, %v486, %v487
    %v489 = vrot.slane %v423, 1
    %v490 = vrot.slane %v424, 1
    %v491 = vsel %vm485, %v489, %v490
    %v492 = vrot.slane %v425, 1
    %v493 = vrot.slane %v426, 1
    %v494 = vsel %vm485, %v492, %v493
    %v495 = vrot.slane %v427, 1
    %v496 = vrot.slane %v428, 1
    %v497 = vsel %vm485, %v495, %v496
    %v498 = vrot.slane %v429, 1
    %v499 = vrot.slane %v430, 1
    %v500 = vsel %vm485, %v498, %v499
    %v501 = vrot.slane %v431, 1
    %v502 = vrot.slane %v432, 1
    %v503 = vsel %vm485, %v501, %v502
    %v504 = vrot.slane %v433, 1
    %v505 = vrot.slane %v434, 1
    %v506 = vsel %vm485, %v504, %v505
    %v507 = vrot.slane %v435, 1
    %v508 = vrot.slane %v436, 1
    %v509 = vsel %vm485, %v507, %v508
    %v510 = vrot.slane %v437, 1
    %v511 = vrot.slane %v438, 1
    %v512 = vsel %vm485, %v510, %v511
    %v513 = vrot.slane %v439, 1
    %v514 = vrot.slane %v440, 1
    %v515 = vsel %vm485, %v513, %v514
    %v516 = vrot.slane %v441, 1
    %v517 = vrot.slane %v442, 1
    %v518 = vsel %vm485, %v516, %v517
    %v519 = vrot.slane %v443, 1
    %v520 = vrot.slane %v444, 1
    %v521 = vsel %vm485, %v519, %v520
    %v522 = vrot.slane %v445, 1
    %v523 = vrot.slane %v446, 1
    %v524 = vsel %vm485, %v522, %v523
    %v525 = vrot.slane %v447, 1
    %v526 = vrot.slane %v448, 1
    %v527 = vsel %vm485, %v525, %v526
    %v528 = vrot.slane %v449, 1
    %v529 = vrot.slane %v450, 1
    %v530 = vsel %vm485, %v528, %v529
    %v531 = vrot.slane %v451, 1
    %v532 = vrot.slane %v452, 1
    %v533 = vsel %vm485, %v531, %v532
    %v550 = vadd.f32 %v404, %v488
    %v551 = vadd.f32 %v405, %v491
    %v552 = vadd.f32 %v406, %v494
    %v553 = vadd.f32 %v407, %v497
    %v554 = vadd.f32 %v408, %v500
    %v555 = vadd.f32 %v409, %v503
    %v556 = vadd.f32 %v410, %v506
    %v557 = vadd.f32 %v411, %v509
    %v558 = vadd.f32 %v412, %v512
    %v559 = vadd.f32 %v413, %v515
    %v560 = vadd.f32 %v414, %v518
    %v561 = vadd.f32 %v415, %v521
    %v562 = vadd.f32 %v416, %v524
    %v563 = vadd.f32 %v417, %v527
    %v564 = vadd.f32 %v418, %v530
    %v565 = vadd.f32 %v419, %v533
    %v566 = vperm.slane %v183, 0
    %v567 = vmul.f32 %v128, %v566
    %v568 = vmul.f32 %v129, %v566
    %v569 = vmul.f32 %v130, %v566
    %v570 = vmul.f32 %v131, %v566
    %v571 = vmul.f32 %v132, %v566
    %v572 = vmul.f32 %v133, %v566
    %v573 = vmul.f32 %v134, %v566
    %v574 = vmul.f32 %v135, %v566
    %v575 = vmul.f32 %v136, %v566
    %v576 = vmul.f32 %v137, %v566
    %v577 = vmul.f32 %v138, %v566
    %v578 = vmul.f32 %v139, %v566
    %v579 = vmul.f32 %v140, %v566
    %v580 = vmul.f32 %v141, %v566
    %v581 = vmul.f32 %v142, %v566
    %v582 = vmul.f32 %v143, %v566
    %v583 = vmul.f32 %v156, %v566
    %v584 = vmul.f32 %v157, %v566
    %v585 = vmul.f32 %v158, %v566
    %v586 = vmul.f32 %v159, %v566
    %v587 = vmul.f32 %v160, %v566
    %v588 = vmul.f32 %v161, %v566
    %v589 = vmul.f32 %v162, %v566
    %v590 = vmul.f32 %v163, %v566
    %v591 = vmul.f32 %v164, %v566
    %v592 = vmul.f32 %v165, %v566
    %v593 = vmul.f32 %v166, %v566
    %v594 = vmul.f32 %v167, %v566
    %v595 = vmul.f32 %v168, %v566
    %v596 = vmul.f32 %v169, %v566
    %v597 = vmul.f32 %v170, %v566
    %v598 = vmul.f32 %v171, %v566
    %v631 = vrot.slane %v567, 1
    %v632 = vrot.slane %v568, 1
    %v633 = vsel %vm485, %v631, %v632
    %v634 = vrot.slane %v569, 1
    %v635 = vrot.slane %v570, 1
    %v636 = vsel %vm485, %v634, %v635
    %v637 = vrot.slane %v571, 1
    %v638 = vrot.slane %v572, 1
    %v639 = vsel %vm485, %v637, %v638
    %v640 = vrot.slane %v573, 1
    %v641 = vrot.slane %v574, 1
    %v642 = vsel %vm485, %v640, %v641
    %v643 = vrot.slane %v575, 1
    %v644 = vrot.slane %v576, 1
    %v645 = vsel %vm485, %v643, %v644
    %v646 = vrot.slane %v577, 1
    %v647 = vrot.slane %v578, 1
    %v648 = vsel %vm485, %v646, %v647
    %v649 = vrot.slane %v579, 1
    %v650 = vrot.slane %v580, 1
    %v651 = vsel %vm485, %v649, %v650
    %v652 = vrot.slane %v581, 1
    %v653 = vrot.slane %v582, 1
    %v654 = vsel %vm485, %v652, %v653
    %v655 = vrot.slane %v583, 1
    %v656 = vrot.slane %v584, 1
    %v657 = vsel %vm485, %v655, %v656
    %v658 = vrot.slane %v585, 1
    %v659 = vrot.slane %v586, 1
    %v660 = vsel %vm485, %v658, %v659
    %v661 = vrot.slane %v587, 1
    %v662 = vrot.slane %v588, 1
    %v663 = vsel %vm485, %v661, %v662
    %v664 = vrot.slane %v589, 1
    %v665 = vrot.slane %v590, 1
    %v666 = vsel %vm485, %v664, %v665
    %v667 = vrot.slane %v591, 1
    %v668 = vrot.slane %v592, 1
    %v669 = vsel %vm485, %v667, %v668
    %v670 = vrot.slane %v593, 1
    %v671 = vrot.slane %v594, 1
    %v672 = vsel %vm485, %v670, %v671
    %v673 = vrot.slane %v595, 1
    %v674 = vrot.slane %v596, 1
    %v675 = vsel %vm485, %v673, %v674
    %v676 = vrot.slane %v597, 1
    %v677 = vrot.slane %v598, 1
    %v678 = vsel %vm485, %v676, %v677
    %v695 = vadd.f32 %v550, %v633
    %v696 = vadd.f32 %v551, %v636
    %v697 = vadd.f32 %v552, %v639
    %v698 = vadd.f32 %v553, %v642
    %v699 = vadd.f32 %v554, %v645
    %v700 = vadd.f32 %v555, %v648
    %v701 = vadd.f32 %v556, %v651
    %v702 = vadd.f32 %v557, %v654
    %v703 = vadd.f32 %v558, %v657
    %v704 = vadd.f32 %v559, %v660
    %v705 = vadd.f32 %v560, %v663
    %v706 = vadd.f32 %v561, %v666
    %v707 = vadd.f32 %v562, %v669
    %v708 = vadd.f32 %v563, %v672
    %v709 = vadd.f32 %v564, %v675
    %v710 = vadd.f32 %v565, %v678
    %v711 = vperm.slane %v183, 7
    %v712 = vmul.f32 %v130, %v711
    %v713 = vmul.f32 %v131, %v711
    %v714 = vmul.f32 %v132, %v711
    %v715 = vmul.f32 %v133, %v711
    %v716 = vmul.f32 %v134, %v711
    %v717 = vmul.f32 %v135, %v711
    %v718 = vmul.f32 %v136, %v711
    %v719 = vmul.f32 %v137, %v711
    %v720 = vmul.f32 %v138, %v711
    %v721 = vmul.f32 %v139, %v711
    %v722 = vmul.f32 %v140, %v711
    %v723 = vmul.f32 %v141, %v711
    %v724 = vmul.f32 %v142, %v711
    %v725 = vmul.f32 %v143, %v711
    %v726 = vmul.f32 %v144, %v711
    %v727 = vmul.f32 %v145, %v711
    %v728 = vmul.f32 %v158, %v711
    %v729 = vmul.f32 %v159, %v711
    %v730 = vmul.f32 %v160, %v711
    %v731 = vmul.f32 %v161, %v711
    %v732 = vmul.f32 %v162, %v711
    %v733 = vmul.f32 %v163, %v711
    %v734 = vmul.f32 %v164, %v711
    %v735 = vmul.f32 %v165, %v711
    %v736 = vmul.f32 %v166, %v711
    %v737 = vmul.f32 %v167, %v711
    %v738 = vmul.f32 %v168, %v711
    %v739 = vmul.f32 %v169, %v711
    %v740 = vmul.f32 %v170, %v711
    %v741 = vmul.f32 %v171, %v711
    %v742 = vmul.f32 %v172, %v711
    %v743 = vmul.f32 %v173, %v711
    %v776 = vrot.slane %v712, 1
    %v777 = vrot.slane %v713, 1
    %v778 = vsel %vm485, %v776, %v777
    %v779 = vrot.slane %v714, 1
    %v780 = vrot.slane %v715, 1
    %v781 = vsel %vm485, %v779, %v780
    %v782 = vrot.slane %v716, 1
    %v783 = vrot.slane %v717, 1
    %v784 = vsel %vm485, %v782, %v783
    %v785 = vrot.slane %v718, 1
    %v786 = vrot.slane %v719, 1
    %v787 = vsel %vm485, %v785, %v786
    %v788 = vrot.slane %v720, 1
    %v789 = vrot.slane %v721, 1
    %v790 = vsel %vm485, %v788, %v789
    %v791 = vrot.slane %v722, 1
    %v792 = vrot.slane %v723, 1
    %v793 = vsel %vm485, %v791, %v792
    %v794 = vrot.slane %v724, 1
    %v795 = vrot.slane %v725, 1
    %v796 = vsel %vm485, %v794, %v795
    %v797 = vrot.slane %v726, 1
    %v798 = vrot.slane %v727, 1
    %v799 = vsel %vm485, %v797, %v798
    %v800 = vrot.slane %v728, 1
    %v801 = vrot.slane %v729, 1
    %v802 = vsel %vm485, %v800, %v801
    %v803 = vrot.slane %v730, 1
    %v804 = vrot.slane %v731, 1
    %v805 = vsel %vm485, %v803, %v804
    %v806 = vrot.slane %v732, 1
    %v807 = vrot.slane %v733, 1
    %v808 = vsel %vm485, %v806, %v807
    %v809 = vrot.slane %v734, 1
    %v810 = vrot.slane %v735, 1
    %v811 = vsel %vm485, %v809, %v810
    %v812 = vrot.slane %v736, 1
    %v813 = vrot.slane %v737, 1
    %v814 = vsel %vm485, %v812, %v813
    %v815 = vrot.slane %v738, 1
    %v816 = vrot.slane %v739, 1
    %v817 = vsel %vm485, %v815, %v816
    %v818 = vrot.slane %v740, 1
    %v819 = vrot.slane %v741, 1
    %v820 = vsel %vm485, %v818, %v819
    %v821 = vrot.slane %v742, 1
    %v822 = vrot.slane %v743, 1
    %v823 = vsel %vm485, %v821, %v822
    %v840 = vadd.f32 %v695, %v778
    %v841 = vadd.f32 %v696, %v781
    %v842 = vadd.f32 %v697, %v784
    %v843 = vadd.f32 %v698, %v787
    %v844 = vadd.f32 %v699, %v790
    %v845 = vadd.f32 %v700, %v793
    %v846 = vadd.f32 %v701, %v796
    %v847 = vadd.f32 %v702, %v799
    %v848 = vadd.f32 %v703, %v802
    %v849 = vadd.f32 %v704, %v805
    %v850 = vadd.f32 %v705, %v808
    %v851 = vadd.f32 %v706, %v811
    %v852 = vadd.f32 %v707, %v814
    %v853 = vadd.f32 %v708, %v817
    %v854 = vadd.f32 %v709, %v820
    %v855 = vadd.f32 %v710, %v823
    %v856 = vperm.slane %v184, 6
    %v857 = vmul.f32 %v132, %v856
    %v858 = vmul.f32 %v133, %v856
    %v859 = vmul.f32 %v134, %v856
    %v860 = vmul.f32 %v135, %v856
    %v861 = vmul.f32 %v136, %v856
    %v862 = vmul.f32 %v137, %v856
    %v863 = vmul.f32 %v138, %v856
    %v864 = vmul.f32 %v139, %v856
    %v865 = vmul.f32 %v140, %v856
    %v866 = vmul.f32 %v141, %v856
    %v867 = vmul.f32 %v142, %v856
    %v868 = vmul.f32 %v143, %v856
    %v869 = vmul.f32 %v144, %v856
    %v870 = vmul.f32 %v145, %v856
    %v871 = vmul.f32 %v146, %v856
    %v872 = vmul.f32 %v147, %v856
    %v873 = vmul.f32 %v160, %v856
    %v874 = vmul.f32 %v161, %v856
    %v875 = vmul.f32 %v162, %v856
    %v876 = vmul.f32 %v163, %v856
    %v877 = vmul.f32 %v164, %v856
    %v878 = vmul.f32 %v165, %v856
    %v879 = vmul.f32 %v166, %v856
    %v880 = vmul.f32 %v167, %v856
    %v881 = vmul.f32 %v168, %v856
    %v882 = vmul.f32 %v169, %v856
    %v883 = vmul.f32 %v170, %v856
    %v884 = vmul.f32 %v171, %v856
    %v885 = vmul.f32 %v172, %v856
    %v886 = vmul.f32 %v173, %v856
    %v887 = vmul.f32 %v174, %v856
    %v888 = vmul.f32 %v175, %v856
    %v921 = vrot.slane %v857, 1
    %v922 = vrot.slane %v858, 1
    %v923 = vsel %vm485, %v921, %v922
    %v924 = vrot.slane %v859, 1
    %v925 = vrot.slane %v860, 1
    %v926 = vsel %vm485, %v924, %v925
    %v927 = vrot.slane %v861, 1
    %v928 = vrot.slane %v862, 1
    %v929 = vsel %vm485, %v927, %v928
    %v930 = vrot.slane %v863, 1
    %v931 = vrot.slane %v864, 1
    %v932 = vsel %vm485, %v930, %v931
    %v933 = vrot.slane %v865, 1
    %v934 = vrot.slane %v866, 1
    %v935 = vsel %vm485, %v933, %v934
    %v936 = vrot.slane %v867, 1
    %v937 = vrot.slane %v868, 1
    %v938 = vsel %vm485, %v936, %v937
    %v939 = vrot.slane %v869, 1
    %v940 = vrot.slane %v870, 1
    %v941 = vsel %vm485, %v939, %v940
    %v942 = vrot.slane %v871, 1
    %v943 = vrot.slane %v872, 1
    %v944 = vsel %vm485, %v942, %v943
    %v945 = vrot.slane %v873, 1
    %v946 = vrot.slane %v874, 1
    %v947 = vsel %vm485, %v945, %v946
    %v948 = vrot.slane %v875, 1
    %v949 = vrot.slane %v876, 1
    %v950 = vsel %vm485, %v948, %v949
    %v951 = vrot.slane %v877, 1
    %v952 = vrot.slane %v878, 1
    %v953 = vsel %vm485, %v951, %v952
    %v954 = vrot.slane %v879, 1
    %v955 = vrot.slane %v880, 1
    %v956 = vsel %vm485, %v954, %v955
    %v957 = vrot.slane %v881, 1
    %v958 = vrot.slane %v882, 1
    %v959 = vsel %vm485, %v957, %v958
    %v960 = vrot.slane %v883, 1
    %v961 = vrot.slane %v884, 1
    %v962 = vsel %vm485, %v960, %v961
    %v963 = vrot.slane %v885, 1
    %v964 = vrot.slane %v886, 1
    %v965 = vsel %vm485, %v963, %v964
    %v966 = vrot.slane %v887, 1
    %v967 = vrot.slane %v888, 1
    %v968 = vsel %vm485, %v966, %v967
    %v985 = vadd.f32 %v840, %v923
    %v986 = vadd.f32 %v841, %v926
    %v987 = vadd.f32 %v842, %v929
    %v988 = vadd.f32 %v843, %v932
    %v989 = vadd.f32 %v844, %v935
    %v990 = vadd.f32 %v845, %v938
    %v991 = vadd.f32 %v846, %v941
    %v992 = vadd.f32 %v847, %v944
    %v993 = vadd.f32 %v848, %v947
    %v994 = vadd.f32 %v849, %v950
    %v995 = vadd.f32 %v850, %v953
    %v996 = vadd.f32 %v851, %v956
    %v997 = vadd.f32 %v852, %v959
    %v998 = vadd.f32 %v853, %v962
    %v999 = vadd.f32 %v854, %v965
    %v1000 = vadd.f32 %v855, %v968
    %v1001 = vperm.slane %v185, 5
    %v1002 = vmul.f32 %v134, %v1001
    %v1003 = vmul.f32 %v135, %v1001
    %v1004 = vmul.f32 %v136, %v1001
    %v1005 = vmul.f32 %v137, %v1001
    %v1006 = vmul.f32 %v138, %v1001
    %v1007 = vmul.f32 %v139, %v1001
    %v1008 = vmul.f32 %v140, %v1001
    %v1009 = vmul.f32 %v141, %v1001
    %v1010 = vmul.f32 %v142, %v1001
    %v1011 = vmul.f32 %v143, %v1001
    %v1012 = vmul.f32 %v144, %v1001
    %v1013 = vmul.f32 %v145, %v1001
    %v1014 = vmul.f32 %v146, %v1001
    %v1015 = vmul.f32 %v147, %v1001
    %v1016 = vmul.f32 %v148, %v1001
    %v1017 = vmul.f32 %v149, %v1001
    %v1018 = vmul.f32 %v162, %v1001
    %v1019 = vmul.f32 %v163, %v1001
    %v1020 = vmul.f32 %v164, %v1001
    %v1021 = vmul.f32 %v165, %v1001
    %v1022 = vmul.f32 %v166, %v1001
    %v1023 = vmul.f32 %v167, %v1001
    %v1024 = vmul.f32 %v168, %v1001
    %v1025 = vmul.f32 %v169, %v1001
    %v1026 = vmul.f32 %v170, %v1001
    %v1027 = vmul.f32 %v171, %v1001
    %v1028 = vmul.f32 %v172, %v1001
    %v1029 = vmul.f32 %v173, %v1001
    %v1030 = vmul.f32 %v174, %v1001
    %v1031 = vmul.f32 %v175, %v1001
    %v1032 = vmul.f32 %v176, %v1001
    %v1033 = vmul.f32 %v177, %v1001
    %v1066 = vrot.slane %v1002, 1
    %v1067 = vrot.slane %v1003, 1
    %v1068 = vsel %vm485, %v1066, %v1067
    %v1069 = vrot.slane %v1004, 1
    %v1070 = vrot.slane %v1005, 1
    %v1071 = vsel %vm485, %v1069, %v1070
    %v1072 = vrot.slane %v1006, 1
    %v1073 = vrot.slane %v1007, 1
    %v1074 = vsel %vm485, %v1072, %v1073
    %v1075 = vrot.slane %v1008, 1
    %v1076 = vrot.slane %v1009, 1
    %v1077 = vsel %vm485, %v1075, %v1076
    %v1078 = vrot.slane %v1010, 1
    %v1079 = vrot.slane %v1011, 1
    %v1080 = vsel %vm485, %v1078, %v1079
    %v1081 = vrot.slane %v1012, 1
    %v1082 = vrot.slane %v1013, 1
    %v1083 = vsel %vm485, %v1081, %v1082
    %v1084 = vrot.slane %v1014, 1
    %v1085 = vrot.slane %v1015, 1
    %v1086 = vsel %vm485, %v1084, %v1085
    %v1087 = vrot.slane %v1016, 1
    %v1088 = vrot.slane %v1017, 1
    %v1089 = vsel %vm485, %v1087, %v1088
    %v1090 = vrot.slane %v1018, 1
    %v1091 = vrot.slane %v1019, 1
    %v1092 = vsel %vm485, %v1090, %v1091
    %v1093 = vrot.slane %v1020, 1
    %v1094 = vrot.slane %v1021, 1
    %v1095 = vsel %vm485, %v1093, %v1094
    %v1096 = vrot.slane %v1022, 1
    %v1097 = vrot.slane %v1023, 1
    %v1098 = vsel %vm485, %v1096, %v1097
    %v1099 = vrot.slane %v1024, 1
    %v1100 = vrot.slane %v1025, 1
    %v1101 = vsel %vm485, %v1099, %v1100
    %v1102 = vrot.slane %v1026, 1
    %v1103 = vrot.slane %v1027, 1
    %v1104 = vsel %vm485, %v1102, %v1103
    %v1105 = vrot.slane %v1028, 1
    %v1106 = vrot.slane %v1029, 1
    %v1107 = vsel %vm485, %v1105, %v1106
    %v1108 = vrot.slane %v1030, 1
    %v1109 = vrot.slane %v1031, 1
    %v1110 = vsel %vm485, %v1108, %v1109
    %v1111 = vrot.slane %v1032, 1
    %v1112 = vrot.slane %v1033, 1
    %v1113 = vsel %vm485, %v1111, %v1112
    %v1130 = vadd.f32 %v985, %v1068
    %v1131 = vadd.f32 %v986, %v1071
    %v1132 = vadd.f32 %v987, %v1074
    %v1133 = vadd.f32 %v988, %v1077
    %v1134 = vadd.f32 %v989, %v1080
    %v1135 = vadd.f32 %v990, %v1083
    %v1136 = vadd.f32 %v991, %v1086
    %v1137 = vadd.f32 %v992, %v1089
    %v1138 = vadd.f32 %v993, %v1092
    %v1139 = vadd.f32 %v994, %v1095
    %v1140 = vadd.f32 %v995, %v1098
    %v1141 = vadd.f32 %v996, %v1101
    %v1142 = vadd.f32 %v997, %v1104
    %v1143 = vadd.f32 %v998, %v1107
    %v1144 = vadd.f32 %v999, %v1110
    %v1145 = vadd.f32 %v1000, %v1113
    %v1146 = vperm.slane %v186, 4
    %v1147 = vmul.f32 %v136, %v1146
    %v1148 = vmul.f32 %v137, %v1146
    %v1149 = vmul.f32 %v138, %v1146
    %v1150 = vmul.f32 %v139, %v1146
    %v1151 = vmul.f32 %v140, %v1146
    %v1152 = vmul.f32 %v141, %v1146
    %v1153 = vmul.f32 %v142, %v1146
    %v1154 = vmul.f32 %v143, %v1146
    %v1155 = vmul.f32 %v144, %v1146
    %v1156 = vmul.f32 %v145, %v1146
    %v1157 = vmul.f32 %v146, %v1146
    %v1158 = vmul.f32 %v147, %v1146
    %v1159 = vmul.f32 %v148, %v1146
    %v1160 = vmul.f32 %v149, %v1146
    %v1161 = vmul.f32 %v150, %v1146
    %v1162 = vmul.f32 %v151, %v1146
    %v1163 = vmul.f32 %v164, %v1146
    %v1164 = vmul.f32 %v165, %v1146
    %v1165 = vmul.f32 %v166, %v1146
    %v1166 = vmul.f32 %v167, %v1146
    %v1167 = vmul.f32 %v168, %v1146
    %v1168 = vmul.f32 %v169, %v1146
    %v1169 = vmul.f32 %v170, %v1146
    %v1170 = vmul.f32 %v171, %v1146
    %v1171 = vmul.f32 %v172, %v1146
    %v1172 = vmul.f32 %v173, %v1146
    %v1173 = vmul.f32 %v174, %v1146
    %v1174 = vmul.f32 %v175, %v1146
    %v1175 = vmul.f32 %v176, %v1146
    %v1176 = vmul.f32 %v177, %v1146
    %v1177 = vmul.f32 %v178, %v1146
    %v1178 = vmul.f32 %v179, %v1146
    %v1211 = vrot.slane %v1147, 1
    %v1212 = vrot.slane %v1148, 1
    %v1213 = vsel %vm485, %v1211, %v1212
    %v1214 = vrot.slane %v1149, 1
    %v1215 = vrot.slane %v1150, 1
    %v1216 = vsel %vm485, %v1214, %v1215
    %v1217 = vrot.slane %v1151, 1
    %v1218 = vrot.slane %v1152, 1
    %v1219 = vsel %vm485, %v1217, %v1218
    %v1220 = vrot.slane %v1153, 1
    %v1221 = vrot.slane %v1154, 1
    %v1222 = vsel %vm485, %v1220, %v1221
    %v1223 = vrot.slane %v1155, 1
    %v1224 = vrot.slane %v1156, 1
    %v1225 = vsel %vm485, %v1223, %v1224
    %v1226 = vrot.slane %v1157, 1
    %v1227 = vrot.slane %v1158, 1
    %v1228 = vsel %vm485, %v1226, %v1227
    %v1229 = vrot.slane %v1159, 1
    %v1230 = vrot.slane %v1160, 1
    %v1231 = vsel %vm485, %v1229, %v1230
    %v1232 = vrot.slane %v1161, 1
    %v1233 = vrot.slane %v1162, 1
    %v1234 = vsel %vm485, %v1232, %v1233
    %v1235 = vrot.slane %v1163, 1
    %v1236 = vrot.slane %v1164, 1
    %v1237 = vsel %vm485, %v1235, %v1236
    %v1238 = vrot.slane %v1165, 1
    %v1239 = vrot.slane %v1166, 1
    %v1240 = vsel %vm485, %v1238, %v1239
    %v1241 = vrot.slane %v1167, 1
    %v1242 = vrot.slane %v1168, 1
    %v1243 = vsel %vm485, %v1241, %v1242
    %v1244 = vrot.slane %v1169, 1
    %v1245 = vrot.slane %v1170, 1
    %v1246 = vsel %vm485, %v1244, %v1245
    %v1247 = vrot.slane %v1171, 1
    %v1248 = vrot.slane %v1172, 1
    %v1249 = vsel %vm485, %v1247, %v1248
    %v1250 = vrot.slane %v1173, 1
    %v1251 = vrot.slane %v1174, 1
    %v1252 = vsel %vm485, %v1250, %v1251
    %v1253 = vrot.slane %v1175, 1
    %v1254 = vrot.slane %v1176, 1
    %v1255 = vsel %vm485, %v1253, %v1254
    %v1256 = vrot.slane %v1177, 1
    %v1257 = vrot.slane %v1178, 1
    %v1258 = vsel %vm485, %v1256, %v1257
    %v1275 = vadd.f32 %v1130, %v1213
    %v1276 = vadd.f32 %v1131, %v1216
    %v1277 = vadd.f32 %v1132, %v1219
    %v1278 = vadd.f32 %v1133, %v1222
    %v1279 = vadd.f32 %v1134, %v1225
    %v1280 = vadd.f32 %v1135, %v1228
    %v1281 = vadd.f32 %v1136, %v1231
    %v1282 = vadd.f32 %v1137, %v1234
    %v1283 = vadd.f32 %v1138, %v1237
    %v1284 = vadd.f32 %v1139, %v1240
    %v1285 = vadd.f32 %v1140, %v1243
    %v1286 = vadd.f32 %v1141, %v1246
    %v1287 = vadd.f32 %v1142, %v1249
    %v1288 = vadd.f32 %v1143, %v1252
    %v1289 = vadd.f32 %v1144, %v1255
    %v1290 = vadd.f32 %v1145, %v1258
    %v1291 = vperm.slane %v187, 3
    %v1292 = vmul.f32 %v138, %v1291
    %v1293 = vmul.f32 %v139, %v1291
    %v1294 = vmul.f32 %v140, %v1291
    %v1295 = vmul.f32 %v141, %v1291
    %v1296 = vmul.f32 %v142, %v1291
    %v1297 = vmul.f32 %v143, %v1291
    %v1298 = vmul.f32 %v144, %v1291
    %v1299 = vmul.f32 %v145, %v1291
    %v1300 = vmul.f32 %v146, %v1291
    %v1301 = vmul.f32 %v147, %v1291
    %v1302 = vmul.f32 %v148, %v1291
    %v1303 = vmul.f32 %v149, %v1291
    %v1304 = vmul.f32 %v150, %v1291
    %v1305 = vmul.f32 %v151, %v1291
    %v1306 = vmul.f32 %v152, %v1291
    %v1307 = vmul.f32 %v153, %v1291
    %v1308 = vmul.f32 %v166, %v1291
    %v1309 = vmul.f32 %v167, %v1291
    %v1310 = vmul.f32 %v168, %v1291
    %v1311 = vmul.f32 %v169, %v1291
    %v1312 = vmul.f32 %v170, %v1291
    %v1313 = vmul.f32 %v171, %v1291
    %v1314 = vmul.f32 %v172, %v1291
    %v1315 = vmul.f32 %v173, %v1291
    %v1316 = vmul.f32 %v174, %v1291
    %v1317 = vmul.f32 %v175, %v1291
    %v1318 = vmul.f32 %v176, %v1291
    %v1319 = vmul.f32 %v177, %v1291
    %v1320 = vmul.f32 %v178, %v1291
    %v1321 = vmul.f32 %v179, %v1291
    %v1322 = vmul.f32 %v180, %v1291
    %v1323 = vmul.f32 %v181, %v1291
    %v1356 = vrot.slane %v1292, 1
    %v1357 = vrot.slane %v1293, 1
    %v1358 = vsel %vm485, %v1356, %v1357
    %v1359 = vrot.slane %v1294, 1
    %v1360 = vrot.slane %v1295, 1
    %v1361 = vsel %vm485, %v1359, %v1360
    %v1362 = vrot.slane %v1296, 1
    %v1363 = vrot.slane %v1297, 1
    %v1364 = vsel %vm485, %v1362, %v1363
    %v1365 = vrot.slane %v1298, 1
    %v1366 = vrot.slane %v1299, 1
    %v1367 = vsel %vm485, %v1365, %v1366
    %v1368 = vrot.slane %v1300, 1
    %v1369 = vrot.slane %v1301, 1
    %v1370 = vsel %vm485, %v1368, %v1369
    %v1371 = vrot.slane %v1302, 1
    %v1372 = vrot.slane %v1303, 1
    %v1373 = vsel %vm485, %v1371, %v1372
    %v1374 = vrot.slane %v1304, 1
    %v1375 = vrot.slane %v1305, 1
    %v1376 = vsel %vm485, %v1374, %v1375
    %v1377 = vrot.slane %v1306, 1
    %v1378 = vrot.slane %v1307, 1
    %v1379 = vsel %vm485, %v1377, %v1378
    %v1380 = vrot.slane %v1308, 1
    %v1381 = vrot.slane %v1309, 1
    %v1382 = vsel %vm485, %v1380, %v1381
    %v1383 = vrot.slane %v1310, 1
    %v1384 = vrot.slane %v1311, 1
    %v1385 = vsel %vm485, %v1383, %v1384
    %v1386 = vrot.slane %v1312, 1
    %v1387 = vrot.slane %v1313, 1
    %v1388 = vsel %vm485, %v1386, %v1387
    %v1389 = vrot.slane %v1314, 1
    %v1390 = vrot.slane %v1315, 1
    %v1391 = vsel %vm485, %v1389, %v1390
    %v1392 = vrot.slane %v1316, 1
    %v1393 = vrot.slane %v1317, 1
    %v1394 = vsel %vm485, %v1392, %v1393
    %v1395 = vrot.slane %v1318, 1
    %v1396 = vrot.slane %v1319, 1
    %v1397 = vsel %vm485, %v1395, %v1396
    %v1398 = vrot.slane %v1320, 1
    %v1399 = vrot.slane %v1321, 1
    %v1400 = vsel %vm485, %v1398, %v1399
    %v1401 = vrot.slane %v1322, 1
    %v1402 = vrot.slane %v1323, 1
    %v1403 = vsel %vm485, %v1401, %v1402
    %v1420 = vadd.f32 %v1275, %v1358
    %v1421 = vadd.f32 %v1276, %v1361
    %v1422 = vadd.f32 %v1277, %v1364
    %v1423 = vadd.f32 %v1278, %v1367
    %v1424 = vadd.f32 %v1279, %v1370
    %v1425 = vadd.f32 %v1280, %v1373
    %v1426 = vadd.f32 %v1281, %v1376
    %v1427 = vadd.f32 %v1282, %v1379
    %v1428 = vadd.f32 %v1283, %v1382
    %v1429 = vadd.f32 %v1284, %v1385
    %v1430 = vadd.f32 %v1285, %v1388
    %v1431 = vadd.f32 %v1286, %v1391
    %v1432 = vadd.f32 %v1287, %v1394
    %v1433 = vadd.f32 %v1288, %v1397
    %v1434 = vadd.f32 %v1289, %v1400
    %v1435 = vadd.f32 %v1290, %v1403
    %v1436 = vperm.slane %v182, 2
    %v1437 = vmul.f32 %v126, %v1436
    %v1438 = vmul.f32 %v127, %v1436
    %v1439 = vmul.f32 %v128, %v1436
    %v1440 = vmul.f32 %v129, %v1436
    %v1441 = vmul.f32 %v130, %v1436
    %v1442 = vmul.f32 %v131, %v1436
    %v1443 = vmul.f32 %v132, %v1436
    %v1444 = vmul.f32 %v133, %v1436
    %v1445 = vmul.f32 %v134, %v1436
    %v1446 = vmul.f32 %v135, %v1436
    %v1447 = vmul.f32 %v136, %v1436
    %v1448 = vmul.f32 %v137, %v1436
    %v1449 = vmul.f32 %v138, %v1436
    %v1450 = vmul.f32 %v139, %v1436
    %v1451 = vmul.f32 %v140, %v1436
    %v1452 = vmul.f32 %v141, %v1436
    %v1453 = vmul.f32 %v154, %v1436
    %v1454 = vmul.f32 %v155, %v1436
    %v1455 = vmul.f32 %v156, %v1436
    %v1456 = vmul.f32 %v157, %v1436
    %v1457 = vmul.f32 %v158, %v1436
    %v1458 = vmul.f32 %v159, %v1436
    %v1459 = vmul.f32 %v160, %v1436
    %v1460 = vmul.f32 %v161, %v1436
    %v1461 = vmul.f32 %v162, %v1436
    %v1462 = vmul.f32 %v163, %v1436
    %v1463 = vmul.f32 %v164, %v1436
    %v1464 = vmul.f32 %v165, %v1436
    %v1465 = vmul.f32 %v166, %v1436
    %v1466 = vmul.f32 %v167, %v1436
    %v1467 = vmul.f32 %v168, %v1436
    %v1468 = vmul.f32 %v169, %v1436
    %vm1501 = vcmask 1045504
    %v1502 = vrot.slane %v1437, 2
    %v1503 = vrot.slane %v1438, 2
    %v1504 = vsel %vm1501, %v1502, %v1503
    %v1505 = vrot.slane %v1439, 2
    %v1506 = vrot.slane %v1440, 2
    %v1507 = vsel %vm1501, %v1505, %v1506
    %v1508 = vrot.slane %v1441, 2
    %v1509 = vrot.slane %v1442, 2
    %v1510 = vsel %vm1501, %v1508, %v1509
    %v1511 = vrot.slane %v1443, 2
    %v1512 = vrot.slane %v1444, 2
    %v1513 = vsel %vm1501, %v1511, %v1512
    %v1514 = vrot.slane %v1445, 2
    %v1515 = vrot.slane %v1446, 2
    %v1516 = vsel %vm1501, %v1514, %v1515
    %v1517 = vrot.slane %v1447, 2
    %v1518 = vrot.slane %v1448, 2
    %v1519 = vsel %vm1501, %v1517, %v1518
    %v1520 = vrot.slane %v1449, 2
    %v1521 = vrot.slane %v1450, 2
    %v1522 = vsel %vm1501, %v1520, %v1521
    %v1523 = vrot.slane %v1451, 2
    %v1524 = vrot.slane %v1452, 2
    %v1525 = vsel %vm1501, %v1523, %v1524
    %v1526 = vrot.slane %v1453, 2
    %v1527 = vrot.slane %v1454, 2
    %v1528 = vsel %vm1501, %v1526, %v1527
    %v1529 = vrot.slane %v1455, 2
    %v1530 = vrot.slane %v1456, 2
    %v1531 = vsel %vm1501, %v1529, %v1530
    %v1532 = vrot.slane %v1457, 2
    %v1533 = vrot.slane %v1458, 2
    %v1534 = vsel %vm1501, %v1532, %v1533
    %v1535 = vrot.slane %v1459, 2
    %v1536 = vrot.slane %v1460, 2
    %v1537 = vsel %vm1501, %v1535, %v1536
    %v1538 = vrot.slane %v1461, 2
    %v1539 = vrot.slane %v1462, 2
    %v1540 = vsel %vm1501, %v1538, %v1539
    %v1541 = vrot.slane %v1463, 2
    %v1542 = vrot.slane %v1464, 2
    %v1543 = vsel %vm1501, %v1541, %v1542
    %v1544 = vrot.slane %v1465, 2
    %v1545 = vrot.slane %v1466, 2
    %v1546 = vsel %vm1501, %v1544, %v1545
    %v1547 = vrot.slane %v1467, 2
    %v1548 = vrot.slane %v1468, 2
    %v1549 = vsel %vm1501, %v1547, %v1548
    %v1566 = vadd.f32 %v1420, %v1504
    %v1567 = vadd.f32 %v1421, %v1507
    %v1568 = vadd.f32 %v1422, %v1510
    %v1569 = vadd.f32 %v1423, %v1513
    %v1570 = vadd.f32 %v1424, %v1516
    %v1571 = vadd.f32 %v1425, %v1519
    %v1572 = vadd.f32 %v1426, %v1522
    %v1573 = vadd.f32 %v1427, %v1525
    %v1574 = vadd.f32 %v1428, %v1528
    %v1575 = vadd.f32 %v1429, %v1531
    %v1576 = vadd.f32 %v1430, %v1534
    %v1577 = vadd.f32 %v1431, %v1537
    %v1578 = vadd.f32 %v1432, %v1540
    %v1579 = vadd.f32 %v1433, %v1543
    %v1580 = vadd.f32 %v1434, %v1546
    %v1581 = vadd.f32 %v1435, %v1549
    %v1582 = vperm.slane %v183, 1
    %v1583 = vmul.f32 %v128, %v1582
    %v1584 = vmul.f32 %v129, %v1582
    %v1585 = vmul.f32 %v130, %v1582
    %v1586 = vmul.f32 %v131, %v1582
    %v1587 = vmul.f32 %v132, %v1582
    %v1588 = vmul.f32 %v133, %v1582
    %v1589 = vmul.f32 %v134, %v1582
    %v1590 = vmul.f32 %v135, %v1582
    %v1591 = vmul.f32 %v136, %v1582
    %v1592 = vmul.f32 %v137, %v1582
    %v1593 = vmul.f32 %v138, %v1582
    %v1594 = vmul.f32 %v139, %v1582
    %v1595 = vmul.f32 %v140, %v1582
    %v1596 = vmul.f32 %v141, %v1582
    %v1597 = vmul.f32 %v142, %v1582
    %v1598 = vmul.f32 %v143, %v1582
    %v1599 = vmul.f32 %v156, %v1582
    %v1600 = vmul.f32 %v157, %v1582
    %v1601 = vmul.f32 %v158, %v1582
    %v1602 = vmul.f32 %v159, %v1582
    %v1603 = vmul.f32 %v160, %v1582
    %v1604 = vmul.f32 %v161, %v1582
    %v1605 = vmul.f32 %v162, %v1582
    %v1606 = vmul.f32 %v163, %v1582
    %v1607 = vmul.f32 %v164, %v1582
    %v1608 = vmul.f32 %v165, %v1582
    %v1609 = vmul.f32 %v166, %v1582
    %v1610 = vmul.f32 %v167, %v1582
    %v1611 = vmul.f32 %v168, %v1582
    %v1612 = vmul.f32 %v169, %v1582
    %v1613 = vmul.f32 %v170, %v1582
    %v1614 = vmul.f32 %v171, %v1582
    %v1647 = vrot.slane %v1583, 2
    %v1648 = vrot.slane %v1584, 2
    %v1649 = vsel %vm1501, %v1647, %v1648
    %v1650 = vrot.slane %v1585, 2
    %v1651 = vrot.slane %v1586, 2
    %v1652 = vsel %vm1501, %v1650, %v1651
    %v1653 = vrot.slane %v1587, 2
    %v1654 = vrot.slane %v1588, 2
    %v1655 = vsel %vm1501, %v1653, %v1654
    %v1656 = vrot.slane %v1589, 2
    %v1657 = vrot.slane %v1590, 2
    %v1658 = vsel %vm1501, %v1656, %v1657
    %v1659 = vrot.slane %v1591, 2
    %v1660 = vrot.slane %v1592, 2
    %v1661 = vsel %vm1501, %v1659, %v1660
    %v1662 = vrot.slane %v1593, 2
    %v1663 = vrot.slane %v1594, 2
    %v1664 = vsel %vm1501, %v1662, %v1663
    %v1665 = vrot.slane %v1595, 2
    %v1666 = vrot.slane %v1596, 2
    %v1667 = vsel %vm1501, %v1665, %v1666
    %v1668 = vrot.slane %v1597, 2
    %v1669 = vrot.slane %v1598, 2
    %v1670 = vsel %vm1501, %v1668, %v1669
    %v1671 = vrot.slane %v1599, 2
    %v1672 = vrot.slane %v1600, 2
    %v1673 = vsel %vm1501, %v1671, %v1672
    %v1674 = vrot.slane %v1601, 2
    %v1675 = vrot.slane %v1602, 2
    %v1676 = vsel %vm1501, %v1674, %v1675
    %v1677 = vrot.slane %v1603, 2
    %v1678 = vrot.slane %v1604, 2
    %v1679 = vsel %vm1501, %v1677, %v1678
    %v1680 = vrot.slane %v1605, 2
    %v1681 = vrot.slane %v1606, 2
    %v1682 = vsel %vm1501, %v1680, %v1681
    %v1683 = vrot.slane %v1607, 2
    %v1684 = vrot.slane %v1608, 2
    %v1685 = vsel %vm1501, %v1683, %v1684
    %v1686 = vrot.slane %v1609, 2
    %v1687 = vrot.slane %v1610, 2
    %v1688 = vsel %vm1501, %v1686, %v1687
    %v1689 = vrot.slane %v1611, 2
    %v1690 = vrot.slane %v1612, 2
    %v1691 = vsel %vm1501, %v1689, %v1690
    %v1692 = vrot.slane %v1613, 2
    %v1693 = vrot.slane %v1614, 2
    %v1694 = vsel %vm1501, %v1692, %v1693
    %v1711 = vadd.f32 %v1566, %v1649
    %v1712 = vadd.f32 %v1567, %v1652
    %v1713 = vadd.f32 %v1568, %v1655
    %v1714 = vadd.f32 %v1569, %v1658
    %v1715 = vadd.f32 %v1570, %v1661
    %v1716 = vadd.f32 %v1571, %v1664
    %v1717 = vadd.f32 %v1572, %v1667
    %v1718 = vadd.f32 %v1573, %v1670
    %v1719 = vadd.f32 %v1574, %v1673
    %v1720 = vadd.f32 %v1575, %v1676
    %v1721 = vadd.f32 %v1576, %v1679
    %v1722 = vadd.f32 %v1577, %v1682
    %v1723 = vadd.f32 %v1578, %v1685
    %v1724 = vadd.f32 %v1579, %v1688
    %v1725 = vadd.f32 %v1580, %v1691
    %v1726 = vadd.f32 %v1581, %v1694
    %v1727 = vperm.slane %v184, 0
    %v1728 = vmul.f32 %v130, %v1727
    %v1729 = vmul.f32 %v131, %v1727
    %v1730 = vmul.f32 %v132, %v1727
    %v1731 = vmul.f32 %v133, %v1727
    %v1732 = vmul.f32 %v134, %v1727
    %v1733 = vmul.f32 %v135, %v1727
    %v1734 = vmul.f32 %v136, %v1727
    %v1735 = vmul.f32 %v137, %v1727
    %v1736 = vmul.f32 %v138, %v1727
    %v1737 = vmul.f32 %v139, %v1727
    %v1738 = vmul.f32 %v140, %v1727
    %v1739 = vmul.f32 %v141, %v1727
    %v1740 = vmul.f32 %v142, %v1727
    %v1741 = vmul.f32 %v143, %v1727
    %v1742 = vmul.f32 %v144, %v1727
    %v1743 = vmul.f32 %v145, %v1727
    %v1744 = vmul.f32 %v158, %v1727
    %v1745 = vmul.f32 %v159, %v1727
    %v1746 = vmul.f32 %v160, %v1727
    %v1747 = vmul.f32 %v161, %v1727
    %v1748 = vmul.f32 %v162, %v1727
    %v1749 = vmul.f32 %v163, %v1727
    %v1750 = vmul.f32 %v164, %v1727
    %v1751 = vmul.f32 %v165, %v1727
    %v1752 = vmul.f32 %v166, %v1727
    %v1753 = vmul.f32 %v167, %v1727
    %v1754 = vmul.f32 %v168, %v1727
    %v1755 = vmul.f32 %v169, %v1727
    %v1756 = vmul.f32 %v170, %v1727
    %v1757 = vmul.f32 %v171, %v1727
    %v1758 = vmul.f32 %v172, %v1727
    %v1759 = vmul.f32 %v173, %v1727
    %v1792 = vrot.slane %v1728, 2
    %v1793 = vrot.slane %v1729, 2
    %v1794 = vsel %vm1501, %v1792, %v1793
    %v1795 = vrot.slane %v1730, 2
    %v1796 = vrot.slane %v1731, 2
    %v1797 = vsel %vm1501, %v1795, %v1796
    %v1798 = vrot.slane %v1732, 2
    %v1799 = vrot.slane %v1733, 2
    %v1800 = vsel %vm1501, %v1798, %v1799
    %v1801 = vrot.slane %v1734, 2
    %v1802 = vrot.slane %v1735, 2
    %v1803 = vsel %vm1501, %v1801, %v1802
    %v1804 = vrot.slane %v1736, 2
    %v1805 = vrot.slane %v1737, 2
    %v1806 = vsel %vm1501, %v1804, %v1805
    %v1807 = vrot.slane %v1738, 2
    %v1808 = vrot.slane %v1739, 2
    %v1809 = vsel %vm1501, %v1807, %v1808
    %v1810 = vrot.slane %v1740, 2
    %v1811 = vrot.slane %v1741, 2
    %v1812 = vsel %vm1501, %v1810, %v1811
    %v1813 = vrot.slane %v1742, 2
    %v1814 = vrot.slane %v1743, 2
    %v1815 = vsel %vm1501, %v1813, %v1814
    %v1816 = vrot.slane %v1744, 2
    %v1817 = vrot.slane %v1745, 2
    %v1818 = vsel %vm1501, %v1816, %v1817
    %v1819 = vrot.slane %v1746, 2
    %v1820 = vrot.slane %v1747, 2
    %v1821 = vsel %vm1501, %v1819, %v1820
    %v1822 = vrot.slane %v1748, 2
    %v1823 = vrot.slane %v1749, 2
    %v1824 = vsel %vm1501, %v1822, %v1823
    %v1825 = vrot.slane %v1750, 2
    %v1826 = vrot.slane %v1751, 2
    %v1827 = vsel %vm1501, %v1825, %v1826
    %v1828 = vrot.slane %v1752, 2
    %v1829 = vrot.slane %v1753, 2
    %v1830 = vsel %vm1501, %v1828, %v1829
    %v1831 = vrot.slane %v1754, 2
    %v1832 = vrot.slane %v1755, 2
    %v1833 = vsel %vm1501, %v1831, %v1832
    %v1834 = vrot.slane %v1756, 2
    %v1835 = vrot.slane %v1757, 2
    %v1836 = vsel %vm1501, %v1834, %v1835
    %v1837 = vrot.slane %v1758, 2
    %v1838 = vrot.slane %v1759, 2
    %v1839 = vsel %vm1501, %v1837, %v1838
    %v1856 = vadd.f32 %v1711, %v1794
    %v1857 = vadd.f32 %v1712, %v1797
    %v1858 = vadd.f32 %v1713, %v1800
    %v1859 = vadd.f32 %v1714, %v1803
    %v1860 = vadd.f32 %v1715, %v1806
    %v1861 = vadd.f32 %v1716, %v1809
    %v1862 = vadd.f32 %v1717, %v1812
    %v1863 = vadd.f32 %v1718, %v1815
    %v1864 = vadd.f32 %v1719, %v1818
    %v1865 = vadd.f32 %v1720, %v1821
    %v1866 = vadd.f32 %v1721, %v1824
    %v1867 = vadd.f32 %v1722, %v1827
    %v1868 = vadd.f32 %v1723, %v1830
    %v1869 = vadd.f32 %v1724, %v1833
    %v1870 = vadd.f32 %v1725, %v1836
    %v1871 = vadd.f32 %v1726, %v1839
    %v1872 = vperm.slane %v184, 7
    %v1873 = vmul.f32 %v132, %v1872
    %v1874 = vmul.f32 %v133, %v1872
    %v1875 = vmul.f32 %v134, %v1872
    %v1876 = vmul.f32 %v135, %v1872
    %v1877 = vmul.f32 %v136, %v1872
    %v1878 = vmul.f32 %v137, %v1872
    %v1879 = vmul.f32 %v138, %v1872
    %v1880 = vmul.f32 %v139, %v1872
    %v1881 = vmul.f32 %v140, %v1872
    %v1882 = vmul.f32 %v141, %v1872
    %v1883 = vmul.f32 %v142, %v1872
    %v1884 = vmul.f32 %v143, %v1872
    %v1885 = vmul.f32 %v144, %v1872
    %v1886 = vmul.f32 %v145, %v1872
    %v1887 = vmul.f32 %v146, %v1872
    %v1888 = vmul.f32 %v147, %v1872
    %v1889 = vmul.f32 %v160, %v1872
    %v1890 = vmul.f32 %v161, %v1872
    %v1891 = vmul.f32 %v162, %v1872
    %v1892 = vmul.f32 %v163, %v1872
    %v1893 = vmul.f32 %v164, %v1872
    %v1894 = vmul.f32 %v165, %v1872
    %v1895 = vmul.f32 %v166, %v1872
    %v1896 = vmul.f32 %v167, %v1872
    %v1897 = vmul.f32 %v168, %v1872
    %v1898 = vmul.f32 %v169, %v1872
    %v1899 = vmul.f32 %v170, %v1872
    %v1900 = vmul.f32 %v171, %v1872
    %v1901 = vmul.f32 %v172, %v1872
    %v1902 = vmul.f32 %v173, %v1872
    %v1903 = vmul.f32 %v174, %v1872
    %v1904 = vmul.f32 %v175, %v1872
    %v1937 = vrot.slane %v1873, 2
    %v1938 = vrot.slane %v1874, 2
    %v1939 = vsel %vm1501, %v1937, %v1938
    %v1940 = vrot.slane %v1875, 2
    %v1941 = vrot.slane %v1876, 2
    %v1942 = vsel %vm1501, %v1940, %v1941
    %v1943 = vrot.slane %v1877, 2
    %v1944 = vrot.slane %v1878, 2
    %v1945 = vsel %vm1501, %v1943, %v1944
    %v1946 = vrot.slane %v1879, 2
    %v1947 = vrot.slane %v1880, 2
    %v1948 = vsel %vm1501, %v1946, %v1947
    %v1949 = vrot.slane %v1881, 2
    %v1950 = vrot.slane %v1882, 2
    %v1951 = vsel %vm1501, %v1949, %v1950
    %v1952 = vrot.slane %v1883, 2
    %v1953 = vrot.slane %v1884, 2
    %v1954 = vsel %vm1501, %v1952, %v1953
    %v1955 = vrot.slane %v1885, 2
    %v1956 = vrot.slane %v1886, 2
    %v1957 = vsel %vm1501, %v1955, %v1956
    %v1958 = vrot.slane %v1887, 2
    %v1959 = vrot.slane %v1888, 2
    %v1960 = vsel %vm1501, %v1958, %v1959
    %v1961 = vrot.slane %v1889, 2
    %v1962 = vrot.slane %v1890, 2
    %v1963 = vsel %vm1501, %v1961, %v1962
    %v1964 = vrot.slane %v1891, 2
    %v1965 = vrot.slane %v1892, 2
    %v1966 = vsel %vm1501, %v1964, %v1965
    %v1967 = vrot.slane %v1893, 2
    %v1968 = vrot.slane %v1894, 2
    %v1969 = vsel %vm1501, %v1967, %v1968
    %v1970 = vrot.slane %v1895, 2
    %v1971 = vrot.slane %v1896, 2
    %v1972 = vsel %vm1501, %v1970, %v1971
    %v1973 = vrot.slane %v1897, 2
    %v1974 = vrot.slane %v1898, 2
    %v1975 = vsel %vm1501, %v1973, %v1974
    %v1976 = vrot.slane %v1899, 2
    %v1977 = vrot.slane %v1900, 2
    %v1978 = vsel %vm1501, %v1976, %v1977
    %v1979 = vrot.slane %v1901, 2
    %v1980 = vrot.slane %v1902, 2
    %v1981 = vsel %vm1501, %v1979, %v1980
    %v1982 = vrot.slane %v1903, 2
    %v1983 = vrot.slane %v1904, 2
    %v1984 = vsel %vm1501, %v1982, %v1983
    %v2001 = vadd.f32 %v1856, %v1939
    %v2002 = vadd.f32 %v1857, %v1942
    %v2003 = vadd.f32 %v1858, %v1945
    %v2004 = vadd.f32 %v1859, %v1948
    %v2005 = vadd.f32 %v1860, %v1951
    %v2006 = vadd.f32 %v1861, %v1954
    %v2007 = vadd.f32 %v1862, %v1957
    %v2008 = vadd.f32 %v1863, %v1960
    %v2009 = vadd.f32 %v1864, %v1963
    %v2010 = vadd.f32 %v1865, %v1966
    %v2011 = vadd.f32 %v1866, %v1969
    %v2012 = vadd.f32 %v1867, %v1972
    %v2013 = vadd.f32 %v1868, %v1975
    %v2014 = vadd.f32 %v1869, %v1978
    %v2015 = vadd.f32 %v1870, %v1981
    %v2016 = vadd.f32 %v1871, %v1984
    %v2017 = vperm.slane %v185, 6
    %v2018 = vmul.f32 %v134, %v2017
    %v2019 = vmul.f32 %v135, %v2017
    %v2020 = vmul.f32 %v136, %v2017
    %v2021 = vmul.f32 %v137, %v2017
    %v2022 = vmul.f32 %v138, %v2017
    %v2023 = vmul.f32 %v139, %v2017
    %v2024 = vmul.f32 %v140, %v2017
    %v2025 = vmul.f32 %v141, %v2017
    %v2026 = vmul.f32 %v142, %v2017
    %v2027 = vmul.f32 %v143, %v2017
    %v2028 = vmul.f32 %v144, %v2017
    %v2029 = vmul.f32 %v145, %v2017
    %v2030 = vmul.f32 %v146, %v2017
    %v2031 = vmul.f32 %v147, %v2017
    %v2032 = vmul.f32 %v148, %v2017
    %v2033 = vmul.f32 %v149, %v2017
    %v2034 = vmul.f32 %v162, %v2017
    %v2035 = vmul.f32 %v163, %v2017
    %v2036 = vmul.f32 %v164, %v2017
    %v2037 = vmul.f32 %v165, %v2017
    %v2038 = vmul.f32 %v166, %v2017
    %v2039 = vmul.f32 %v167, %v2017
    %v2040 = vmul.f32 %v168, %v2017
    %v2041 = vmul.f32 %v169, %v2017
    %v2042 = vmul.f32 %v170, %v2017
    %v2043 = vmul.f32 %v171, %v2017
    %v2044 = vmul.f32 %v172, %v2017
    %v2045 = vmul.f32 %v173, %v2017
    %v2046 = vmul.f32 %v174, %v2017
    %v2047 = vmul.f32 %v175, %v2017
    %v2048 = vmul.f32 %v176, %v2017
    %v2049 = vmul.f32 %v177, %v2017
    %v2082 = vrot.slane %v2018, 2
    %v2083 = vrot.slane %v2019, 2
    %v2084 = vsel %vm1501, %v2082, %v2083
    %v2085 = vrot.slane %v2020, 2
    %v2086 = vrot.slane %v2021, 2
    %v2087 = vsel %vm1501, %v2085, %v2086
    %v2088 = vrot.slane %v2022, 2
    %v2089 = vrot.slane %v2023, 2
    %v2090 = vsel %vm1501, %v2088, %v2089
    %v2091 = vrot.slane %v2024, 2
    %v2092 = vrot.slane %v2025, 2
    %v2093 = vsel %vm1501, %v2091, %v2092
    %v2094 = vrot.slane %v2026, 2
    %v2095 = vrot.slane %v2027, 2
    %v2096 = vsel %vm1501, %v2094, %v2095
    %v2097 = vrot.slane %v2028, 2
    %v2098 = vrot.slane %v2029, 2
    %v2099 = vsel %vm1501, %v2097, %v2098
    %v2100 = vrot.slane %v2030, 2
    %v2101 = vrot.slane %v2031, 2
    %v2102 = vsel %vm1501, %v2100, %v2101
    %v2103 = vrot.slane %v2032, 2
    %v2104 = vrot.slane %v2033, 2
    %v2105 = vsel %vm1501, %v2103, %v2104
    %v2106 = vrot.slane %v2034, 2
    %v2107 = vrot.slane %v2035, 2
    %v2108 = vsel %vm1501, %v2106, %v2107
    %v2109 = vrot.slane %v2036, 2
    %v2110 = vrot.slane %v2037, 2
    %v2111 = vsel %vm1501, %v2109, %v2110
    %v2112 = vrot.slane %v2038, 2
    %v2113 = vrot.slane %v2039, 2
    %v2114 = vsel %vm1501, %v2112, %v2113
    %v2115 = vrot.slane %v2040, 2
    %v2116 = vrot.slane %v2041, 2
    %v2117 = vsel %vm1501, %v2115, %v2116
    %v2118 = vrot.slane %v2042, 2
    %v2119 = vrot.slane %v2043, 2
    %v2120 = vsel %vm1501, %v2118, %v2119
    %v2121 = vrot.slane %v2044, 2
    %v2122 = vrot.slane %v2045, 2
    %v2123 = vsel %vm1501, %v2121, %v2122
    %v2124 = vrot.slane %v2046, 2
    %v2125 = vrot.slane %v2047, 2
    %v2126 = vsel %vm1501, %v2124, %v2125
    %v2127 = vrot.slane %v2048, 2
    %v2128 = vrot.slane %v2049, 2
    %v2129 = vsel %vm1501, %v2127, %v2128
    %v2146 = vadd.f32 %v2001, %v2084
    %v2147 = vadd.f32 %v2002, %v2087
    %v2148 = vadd.f32 %v2003, %v2090
    %v2149 = vadd.f32 %v2004, %v2093
    %v2150 = vadd.f32 %v2005, %v2096
    %v2151 = vadd.f32 %v2006, %v2099
    %v2152 = vadd.f32 %v2007, %v2102
    %v2153 = vadd.f32 %v2008, %v2105
    %v2154 = vadd.f32 %v2009, %v2108
    %v2155 = vadd.f32 %v2010, %v2111
    %v2156 = vadd.f32 %v2011, %v2114
    %v2157 = vadd.f32 %v2012, %v2117
    %v2158 = vadd.f32 %v2013, %v2120
    %v2159 = vadd.f32 %v2014, %v2123
    %v2160 = vadd.f32 %v2015, %v2126
    %v2161 = vadd.f32 %v2016, %v2129
    %v2162 = vperm.slane %v186, 5
    %v2163 = vmul.f32 %v136, %v2162
    %v2164 = vmul.f32 %v137, %v2162
    %v2165 = vmul.f32 %v138, %v2162
    %v2166 = vmul.f32 %v139, %v2162
    %v2167 = vmul.f32 %v140, %v2162
    %v2168 = vmul.f32 %v141, %v2162
    %v2169 = vmul.f32 %v142, %v2162
    %v2170 = vmul.f32 %v143, %v2162
    %v2171 = vmul.f32 %v144, %v2162
    %v2172 = vmul.f32 %v145, %v2162
    %v2173 = vmul.f32 %v146, %v2162
    %v2174 = vmul.f32 %v147, %v2162
    %v2175 = vmul.f32 %v148, %v2162
    %v2176 = vmul.f32 %v149, %v2162
    %v2177 = vmul.f32 %v150, %v2162
    %v2178 = vmul.f32 %v151, %v2162
    %v2179 = vmul.f32 %v164, %v2162
    %v2180 = vmul.f32 %v165, %v2162
    %v2181 = vmul.f32 %v166, %v2162
    %v2182 = vmul.f32 %v167, %v2162
    %v2183 = vmul.f32 %v168, %v2162
    %v2184 = vmul.f32 %v169, %v2162
    %v2185 = vmul.f32 %v170, %v2162
    %v2186 = vmul.f32 %v171, %v2162
    %v2187 = vmul.f32 %v172, %v2162
    %v2188 = vmul.f32 %v173, %v2162
    %v2189 = vmul.f32 %v174, %v2162
    %v2190 = vmul.f32 %v175, %v2162
    %v2191 = vmul.f32 %v176, %v2162
    %v2192 = vmul.f32 %v177, %v2162
    %v2193 = vmul.f32 %v178, %v2162
    %v2194 = vmul.f32 %v179, %v2162
    %v2227 = vrot.slane %v2163, 2
    %v2228 = vrot.slane %v2164, 2
    %v2229 = vsel %vm1501, %v2227, %v2228
    %v2230 = vrot.slane %v2165, 2
    %v2231 = vrot.slane %v2166, 2
    %v2232 = vsel %vm1501, %v2230, %v2231
    %v2233 = vrot.slane %v2167, 2
    %v2234 = vrot.slane %v2168, 2
    %v2235 = vsel %vm1501, %v2233, %v2234
    %v2236 = vrot.slane %v2169, 2
    %v2237 = vrot.slane %v2170, 2
    %v2238 = vsel %vm1501, %v2236, %v2237
    %v2239 = vrot.slane %v2171, 2
    %v2240 = vrot.slane %v2172, 2
    %v2241 = vsel %vm1501, %v2239, %v2240
    %v2242 = vrot.slane %v2173, 2
    %v2243 = vrot.slane %v2174, 2
    %v2244 = vsel %vm1501, %v2242, %v2243
    %v2245 = vrot.slane %v2175, 2
    %v2246 = vrot.slane %v2176, 2
    %v2247 = vsel %vm1501, %v2245, %v2246
    %v2248 = vrot.slane %v2177, 2
    %v2249 = vrot.slane %v2178, 2
    %v2250 = vsel %vm1501, %v2248, %v2249
    %v2251 = vrot.slane %v2179, 2
    %v2252 = vrot.slane %v2180, 2
    %v2253 = vsel %vm1501, %v2251, %v2252
    %v2254 = vrot.slane %v2181, 2
    %v2255 = vrot.slane %v2182, 2
    %v2256 = vsel %vm1501, %v2254, %v2255
    %v2257 = vrot.slane %v2183, 2
    %v2258 = vrot.slane %v2184, 2
    %v2259 = vsel %vm1501, %v2257, %v2258
    %v2260 = vrot.slane %v2185, 2
    %v2261 = vrot.slane %v2186, 2
    %v2262 = vsel %vm1501, %v2260, %v2261
    %v2263 = vrot.slane %v2187, 2
    %v2264 = vrot.slane %v2188, 2
    %v2265 = vsel %vm1501, %v2263, %v2264
    %v2266 = vrot.slane %v2189, 2
    %v2267 = vrot.slane %v2190, 2
    %v2268 = vsel %vm1501, %v2266, %v2267
    %v2269 = vrot.slane %v2191, 2
    %v2270 = vrot.slane %v2192, 2
    %v2271 = vsel %vm1501, %v2269, %v2270
    %v2272 = vrot.slane %v2193, 2
    %v2273 = vrot.slane %v2194, 2
    %v2274 = vsel %vm1501, %v2272, %v2273
    %v2291 = vadd.f32 %v2146, %v2229
    %v2292 = vadd.f32 %v2147, %v2232
    %v2293 = vadd.f32 %v2148, %v2235
    %v2294 = vadd.f32 %v2149, %v2238
    %v2295 = vadd.f32 %v2150, %v2241
    %v2296 = vadd.f32 %v2151, %v2244
    %v2297 = vadd.f32 %v2152, %v2247
    %v2298 = vadd.f32 %v2153, %v2250
    %v2299 = vadd.f32 %v2154, %v2253
    %v2300 = vadd.f32 %v2155, %v2256
    %v2301 = vadd.f32 %v2156, %v2259
    %v2302 = vadd.f32 %v2157, %v2262
    %v2303 = vadd.f32 %v2158, %v2265
    %v2304 = vadd.f32 %v2159, %v2268
    %v2305 = vadd.f32 %v2160, %v2271
    %v2306 = vadd.f32 %v2161, %v2274
    %v2307 = vperm.slane %v187, 4
    %v2308 = vmul.f32 %v138, %v2307
    %v2309 = vmul.f32 %v139, %v2307
    %v2310 = vmul.f32 %v140, %v2307
    %v2311 = vmul.f32 %v141, %v2307
    %v2312 = vmul.f32 %v142, %v2307
    %v2313 = vmul.f32 %v143, %v2307
    %v2314 = vmul.f32 %v144, %v2307
    %v2315 = vmul.f32 %v145, %v2307
    %v2316 = vmul.f32 %v146, %v2307
    %v2317 = vmul.f32 %v147, %v2307
    %v2318 = vmul.f32 %v148, %v2307
    %v2319 = vmul.f32 %v149, %v2307
    %v2320 = vmul.f32 %v150, %v2307
    %v2321 = vmul.f32 %v151, %v2307
    %v2322 = vmul.f32 %v152, %v2307
    %v2323 = vmul.f32 %v153, %v2307
    %v2324 = vmul.f32 %v166, %v2307
    %v2325 = vmul.f32 %v167, %v2307
    %v2326 = vmul.f32 %v168, %v2307
    %v2327 = vmul.f32 %v169, %v2307
    %v2328 = vmul.f32 %v170, %v2307
    %v2329 = vmul.f32 %v171, %v2307
    %v2330 = vmul.f32 %v172, %v2307
    %v2331 = vmul.f32 %v173, %v2307
    %v2332 = vmul.f32 %v174, %v2307
    %v2333 = vmul.f32 %v175, %v2307
    %v2334 = vmul.f32 %v176, %v2307
    %v2335 = vmul.f32 %v177, %v2307
    %v2336 = vmul.f32 %v178, %v2307
    %v2337 = vmul.f32 %v179, %v2307
    %v2338 = vmul.f32 %v180, %v2307
    %v2339 = vmul.f32 %v181, %v2307
    %v2372 = vrot.slane %v2308, 2
    %v2373 = vrot.slane %v2309, 2
    %v2374 = vsel %vm1501, %v2372, %v2373
    %v2375 = vrot.slane %v2310, 2
    %v2376 = vrot.slane %v2311, 2
    %v2377 = vsel %vm1501, %v2375, %v2376
    %v2378 = vrot.slane %v2312, 2
    %v2379 = vrot.slane %v2313, 2
    %v2380 = vsel %vm1501, %v2378, %v2379
    %v2381 = vrot.slane %v2314, 2
    %v2382 = vrot.slane %v2315, 2
    %v2383 = vsel %vm1501, %v2381, %v2382
    %v2384 = vrot.slane %v2316, 2
    %v2385 = vrot.slane %v2317, 2
    %v2386 = vsel %vm1501, %v2384, %v2385
    %v2387 = vrot.slane %v2318, 2
    %v2388 = vrot.slane %v2319, 2
    %v2389 = vsel %vm1501, %v2387, %v2388
    %v2390 = vrot.slane %v2320, 2
    %v2391 = vrot.slane %v2321, 2
    %v2392 = vsel %vm1501, %v2390, %v2391
    %v2393 = vrot.slane %v2322, 2
    %v2394 = vrot.slane %v2323, 2
    %v2395 = vsel %vm1501, %v2393, %v2394
    %v2396 = vrot.slane %v2324, 2
    %v2397 = vrot.slane %v2325, 2
    %v2398 = vsel %vm1501, %v2396, %v2397
    %v2399 = vrot.slane %v2326, 2
    %v2400 = vrot.slane %v2327, 2
    %v2401 = vsel %vm1501, %v2399, %v2400
    %v2402 = vrot.slane %v2328, 2
    %v2403 = vrot.slane %v2329, 2
    %v2404 = vsel %vm1501, %v2402, %v2403
    %v2405 = vrot.slane %v2330, 2
    %v2406 = vrot.slane %v2331, 2
    %v2407 = vsel %vm1501, %v2405, %v2406
    %v2408 = vrot.slane %v2332, 2
    %v2409 = vrot.slane %v2333, 2
    %v2410 = vsel %vm1501, %v2408, %v2409
    %v2411 = vrot.slane %v2334, 2
    %v2412 = vrot.slane %v2335, 2
    %v2413 = vsel %vm1501, %v2411, %v2412
    %v2414 = vrot.slane %v2336, 2
    %v2415 = vrot.slane %v2337, 2
    %v2416 = vsel %vm1501, %v2414, %v2415
    %v2417 = vrot.slane %v2338, 2
    %v2418 = vrot.slane %v2339, 2
    %v2419 = vsel %vm1501, %v2417, %v2418
    %v2436 = vadd.f32 %v2291, %v2374
    %v2437 = vadd.f32 %v2292, %v2377
    %v2438 = vadd.f32 %v2293, %v2380
    %v2439 = vadd.f32 %v2294, %v2383
    %v2440 = vadd.f32 %v2295, %v2386
    %v2441 = vadd.f32 %v2296, %v2389
    %v2442 = vadd.f32 %v2297, %v2392
    %v2443 = vadd.f32 %v2298, %v2395
    %v2444 = vadd.f32 %v2299, %v2398
    %v2445 = vadd.f32 %v2300, %v2401
    %v2446 = vadd.f32 %v2301, %v2404
    %v2447 = vadd.f32 %v2302, %v2407
    %v2448 = vadd.f32 %v2303, %v2410
    %v2449 = vadd.f32 %v2304, %v2413
    %v2450 = vadd.f32 %v2305, %v2416
    %v2451 = vadd.f32 %v2306, %v2419
    %v2452 = vperm.slane %v182, 3
    %v2453 = vmul.f32 %v126, %v2452
    %v2454 = vmul.f32 %v127, %v2452
    %v2455 = vmul.f32 %v128, %v2452
    %v2456 = vmul.f32 %v129, %v2452
    %v2457 = vmul.f32 %v130, %v2452
    %v2458 = vmul.f32 %v131, %v2452
    %v2459 = vmul.f32 %v132, %v2452
    %v2460 = vmul.f32 %v133, %v2452
    %v2461 = vmul.f32 %v134, %v2452
    %v2462 = vmul.f32 %v135, %v2452
    %v2463 = vmul.f32 %v136, %v2452
    %v2464 = vmul.f32 %v137, %v2452
    %v2465 = vmul.f32 %v138, %v2452
    %v2466 = vmul.f32 %v139, %v2452
    %v2467 = vmul.f32 %v140, %v2452
    %v2468 = vmul.f32 %v141, %v2452
    %v2469 = vmul.f32 %v154, %v2452
    %v2470 = vmul.f32 %v155, %v2452
    %v2471 = vmul.f32 %v156, %v2452
    %v2472 = vmul.f32 %v157, %v2452
    %v2473 = vmul.f32 %v158, %v2452
    %v2474 = vmul.f32 %v159, %v2452
    %v2475 = vmul.f32 %v160, %v2452
    %v2476 = vmul.f32 %v161, %v2452
    %v2477 = vmul.f32 %v162, %v2452
    %v2478 = vmul.f32 %v163, %v2452
    %v2479 = vmul.f32 %v164, %v2452
    %v2480 = vmul.f32 %v165, %v2452
    %v2481 = vmul.f32 %v166, %v2452
    %v2482 = vmul.f32 %v167, %v2452
    %v2483 = vmul.f32 %v168, %v2452
    %v2484 = vmul.f32 %v169, %v2452
    %vm2517 = vcmask 1044480
    %v2518 = vrot.slane %v2453, 3
    %v2519 = vrot.slane %v2454, 3
    %v2520 = vsel %vm2517, %v2518, %v2519
    %v2521 = vrot.slane %v2455, 3
    %v2522 = vrot.slane %v2456, 3
    %v2523 = vsel %vm2517, %v2521, %v2522
    %v2524 = vrot.slane %v2457, 3
    %v2525 = vrot.slane %v2458, 3
    %v2526 = vsel %vm2517, %v2524, %v2525
    %v2527 = vrot.slane %v2459, 3
    %v2528 = vrot.slane %v2460, 3
    %v2529 = vsel %vm2517, %v2527, %v2528
    %v2530 = vrot.slane %v2461, 3
    %v2531 = vrot.slane %v2462, 3
    %v2532 = vsel %vm2517, %v2530, %v2531
    %v2533 = vrot.slane %v2463, 3
    %v2534 = vrot.slane %v2464, 3
    %v2535 = vsel %vm2517, %v2533, %v2534
    %v2536 = vrot.slane %v2465, 3
    %v2537 = vrot.slane %v2466, 3
    %v2538 = vsel %vm2517, %v2536, %v2537
    %v2539 = vrot.slane %v2467, 3
    %v2540 = vrot.slane %v2468, 3
    %v2541 = vsel %vm2517, %v2539, %v2540
    %v2542 = vrot.slane %v2469, 3
    %v2543 = vrot.slane %v2470, 3
    %v2544 = vsel %vm2517, %v2542, %v2543
    %v2545 = vrot.slane %v2471, 3
    %v2546 = vrot.slane %v2472, 3
    %v2547 = vsel %vm2517, %v2545, %v2546
    %v2548 = vrot.slane %v2473, 3
    %v2549 = vrot.slane %v2474, 3
    %v2550 = vsel %vm2517, %v2548, %v2549
    %v2551 = vrot.slane %v2475, 3
    %v2552 = vrot.slane %v2476, 3
    %v2553 = vsel %vm2517, %v2551, %v2552
    %v2554 = vrot.slane %v2477, 3
    %v2555 = vrot.slane %v2478, 3
    %v2556 = vsel %vm2517, %v2554, %v2555
    %v2557 = vrot.slane %v2479, 3
    %v2558 = vrot.slane %v2480, 3
    %v2559 = vsel %vm2517, %v2557, %v2558
    %v2560 = vrot.slane %v2481, 3
    %v2561 = vrot.slane %v2482, 3
    %v2562 = vsel %vm2517, %v2560, %v2561
    %v2563 = vrot.slane %v2483, 3
    %v2564 = vrot.slane %v2484, 3
    %v2565 = vsel %vm2517, %v2563, %v2564
    %v2582 = vadd.f32 %v2436, %v2520
    %v2583 = vadd.f32 %v2437, %v2523
    %v2584 = vadd.f32 %v2438, %v2526
    %v2585 = vadd.f32 %v2439, %v2529
    %v2586 = vadd.f32 %v2440, %v2532
    %v2587 = vadd.f32 %v2441, %v2535
    %v2588 = vadd.f32 %v2442, %v2538
    %v2589 = vadd.f32 %v2443, %v2541
    %v2590 = vadd.f32 %v2444, %v2544
    %v2591 = vadd.f32 %v2445, %v2547
    %v2592 = vadd.f32 %v2446, %v2550
    %v2593 = vadd.f32 %v2447, %v2553
    %v2594 = vadd.f32 %v2448, %v2556
    %v2595 = vadd.f32 %v2449, %v2559
    %v2596 = vadd.f32 %v2450, %v2562
    %v2597 = vadd.f32 %v2451, %v2565
    %v2598 = vperm.slane %v183, 2
    %v2599 = vmul.f32 %v128, %v2598
    %v2600 = vmul.f32 %v129, %v2598
    %v2601 = vmul.f32 %v130, %v2598
    %v2602 = vmul.f32 %v131, %v2598
    %v2603 = vmul.f32 %v132, %v2598
    %v2604 = vmul.f32 %v133, %v2598
    %v2605 = vmul.f32 %v134, %v2598
    %v2606 = vmul.f32 %v135, %v2598
    %v2607 = vmul.f32 %v136, %v2598
    %v2608 = vmul.f32 %v137, %v2598
    %v2609 = vmul.f32 %v138, %v2598
    %v2610 = vmul.f32 %v139, %v2598
    %v2611 = vmul.f32 %v140, %v2598
    %v2612 = vmul.f32 %v141, %v2598
    %v2613 = vmul.f32 %v142, %v2598
    %v2614 = vmul.f32 %v143, %v2598
    %v2615 = vmul.f32 %v156, %v2598
    %v2616 = vmul.f32 %v157, %v2598
    %v2617 = vmul.f32 %v158, %v2598
    %v2618 = vmul.f32 %v159, %v2598
    %v2619 = vmul.f32 %v160, %v2598
    %v2620 = vmul.f32 %v161, %v2598
    %v2621 = vmul.f32 %v162, %v2598
    %v2622 = vmul.f32 %v163, %v2598
    %v2623 = vmul.f32 %v164, %v2598
    %v2624 = vmul.f32 %v165, %v2598
    %v2625 = vmul.f32 %v166, %v2598
    %v2626 = vmul.f32 %v167, %v2598
    %v2627 = vmul.f32 %v168, %v2598
    %v2628 = vmul.f32 %v169, %v2598
    %v2629 = vmul.f32 %v170, %v2598
    %v2630 = vmul.f32 %v171, %v2598
    %v2663 = vrot.slane %v2599, 3
    %v2664 = vrot.slane %v2600, 3
    %v2665 = vsel %vm2517, %v2663, %v2664
    %v2666 = vrot.slane %v2601, 3
    %v2667 = vrot.slane %v2602, 3
    %v2668 = vsel %vm2517, %v2666, %v2667
    %v2669 = vrot.slane %v2603, 3
    %v2670 = vrot.slane %v2604, 3
    %v2671 = vsel %vm2517, %v2669, %v2670
    %v2672 = vrot.slane %v2605, 3
    %v2673 = vrot.slane %v2606, 3
    %v2674 = vsel %vm2517, %v2672, %v2673
    %v2675 = vrot.slane %v2607, 3
    %v2676 = vrot.slane %v2608, 3
    %v2677 = vsel %vm2517, %v2675, %v2676
    %v2678 = vrot.slane %v2609, 3
    %v2679 = vrot.slane %v2610, 3
    %v2680 = vsel %vm2517, %v2678, %v2679
    %v2681 = vrot.slane %v2611, 3
    %v2682 = vrot.slane %v2612, 3
    %v2683 = vsel %vm2517, %v2681, %v2682
    %v2684 = vrot.slane %v2613, 3
    %v2685 = vrot.slane %v2614, 3
    %v2686 = vsel %vm2517, %v2684, %v2685
    %v2687 = vrot.slane %v2615, 3
    %v2688 = vrot.slane %v2616, 3
    %v2689 = vsel %vm2517, %v2687, %v2688
    %v2690 = vrot.slane %v2617, 3
    %v2691 = vrot.slane %v2618, 3
    %v2692 = vsel %vm2517, %v2690, %v2691
    %v2693 = vrot.slane %v2619, 3
    %v2694 = vrot.slane %v2620, 3
    %v2695 = vsel %vm2517, %v2693, %v2694
    %v2696 = vrot.slane %v2621, 3
    %v2697 = vrot.slane %v2622, 3
    %v2698 = vsel %vm2517, %v2696, %v2697
    %v2699 = vrot.slane %v2623, 3
    %v2700 = vrot.slane %v2624, 3
    %v2701 = vsel %vm2517, %v2699, %v2700
    %v2702 = vrot.slane %v2625, 3
    %v2703 = vrot.slane %v2626, 3
    %v2704 = vsel %vm2517, %v2702, %v2703
    %v2705 = vrot.slane %v2627, 3
    %v2706 = vrot.slane %v2628, 3
    %v2707 = vsel %vm2517, %v2705, %v2706
    %v2708 = vrot.slane %v2629, 3
    %v2709 = vrot.slane %v2630, 3
    %v2710 = vsel %vm2517, %v2708, %v2709
    %v2727 = vadd.f32 %v2582, %v2665
    %v2728 = vadd.f32 %v2583, %v2668
    %v2729 = vadd.f32 %v2584, %v2671
    %v2730 = vadd.f32 %v2585, %v2674
    %v2731 = vadd.f32 %v2586, %v2677
    %v2732 = vadd.f32 %v2587, %v2680
    %v2733 = vadd.f32 %v2588, %v2683
    %v2734 = vadd.f32 %v2589, %v2686
    %v2735 = vadd.f32 %v2590, %v2689
    %v2736 = vadd.f32 %v2591, %v2692
    %v2737 = vadd.f32 %v2592, %v2695
    %v2738 = vadd.f32 %v2593, %v2698
    %v2739 = vadd.f32 %v2594, %v2701
    %v2740 = vadd.f32 %v2595, %v2704
    %v2741 = vadd.f32 %v2596, %v2707
    %v2742 = vadd.f32 %v2597, %v2710
    %v2743 = vperm.slane %v184, 1
    %v2744 = vmul.f32 %v130, %v2743
    %v2745 = vmul.f32 %v131, %v2743
    %v2746 = vmul.f32 %v132, %v2743
    %v2747 = vmul.f32 %v133, %v2743
    %v2748 = vmul.f32 %v134, %v2743
    %v2749 = vmul.f32 %v135, %v2743
    %v2750 = vmul.f32 %v136, %v2743
    %v2751 = vmul.f32 %v137, %v2743
    %v2752 = vmul.f32 %v138, %v2743
    %v2753 = vmul.f32 %v139, %v2743
    %v2754 = vmul.f32 %v140, %v2743
    %v2755 = vmul.f32 %v141, %v2743
    %v2756 = vmul.f32 %v142, %v2743
    %v2757 = vmul.f32 %v143, %v2743
    %v2758 = vmul.f32 %v144, %v2743
    %v2759 = vmul.f32 %v145, %v2743
    %v2760 = vmul.f32 %v158, %v2743
    %v2761 = vmul.f32 %v159, %v2743
    %v2762 = vmul.f32 %v160, %v2743
    %v2763 = vmul.f32 %v161, %v2743
    %v2764 = vmul.f32 %v162, %v2743
    %v2765 = vmul.f32 %v163, %v2743
    %v2766 = vmul.f32 %v164, %v2743
    %v2767 = vmul.f32 %v165, %v2743
    %v2768 = vmul.f32 %v166, %v2743
    %v2769 = vmul.f32 %v167, %v2743
    %v2770 = vmul.f32 %v168, %v2743
    %v2771 = vmul.f32 %v169, %v2743
    %v2772 = vmul.f32 %v170, %v2743
    %v2773 = vmul.f32 %v171, %v2743
    %v2774 = vmul.f32 %v172, %v2743
    %v2775 = vmul.f32 %v173, %v2743
    %v2808 = vrot.slane %v2744, 3
    %v2809 = vrot.slane %v2745, 3
    %v2810 = vsel %vm2517, %v2808, %v2809
    %v2811 = vrot.slane %v2746, 3
    %v2812 = vrot.slane %v2747, 3
    %v2813 = vsel %vm2517, %v2811, %v2812
    %v2814 = vrot.slane %v2748, 3
    %v2815 = vrot.slane %v2749, 3
    %v2816 = vsel %vm2517, %v2814, %v2815
    %v2817 = vrot.slane %v2750, 3
    %v2818 = vrot.slane %v2751, 3
    %v2819 = vsel %vm2517, %v2817, %v2818
    %v2820 = vrot.slane %v2752, 3
    %v2821 = vrot.slane %v2753, 3
    %v2822 = vsel %vm2517, %v2820, %v2821
    %v2823 = vrot.slane %v2754, 3
    %v2824 = vrot.slane %v2755, 3
    %v2825 = vsel %vm2517, %v2823, %v2824
    %v2826 = vrot.slane %v2756, 3
    %v2827 = vrot.slane %v2757, 3
    %v2828 = vsel %vm2517, %v2826, %v2827
    %v2829 = vrot.slane %v2758, 3
    %v2830 = vrot.slane %v2759, 3
    %v2831 = vsel %vm2517, %v2829, %v2830
    %v2832 = vrot.slane %v2760, 3
    %v2833 = vrot.slane %v2761, 3
    %v2834 = vsel %vm2517, %v2832, %v2833
    %v2835 = vrot.slane %v2762, 3
    %v2836 = vrot.slane %v2763, 3
    %v2837 = vsel %vm2517, %v2835, %v2836
    %v2838 = vrot.slane %v2764, 3
    %v2839 = vrot.slane %v2765, 3
    %v2840 = vsel %vm2517, %v2838, %v2839
    %v2841 = vrot.slane %v2766, 3
    %v2842 = vrot.slane %v2767, 3
    %v2843 = vsel %vm2517, %v2841, %v2842
    %v2844 = vrot.slane %v2768, 3
    %v2845 = vrot.slane %v2769, 3
    %v2846 = vsel %vm2517, %v2844, %v2845
    %v2847 = vrot.slane %v2770, 3
    %v2848 = vrot.slane %v2771, 3
    %v2849 = vsel %vm2517, %v2847, %v2848
    %v2850 = vrot.slane %v2772, 3
    %v2851 = vrot.slane %v2773, 3
    %v2852 = vsel %vm2517, %v2850, %v2851
    %v2853 = vrot.slane %v2774, 3
    %v2854 = vrot.slane %v2775, 3
    %v2855 = vsel %vm2517, %v2853, %v2854
    %v2872 = vadd.f32 %v2727, %v2810
    %v2873 = vadd.f32 %v2728, %v2813
    %v2874 = vadd.f32 %v2729, %v2816
    %v2875 = vadd.f32 %v2730, %v2819
    %v2876 = vadd.f32 %v2731, %v2822
    %v2877 = vadd.f32 %v2732, %v2825
    %v2878 = vadd.f32 %v2733, %v2828
    %v2879 = vadd.f32 %v2734, %v2831
    %v2880 = vadd.f32 %v2735, %v2834
    %v2881 = vadd.f32 %v2736, %v2837
    %v2882 = vadd.f32 %v2737, %v2840
    %v2883 = vadd.f32 %v2738, %v2843
    %v2884 = vadd.f32 %v2739, %v2846
    %v2885 = vadd.f32 %v2740, %v2849
    %v2886 = vadd.f32 %v2741, %v2852
    %v2887 = vadd.f32 %v2742, %v2855
    %v2888 = vperm.slane %v185, 0
    %v2889 = vmul.f32 %v132, %v2888
    %v2890 = vmul.f32 %v133, %v2888
    %v2891 = vmul.f32 %v134, %v2888
    %v2892 = vmul.f32 %v135, %v2888
    %v2893 = vmul.f32 %v136, %v2888
    %v2894 = vmul.f32 %v137, %v2888
    %v2895 = vmul.f32 %v138, %v2888
    %v2896 = vmul.f32 %v139, %v2888
    %v2897 = vmul.f32 %v140, %v2888
    %v2898 = vmul.f32 %v141, %v2888
    %v2899 = vmul.f32 %v142, %v2888
    %v2900 = vmul.f32 %v143, %v2888
    %v2901 = vmul.f32 %v144, %v2888
    %v2902 = vmul.f32 %v145, %v2888
    %v2903 = vmul.f32 %v146, %v2888
    %v2904 = vmul.f32 %v147, %v2888
    %v2905 = vmul.f32 %v160, %v2888
    %v2906 = vmul.f32 %v161, %v2888
    %v2907 = vmul.f32 %v162, %v2888
    %v2908 = vmul.f32 %v163, %v2888
    %v2909 = vmul.f32 %v164, %v2888
    %v2910 = vmul.f32 %v165, %v2888
    %v2911 = vmul.f32 %v166, %v2888
    %v2912 = vmul.f32 %v167, %v2888
    %v2913 = vmul.f32 %v168, %v2888
    %v2914 = vmul.f32 %v169, %v2888
    %v2915 = vmul.f32 %v170, %v2888
    %v2916 = vmul.f32 %v171, %v2888
    %v2917 = vmul.f32 %v172, %v2888
    %v2918 = vmul.f32 %v173, %v2888
    %v2919 = vmul.f32 %v174, %v2888
    %v2920 = vmul.f32 %v175, %v2888
    %v2953 = vrot.slane %v2889, 3
    %v2954 = vrot.slane %v2890, 3
    %v2955 = vsel %vm2517, %v2953, %v2954
    %v2956 = vrot.slane %v2891, 3
    %v2957 = vrot.slane %v2892, 3
    %v2958 = vsel %vm2517, %v2956, %v2957
    %v2959 = vrot.slane %v2893, 3
    %v2960 = vrot.slane %v2894, 3
    %v2961 = vsel %vm2517, %v2959, %v2960
    %v2962 = vrot.slane %v2895, 3
    %v2963 = vrot.slane %v2896, 3
    %v2964 = vsel %vm2517, %v2962, %v2963
    %v2965 = vrot.slane %v2897, 3
    %v2966 = vrot.slane %v2898, 3
    %v2967 = vsel %vm2517, %v2965, %v2966
    %v2968 = vrot.slane %v2899, 3
    %v2969 = vrot.slane %v2900, 3
    %v2970 = vsel %vm2517, %v2968, %v2969
    %v2971 = vrot.slane %v2901, 3
    %v2972 = vrot.slane %v2902, 3
    %v2973 = vsel %vm2517, %v2971, %v2972
    %v2974 = vrot.slane %v2903, 3
    %v2975 = vrot.slane %v2904, 3
    %v2976 = vsel %vm2517, %v2974, %v2975
    %v2977 = vrot.slane %v2905, 3
    %v2978 = vrot.slane %v2906, 3
    %v2979 = vsel %vm2517, %v2977, %v2978
    %v2980 = vrot.slane %v2907, 3
    %v2981 = vrot.slane %v2908, 3
    %v2982 = vsel %vm2517, %v2980, %v2981
    %v2983 = vrot.slane %v2909, 3
    %v2984 = vrot.slane %v2910, 3
    %v2985 = vsel %vm2517, %v2983, %v2984
    %v2986 = vrot.slane %v2911, 3
    %v2987 = vrot.slane %v2912, 3
    %v2988 = vsel %vm2517, %v2986, %v2987
    %v2989 = vrot.slane %v2913, 3
    %v2990 = vrot.slane %v2914, 3
    %v2991 = vsel %vm2517, %v2989, %v2990
    %v2992 = vrot.slane %v2915, 3
    %v2993 = vrot.slane %v2916, 3
    %v2994 = vsel %vm2517, %v2992, %v2993
    %v2995 = vrot.slane %v2917, 3
    %v2996 = vrot.slane %v2918, 3
    %v2997 = vsel %vm2517, %v2995, %v2996
    %v2998 = vrot.slane %v2919, 3
    %v2999 = vrot.slane %v2920, 3
    %v3000 = vsel %vm2517, %v2998, %v2999
    %v3017 = vadd.f32 %v2872, %v2955
    %v3018 = vadd.f32 %v2873, %v2958
    %v3019 = vadd.f32 %v2874, %v2961
    %v3020 = vadd.f32 %v2875, %v2964
    %v3021 = vadd.f32 %v2876, %v2967
    %v3022 = vadd.f32 %v2877, %v2970
    %v3023 = vadd.f32 %v2878, %v2973
    %v3024 = vadd.f32 %v2879, %v2976
    %v3025 = vadd.f32 %v2880, %v2979
    %v3026 = vadd.f32 %v2881, %v2982
    %v3027 = vadd.f32 %v2882, %v2985
    %v3028 = vadd.f32 %v2883, %v2988
    %v3029 = vadd.f32 %v2884, %v2991
    %v3030 = vadd.f32 %v2885, %v2994
    %v3031 = vadd.f32 %v2886, %v2997
    %v3032 = vadd.f32 %v2887, %v3000
    %v3033 = vperm.slane %v185, 7
    %v3034 = vmul.f32 %v134, %v3033
    %v3035 = vmul.f32 %v135, %v3033
    %v3036 = vmul.f32 %v136, %v3033
    %v3037 = vmul.f32 %v137, %v3033
    %v3038 = vmul.f32 %v138, %v3033
    %v3039 = vmul.f32 %v139, %v3033
    %v3040 = vmul.f32 %v140, %v3033
    %v3041 = vmul.f32 %v141, %v3033
    %v3042 = vmul.f32 %v142, %v3033
    %v3043 = vmul.f32 %v143, %v3033
    %v3044 = vmul.f32 %v144, %v3033
    %v3045 = vmul.f32 %v145, %v3033
    %v3046 = vmul.f32 %v146, %v3033
    %v3047 = vmul.f32 %v147, %v3033
    %v3048 = vmul.f32 %v148, %v3033
    %v3049 = vmul.f32 %v149, %v3033
    %v3050 = vmul.f32 %v162, %v3033
    %v3051 = vmul.f32 %v163, %v3033
    %v3052 = vmul.f32 %v164, %v3033
    %v3053 = vmul.f32 %v165, %v3033
    %v3054 = vmul.f32 %v166, %v3033
    %v3055 = vmul.f32 %v167, %v3033
    %v3056 = vmul.f32 %v168, %v3033
    %v3057 = vmul.f32 %v169, %v3033
    %v3058 = vmul.f32 %v170, %v3033
    %v3059 = vmul.f32 %v171, %v3033
    %v3060 = vmul.f32 %v172, %v3033
    %v3061 = vmul.f32 %v173, %v3033
    %v3062 = vmul.f32 %v174, %v3033
    %v3063 = vmul.f32 %v175, %v3033
    %v3064 = vmul.f32 %v176, %v3033
    %v3065 = vmul.f32 %v177, %v3033
    %v3098 = vrot.slane %v3034, 3
    %v3099 = vrot.slane %v3035, 3
    %v3100 = vsel %vm2517, %v3098, %v3099
    %v3101 = vrot.slane %v3036, 3
    %v3102 = vrot.slane %v3037, 3
    %v3103 = vsel %vm2517, %v3101, %v3102
    %v3104 = vrot.slane %v3038, 3
    %v3105 = vrot.slane %v3039, 3
    %v3106 = vsel %vm2517, %v3104, %v3105
    %v3107 = vrot.slane %v3040, 3
    %v3108 = vrot.slane %v3041, 3
    %v3109 = vsel %vm2517, %v3107, %v3108
    %v3110 = vrot.slane %v3042, 3
    %v3111 = vrot.slane %v3043, 3
    %v3112 = vsel %vm2517, %v3110, %v3111
    %v3113 = vrot.slane %v3044, 3
    %v3114 = vrot.slane %v3045, 3
    %v3115 = vsel %vm2517, %v3113, %v3114
    %v3116 = vrot.slane %v3046, 3
    %v3117 = vrot.slane %v3047, 3
    %v3118 = vsel %vm2517, %v3116, %v3117
    %v3119 = vrot.slane %v3048, 3
    %v3120 = vrot.slane %v3049, 3
    %v3121 = vsel %vm2517, %v3119, %v3120
    %v3122 = vrot.slane %v3050, 3
    %v3123 = vrot.slane %v3051, 3
    %v3124 = vsel %vm2517, %v3122, %v3123
    %v3125 = vrot.slane %v3052, 3
    %v3126 = vrot.slane %v3053, 3
    %v3127 = vsel %vm2517, %v3125, %v3126
    %v3128 = vrot.slane %v3054, 3
    %v3129 = vrot.slane %v3055, 3
    %v3130 = vsel %vm2517, %v3128, %v3129
    %v3131 = vrot.slane %v3056, 3
    %v3132 = vrot.slane %v3057, 3
    %v3133 = vsel %vm2517, %v3131, %v3132
    %v3134 = vrot.slane %v3058, 3
    %v3135 = vrot.slane %v3059, 3
    %v3136 = vsel %vm2517, %v3134, %v3135
    %v3137 = vrot.slane %v3060, 3
    %v3138 = vrot.slane %v3061, 3
    %v3139 = vsel %vm2517, %v3137, %v3138
    %v3140 = vrot.slane %v3062, 3
    %v3141 = vrot.slane %v3063, 3
    %v3142 = vsel %vm2517, %v3140, %v3141
    %v3143 = vrot.slane %v3064, 3
    %v3144 = vrot.slane %v3065, 3
    %v3145 = vsel %vm2517, %v3143, %v3144
    %v3162 = vadd.f32 %v3017, %v3100
    %v3163 = vadd.f32 %v3018, %v3103
    %v3164 = vadd.f32 %v3019, %v3106
    %v3165 = vadd.f32 %v3020, %v3109
    %v3166 = vadd.f32 %v3021, %v3112
    %v3167 = vadd.f32 %v3022, %v3115
    %v3168 = vadd.f32 %v3023, %v3118
    %v3169 = vadd.f32 %v3024, %v3121
    %v3170 = vadd.f32 %v3025, %v3124
    %v3171 = vadd.f32 %v3026, %v3127
    %v3172 = vadd.f32 %v3027, %v3130
    %v3173 = vadd.f32 %v3028, %v3133
    %v3174 = vadd.f32 %v3029, %v3136
    %v3175 = vadd.f32 %v3030, %v3139
    %v3176 = vadd.f32 %v3031, %v3142
    %v3177 = vadd.f32 %v3032, %v3145
    %v3178 = vperm.slane %v186, 6
    %v3179 = vmul.f32 %v136, %v3178
    %v3180 = vmul.f32 %v137, %v3178
    %v3181 = vmul.f32 %v138, %v3178
    %v3182 = vmul.f32 %v139, %v3178
    %v3183 = vmul.f32 %v140, %v3178
    %v3184 = vmul.f32 %v141, %v3178
    %v3185 = vmul.f32 %v142, %v3178
    %v3186 = vmul.f32 %v143, %v3178
    %v3187 = vmul.f32 %v144, %v3178
    %v3188 = vmul.f32 %v145, %v3178
    %v3189 = vmul.f32 %v146, %v3178
    %v3190 = vmul.f32 %v147, %v3178
    %v3191 = vmul.f32 %v148, %v3178
    %v3192 = vmul.f32 %v149, %v3178
    %v3193 = vmul.f32 %v150, %v3178
    %v3194 = vmul.f32 %v151, %v3178
    %v3195 = vmul.f32 %v164, %v3178
    %v3196 = vmul.f32 %v165, %v3178
    %v3197 = vmul.f32 %v166, %v3178
    %v3198 = vmul.f32 %v167, %v3178
    %v3199 = vmul.f32 %v168, %v3178
    %v3200 = vmul.f32 %v169, %v3178
    %v3201 = vmul.f32 %v170, %v3178
    %v3202 = vmul.f32 %v171, %v3178
    %v3203 = vmul.f32 %v172, %v3178
    %v3204 = vmul.f32 %v173, %v3178
    %v3205 = vmul.f32 %v174, %v3178
    %v3206 = vmul.f32 %v175, %v3178
    %v3207 = vmul.f32 %v176, %v3178
    %v3208 = vmul.f32 %v177, %v3178
    %v3209 = vmul.f32 %v178, %v3178
    %v3210 = vmul.f32 %v179, %v3178
    %v3243 = vrot.slane %v3179, 3
    %v3244 = vrot.slane %v3180, 3
    %v3245 = vsel %vm2517, %v3243, %v3244
    %v3246 = vrot.slane %v3181, 3
    %v3247 = vrot.slane %v3182, 3
    %v3248 = vsel %vm2517, %v3246, %v3247
    %v3249 = vrot.slane %v3183, 3
    %v3250 = vrot.slane %v3184, 3
    %v3251 = vsel %vm2517, %v3249, %v3250
    %v3252 = vrot.slane %v3185, 3
    %v3253 = vrot.slane %v3186, 3
    %v3254 = vsel %vm2517, %v3252, %v3253
    %v3255 = vrot.slane %v3187, 3
    %v3256 = vrot.slane %v3188, 3
    %v3257 = vsel %vm2517, %v3255, %v3256
    %v3258 = vrot.slane %v3189, 3
    %v3259 = vrot.slane %v3190, 3
    %v3260 = vsel %vm2517, %v3258, %v3259
    %v3261 = vrot.slane %v3191, 3
    %v3262 = vrot.slane %v3192, 3
    %v3263 = vsel %vm2517, %v3261, %v3262
    %v3264 = vrot.slane %v3193, 3
    %v3265 = vrot.slane %v3194, 3
    %v3266 = vsel %vm2517, %v3264, %v3265
    %v3267 = vrot.slane %v3195, 3
    %v3268 = vrot.slane %v3196, 3
    %v3269 = vsel %vm2517, %v3267, %v3268
    %v3270 = vrot.slane %v3197, 3
    %v3271 = vrot.slane %v3198, 3
    %v3272 = vsel %vm2517, %v3270, %v3271
    %v3273 = vrot.slane %v3199, 3
    %v3274 = vrot.slane %v3200, 3
    %v3275 = vsel %vm2517, %v3273, %v3274
    %v3276 = vrot.slane %v3201, 3
    %v3277 = vrot.slane %v3202, 3
    %v3278 = vsel %vm2517, %v3276, %v3277
    %v3279 = vrot.slane %v3203, 3
    %v3280 = vrot.slane %v3204, 3
    %v3281 = vsel %vm2517, %v3279, %v3280
    %v3282 = vrot.slane %v3205, 3
    %v3283 = vrot.slane %v3206, 3
    %v3284 = vsel %vm2517, %v3282, %v3283
    %v3285 = vrot.slane %v3207, 3
    %v3286 = vrot.slane %v3208, 3
    %v3287 = vsel %vm2517, %v3285, %v3286
    %v3288 = vrot.slane %v3209, 3
    %v3289 = vrot.slane %v3210, 3
    %v3290 = vsel %vm2517, %v3288, %v3289
    %v3307 = vadd.f32 %v3162, %v3245
    %v3308 = vadd.f32 %v3163, %v3248
    %v3309 = vadd.f32 %v3164, %v3251
    %v3310 = vadd.f32 %v3165, %v3254
    %v3311 = vadd.f32 %v3166, %v3257
    %v3312 = vadd.f32 %v3167, %v3260
    %v3313 = vadd.f32 %v3168, %v3263
    %v3314 = vadd.f32 %v3169, %v3266
    %v3315 = vadd.f32 %v3170, %v3269
    %v3316 = vadd.f32 %v3171, %v3272
    %v3317 = vadd.f32 %v3172, %v3275
    %v3318 = vadd.f32 %v3173, %v3278
    %v3319 = vadd.f32 %v3174, %v3281
    %v3320 = vadd.f32 %v3175, %v3284
    %v3321 = vadd.f32 %v3176, %v3287
    %v3322 = vadd.f32 %v3177, %v3290
    %v3323 = vperm.slane %v187, 5
    %v3324 = vmul.f32 %v138, %v3323
    %v3325 = vmul.f32 %v139, %v3323
    %v3326 = vmul.f32 %v140, %v3323
    %v3327 = vmul.f32 %v141, %v3323
    %v3328 = vmul.f32 %v142, %v3323
    %v3329 = vmul.f32 %v143, %v3323
    %v3330 = vmul.f32 %v144, %v3323
    %v3331 = vmul.f32 %v145, %v3323
    %v3332 = vmul.f32 %v146, %v3323
    %v3333 = vmul.f32 %v147, %v3323
    %v3334 = vmul.f32 %v148, %v3323
    %v3335 = vmul.f32 %v149, %v3323
    %v3336 = vmul.f32 %v150, %v3323
    %v3337 = vmul.f32 %v151, %v3323
    %v3338 = vmul.f32 %v152, %v3323
    %v3339 = vmul.f32 %v153, %v3323
    %v3340 = vmul.f32 %v166, %v3323
    %v3341 = vmul.f32 %v167, %v3323
    %v3342 = vmul.f32 %v168, %v3323
    %v3343 = vmul.f32 %v169, %v3323
    %v3344 = vmul.f32 %v170, %v3323
    %v3345 = vmul.f32 %v171, %v3323
    %v3346 = vmul.f32 %v172, %v3323
    %v3347 = vmul.f32 %v173, %v3323
    %v3348 = vmul.f32 %v174, %v3323
    %v3349 = vmul.f32 %v175, %v3323
    %v3350 = vmul.f32 %v176, %v3323
    %v3351 = vmul.f32 %v177, %v3323
    %v3352 = vmul.f32 %v178, %v3323
    %v3353 = vmul.f32 %v179, %v3323
    %v3354 = vmul.f32 %v180, %v3323
    %v3355 = vmul.f32 %v181, %v3323
    %v3388 = vrot.slane %v3324, 3
    %v3389 = vrot.slane %v3325, 3
    %v3390 = vsel %vm2517, %v3388, %v3389
    %v3391 = vrot.slane %v3326, 3
    %v3392 = vrot.slane %v3327, 3
    %v3393 = vsel %vm2517, %v3391, %v3392
    %v3394 = vrot.slane %v3328, 3
    %v3395 = vrot.slane %v3329, 3
    %v3396 = vsel %vm2517, %v3394, %v3395
    %v3397 = vrot.slane %v3330, 3
    %v3398 = vrot.slane %v3331, 3
    %v3399 = vsel %vm2517, %v3397, %v3398
    %v3400 = vrot.slane %v3332, 3
    %v3401 = vrot.slane %v3333, 3
    %v3402 = vsel %vm2517, %v3400, %v3401
    %v3403 = vrot.slane %v3334, 3
    %v3404 = vrot.slane %v3335, 3
    %v3405 = vsel %vm2517, %v3403, %v3404
    %v3406 = vrot.slane %v3336, 3
    %v3407 = vrot.slane %v3337, 3
    %v3408 = vsel %vm2517, %v3406, %v3407
    %v3409 = vrot.slane %v3338, 3
    %v3410 = vrot.slane %v3339, 3
    %v3411 = vsel %vm2517, %v3409, %v3410
    %v3412 = vrot.slane %v3340, 3
    %v3413 = vrot.slane %v3341, 3
    %v3414 = vsel %vm2517, %v3412, %v3413
    %v3415 = vrot.slane %v3342, 3
    %v3416 = vrot.slane %v3343, 3
    %v3417 = vsel %vm2517, %v3415, %v3416
    %v3418 = vrot.slane %v3344, 3
    %v3419 = vrot.slane %v3345, 3
    %v3420 = vsel %vm2517, %v3418, %v3419
    %v3421 = vrot.slane %v3346, 3
    %v3422 = vrot.slane %v3347, 3
    %v3423 = vsel %vm2517, %v3421, %v3422
    %v3424 = vrot.slane %v3348, 3
    %v3425 = vrot.slane %v3349, 3
    %v3426 = vsel %vm2517, %v3424, %v3425
    %v3427 = vrot.slane %v3350, 3
    %v3428 = vrot.slane %v3351, 3
    %v3429 = vsel %vm2517, %v3427, %v3428
    %v3430 = vrot.slane %v3352, 3
    %v3431 = vrot.slane %v3353, 3
    %v3432 = vsel %vm2517, %v3430, %v3431
    %v3433 = vrot.slane %v3354, 3
    %v3434 = vrot.slane %v3355, 3
    %v3435 = vsel %vm2517, %v3433, %v3434
    %v3452 = vadd.f32 %v3307, %v3390
    %v3453 = vadd.f32 %v3308, %v3393
    %v3454 = vadd.f32 %v3309, %v3396
    %v3455 = vadd.f32 %v3310, %v3399
    %v3456 = vadd.f32 %v3311, %v3402
    %v3457 = vadd.f32 %v3312, %v3405
    %v3458 = vadd.f32 %v3313, %v3408
    %v3459 = vadd.f32 %v3314, %v3411
    %v3460 = vadd.f32 %v3315, %v3414
    %v3461 = vadd.f32 %v3316, %v3417
    %v3462 = vadd.f32 %v3317, %v3420
    %v3463 = vadd.f32 %v3318, %v3423
    %v3464 = vadd.f32 %v3319, %v3426
    %v3465 = vadd.f32 %v3320, %v3429
    %v3466 = vadd.f32 %v3321, %v3432
    %v3467 = vadd.f32 %v3322, %v3435
    %v3468 = vperm.slane %v182, 4
    %v3469 = vmul.f32 %v126, %v3468
    %v3470 = vmul.f32 %v127, %v3468
    %v3471 = vmul.f32 %v128, %v3468
    %v3472 = vmul.f32 %v129, %v3468
    %v3473 = vmul.f32 %v130, %v3468
    %v3474 = vmul.f32 %v131, %v3468
    %v3475 = vmul.f32 %v132, %v3468
    %v3476 = vmul.f32 %v133, %v3468
    %v3477 = vmul.f32 %v134, %v3468
    %v3478 = vmul.f32 %v135, %v3468
    %v3479 = vmul.f32 %v136, %v3468
    %v3480 = vmul.f32 %v137, %v3468
    %v3481 = vmul.f32 %v138, %v3468
    %v3482 = vmul.f32 %v139, %v3468
    %v3483 = vmul.f32 %v140, %v3468
    %v3484 = vmul.f32 %v141, %v3468
    %v3485 = vmul.f32 %v154, %v3468
    %v3486 = vmul.f32 %v155, %v3468
    %v3487 = vmul.f32 %v156, %v3468
    %v3488 = vmul.f32 %v157, %v3468
    %v3489 = vmul.f32 %v158, %v3468
    %v3490 = vmul.f32 %v159, %v3468
    %v3491 = vmul.f32 %v160, %v3468
    %v3492 = vmul.f32 %v161, %v3468
    %v3493 = vmul.f32 %v162, %v3468
    %v3494 = vmul.f32 %v163, %v3468
    %v3495 = vmul.f32 %v164, %v3468
    %v3496 = vmul.f32 %v165, %v3468
    %v3497 = vmul.f32 %v166, %v3468
    %v3498 = vmul.f32 %v167, %v3468
    %v3499 = vmul.f32 %v168, %v3468
    %v3500 = vmul.f32 %v169, %v3468
    %vm3533 = vcmask 1043456
    %v3534 = vrot.slane %v3469, 4
    %v3535 = vrot.slane %v3470, 4
    %v3536 = vsel %vm3533, %v3534, %v3535
    %v3537 = vrot.slane %v3471, 4
    %v3538 = vrot.slane %v3472, 4
    %v3539 = vsel %vm3533, %v3537, %v3538
    %v3540 = vrot.slane %v3473, 4
    %v3541 = vrot.slane %v3474, 4
    %v3542 = vsel %vm3533, %v3540, %v3541
    %v3543 = vrot.slane %v3475, 4
    %v3544 = vrot.slane %v3476, 4
    %v3545 = vsel %vm3533, %v3543, %v3544
    %v3546 = vrot.slane %v3477, 4
    %v3547 = vrot.slane %v3478, 4
    %v3548 = vsel %vm3533, %v3546, %v3547
    %v3549 = vrot.slane %v3479, 4
    %v3550 = vrot.slane %v3480, 4
    %v3551 = vsel %vm3533, %v3549, %v3550
    %v3552 = vrot.slane %v3481, 4
    %v3553 = vrot.slane %v3482, 4
    %v3554 = vsel %vm3533, %v3552, %v3553
    %v3555 = vrot.slane %v3483, 4
    %v3556 = vrot.slane %v3484, 4
    %v3557 = vsel %vm3533, %v3555, %v3556
    %v3558 = vrot.slane %v3485, 4
    %v3559 = vrot.slane %v3486, 4
    %v3560 = vsel %vm3533, %v3558, %v3559
    %v3561 = vrot.slane %v3487, 4
    %v3562 = vrot.slane %v3488, 4
    %v3563 = vsel %vm3533, %v3561, %v3562
    %v3564 = vrot.slane %v3489, 4
    %v3565 = vrot.slane %v3490, 4
    %v3566 = vsel %vm3533, %v3564, %v3565
    %v3567 = vrot.slane %v3491, 4
    %v3568 = vrot.slane %v3492, 4
    %v3569 = vsel %vm3533, %v3567, %v3568
    %v3570 = vrot.slane %v3493, 4
    %v3571 = vrot.slane %v3494, 4
    %v3572 = vsel %vm3533, %v3570, %v3571
    %v3573 = vrot.slane %v3495, 4
    %v3574 = vrot.slane %v3496, 4
    %v3575 = vsel %vm3533, %v3573, %v3574
    %v3576 = vrot.slane %v3497, 4
    %v3577 = vrot.slane %v3498, 4
    %v3578 = vsel %vm3533, %v3576, %v3577
    %v3579 = vrot.slane %v3499, 4
    %v3580 = vrot.slane %v3500, 4
    %v3581 = vsel %vm3533, %v3579, %v3580
    %v3598 = vadd.f32 %v3452, %v3536
    %v3599 = vadd.f32 %v3453, %v3539
    %v3600 = vadd.f32 %v3454, %v3542
    %v3601 = vadd.f32 %v3455, %v3545
    %v3602 = vadd.f32 %v3456, %v3548
    %v3603 = vadd.f32 %v3457, %v3551
    %v3604 = vadd.f32 %v3458, %v3554
    %v3605 = vadd.f32 %v3459, %v3557
    %v3606 = vadd.f32 %v3460, %v3560
    %v3607 = vadd.f32 %v3461, %v3563
    %v3608 = vadd.f32 %v3462, %v3566
    %v3609 = vadd.f32 %v3463, %v3569
    %v3610 = vadd.f32 %v3464, %v3572
    %v3611 = vadd.f32 %v3465, %v3575
    %v3612 = vadd.f32 %v3466, %v3578
    %v3613 = vadd.f32 %v3467, %v3581
    %v3614 = vperm.slane %v183, 3
    %v3615 = vmul.f32 %v128, %v3614
    %v3616 = vmul.f32 %v129, %v3614
    %v3617 = vmul.f32 %v130, %v3614
    %v3618 = vmul.f32 %v131, %v3614
    %v3619 = vmul.f32 %v132, %v3614
    %v3620 = vmul.f32 %v133, %v3614
    %v3621 = vmul.f32 %v134, %v3614
    %v3622 = vmul.f32 %v135, %v3614
    %v3623 = vmul.f32 %v136, %v3614
    %v3624 = vmul.f32 %v137, %v3614
    %v3625 = vmul.f32 %v138, %v3614
    %v3626 = vmul.f32 %v139, %v3614
    %v3627 = vmul.f32 %v140, %v3614
    %v3628 = vmul.f32 %v141, %v3614
    %v3629 = vmul.f32 %v142, %v3614
    %v3630 = vmul.f32 %v143, %v3614
    %v3631 = vmul.f32 %v156, %v3614
    %v3632 = vmul.f32 %v157, %v3614
    %v3633 = vmul.f32 %v158, %v3614
    %v3634 = vmul.f32 %v159, %v3614
    %v3635 = vmul.f32 %v160, %v3614
    %v3636 = vmul.f32 %v161, %v3614
    %v3637 = vmul.f32 %v162, %v3614
    %v3638 = vmul.f32 %v163, %v3614
    %v3639 = vmul.f32 %v164, %v3614
    %v3640 = vmul.f32 %v165, %v3614
    %v3641 = vmul.f32 %v166, %v3614
    %v3642 = vmul.f32 %v167, %v3614
    %v3643 = vmul.f32 %v168, %v3614
    %v3644 = vmul.f32 %v169, %v3614
    %v3645 = vmul.f32 %v170, %v3614
    %v3646 = vmul.f32 %v171, %v3614
    %v3679 = vrot.slane %v3615, 4
    %v3680 = vrot.slane %v3616, 4
    %v3681 = vsel %vm3533, %v3679, %v3680
    %v3682 = vrot.slane %v3617, 4
    %v3683 = vrot.slane %v3618, 4
    %v3684 = vsel %vm3533, %v3682, %v3683
    %v3685 = vrot.slane %v3619, 4
    %v3686 = vrot.slane %v3620, 4
    %v3687 = vsel %vm3533, %v3685, %v3686
    %v3688 = vrot.slane %v3621, 4
    %v3689 = vrot.slane %v3622, 4
    %v3690 = vsel %vm3533, %v3688, %v3689
    %v3691 = vrot.slane %v3623, 4
    %v3692 = vrot.slane %v3624, 4
    %v3693 = vsel %vm3533, %v3691, %v3692
    %v3694 = vrot.slane %v3625, 4
    %v3695 = vrot.slane %v3626, 4
    %v3696 = vsel %vm3533, %v3694, %v3695
    %v3697 = vrot.slane %v3627, 4
    %v3698 = vrot.slane %v3628, 4
    %v3699 = vsel %vm3533, %v3697, %v3698
    %v3700 = vrot.slane %v3629, 4
    %v3701 = vrot.slane %v3630, 4
    %v3702 = vsel %vm3533, %v3700, %v3701
    %v3703 = vrot.slane %v3631, 4
    %v3704 = vrot.slane %v3632, 4
    %v3705 = vsel %vm3533, %v3703, %v3704
    %v3706 = vrot.slane %v3633, 4
    %v3707 = vrot.slane %v3634, 4
    %v3708 = vsel %vm3533, %v3706, %v3707
    %v3709 = vrot.slane %v3635, 4
    %v3710 = vrot.slane %v3636, 4
    %v3711 = vsel %vm3533, %v3709, %v3710
    %v3712 = vrot.slane %v3637, 4
    %v3713 = vrot.slane %v3638, 4
    %v3714 = vsel %vm3533, %v3712, %v3713
    %v3715 = vrot.slane %v3639, 4
    %v3716 = vrot.slane %v3640, 4
    %v3717 = vsel %vm3533, %v3715, %v3716
    %v3718 = vrot.slane %v3641, 4
    %v3719 = vrot.slane %v3642, 4
    %v3720 = vsel %vm3533, %v3718, %v3719
    %v3721 = vrot.slane %v3643, 4
    %v3722 = vrot.slane %v3644, 4
    %v3723 = vsel %vm3533, %v3721, %v3722
    %v3724 = vrot.slane %v3645, 4
    %v3725 = vrot.slane %v3646, 4
    %v3726 = vsel %vm3533, %v3724, %v3725
    %v3743 = vadd.f32 %v3598, %v3681
    %v3744 = vadd.f32 %v3599, %v3684
    %v3745 = vadd.f32 %v3600, %v3687
    %v3746 = vadd.f32 %v3601, %v3690
    %v3747 = vadd.f32 %v3602, %v3693
    %v3748 = vadd.f32 %v3603, %v3696
    %v3749 = vadd.f32 %v3604, %v3699
    %v3750 = vadd.f32 %v3605, %v3702
    %v3751 = vadd.f32 %v3606, %v3705
    %v3752 = vadd.f32 %v3607, %v3708
    %v3753 = vadd.f32 %v3608, %v3711
    %v3754 = vadd.f32 %v3609, %v3714
    %v3755 = vadd.f32 %v3610, %v3717
    %v3756 = vadd.f32 %v3611, %v3720
    %v3757 = vadd.f32 %v3612, %v3723
    %v3758 = vadd.f32 %v3613, %v3726
    %v3759 = vperm.slane %v184, 2
    %v3760 = vmul.f32 %v130, %v3759
    %v3761 = vmul.f32 %v131, %v3759
    %v3762 = vmul.f32 %v132, %v3759
    %v3763 = vmul.f32 %v133, %v3759
    %v3764 = vmul.f32 %v134, %v3759
    %v3765 = vmul.f32 %v135, %v3759
    %v3766 = vmul.f32 %v136, %v3759
    %v3767 = vmul.f32 %v137, %v3759
    %v3768 = vmul.f32 %v138, %v3759
    %v3769 = vmul.f32 %v139, %v3759
    %v3770 = vmul.f32 %v140, %v3759
    %v3771 = vmul.f32 %v141, %v3759
    %v3772 = vmul.f32 %v142, %v3759
    %v3773 = vmul.f32 %v143, %v3759
    %v3774 = vmul.f32 %v144, %v3759
    %v3775 = vmul.f32 %v145, %v3759
    %v3776 = vmul.f32 %v158, %v3759
    %v3777 = vmul.f32 %v159, %v3759
    %v3778 = vmul.f32 %v160, %v3759
    %v3779 = vmul.f32 %v161, %v3759
    %v3780 = vmul.f32 %v162, %v3759
    %v3781 = vmul.f32 %v163, %v3759
    %v3782 = vmul.f32 %v164, %v3759
    %v3783 = vmul.f32 %v165, %v3759
    %v3784 = vmul.f32 %v166, %v3759
    %v3785 = vmul.f32 %v167, %v3759
    %v3786 = vmul.f32 %v168, %v3759
    %v3787 = vmul.f32 %v169, %v3759
    %v3788 = vmul.f32 %v170, %v3759
    %v3789 = vmul.f32 %v171, %v3759
    %v3790 = vmul.f32 %v172, %v3759
    %v3791 = vmul.f32 %v173, %v3759
    %v3824 = vrot.slane %v3760, 4
    %v3825 = vrot.slane %v3761, 4
    %v3826 = vsel %vm3533, %v3824, %v3825
    %v3827 = vrot.slane %v3762, 4
    %v3828 = vrot.slane %v3763, 4
    %v3829 = vsel %vm3533, %v3827, %v3828
    %v3830 = vrot.slane %v3764, 4
    %v3831 = vrot.slane %v3765, 4
    %v3832 = vsel %vm3533, %v3830, %v3831
    %v3833 = vrot.slane %v3766, 4
    %v3834 = vrot.slane %v3767, 4
    %v3835 = vsel %vm3533, %v3833, %v3834
    %v3836 = vrot.slane %v3768, 4
    %v3837 = vrot.slane %v3769, 4
    %v3838 = vsel %vm3533, %v3836, %v3837
    %v3839 = vrot.slane %v3770, 4
    %v3840 = vrot.slane %v3771, 4
    %v3841 = vsel %vm3533, %v3839, %v3840
    %v3842 = vrot.slane %v3772, 4
    %v3843 = vrot.slane %v3773, 4
    %v3844 = vsel %vm3533, %v3842, %v3843
    %v3845 = vrot.slane %v3774, 4
    %v3846 = vrot.slane %v3775, 4
    %v3847 = vsel %vm3533, %v3845, %v3846
    %v3848 = vrot.slane %v3776, 4
    %v3849 = vrot.slane %v3777, 4
    %v3850 = vsel %vm3533, %v3848, %v3849
    %v3851 = vrot.slane %v3778, 4
    %v3852 = vrot.slane %v3779, 4
    %v3853 = vsel %vm3533, %v3851, %v3852
    %v3854 = vrot.slane %v3780, 4
    %v3855 = vrot.slane %v3781, 4
    %v3856 = vsel %vm3533, %v3854, %v3855
    %v3857 = vrot.slane %v3782, 4
    %v3858 = vrot.slane %v3783, 4
    %v3859 = vsel %vm3533, %v3857, %v3858
    %v3860 = vrot.slane %v3784, 4
    %v3861 = vrot.slane %v3785, 4
    %v3862 = vsel %vm3533, %v3860, %v3861
    %v3863 = vrot.slane %v3786, 4
    %v3864 = vrot.slane %v3787, 4
    %v3865 = vsel %vm3533, %v3863, %v3864
    %v3866 = vrot.slane %v3788, 4
    %v3867 = vrot.slane %v3789, 4
    %v3868 = vsel %vm3533, %v3866, %v3867
    %v3869 = vrot.slane %v3790, 4
    %v3870 = vrot.slane %v3791, 4
    %v3871 = vsel %vm3533, %v3869, %v3870
    %v3888 = vadd.f32 %v3743, %v3826
    %v3889 = vadd.f32 %v3744, %v3829
    %v3890 = vadd.f32 %v3745, %v3832
    %v3891 = vadd.f32 %v3746, %v3835
    %v3892 = vadd.f32 %v3747, %v3838
    %v3893 = vadd.f32 %v3748, %v3841
    %v3894 = vadd.f32 %v3749, %v3844
    %v3895 = vadd.f32 %v3750, %v3847
    %v3896 = vadd.f32 %v3751, %v3850
    %v3897 = vadd.f32 %v3752, %v3853
    %v3898 = vadd.f32 %v3753, %v3856
    %v3899 = vadd.f32 %v3754, %v3859
    %v3900 = vadd.f32 %v3755, %v3862
    %v3901 = vadd.f32 %v3756, %v3865
    %v3902 = vadd.f32 %v3757, %v3868
    %v3903 = vadd.f32 %v3758, %v3871
    %v3904 = vperm.slane %v185, 1
    %v3905 = vmul.f32 %v132, %v3904
    %v3906 = vmul.f32 %v133, %v3904
    %v3907 = vmul.f32 %v134, %v3904
    %v3908 = vmul.f32 %v135, %v3904
    %v3909 = vmul.f32 %v136, %v3904
    %v3910 = vmul.f32 %v137, %v3904
    %v3911 = vmul.f32 %v138, %v3904
    %v3912 = vmul.f32 %v139, %v3904
    %v3913 = vmul.f32 %v140, %v3904
    %v3914 = vmul.f32 %v141, %v3904
    %v3915 = vmul.f32 %v142, %v3904
    %v3916 = vmul.f32 %v143, %v3904
    %v3917 = vmul.f32 %v144, %v3904
    %v3918 = vmul.f32 %v145, %v3904
    %v3919 = vmul.f32 %v146, %v3904
    %v3920 = vmul.f32 %v147, %v3904
    %v3921 = vmul.f32 %v160, %v3904
    %v3922 = vmul.f32 %v161, %v3904
    %v3923 = vmul.f32 %v162, %v3904
    %v3924 = vmul.f32 %v163, %v3904
    %v3925 = vmul.f32 %v164, %v3904
    %v3926 = vmul.f32 %v165, %v3904
    %v3927 = vmul.f32 %v166, %v3904
    %v3928 = vmul.f32 %v167, %v3904
    %v3929 = vmul.f32 %v168, %v3904
    %v3930 = vmul.f32 %v169, %v3904
    %v3931 = vmul.f32 %v170, %v3904
    %v3932 = vmul.f32 %v171, %v3904
    %v3933 = vmul.f32 %v172, %v3904
    %v3934 = vmul.f32 %v173, %v3904
    %v3935 = vmul.f32 %v174, %v3904
    %v3936 = vmul.f32 %v175, %v3904
    %v3969 = vrot.slane %v3905, 4
    %v3970 = vrot.slane %v3906, 4
    %v3971 = vsel %vm3533, %v3969, %v3970
    %v3972 = vrot.slane %v3907, 4
    %v3973 = vrot.slane %v3908, 4
    %v3974 = vsel %vm3533, %v3972, %v3973
    %v3975 = vrot.slane %v3909, 4
    %v3976 = vrot.slane %v3910, 4
    %v3977 = vsel %vm3533, %v3975, %v3976
    %v3978 = vrot.slane %v3911, 4
    %v3979 = vrot.slane %v3912, 4
    %v3980 = vsel %vm3533, %v3978, %v3979
    %v3981 = vrot.slane %v3913, 4
    %v3982 = vrot.slane %v3914, 4
    %v3983 = vsel %vm3533, %v3981, %v3982
    %v3984 = vrot.slane %v3915, 4
    %v3985 = vrot.slane %v3916, 4
    %v3986 = vsel %vm3533, %v3984, %v3985
    %v3987 = vrot.slane %v3917, 4
    %v3988 = vrot.slane %v3918, 4
    %v3989 = vsel %vm3533, %v3987, %v3988
    %v3990 = vrot.slane %v3919, 4
    %v3991 = vrot.slane %v3920, 4
    %v3992 = vsel %vm3533, %v3990, %v3991
    %v3993 = vrot.slane %v3921, 4
    %v3994 = vrot.slane %v3922, 4
    %v3995 = vsel %vm3533, %v3993, %v3994
    %v3996 = vrot.slane %v3923, 4
    %v3997 = vrot.slane %v3924, 4
    %v3998 = vsel %vm3533, %v3996, %v3997
    %v3999 = vrot.slane %v3925, 4
    %v4000 = vrot.slane %v3926, 4
    %v4001 = vsel %vm3533, %v3999, %v4000
    %v4002 = vrot.slane %v3927, 4
    %v4003 = vrot.slane %v3928, 4
    %v4004 = vsel %vm3533, %v4002, %v4003
    %v4005 = vrot.slane %v3929, 4
    %v4006 = vrot.slane %v3930, 4
    %v4007 = vsel %vm3533, %v4005, %v4006
    %v4008 = vrot.slane %v3931, 4
    %v4009 = vrot.slane %v3932, 4
    %v4010 = vsel %vm3533, %v4008, %v4009
    %v4011 = vrot.slane %v3933, 4
    %v4012 = vrot.slane %v3934, 4
    %v4013 = vsel %vm3533, %v4011, %v4012
    %v4014 = vrot.slane %v3935, 4
    %v4015 = vrot.slane %v3936, 4
    %v4016 = vsel %vm3533, %v4014, %v4015
    %v4033 = vadd.f32 %v3888, %v3971
    %v4034 = vadd.f32 %v3889, %v3974
    %v4035 = vadd.f32 %v3890, %v3977
    %v4036 = vadd.f32 %v3891, %v3980
    %v4037 = vadd.f32 %v3892, %v3983
    %v4038 = vadd.f32 %v3893, %v3986
    %v4039 = vadd.f32 %v3894, %v3989
    %v4040 = vadd.f32 %v3895, %v3992
    %v4041 = vadd.f32 %v3896, %v3995
    %v4042 = vadd.f32 %v3897, %v3998
    %v4043 = vadd.f32 %v3898, %v4001
    %v4044 = vadd.f32 %v3899, %v4004
    %v4045 = vadd.f32 %v3900, %v4007
    %v4046 = vadd.f32 %v3901, %v4010
    %v4047 = vadd.f32 %v3902, %v4013
    %v4048 = vadd.f32 %v3903, %v4016
    %v4049 = vperm.slane %v186, 0
    %v4050 = vmul.f32 %v134, %v4049
    %v4051 = vmul.f32 %v135, %v4049
    %v4052 = vmul.f32 %v136, %v4049
    %v4053 = vmul.f32 %v137, %v4049
    %v4054 = vmul.f32 %v138, %v4049
    %v4055 = vmul.f32 %v139, %v4049
    %v4056 = vmul.f32 %v140, %v4049
    %v4057 = vmul.f32 %v141, %v4049
    %v4058 = vmul.f32 %v142, %v4049
    %v4059 = vmul.f32 %v143, %v4049
    %v4060 = vmul.f32 %v144, %v4049
    %v4061 = vmul.f32 %v145, %v4049
    %v4062 = vmul.f32 %v146, %v4049
    %v4063 = vmul.f32 %v147, %v4049
    %v4064 = vmul.f32 %v148, %v4049
    %v4065 = vmul.f32 %v149, %v4049
    %v4066 = vmul.f32 %v162, %v4049
    %v4067 = vmul.f32 %v163, %v4049
    %v4068 = vmul.f32 %v164, %v4049
    %v4069 = vmul.f32 %v165, %v4049
    %v4070 = vmul.f32 %v166, %v4049
    %v4071 = vmul.f32 %v167, %v4049
    %v4072 = vmul.f32 %v168, %v4049
    %v4073 = vmul.f32 %v169, %v4049
    %v4074 = vmul.f32 %v170, %v4049
    %v4075 = vmul.f32 %v171, %v4049
    %v4076 = vmul.f32 %v172, %v4049
    %v4077 = vmul.f32 %v173, %v4049
    %v4078 = vmul.f32 %v174, %v4049
    %v4079 = vmul.f32 %v175, %v4049
    %v4080 = vmul.f32 %v176, %v4049
    %v4081 = vmul.f32 %v177, %v4049
    %v4114 = vrot.slane %v4050, 4
    %v4115 = vrot.slane %v4051, 4
    %v4116 = vsel %vm3533, %v4114, %v4115
    %v4117 = vrot.slane %v4052, 4
    %v4118 = vrot.slane %v4053, 4
    %v4119 = vsel %vm3533, %v4117, %v4118
    %v4120 = vrot.slane %v4054, 4
    %v4121 = vrot.slane %v4055, 4
    %v4122 = vsel %vm3533, %v4120, %v4121
    %v4123 = vrot.slane %v4056, 4
    %v4124 = vrot.slane %v4057, 4
    %v4125 = vsel %vm3533, %v4123, %v4124
    %v4126 = vrot.slane %v4058, 4
    %v4127 = vrot.slane %v4059, 4
    %v4128 = vsel %vm3533, %v4126, %v4127
    %v4129 = vrot.slane %v4060, 4
    %v4130 = vrot.slane %v4061, 4
    %v4131 = vsel %vm3533, %v4129, %v4130
    %v4132 = vrot.slane %v4062, 4
    %v4133 = vrot.slane %v4063, 4
    %v4134 = vsel %vm3533, %v4132, %v4133
    %v4135 = vrot.slane %v4064, 4
    %v4136 = vrot.slane %v4065, 4
    %v4137 = vsel %vm3533, %v4135, %v4136
    %v4138 = vrot.slane %v4066, 4
    %v4139 = vrot.slane %v4067, 4
    %v4140 = vsel %vm3533, %v4138, %v4139
    %v4141 = vrot.slane %v4068, 4
    %v4142 = vrot.slane %v4069, 4
    %v4143 = vsel %vm3533, %v4141, %v4142
    %v4144 = vrot.slane %v4070, 4
    %v4145 = vrot.slane %v4071, 4
    %v4146 = vsel %vm3533, %v4144, %v4145
    %v4147 = vrot.slane %v4072, 4
    %v4148 = vrot.slane %v4073, 4
    %v4149 = vsel %vm3533, %v4147, %v4148
    %v4150 = vrot.slane %v4074, 4
    %v4151 = vrot.slane %v4075, 4
    %v4152 = vsel %vm3533, %v4150, %v4151
    %v4153 = vrot.slane %v4076, 4
    %v4154 = vrot.slane %v4077, 4
    %v4155 = vsel %vm3533, %v4153, %v4154
    %v4156 = vrot.slane %v4078, 4
    %v4157 = vrot.slane %v4079, 4
    %v4158 = vsel %vm3533, %v4156, %v4157
    %v4159 = vrot.slane %v4080, 4
    %v4160 = vrot.slane %v4081, 4
    %v4161 = vsel %vm3533, %v4159, %v4160
    %v4178 = vadd.f32 %v4033, %v4116
    %v4179 = vadd.f32 %v4034, %v4119
    %v4180 = vadd.f32 %v4035, %v4122
    %v4181 = vadd.f32 %v4036, %v4125
    %v4182 = vadd.f32 %v4037, %v4128
    %v4183 = vadd.f32 %v4038, %v4131
    %v4184 = vadd.f32 %v4039, %v4134
    %v4185 = vadd.f32 %v4040, %v4137
    %v4186 = vadd.f32 %v4041, %v4140
    %v4187 = vadd.f32 %v4042, %v4143
    %v4188 = vadd.f32 %v4043, %v4146
    %v4189 = vadd.f32 %v4044, %v4149
    %v4190 = vadd.f32 %v4045, %v4152
    %v4191 = vadd.f32 %v4046, %v4155
    %v4192 = vadd.f32 %v4047, %v4158
    %v4193 = vadd.f32 %v4048, %v4161
    %v4194 = vperm.slane %v186, 7
    %v4195 = vmul.f32 %v136, %v4194
    %v4196 = vmul.f32 %v137, %v4194
    %v4197 = vmul.f32 %v138, %v4194
    %v4198 = vmul.f32 %v139, %v4194
    %v4199 = vmul.f32 %v140, %v4194
    %v4200 = vmul.f32 %v141, %v4194
    %v4201 = vmul.f32 %v142, %v4194
    %v4202 = vmul.f32 %v143, %v4194
    %v4203 = vmul.f32 %v144, %v4194
    %v4204 = vmul.f32 %v145, %v4194
    %v4205 = vmul.f32 %v146, %v4194
    %v4206 = vmul.f32 %v147, %v4194
    %v4207 = vmul.f32 %v148, %v4194
    %v4208 = vmul.f32 %v149, %v4194
    %v4209 = vmul.f32 %v150, %v4194
    %v4210 = vmul.f32 %v151, %v4194
    %v4211 = vmul.f32 %v164, %v4194
    %v4212 = vmul.f32 %v165, %v4194
    %v4213 = vmul.f32 %v166, %v4194
    %v4214 = vmul.f32 %v167, %v4194
    %v4215 = vmul.f32 %v168, %v4194
    %v4216 = vmul.f32 %v169, %v4194
    %v4217 = vmul.f32 %v170, %v4194
    %v4218 = vmul.f32 %v171, %v4194
    %v4219 = vmul.f32 %v172, %v4194
    %v4220 = vmul.f32 %v173, %v4194
    %v4221 = vmul.f32 %v174, %v4194
    %v4222 = vmul.f32 %v175, %v4194
    %v4223 = vmul.f32 %v176, %v4194
    %v4224 = vmul.f32 %v177, %v4194
    %v4225 = vmul.f32 %v178, %v4194
    %v4226 = vmul.f32 %v179, %v4194
    %v4259 = vrot.slane %v4195, 4
    %v4260 = vrot.slane %v4196, 4
    %v4261 = vsel %vm3533, %v4259, %v4260
    %v4262 = vrot.slane %v4197, 4
    %v4263 = vrot.slane %v4198, 4
    %v4264 = vsel %vm3533, %v4262, %v4263
    %v4265 = vrot.slane %v4199, 4
    %v4266 = vrot.slane %v4200, 4
    %v4267 = vsel %vm3533, %v4265, %v4266
    %v4268 = vrot.slane %v4201, 4
    %v4269 = vrot.slane %v4202, 4
    %v4270 = vsel %vm3533, %v4268, %v4269
    %v4271 = vrot.slane %v4203, 4
    %v4272 = vrot.slane %v4204, 4
    %v4273 = vsel %vm3533, %v4271, %v4272
    %v4274 = vrot.slane %v4205, 4
    %v4275 = vrot.slane %v4206, 4
    %v4276 = vsel %vm3533, %v4274, %v4275
    %v4277 = vrot.slane %v4207, 4
    %v4278 = vrot.slane %v4208, 4
    %v4279 = vsel %vm3533, %v4277, %v4278
    %v4280 = vrot.slane %v4209, 4
    %v4281 = vrot.slane %v4210, 4
    %v4282 = vsel %vm3533, %v4280, %v4281
    %v4283 = vrot.slane %v4211, 4
    %v4284 = vrot.slane %v4212, 4
    %v4285 = vsel %vm3533, %v4283, %v4284
    %v4286 = vrot.slane %v4213, 4
    %v4287 = vrot.slane %v4214, 4
    %v4288 = vsel %vm3533, %v4286, %v4287
    %v4289 = vrot.slane %v4215, 4
    %v4290 = vrot.slane %v4216, 4
    %v4291 = vsel %vm3533, %v4289, %v4290
    %v4292 = vrot.slane %v4217, 4
    %v4293 = vrot.slane %v4218, 4
    %v4294 = vsel %vm3533, %v4292, %v4293
    %v4295 = vrot.slane %v4219, 4
    %v4296 = vrot.slane %v4220, 4
    %v4297 = vsel %vm3533, %v4295, %v4296
    %v4298 = vrot.slane %v4221, 4
    %v4299 = vrot.slane %v4222, 4
    %v4300 = vsel %vm3533, %v4298, %v4299
    %v4301 = vrot.slane %v4223, 4
    %v4302 = vrot.slane %v4224, 4
    %v4303 = vsel %vm3533, %v4301, %v4302
    %v4304 = vrot.slane %v4225, 4
    %v4305 = vrot.slane %v4226, 4
    %v4306 = vsel %vm3533, %v4304, %v4305
    %v4323 = vadd.f32 %v4178, %v4261
    %v4324 = vadd.f32 %v4179, %v4264
    %v4325 = vadd.f32 %v4180, %v4267
    %v4326 = vadd.f32 %v4181, %v4270
    %v4327 = vadd.f32 %v4182, %v4273
    %v4328 = vadd.f32 %v4183, %v4276
    %v4329 = vadd.f32 %v4184, %v4279
    %v4330 = vadd.f32 %v4185, %v4282
    %v4331 = vadd.f32 %v4186, %v4285
    %v4332 = vadd.f32 %v4187, %v4288
    %v4333 = vadd.f32 %v4188, %v4291
    %v4334 = vadd.f32 %v4189, %v4294
    %v4335 = vadd.f32 %v4190, %v4297
    %v4336 = vadd.f32 %v4191, %v4300
    %v4337 = vadd.f32 %v4192, %v4303
    %v4338 = vadd.f32 %v4193, %v4306
    %v4339 = vperm.slane %v187, 6
    %v4340 = vmul.f32 %v138, %v4339
    %v4341 = vmul.f32 %v139, %v4339
    %v4342 = vmul.f32 %v140, %v4339
    %v4343 = vmul.f32 %v141, %v4339
    %v4344 = vmul.f32 %v142, %v4339
    %v4345 = vmul.f32 %v143, %v4339
    %v4346 = vmul.f32 %v144, %v4339
    %v4347 = vmul.f32 %v145, %v4339
    %v4348 = vmul.f32 %v146, %v4339
    %v4349 = vmul.f32 %v147, %v4339
    %v4350 = vmul.f32 %v148, %v4339
    %v4351 = vmul.f32 %v149, %v4339
    %v4352 = vmul.f32 %v150, %v4339
    %v4353 = vmul.f32 %v151, %v4339
    %v4354 = vmul.f32 %v152, %v4339
    %v4355 = vmul.f32 %v153, %v4339
    %v4356 = vmul.f32 %v166, %v4339
    %v4357 = vmul.f32 %v167, %v4339
    %v4358 = vmul.f32 %v168, %v4339
    %v4359 = vmul.f32 %v169, %v4339
    %v4360 = vmul.f32 %v170, %v4339
    %v4361 = vmul.f32 %v171, %v4339
    %v4362 = vmul.f32 %v172, %v4339
    %v4363 = vmul.f32 %v173, %v4339
    %v4364 = vmul.f32 %v174, %v4339
    %v4365 = vmul.f32 %v175, %v4339
    %v4366 = vmul.f32 %v176, %v4339
    %v4367 = vmul.f32 %v177, %v4339
    %v4368 = vmul.f32 %v178, %v4339
    %v4369 = vmul.f32 %v179, %v4339
    %v4370 = vmul.f32 %v180, %v4339
    %v4371 = vmul.f32 %v181, %v4339
    %v4404 = vrot.slane %v4340, 4
    %v4405 = vrot.slane %v4341, 4
    %v4406 = vsel %vm3533, %v4404, %v4405
    %v4407 = vrot.slane %v4342, 4
    %v4408 = vrot.slane %v4343, 4
    %v4409 = vsel %vm3533, %v4407, %v4408
    %v4410 = vrot.slane %v4344, 4
    %v4411 = vrot.slane %v4345, 4
    %v4412 = vsel %vm3533, %v4410, %v4411
    %v4413 = vrot.slane %v4346, 4
    %v4414 = vrot.slane %v4347, 4
    %v4415 = vsel %vm3533, %v4413, %v4414
    %v4416 = vrot.slane %v4348, 4
    %v4417 = vrot.slane %v4349, 4
    %v4418 = vsel %vm3533, %v4416, %v4417
    %v4419 = vrot.slane %v4350, 4
    %v4420 = vrot.slane %v4351, 4
    %v4421 = vsel %vm3533, %v4419, %v4420
    %v4422 = vrot.slane %v4352, 4
    %v4423 = vrot.slane %v4353, 4
    %v4424 = vsel %vm3533, %v4422, %v4423
    %v4425 = vrot.slane %v4354, 4
    %v4426 = vrot.slane %v4355, 4
    %v4427 = vsel %vm3533, %v4425, %v4426
    %v4428 = vrot.slane %v4356, 4
    %v4429 = vrot.slane %v4357, 4
    %v4430 = vsel %vm3533, %v4428, %v4429
    %v4431 = vrot.slane %v4358, 4
    %v4432 = vrot.slane %v4359, 4
    %v4433 = vsel %vm3533, %v4431, %v4432
    %v4434 = vrot.slane %v4360, 4
    %v4435 = vrot.slane %v4361, 4
    %v4436 = vsel %vm3533, %v4434, %v4435
    %v4437 = vrot.slane %v4362, 4
    %v4438 = vrot.slane %v4363, 4
    %v4439 = vsel %vm3533, %v4437, %v4438
    %v4440 = vrot.slane %v4364, 4
    %v4441 = vrot.slane %v4365, 4
    %v4442 = vsel %vm3533, %v4440, %v4441
    %v4443 = vrot.slane %v4366, 4
    %v4444 = vrot.slane %v4367, 4
    %v4445 = vsel %vm3533, %v4443, %v4444
    %v4446 = vrot.slane %v4368, 4
    %v4447 = vrot.slane %v4369, 4
    %v4448 = vsel %vm3533, %v4446, %v4447
    %v4449 = vrot.slane %v4370, 4
    %v4450 = vrot.slane %v4371, 4
    %v4451 = vsel %vm3533, %v4449, %v4450
    %v4468 = vadd.f32 %v4323, %v4406
    %v4469 = vadd.f32 %v4324, %v4409
    %v4470 = vadd.f32 %v4325, %v4412
    %v4471 = vadd.f32 %v4326, %v4415
    %v4472 = vadd.f32 %v4327, %v4418
    %v4473 = vadd.f32 %v4328, %v4421
    %v4474 = vadd.f32 %v4329, %v4424
    %v4475 = vadd.f32 %v4330, %v4427
    %v4476 = vadd.f32 %v4331, %v4430
    %v4477 = vadd.f32 %v4332, %v4433
    %v4478 = vadd.f32 %v4333, %v4436
    %v4479 = vadd.f32 %v4334, %v4439
    %v4480 = vadd.f32 %v4335, %v4442
    %v4481 = vadd.f32 %v4336, %v4445
    %v4482 = vadd.f32 %v4337, %v4448
    %v4483 = vadd.f32 %v4338, %v4451
    %v4484 = vperm.slane %v182, 5
    %v4485 = vmul.f32 %v126, %v4484
    %v4486 = vmul.f32 %v127, %v4484
    %v4487 = vmul.f32 %v128, %v4484
    %v4488 = vmul.f32 %v129, %v4484
    %v4489 = vmul.f32 %v130, %v4484
    %v4490 = vmul.f32 %v131, %v4484
    %v4491 = vmul.f32 %v132, %v4484
    %v4492 = vmul.f32 %v133, %v4484
    %v4493 = vmul.f32 %v134, %v4484
    %v4494 = vmul.f32 %v135, %v4484
    %v4495 = vmul.f32 %v136, %v4484
    %v4496 = vmul.f32 %v137, %v4484
    %v4497 = vmul.f32 %v138, %v4484
    %v4498 = vmul.f32 %v139, %v4484
    %v4499 = vmul.f32 %v140, %v4484
    %v4500 = vmul.f32 %v141, %v4484
    %v4501 = vmul.f32 %v154, %v4484
    %v4502 = vmul.f32 %v155, %v4484
    %v4503 = vmul.f32 %v156, %v4484
    %v4504 = vmul.f32 %v157, %v4484
    %v4505 = vmul.f32 %v158, %v4484
    %v4506 = vmul.f32 %v159, %v4484
    %v4507 = vmul.f32 %v160, %v4484
    %v4508 = vmul.f32 %v161, %v4484
    %v4509 = vmul.f32 %v162, %v4484
    %v4510 = vmul.f32 %v163, %v4484
    %v4511 = vmul.f32 %v164, %v4484
    %v4512 = vmul.f32 %v165, %v4484
    %v4513 = vmul.f32 %v166, %v4484
    %v4514 = vmul.f32 %v167, %v4484
    %v4515 = vmul.f32 %v168, %v4484
    %v4516 = vmul.f32 %v169, %v4484
    %vm4549 = vcmask 1042432
    %v4550 = vrot.slane %v4485, 5
    %v4551 = vrot.slane %v4486, 5
    %v4552 = vsel %vm4549, %v4550, %v4551
    %v4553 = vrot.slane %v4487, 5
    %v4554 = vrot.slane %v4488, 5
    %v4555 = vsel %vm4549, %v4553, %v4554
    %v4556 = vrot.slane %v4489, 5
    %v4557 = vrot.slane %v4490, 5
    %v4558 = vsel %vm4549, %v4556, %v4557
    %v4559 = vrot.slane %v4491, 5
    %v4560 = vrot.slane %v4492, 5
    %v4561 = vsel %vm4549, %v4559, %v4560
    %v4562 = vrot.slane %v4493, 5
    %v4563 = vrot.slane %v4494, 5
    %v4564 = vsel %vm4549, %v4562, %v4563
    %v4565 = vrot.slane %v4495, 5
    %v4566 = vrot.slane %v4496, 5
    %v4567 = vsel %vm4549, %v4565, %v4566
    %v4568 = vrot.slane %v4497, 5
    %v4569 = vrot.slane %v4498, 5
    %v4570 = vsel %vm4549, %v4568, %v4569
    %v4571 = vrot.slane %v4499, 5
    %v4572 = vrot.slane %v4500, 5
    %v4573 = vsel %vm4549, %v4571, %v4572
    %v4574 = vrot.slane %v4501, 5
    %v4575 = vrot.slane %v4502, 5
    %v4576 = vsel %vm4549, %v4574, %v4575
    %v4577 = vrot.slane %v4503, 5
    %v4578 = vrot.slane %v4504, 5
    %v4579 = vsel %vm4549, %v4577, %v4578
    %v4580 = vrot.slane %v4505, 5
    %v4581 = vrot.slane %v4506, 5
    %v4582 = vsel %vm4549, %v4580, %v4581
    %v4583 = vrot.slane %v4507, 5
    %v4584 = vrot.slane %v4508, 5
    %v4585 = vsel %vm4549, %v4583, %v4584
    %v4586 = vrot.slane %v4509, 5
    %v4587 = vrot.slane %v4510, 5
    %v4588 = vsel %vm4549, %v4586, %v4587
    %v4589 = vrot.slane %v4511, 5
    %v4590 = vrot.slane %v4512, 5
    %v4591 = vsel %vm4549, %v4589, %v4590
    %v4592 = vrot.slane %v4513, 5
    %v4593 = vrot.slane %v4514, 5
    %v4594 = vsel %vm4549, %v4592, %v4593
    %v4595 = vrot.slane %v4515, 5
    %v4596 = vrot.slane %v4516, 5
    %v4597 = vsel %vm4549, %v4595, %v4596
    %v4614 = vadd.f32 %v4468, %v4552
    %v4615 = vadd.f32 %v4469, %v4555
    %v4616 = vadd.f32 %v4470, %v4558
    %v4617 = vadd.f32 %v4471, %v4561
    %v4618 = vadd.f32 %v4472, %v4564
    %v4619 = vadd.f32 %v4473, %v4567
    %v4620 = vadd.f32 %v4474, %v4570
    %v4621 = vadd.f32 %v4475, %v4573
    %v4622 = vadd.f32 %v4476, %v4576
    %v4623 = vadd.f32 %v4477, %v4579
    %v4624 = vadd.f32 %v4478, %v4582
    %v4625 = vadd.f32 %v4479, %v4585
    %v4626 = vadd.f32 %v4480, %v4588
    %v4627 = vadd.f32 %v4481, %v4591
    %v4628 = vadd.f32 %v4482, %v4594
    %v4629 = vadd.f32 %v4483, %v4597
    %v4630 = vperm.slane %v183, 4
    %v4631 = vmul.f32 %v128, %v4630
    %v4632 = vmul.f32 %v129, %v4630
    %v4633 = vmul.f32 %v130, %v4630
    %v4634 = vmul.f32 %v131, %v4630
    %v4635 = vmul.f32 %v132, %v4630
    %v4636 = vmul.f32 %v133, %v4630
    %v4637 = vmul.f32 %v134, %v4630
    %v4638 = vmul.f32 %v135, %v4630
    %v4639 = vmul.f32 %v136, %v4630
    %v4640 = vmul.f32 %v137, %v4630
    %v4641 = vmul.f32 %v138, %v4630
    %v4642 = vmul.f32 %v139, %v4630
    %v4643 = vmul.f32 %v140, %v4630
    %v4644 = vmul.f32 %v141, %v4630
    %v4645 = vmul.f32 %v142, %v4630
    %v4646 = vmul.f32 %v143, %v4630
    %v4647 = vmul.f32 %v156, %v4630
    %v4648 = vmul.f32 %v157, %v4630
    %v4649 = vmul.f32 %v158, %v4630
    %v4650 = vmul.f32 %v159, %v4630
    %v4651 = vmul.f32 %v160, %v4630
    %v4652 = vmul.f32 %v161, %v4630
    %v4653 = vmul.f32 %v162, %v4630
    %v4654 = vmul.f32 %v163, %v4630
    %v4655 = vmul.f32 %v164, %v4630
    %v4656 = vmul.f32 %v165, %v4630
    %v4657 = vmul.f32 %v166, %v4630
    %v4658 = vmul.f32 %v167, %v4630
    %v4659 = vmul.f32 %v168, %v4630
    %v4660 = vmul.f32 %v169, %v4630
    %v4661 = vmul.f32 %v170, %v4630
    %v4662 = vmul.f32 %v171, %v4630
    %v4695 = vrot.slane %v4631, 5
    %v4696 = vrot.slane %v4632, 5
    %v4697 = vsel %vm4549, %v4695, %v4696
    %v4698 = vrot.slane %v4633, 5
    %v4699 = vrot.slane %v4634, 5
    %v4700 = vsel %vm4549, %v4698, %v4699
    %v4701 = vrot.slane %v4635, 5
    %v4702 = vrot.slane %v4636, 5
    %v4703 = vsel %vm4549, %v4701, %v4702
    %v4704 = vrot.slane %v4637, 5
    %v4705 = vrot.slane %v4638, 5
    %v4706 = vsel %vm4549, %v4704, %v4705
    %v4707 = vrot.slane %v4639, 5
    %v4708 = vrot.slane %v4640, 5
    %v4709 = vsel %vm4549, %v4707, %v4708
    %v4710 = vrot.slane %v4641, 5
    %v4711 = vrot.slane %v4642, 5
    %v4712 = vsel %vm4549, %v4710, %v4711
    %v4713 = vrot.slane %v4643, 5
    %v4714 = vrot.slane %v4644, 5
    %v4715 = vsel %vm4549, %v4713, %v4714
    %v4716 = vrot.slane %v4645, 5
    %v4717 = vrot.slane %v4646, 5
    %v4718 = vsel %vm4549, %v4716, %v4717
    %v4719 = vrot.slane %v4647, 5
    %v4720 = vrot.slane %v4648, 5
    %v4721 = vsel %vm4549, %v4719, %v4720
    %v4722 = vrot.slane %v4649, 5
    %v4723 = vrot.slane %v4650, 5
    %v4724 = vsel %vm4549, %v4722, %v4723
    %v4725 = vrot.slane %v4651, 5
    %v4726 = vrot.slane %v4652, 5
    %v4727 = vsel %vm4549, %v4725, %v4726
    %v4728 = vrot.slane %v4653, 5
    %v4729 = vrot.slane %v4654, 5
    %v4730 = vsel %vm4549, %v4728, %v4729
    %v4731 = vrot.slane %v4655, 5
    %v4732 = vrot.slane %v4656, 5
    %v4733 = vsel %vm4549, %v4731, %v4732
    %v4734 = vrot.slane %v4657, 5
    %v4735 = vrot.slane %v4658, 5
    %v4736 = vsel %vm4549, %v4734, %v4735
    %v4737 = vrot.slane %v4659, 5
    %v4738 = vrot.slane %v4660, 5
    %v4739 = vsel %vm4549, %v4737, %v4738
    %v4740 = vrot.slane %v4661, 5
    %v4741 = vrot.slane %v4662, 5
    %v4742 = vsel %vm4549, %v4740, %v4741
    %v4759 = vadd.f32 %v4614, %v4697
    %v4760 = vadd.f32 %v4615, %v4700
    %v4761 = vadd.f32 %v4616, %v4703
    %v4762 = vadd.f32 %v4617, %v4706
    %v4763 = vadd.f32 %v4618, %v4709
    %v4764 = vadd.f32 %v4619, %v4712
    %v4765 = vadd.f32 %v4620, %v4715
    %v4766 = vadd.f32 %v4621, %v4718
    %v4767 = vadd.f32 %v4622, %v4721
    %v4768 = vadd.f32 %v4623, %v4724
    %v4769 = vadd.f32 %v4624, %v4727
    %v4770 = vadd.f32 %v4625, %v4730
    %v4771 = vadd.f32 %v4626, %v4733
    %v4772 = vadd.f32 %v4627, %v4736
    %v4773 = vadd.f32 %v4628, %v4739
    %v4774 = vadd.f32 %v4629, %v4742
    %v4775 = vperm.slane %v184, 3
    %v4776 = vmul.f32 %v130, %v4775
    %v4777 = vmul.f32 %v131, %v4775
    %v4778 = vmul.f32 %v132, %v4775
    %v4779 = vmul.f32 %v133, %v4775
    %v4780 = vmul.f32 %v134, %v4775
    %v4781 = vmul.f32 %v135, %v4775
    %v4782 = vmul.f32 %v136, %v4775
    %v4783 = vmul.f32 %v137, %v4775
    %v4784 = vmul.f32 %v138, %v4775
    %v4785 = vmul.f32 %v139, %v4775
    %v4786 = vmul.f32 %v140, %v4775
    %v4787 = vmul.f32 %v141, %v4775
    %v4788 = vmul.f32 %v142, %v4775
    %v4789 = vmul.f32 %v143, %v4775
    %v4790 = vmul.f32 %v144, %v4775
    %v4791 = vmul.f32 %v145, %v4775
    %v4792 = vmul.f32 %v158, %v4775
    %v4793 = vmul.f32 %v159, %v4775
    %v4794 = vmul.f32 %v160, %v4775
    %v4795 = vmul.f32 %v161, %v4775
    %v4796 = vmul.f32 %v162, %v4775
    %v4797 = vmul.f32 %v163, %v4775
    %v4798 = vmul.f32 %v164, %v4775
    %v4799 = vmul.f32 %v165, %v4775
    %v4800 = vmul.f32 %v166, %v4775
    %v4801 = vmul.f32 %v167, %v4775
    %v4802 = vmul.f32 %v168, %v4775
    %v4803 = vmul.f32 %v169, %v4775
    %v4804 = vmul.f32 %v170, %v4775
    %v4805 = vmul.f32 %v171, %v4775
    %v4806 = vmul.f32 %v172, %v4775
    %v4807 = vmul.f32 %v173, %v4775
    %v4840 = vrot.slane %v4776, 5
    %v4841 = vrot.slane %v4777, 5
    %v4842 = vsel %vm4549, %v4840, %v4841
    %v4843 = vrot.slane %v4778, 5
    %v4844 = vrot.slane %v4779, 5
    %v4845 = vsel %vm4549, %v4843, %v4844
    %v4846 = vrot.slane %v4780, 5
    %v4847 = vrot.slane %v4781, 5
    %v4848 = vsel %vm4549, %v4846, %v4847
    %v4849 = vrot.slane %v4782, 5
    %v4850 = vrot.slane %v4783, 5
    %v4851 = vsel %vm4549, %v4849, %v4850
    %v4852 = vrot.slane %v4784, 5
    %v4853 = vrot.slane %v4785, 5
    %v4854 = vsel %vm4549, %v4852, %v4853
    %v4855 = vrot.slane %v4786, 5
    %v4856 = vrot.slane %v4787, 5
    %v4857 = vsel %vm4549, %v4855, %v4856
    %v4858 = vrot.slane %v4788, 5
    %v4859 = vrot.slane %v4789, 5
    %v4860 = vsel %vm4549, %v4858, %v4859
    %v4861 = vrot.slane %v4790, 5
    %v4862 = vrot.slane %v4791, 5
    %v4863 = vsel %vm4549, %v4861, %v4862
    %v4864 = vrot.slane %v4792, 5
    %v4865 = vrot.slane %v4793, 5
    %v4866 = vsel %vm4549, %v4864, %v4865
    %v4867 = vrot.slane %v4794, 5
    %v4868 = vrot.slane %v4795, 5
    %v4869 = vsel %vm4549, %v4867, %v4868
    %v4870 = vrot.slane %v4796, 5
    %v4871 = vrot.slane %v4797, 5
    %v4872 = vsel %vm4549, %v4870, %v4871
    %v4873 = vrot.slane %v4798, 5
    %v4874 = vrot.slane %v4799, 5
    %v4875 = vsel %vm4549, %v4873, %v4874
    %v4876 = vrot.slane %v4800, 5
    %v4877 = vrot.slane %v4801, 5
    %v4878 = vsel %vm4549, %v4876, %v4877
    %v4879 = vrot.slane %v4802, 5
    %v4880 = vrot.slane %v4803, 5
    %v4881 = vsel %vm4549, %v4879, %v4880
    %v4882 = vrot.slane %v4804, 5
    %v4883 = vrot.slane %v4805, 5
    %v4884 = vsel %vm4549, %v4882, %v4883
    %v4885 = vrot.slane %v4806, 5
    %v4886 = vrot.slane %v4807, 5
    %v4887 = vsel %vm4549, %v4885, %v4886
    %v4904 = vadd.f32 %v4759, %v4842
    %v4905 = vadd.f32 %v4760, %v4845
    %v4906 = vadd.f32 %v4761, %v4848
    %v4907 = vadd.f32 %v4762, %v4851
    %v4908 = vadd.f32 %v4763, %v4854
    %v4909 = vadd.f32 %v4764, %v4857
    %v4910 = vadd.f32 %v4765, %v4860
    %v4911 = vadd.f32 %v4766, %v4863
    %v4912 = vadd.f32 %v4767, %v4866
    %v4913 = vadd.f32 %v4768, %v4869
    %v4914 = vadd.f32 %v4769, %v4872
    %v4915 = vadd.f32 %v4770, %v4875
    %v4916 = vadd.f32 %v4771, %v4878
    %v4917 = vadd.f32 %v4772, %v4881
    %v4918 = vadd.f32 %v4773, %v4884
    %v4919 = vadd.f32 %v4774, %v4887
    %v4920 = vperm.slane %v185, 2
    %v4921 = vmul.f32 %v132, %v4920
    %v4922 = vmul.f32 %v133, %v4920
    %v4923 = vmul.f32 %v134, %v4920
    %v4924 = vmul.f32 %v135, %v4920
    %v4925 = vmul.f32 %v136, %v4920
    %v4926 = vmul.f32 %v137, %v4920
    %v4927 = vmul.f32 %v138, %v4920
    %v4928 = vmul.f32 %v139, %v4920
    %v4929 = vmul.f32 %v140, %v4920
    %v4930 = vmul.f32 %v141, %v4920
    %v4931 = vmul.f32 %v142, %v4920
    %v4932 = vmul.f32 %v143, %v4920
    %v4933 = vmul.f32 %v144, %v4920
    %v4934 = vmul.f32 %v145, %v4920
    %v4935 = vmul.f32 %v146, %v4920
    %v4936 = vmul.f32 %v147, %v4920
    %v4937 = vmul.f32 %v160, %v4920
    %v4938 = vmul.f32 %v161, %v4920
    %v4939 = vmul.f32 %v162, %v4920
    %v4940 = vmul.f32 %v163, %v4920
    %v4941 = vmul.f32 %v164, %v4920
    %v4942 = vmul.f32 %v165, %v4920
    %v4943 = vmul.f32 %v166, %v4920
    %v4944 = vmul.f32 %v167, %v4920
    %v4945 = vmul.f32 %v168, %v4920
    %v4946 = vmul.f32 %v169, %v4920
    %v4947 = vmul.f32 %v170, %v4920
    %v4948 = vmul.f32 %v171, %v4920
    %v4949 = vmul.f32 %v172, %v4920
    %v4950 = vmul.f32 %v173, %v4920
    %v4951 = vmul.f32 %v174, %v4920
    %v4952 = vmul.f32 %v175, %v4920
    %v4985 = vrot.slane %v4921, 5
    %v4986 = vrot.slane %v4922, 5
    %v4987 = vsel %vm4549, %v4985, %v4986
    %v4988 = vrot.slane %v4923, 5
    %v4989 = vrot.slane %v4924, 5
    %v4990 = vsel %vm4549, %v4988, %v4989
    %v4991 = vrot.slane %v4925, 5
    %v4992 = vrot.slane %v4926, 5
    %v4993 = vsel %vm4549, %v4991, %v4992
    %v4994 = vrot.slane %v4927, 5
    %v4995 = vrot.slane %v4928, 5
    %v4996 = vsel %vm4549, %v4994, %v4995
    %v4997 = vrot.slane %v4929, 5
    %v4998 = vrot.slane %v4930, 5
    %v4999 = vsel %vm4549, %v4997, %v4998
    %v5000 = vrot.slane %v4931, 5
    %v5001 = vrot.slane %v4932, 5
    %v5002 = vsel %vm4549, %v5000, %v5001
    %v5003 = vrot.slane %v4933, 5
    %v5004 = vrot.slane %v4934, 5
    %v5005 = vsel %vm4549, %v5003, %v5004
    %v5006 = vrot.slane %v4935, 5
    %v5007 = vrot.slane %v4936, 5
    %v5008 = vsel %vm4549, %v5006, %v5007
    %v5009 = vrot.slane %v4937, 5
    %v5010 = vrot.slane %v4938, 5
    %v5011 = vsel %vm4549, %v5009, %v5010
    %v5012 = vrot.slane %v4939, 5
    %v5013 = vrot.slane %v4940, 5
    %v5014 = vsel %vm4549, %v5012, %v5013
    %v5015 = vrot.slane %v4941, 5
    %v5016 = vrot.slane %v4942, 5
    %v5017 = vsel %vm4549, %v5015, %v5016
    %v5018 = vrot.slane %v4943, 5
    %v5019 = vrot.slane %v4944, 5
    %v5020 = vsel %vm4549, %v5018, %v5019
    %v5021 = vrot.slane %v4945, 5
    %v5022 = vrot.slane %v4946, 5
    %v5023 = vsel %vm4549, %v5021, %v5022
    %v5024 = vrot.slane %v4947, 5
    %v5025 = vrot.slane %v4948, 5
    %v5026 = vsel %vm4549, %v5024, %v5025
    %v5027 = vrot.slane %v4949, 5
    %v5028 = vrot.slane %v4950, 5
    %v5029 = vsel %vm4549, %v5027, %v5028
    %v5030 = vrot.slane %v4951, 5
    %v5031 = vrot.slane %v4952, 5
    %v5032 = vsel %vm4549, %v5030, %v5031
    %v5049 = vadd.f32 %v4904, %v4987
    %v5050 = vadd.f32 %v4905, %v4990
    %v5051 = vadd.f32 %v4906, %v4993
    %v5052 = vadd.f32 %v4907, %v4996
    %v5053 = vadd.f32 %v4908, %v4999
    %v5054 = vadd.f32 %v4909, %v5002
    %v5055 = vadd.f32 %v4910, %v5005
    %v5056 = vadd.f32 %v4911, %v5008
    %v5057 = vadd.f32 %v4912, %v5011
    %v5058 = vadd.f32 %v4913, %v5014
    %v5059 = vadd.f32 %v4914, %v5017
    %v5060 = vadd.f32 %v4915, %v5020
    %v5061 = vadd.f32 %v4916, %v5023
    %v5062 = vadd.f32 %v4917, %v5026
    %v5063 = vadd.f32 %v4918, %v5029
    %v5064 = vadd.f32 %v4919, %v5032
    %v5065 = vperm.slane %v186, 1
    %v5066 = vmul.f32 %v134, %v5065
    %v5067 = vmul.f32 %v135, %v5065
    %v5068 = vmul.f32 %v136, %v5065
    %v5069 = vmul.f32 %v137, %v5065
    %v5070 = vmul.f32 %v138, %v5065
    %v5071 = vmul.f32 %v139, %v5065
    %v5072 = vmul.f32 %v140, %v5065
    %v5073 = vmul.f32 %v141, %v5065
    %v5074 = vmul.f32 %v142, %v5065
    %v5075 = vmul.f32 %v143, %v5065
    %v5076 = vmul.f32 %v144, %v5065
    %v5077 = vmul.f32 %v145, %v5065
    %v5078 = vmul.f32 %v146, %v5065
    %v5079 = vmul.f32 %v147, %v5065
    %v5080 = vmul.f32 %v148, %v5065
    %v5081 = vmul.f32 %v149, %v5065
    %v5082 = vmul.f32 %v162, %v5065
    %v5083 = vmul.f32 %v163, %v5065
    %v5084 = vmul.f32 %v164, %v5065
    %v5085 = vmul.f32 %v165, %v5065
    %v5086 = vmul.f32 %v166, %v5065
    %v5087 = vmul.f32 %v167, %v5065
    %v5088 = vmul.f32 %v168, %v5065
    %v5089 = vmul.f32 %v169, %v5065
    %v5090 = vmul.f32 %v170, %v5065
    %v5091 = vmul.f32 %v171, %v5065
    %v5092 = vmul.f32 %v172, %v5065
    %v5093 = vmul.f32 %v173, %v5065
    %v5094 = vmul.f32 %v174, %v5065
    %v5095 = vmul.f32 %v175, %v5065
    %v5096 = vmul.f32 %v176, %v5065
    %v5097 = vmul.f32 %v177, %v5065
    %v5130 = vrot.slane %v5066, 5
    %v5131 = vrot.slane %v5067, 5
    %v5132 = vsel %vm4549, %v5130, %v5131
    %v5133 = vrot.slane %v5068, 5
    %v5134 = vrot.slane %v5069, 5
    %v5135 = vsel %vm4549, %v5133, %v5134
    %v5136 = vrot.slane %v5070, 5
    %v5137 = vrot.slane %v5071, 5
    %v5138 = vsel %vm4549, %v5136, %v5137
    %v5139 = vrot.slane %v5072, 5
    %v5140 = vrot.slane %v5073, 5
    %v5141 = vsel %vm4549, %v5139, %v5140
    %v5142 = vrot.slane %v5074, 5
    %v5143 = vrot.slane %v5075, 5
    %v5144 = vsel %vm4549, %v5142, %v5143
    %v5145 = vrot.slane %v5076, 5
    %v5146 = vrot.slane %v5077, 5
    %v5147 = vsel %vm4549, %v5145, %v5146
    %v5148 = vrot.slane %v5078, 5
    %v5149 = vrot.slane %v5079, 5
    %v5150 = vsel %vm4549, %v5148, %v5149
    %v5151 = vrot.slane %v5080, 5
    %v5152 = vrot.slane %v5081, 5
    %v5153 = vsel %vm4549, %v5151, %v5152
    %v5154 = vrot.slane %v5082, 5
    %v5155 = vrot.slane %v5083, 5
    %v5156 = vsel %vm4549, %v5154, %v5155
    %v5157 = vrot.slane %v5084, 5
    %v5158 = vrot.slane %v5085, 5
    %v5159 = vsel %vm4549, %v5157, %v5158
    %v5160 = vrot.slane %v5086, 5
    %v5161 = vrot.slane %v5087, 5
    %v5162 = vsel %vm4549, %v5160, %v5161
    %v5163 = vrot.slane %v5088, 5
    %v5164 = vrot.slane %v5089, 5
    %v5165 = vsel %vm4549, %v5163, %v5164
    %v5166 = vrot.slane %v5090, 5
    %v5167 = vrot.slane %v5091, 5
    %v5168 = vsel %vm4549, %v5166, %v5167
    %v5169 = vrot.slane %v5092, 5
    %v5170 = vrot.slane %v5093, 5
    %v5171 = vsel %vm4549, %v5169, %v5170
    %v5172 = vrot.slane %v5094, 5
    %v5173 = vrot.slane %v5095, 5
    %v5174 = vsel %vm4549, %v5172, %v5173
    %v5175 = vrot.slane %v5096, 5
    %v5176 = vrot.slane %v5097, 5
    %v5177 = vsel %vm4549, %v5175, %v5176
    %v5194 = vadd.f32 %v5049, %v5132
    %v5195 = vadd.f32 %v5050, %v5135
    %v5196 = vadd.f32 %v5051, %v5138
    %v5197 = vadd.f32 %v5052, %v5141
    %v5198 = vadd.f32 %v5053, %v5144
    %v5199 = vadd.f32 %v5054, %v5147
    %v5200 = vadd.f32 %v5055, %v5150
    %v5201 = vadd.f32 %v5056, %v5153
    %v5202 = vadd.f32 %v5057, %v5156
    %v5203 = vadd.f32 %v5058, %v5159
    %v5204 = vadd.f32 %v5059, %v5162
    %v5205 = vadd.f32 %v5060, %v5165
    %v5206 = vadd.f32 %v5061, %v5168
    %v5207 = vadd.f32 %v5062, %v5171
    %v5208 = vadd.f32 %v5063, %v5174
    %v5209 = vadd.f32 %v5064, %v5177
    %v5210 = vperm.slane %v187, 0
    %v5211 = vmul.f32 %v136, %v5210
    %v5212 = vmul.f32 %v137, %v5210
    %v5213 = vmul.f32 %v138, %v5210
    %v5214 = vmul.f32 %v139, %v5210
    %v5215 = vmul.f32 %v140, %v5210
    %v5216 = vmul.f32 %v141, %v5210
    %v5217 = vmul.f32 %v142, %v5210
    %v5218 = vmul.f32 %v143, %v5210
    %v5219 = vmul.f32 %v144, %v5210
    %v5220 = vmul.f32 %v145, %v5210
    %v5221 = vmul.f32 %v146, %v5210
    %v5222 = vmul.f32 %v147, %v5210
    %v5223 = vmul.f32 %v148, %v5210
    %v5224 = vmul.f32 %v149, %v5210
    %v5225 = vmul.f32 %v150, %v5210
    %v5226 = vmul.f32 %v151, %v5210
    %v5227 = vmul.f32 %v164, %v5210
    %v5228 = vmul.f32 %v165, %v5210
    %v5229 = vmul.f32 %v166, %v5210
    %v5230 = vmul.f32 %v167, %v5210
    %v5231 = vmul.f32 %v168, %v5210
    %v5232 = vmul.f32 %v169, %v5210
    %v5233 = vmul.f32 %v170, %v5210
    %v5234 = vmul.f32 %v171, %v5210
    %v5235 = vmul.f32 %v172, %v5210
    %v5236 = vmul.f32 %v173, %v5210
    %v5237 = vmul.f32 %v174, %v5210
    %v5238 = vmul.f32 %v175, %v5210
    %v5239 = vmul.f32 %v176, %v5210
    %v5240 = vmul.f32 %v177, %v5210
    %v5241 = vmul.f32 %v178, %v5210
    %v5242 = vmul.f32 %v179, %v5210
    %v5275 = vrot.slane %v5211, 5
    %v5276 = vrot.slane %v5212, 5
    %v5277 = vsel %vm4549, %v5275, %v5276
    %v5278 = vrot.slane %v5213, 5
    %v5279 = vrot.slane %v5214, 5
    %v5280 = vsel %vm4549, %v5278, %v5279
    %v5281 = vrot.slane %v5215, 5
    %v5282 = vrot.slane %v5216, 5
    %v5283 = vsel %vm4549, %v5281, %v5282
    %v5284 = vrot.slane %v5217, 5
    %v5285 = vrot.slane %v5218, 5
    %v5286 = vsel %vm4549, %v5284, %v5285
    %v5287 = vrot.slane %v5219, 5
    %v5288 = vrot.slane %v5220, 5
    %v5289 = vsel %vm4549, %v5287, %v5288
    %v5290 = vrot.slane %v5221, 5
    %v5291 = vrot.slane %v5222, 5
    %v5292 = vsel %vm4549, %v5290, %v5291
    %v5293 = vrot.slane %v5223, 5
    %v5294 = vrot.slane %v5224, 5
    %v5295 = vsel %vm4549, %v5293, %v5294
    %v5296 = vrot.slane %v5225, 5
    %v5297 = vrot.slane %v5226, 5
    %v5298 = vsel %vm4549, %v5296, %v5297
    %v5299 = vrot.slane %v5227, 5
    %v5300 = vrot.slane %v5228, 5
    %v5301 = vsel %vm4549, %v5299, %v5300
    %v5302 = vrot.slane %v5229, 5
    %v5303 = vrot.slane %v5230, 5
    %v5304 = vsel %vm4549, %v5302, %v5303
    %v5305 = vrot.slane %v5231, 5
    %v5306 = vrot.slane %v5232, 5
    %v5307 = vsel %vm4549, %v5305, %v5306
    %v5308 = vrot.slane %v5233, 5
    %v5309 = vrot.slane %v5234, 5
    %v5310 = vsel %vm4549, %v5308, %v5309
    %v5311 = vrot.slane %v5235, 5
    %v5312 = vrot.slane %v5236, 5
    %v5313 = vsel %vm4549, %v5311, %v5312
    %v5314 = vrot.slane %v5237, 5
    %v5315 = vrot.slane %v5238, 5
    %v5316 = vsel %vm4549, %v5314, %v5315
    %v5317 = vrot.slane %v5239, 5
    %v5318 = vrot.slane %v5240, 5
    %v5319 = vsel %vm4549, %v5317, %v5318
    %v5320 = vrot.slane %v5241, 5
    %v5321 = vrot.slane %v5242, 5
    %v5322 = vsel %vm4549, %v5320, %v5321
    %v5339 = vadd.f32 %v5194, %v5277
    %v5340 = vadd.f32 %v5195, %v5280
    %v5341 = vadd.f32 %v5196, %v5283
    %v5342 = vadd.f32 %v5197, %v5286
    %v5343 = vadd.f32 %v5198, %v5289
    %v5344 = vadd.f32 %v5199, %v5292
    %v5345 = vadd.f32 %v5200, %v5295
    %v5346 = vadd.f32 %v5201, %v5298
    %v5347 = vadd.f32 %v5202, %v5301
    %v5348 = vadd.f32 %v5203, %v5304
    %v5349 = vadd.f32 %v5204, %v5307
    %v5350 = vadd.f32 %v5205, %v5310
    %v5351 = vadd.f32 %v5206, %v5313
    %v5352 = vadd.f32 %v5207, %v5316
    %v5353 = vadd.f32 %v5208, %v5319
    %v5354 = vadd.f32 %v5209, %v5322
    %v5355 = vperm.slane %v187, 7
    %v5356 = vmul.f32 %v138, %v5355
    %v5357 = vmul.f32 %v139, %v5355
    %v5358 = vmul.f32 %v140, %v5355
    %v5359 = vmul.f32 %v141, %v5355
    %v5360 = vmul.f32 %v142, %v5355
    %v5361 = vmul.f32 %v143, %v5355
    %v5362 = vmul.f32 %v144, %v5355
    %v5363 = vmul.f32 %v145, %v5355
    %v5364 = vmul.f32 %v146, %v5355
    %v5365 = vmul.f32 %v147, %v5355
    %v5366 = vmul.f32 %v148, %v5355
    %v5367 = vmul.f32 %v149, %v5355
    %v5368 = vmul.f32 %v150, %v5355
    %v5369 = vmul.f32 %v151, %v5355
    %v5370 = vmul.f32 %v152, %v5355
    %v5371 = vmul.f32 %v153, %v5355
    %v5372 = vmul.f32 %v166, %v5355
    %v5373 = vmul.f32 %v167, %v5355
    %v5374 = vmul.f32 %v168, %v5355
    %v5375 = vmul.f32 %v169, %v5355
    %v5376 = vmul.f32 %v170, %v5355
    %v5377 = vmul.f32 %v171, %v5355
    %v5378 = vmul.f32 %v172, %v5355
    %v5379 = vmul.f32 %v173, %v5355
    %v5380 = vmul.f32 %v174, %v5355
    %v5381 = vmul.f32 %v175, %v5355
    %v5382 = vmul.f32 %v176, %v5355
    %v5383 = vmul.f32 %v177, %v5355
    %v5384 = vmul.f32 %v178, %v5355
    %v5385 = vmul.f32 %v179, %v5355
    %v5386 = vmul.f32 %v180, %v5355
    %v5387 = vmul.f32 %v181, %v5355
    %v5420 = vrot.slane %v5356, 5
    %v5421 = vrot.slane %v5357, 5
    %v5422 = vsel %vm4549, %v5420, %v5421
    %v5423 = vrot.slane %v5358, 5
    %v5424 = vrot.slane %v5359, 5
    %v5425 = vsel %vm4549, %v5423, %v5424
    %v5426 = vrot.slane %v5360, 5
    %v5427 = vrot.slane %v5361, 5
    %v5428 = vsel %vm4549, %v5426, %v5427
    %v5429 = vrot.slane %v5362, 5
    %v5430 = vrot.slane %v5363, 5
    %v5431 = vsel %vm4549, %v5429, %v5430
    %v5432 = vrot.slane %v5364, 5
    %v5433 = vrot.slane %v5365, 5
    %v5434 = vsel %vm4549, %v5432, %v5433
    %v5435 = vrot.slane %v5366, 5
    %v5436 = vrot.slane %v5367, 5
    %v5437 = vsel %vm4549, %v5435, %v5436
    %v5438 = vrot.slane %v5368, 5
    %v5439 = vrot.slane %v5369, 5
    %v5440 = vsel %vm4549, %v5438, %v5439
    %v5441 = vrot.slane %v5370, 5
    %v5442 = vrot.slane %v5371, 5
    %v5443 = vsel %vm4549, %v5441, %v5442
    %v5444 = vrot.slane %v5372, 5
    %v5445 = vrot.slane %v5373, 5
    %v5446 = vsel %vm4549, %v5444, %v5445
    %v5447 = vrot.slane %v5374, 5
    %v5448 = vrot.slane %v5375, 5
    %v5449 = vsel %vm4549, %v5447, %v5448
    %v5450 = vrot.slane %v5376, 5
    %v5451 = vrot.slane %v5377, 5
    %v5452 = vsel %vm4549, %v5450, %v5451
    %v5453 = vrot.slane %v5378, 5
    %v5454 = vrot.slane %v5379, 5
    %v5455 = vsel %vm4549, %v5453, %v5454
    %v5456 = vrot.slane %v5380, 5
    %v5457 = vrot.slane %v5381, 5
    %v5458 = vsel %vm4549, %v5456, %v5457
    %v5459 = vrot.slane %v5382, 5
    %v5460 = vrot.slane %v5383, 5
    %v5461 = vsel %vm4549, %v5459, %v5460
    %v5462 = vrot.slane %v5384, 5
    %v5463 = vrot.slane %v5385, 5
    %v5464 = vsel %vm4549, %v5462, %v5463
    %v5465 = vrot.slane %v5386, 5
    %v5466 = vrot.slane %v5387, 5
    %v5467 = vsel %vm4549, %v5465, %v5466
    %v5484 = vadd.f32 %v5339, %v5422
    %v5485 = vadd.f32 %v5340, %v5425
    %v5486 = vadd.f32 %v5341, %v5428
    %v5487 = vadd.f32 %v5342, %v5431
    %v5488 = vadd.f32 %v5343, %v5434
    %v5489 = vadd.f32 %v5344, %v5437
    %v5490 = vadd.f32 %v5345, %v5440
    %v5491 = vadd.f32 %v5346, %v5443
    %v5492 = vadd.f32 %v5347, %v5446
    %v5493 = vadd.f32 %v5348, %v5449
    %v5494 = vadd.f32 %v5349, %v5452
    %v5495 = vadd.f32 %v5350, %v5455
    %v5496 = vadd.f32 %v5351, %v5458
    %v5497 = vadd.f32 %v5352, %v5461
    %v5498 = vadd.f32 %v5353, %v5464
    %v5499 = vadd.f32 %v5354, %v5467
    %v5500 = vperm.slane %v182, 6
    %v5501 = vmul.f32 %v126, %v5500
    %v5502 = vmul.f32 %v127, %v5500
    %v5503 = vmul.f32 %v128, %v5500
    %v5504 = vmul.f32 %v129, %v5500
    %v5505 = vmul.f32 %v130, %v5500
    %v5506 = vmul.f32 %v131, %v5500
    %v5507 = vmul.f32 %v132, %v5500
    %v5508 = vmul.f32 %v133, %v5500
    %v5509 = vmul.f32 %v134, %v5500
    %v5510 = vmul.f32 %v135, %v5500
    %v5511 = vmul.f32 %v136, %v5500
    %v5512 = vmul.f32 %v137, %v5500
    %v5513 = vmul.f32 %v138, %v5500
    %v5514 = vmul.f32 %v139, %v5500
    %v5515 = vmul.f32 %v140, %v5500
    %v5516 = vmul.f32 %v141, %v5500
    %v5517 = vmul.f32 %v154, %v5500
    %v5518 = vmul.f32 %v155, %v5500
    %v5519 = vmul.f32 %v156, %v5500
    %v5520 = vmul.f32 %v157, %v5500
    %v5521 = vmul.f32 %v158, %v5500
    %v5522 = vmul.f32 %v159, %v5500
    %v5523 = vmul.f32 %v160, %v5500
    %v5524 = vmul.f32 %v161, %v5500
    %v5525 = vmul.f32 %v162, %v5500
    %v5526 = vmul.f32 %v163, %v5500
    %v5527 = vmul.f32 %v164, %v5500
    %v5528 = vmul.f32 %v165, %v5500
    %v5529 = vmul.f32 %v166, %v5500
    %v5530 = vmul.f32 %v167, %v5500
    %v5531 = vmul.f32 %v168, %v5500
    %v5532 = vmul.f32 %v169, %v5500
    %vm5565 = vcmask 1041408
    %v5566 = vrot.slane %v5501, 6
    %v5567 = vrot.slane %v5502, 6
    %v5568 = vsel %vm5565, %v5566, %v5567
    %v5569 = vrot.slane %v5503, 6
    %v5570 = vrot.slane %v5504, 6
    %v5571 = vsel %vm5565, %v5569, %v5570
    %v5572 = vrot.slane %v5505, 6
    %v5573 = vrot.slane %v5506, 6
    %v5574 = vsel %vm5565, %v5572, %v5573
    %v5575 = vrot.slane %v5507, 6
    %v5576 = vrot.slane %v5508, 6
    %v5577 = vsel %vm5565, %v5575, %v5576
    %v5578 = vrot.slane %v5509, 6
    %v5579 = vrot.slane %v5510, 6
    %v5580 = vsel %vm5565, %v5578, %v5579
    %v5581 = vrot.slane %v5511, 6
    %v5582 = vrot.slane %v5512, 6
    %v5583 = vsel %vm5565, %v5581, %v5582
    %v5584 = vrot.slane %v5513, 6
    %v5585 = vrot.slane %v5514, 6
    %v5586 = vsel %vm5565, %v5584, %v5585
    %v5587 = vrot.slane %v5515, 6
    %v5588 = vrot.slane %v5516, 6
    %v5589 = vsel %vm5565, %v5587, %v5588
    %v5590 = vrot.slane %v5517, 6
    %v5591 = vrot.slane %v5518, 6
    %v5592 = vsel %vm5565, %v5590, %v5591
    %v5593 = vrot.slane %v5519, 6
    %v5594 = vrot.slane %v5520, 6
    %v5595 = vsel %vm5565, %v5593, %v5594
    %v5596 = vrot.slane %v5521, 6
    %v5597 = vrot.slane %v5522, 6
    %v5598 = vsel %vm5565, %v5596, %v5597
    %v5599 = vrot.slane %v5523, 6
    %v5600 = vrot.slane %v5524, 6
    %v5601 = vsel %vm5565, %v5599, %v5600
    %v5602 = vrot.slane %v5525, 6
    %v5603 = vrot.slane %v5526, 6
    %v5604 = vsel %vm5565, %v5602, %v5603
    %v5605 = vrot.slane %v5527, 6
    %v5606 = vrot.slane %v5528, 6
    %v5607 = vsel %vm5565, %v5605, %v5606
    %v5608 = vrot.slane %v5529, 6
    %v5609 = vrot.slane %v5530, 6
    %v5610 = vsel %vm5565, %v5608, %v5609
    %v5611 = vrot.slane %v5531, 6
    %v5612 = vrot.slane %v5532, 6
    %v5613 = vsel %vm5565, %v5611, %v5612
    %v5630 = vadd.f32 %v5484, %v5568
    %v5631 = vadd.f32 %v5485, %v5571
    %v5632 = vadd.f32 %v5486, %v5574
    %v5633 = vadd.f32 %v5487, %v5577
    %v5634 = vadd.f32 %v5488, %v5580
    %v5635 = vadd.f32 %v5489, %v5583
    %v5636 = vadd.f32 %v5490, %v5586
    %v5637 = vadd.f32 %v5491, %v5589
    %v5638 = vadd.f32 %v5492, %v5592
    %v5639 = vadd.f32 %v5493, %v5595
    %v5640 = vadd.f32 %v5494, %v5598
    %v5641 = vadd.f32 %v5495, %v5601
    %v5642 = vadd.f32 %v5496, %v5604
    %v5643 = vadd.f32 %v5497, %v5607
    %v5644 = vadd.f32 %v5498, %v5610
    %v5645 = vadd.f32 %v5499, %v5613
    %v5646 = vperm.slane %v183, 5
    %v5647 = vmul.f32 %v128, %v5646
    %v5648 = vmul.f32 %v129, %v5646
    %v5649 = vmul.f32 %v130, %v5646
    %v5650 = vmul.f32 %v131, %v5646
    %v5651 = vmul.f32 %v132, %v5646
    %v5652 = vmul.f32 %v133, %v5646
    %v5653 = vmul.f32 %v134, %v5646
    %v5654 = vmul.f32 %v135, %v5646
    %v5655 = vmul.f32 %v136, %v5646
    %v5656 = vmul.f32 %v137, %v5646
    %v5657 = vmul.f32 %v138, %v5646
    %v5658 = vmul.f32 %v139, %v5646
    %v5659 = vmul.f32 %v140, %v5646
    %v5660 = vmul.f32 %v141, %v5646
    %v5661 = vmul.f32 %v142, %v5646
    %v5662 = vmul.f32 %v143, %v5646
    %v5663 = vmul.f32 %v156, %v5646
    %v5664 = vmul.f32 %v157, %v5646
    %v5665 = vmul.f32 %v158, %v5646
    %v5666 = vmul.f32 %v159, %v5646
    %v5667 = vmul.f32 %v160, %v5646
    %v5668 = vmul.f32 %v161, %v5646
    %v5669 = vmul.f32 %v162, %v5646
    %v5670 = vmul.f32 %v163, %v5646
    %v5671 = vmul.f32 %v164, %v5646
    %v5672 = vmul.f32 %v165, %v5646
    %v5673 = vmul.f32 %v166, %v5646
    %v5674 = vmul.f32 %v167, %v5646
    %v5675 = vmul.f32 %v168, %v5646
    %v5676 = vmul.f32 %v169, %v5646
    %v5677 = vmul.f32 %v170, %v5646
    %v5678 = vmul.f32 %v171, %v5646
    %v5711 = vrot.slane %v5647, 6
    %v5712 = vrot.slane %v5648, 6
    %v5713 = vsel %vm5565, %v5711, %v5712
    %v5714 = vrot.slane %v5649, 6
    %v5715 = vrot.slane %v5650, 6
    %v5716 = vsel %vm5565, %v5714, %v5715
    %v5717 = vrot.slane %v5651, 6
    %v5718 = vrot.slane %v5652, 6
    %v5719 = vsel %vm5565, %v5717, %v5718
    %v5720 = vrot.slane %v5653, 6
    %v5721 = vrot.slane %v5654, 6
    %v5722 = vsel %vm5565, %v5720, %v5721
    %v5723 = vrot.slane %v5655, 6
    %v5724 = vrot.slane %v5656, 6
    %v5725 = vsel %vm5565, %v5723, %v5724
    %v5726 = vrot.slane %v5657, 6
    %v5727 = vrot.slane %v5658, 6
    %v5728 = vsel %vm5565, %v5726, %v5727
    %v5729 = vrot.slane %v5659, 6
    %v5730 = vrot.slane %v5660, 6
    %v5731 = vsel %vm5565, %v5729, %v5730
    %v5732 = vrot.slane %v5661, 6
    %v5733 = vrot.slane %v5662, 6
    %v5734 = vsel %vm5565, %v5732, %v5733
    %v5735 = vrot.slane %v5663, 6
    %v5736 = vrot.slane %v5664, 6
    %v5737 = vsel %vm5565, %v5735, %v5736
    %v5738 = vrot.slane %v5665, 6
    %v5739 = vrot.slane %v5666, 6
    %v5740 = vsel %vm5565, %v5738, %v5739
    %v5741 = vrot.slane %v5667, 6
    %v5742 = vrot.slane %v5668, 6
    %v5743 = vsel %vm5565, %v5741, %v5742
    %v5744 = vrot.slane %v5669, 6
    %v5745 = vrot.slane %v5670, 6
    %v5746 = vsel %vm5565, %v5744, %v5745
    %v5747 = vrot.slane %v5671, 6
    %v5748 = vrot.slane %v5672, 6
    %v5749 = vsel %vm5565, %v5747, %v5748
    %v5750 = vrot.slane %v5673, 6
    %v5751 = vrot.slane %v5674, 6
    %v5752 = vsel %vm5565, %v5750, %v5751
    %v5753 = vrot.slane %v5675, 6
    %v5754 = vrot.slane %v5676, 6
    %v5755 = vsel %vm5565, %v5753, %v5754
    %v5756 = vrot.slane %v5677, 6
    %v5757 = vrot.slane %v5678, 6
    %v5758 = vsel %vm5565, %v5756, %v5757
    %v5775 = vadd.f32 %v5630, %v5713
    %v5776 = vadd.f32 %v5631, %v5716
    %v5777 = vadd.f32 %v5632, %v5719
    %v5778 = vadd.f32 %v5633, %v5722
    %v5779 = vadd.f32 %v5634, %v5725
    %v5780 = vadd.f32 %v5635, %v5728
    %v5781 = vadd.f32 %v5636, %v5731
    %v5782 = vadd.f32 %v5637, %v5734
    %v5783 = vadd.f32 %v5638, %v5737
    %v5784 = vadd.f32 %v5639, %v5740
    %v5785 = vadd.f32 %v5640, %v5743
    %v5786 = vadd.f32 %v5641, %v5746
    %v5787 = vadd.f32 %v5642, %v5749
    %v5788 = vadd.f32 %v5643, %v5752
    %v5789 = vadd.f32 %v5644, %v5755
    %v5790 = vadd.f32 %v5645, %v5758
    %v5791 = vperm.slane %v184, 4
    %v5792 = vmul.f32 %v130, %v5791
    %v5793 = vmul.f32 %v131, %v5791
    %v5794 = vmul.f32 %v132, %v5791
    %v5795 = vmul.f32 %v133, %v5791
    %v5796 = vmul.f32 %v134, %v5791
    %v5797 = vmul.f32 %v135, %v5791
    %v5798 = vmul.f32 %v136, %v5791
    %v5799 = vmul.f32 %v137, %v5791
    %v5800 = vmul.f32 %v138, %v5791
    %v5801 = vmul.f32 %v139, %v5791
    %v5802 = vmul.f32 %v140, %v5791
    %v5803 = vmul.f32 %v141, %v5791
    %v5804 = vmul.f32 %v142, %v5791
    %v5805 = vmul.f32 %v143, %v5791
    %v5806 = vmul.f32 %v144, %v5791
    %v5807 = vmul.f32 %v145, %v5791
    %v5808 = vmul.f32 %v158, %v5791
    %v5809 = vmul.f32 %v159, %v5791
    %v5810 = vmul.f32 %v160, %v5791
    %v5811 = vmul.f32 %v161, %v5791
    %v5812 = vmul.f32 %v162, %v5791
    %v5813 = vmul.f32 %v163, %v5791
    %v5814 = vmul.f32 %v164, %v5791
    %v5815 = vmul.f32 %v165, %v5791
    %v5816 = vmul.f32 %v166, %v5791
    %v5817 = vmul.f32 %v167, %v5791
    %v5818 = vmul.f32 %v168, %v5791
    %v5819 = vmul.f32 %v169, %v5791
    %v5820 = vmul.f32 %v170, %v5791
    %v5821 = vmul.f32 %v171, %v5791
    %v5822 = vmul.f32 %v172, %v5791
    %v5823 = vmul.f32 %v173, %v5791
    %v5856 = vrot.slane %v5792, 6
    %v5857 = vrot.slane %v5793, 6
    %v5858 = vsel %vm5565, %v5856, %v5857
    %v5859 = vrot.slane %v5794, 6
    %v5860 = vrot.slane %v5795, 6
    %v5861 = vsel %vm5565, %v5859, %v5860
    %v5862 = vrot.slane %v5796, 6
    %v5863 = vrot.slane %v5797, 6
    %v5864 = vsel %vm5565, %v5862, %v5863
    %v5865 = vrot.slane %v5798, 6
    %v5866 = vrot.slane %v5799, 6
    %v5867 = vsel %vm5565, %v5865, %v5866
    %v5868 = vrot.slane %v5800, 6
    %v5869 = vrot.slane %v5801, 6
    %v5870 = vsel %vm5565, %v5868, %v5869
    %v5871 = vrot.slane %v5802, 6
    %v5872 = vrot.slane %v5803, 6
    %v5873 = vsel %vm5565, %v5871, %v5872
    %v5874 = vrot.slane %v5804, 6
    %v5875 = vrot.slane %v5805, 6
    %v5876 = vsel %vm5565, %v5874, %v5875
    %v5877 = vrot.slane %v5806, 6
    %v5878 = vrot.slane %v5807, 6
    %v5879 = vsel %vm5565, %v5877, %v5878
    %v5880 = vrot.slane %v5808, 6
    %v5881 = vrot.slane %v5809, 6
    %v5882 = vsel %vm5565, %v5880, %v5881
    %v5883 = vrot.slane %v5810, 6
    %v5884 = vrot.slane %v5811, 6
    %v5885 = vsel %vm5565, %v5883, %v5884
    %v5886 = vrot.slane %v5812, 6
    %v5887 = vrot.slane %v5813, 6
    %v5888 = vsel %vm5565, %v5886, %v5887
    %v5889 = vrot.slane %v5814, 6
    %v5890 = vrot.slane %v5815, 6
    %v5891 = vsel %vm5565, %v5889, %v5890
    %v5892 = vrot.slane %v5816, 6
    %v5893 = vrot.slane %v5817, 6
    %v5894 = vsel %vm5565, %v5892, %v5893
    %v5895 = vrot.slane %v5818, 6
    %v5896 = vrot.slane %v5819, 6
    %v5897 = vsel %vm5565, %v5895, %v5896
    %v5898 = vrot.slane %v5820, 6
    %v5899 = vrot.slane %v5821, 6
    %v5900 = vsel %vm5565, %v5898, %v5899
    %v5901 = vrot.slane %v5822, 6
    %v5902 = vrot.slane %v5823, 6
    %v5903 = vsel %vm5565, %v5901, %v5902
    %v5920 = vadd.f32 %v5775, %v5858
    %v5921 = vadd.f32 %v5776, %v5861
    %v5922 = vadd.f32 %v5777, %v5864
    %v5923 = vadd.f32 %v5778, %v5867
    %v5924 = vadd.f32 %v5779, %v5870
    %v5925 = vadd.f32 %v5780, %v5873
    %v5926 = vadd.f32 %v5781, %v5876
    %v5927 = vadd.f32 %v5782, %v5879
    %v5928 = vadd.f32 %v5783, %v5882
    %v5929 = vadd.f32 %v5784, %v5885
    %v5930 = vadd.f32 %v5785, %v5888
    %v5931 = vadd.f32 %v5786, %v5891
    %v5932 = vadd.f32 %v5787, %v5894
    %v5933 = vadd.f32 %v5788, %v5897
    %v5934 = vadd.f32 %v5789, %v5900
    %v5935 = vadd.f32 %v5790, %v5903
    %v5936 = vperm.slane %v185, 3
    %v5937 = vmul.f32 %v132, %v5936
    %v5938 = vmul.f32 %v133, %v5936
    %v5939 = vmul.f32 %v134, %v5936
    %v5940 = vmul.f32 %v135, %v5936
    %v5941 = vmul.f32 %v136, %v5936
    %v5942 = vmul.f32 %v137, %v5936
    %v5943 = vmul.f32 %v138, %v5936
    %v5944 = vmul.f32 %v139, %v5936
    %v5945 = vmul.f32 %v140, %v5936
    %v5946 = vmul.f32 %v141, %v5936
    %v5947 = vmul.f32 %v142, %v5936
    %v5948 = vmul.f32 %v143, %v5936
    %v5949 = vmul.f32 %v144, %v5936
    %v5950 = vmul.f32 %v145, %v5936
    %v5951 = vmul.f32 %v146, %v5936
    %v5952 = vmul.f32 %v147, %v5936
    %v5953 = vmul.f32 %v160, %v5936
    %v5954 = vmul.f32 %v161, %v5936
    %v5955 = vmul.f32 %v162, %v5936
    %v5956 = vmul.f32 %v163, %v5936
    %v5957 = vmul.f32 %v164, %v5936
    %v5958 = vmul.f32 %v165, %v5936
    %v5959 = vmul.f32 %v166, %v5936
    %v5960 = vmul.f32 %v167, %v5936
    %v5961 = vmul.f32 %v168, %v5936
    %v5962 = vmul.f32 %v169, %v5936
    %v5963 = vmul.f32 %v170, %v5936
    %v5964 = vmul.f32 %v171, %v5936
    %v5965 = vmul.f32 %v172, %v5936
    %v5966 = vmul.f32 %v173, %v5936
    %v5967 = vmul.f32 %v174, %v5936
    %v5968 = vmul.f32 %v175, %v5936
    %v6001 = vrot.slane %v5937, 6
    %v6002 = vrot.slane %v5938, 6
    %v6003 = vsel %vm5565, %v6001, %v6002
    %v6004 = vrot.slane %v5939, 6
    %v6005 = vrot.slane %v5940, 6
    %v6006 = vsel %vm5565, %v6004, %v6005
    %v6007 = vrot.slane %v5941, 6
    %v6008 = vrot.slane %v5942, 6
    %v6009 = vsel %vm5565, %v6007, %v6008
    %v6010 = vrot.slane %v5943, 6
    %v6011 = vrot.slane %v5944, 6
    %v6012 = vsel %vm5565, %v6010, %v6011
    %v6013 = vrot.slane %v5945, 6
    %v6014 = vrot.slane %v5946, 6
    %v6015 = vsel %vm5565, %v6013, %v6014
    %v6016 = vrot.slane %v5947, 6
    %v6017 = vrot.slane %v5948, 6
    %v6018 = vsel %vm5565, %v6016, %v6017
    %v6019 = vrot.slane %v5949, 6
    %v6020 = vrot.slane %v5950, 6
    %v6021 = vsel %vm5565, %v6019, %v6020
    %v6022 = vrot.slane %v5951, 6
    %v6023 = vrot.slane %v5952, 6
    %v6024 = vsel %vm5565, %v6022, %v6023
    %v6025 = vrot.slane %v5953, 6
    %v6026 = vrot.slane %v5954, 6
    %v6027 = vsel %vm5565, %v6025, %v6026
    %v6028 = vrot.slane %v5955, 6
    %v6029 = vrot.slane %v5956, 6
    %v6030 = vsel %vm5565, %v6028, %v6029
    %v6031 = vrot.slane %v5957, 6
    %v6032 = vrot.slane %v5958, 6
    %v6033 = vsel %vm5565, %v6031, %v6032
    %v6034 = vrot.slane %v5959, 6
    %v6035 = vrot.slane %v5960, 6
    %v6036 = vsel %vm5565, %v6034, %v6035
    %v6037 = vrot.slane %v5961, 6
    %v6038 = vrot.slane %v5962, 6
    %v6039 = vsel %vm5565, %v6037, %v6038
    %v6040 = vrot.slane %v5963, 6
    %v6041 = vrot.slane %v5964, 6
    %v6042 = vsel %vm5565, %v6040, %v6041
    %v6043 = vrot.slane %v5965, 6
    %v6044 = vrot.slane %v5966, 6
    %v6045 = vsel %vm5565, %v6043, %v6044
    %v6046 = vrot.slane %v5967, 6
    %v6047 = vrot.slane %v5968, 6
    %v6048 = vsel %vm5565, %v6046, %v6047
    %v6065 = vadd.f32 %v5920, %v6003
    %v6066 = vadd.f32 %v5921, %v6006
    %v6067 = vadd.f32 %v5922, %v6009
    %v6068 = vadd.f32 %v5923, %v6012
    %v6069 = vadd.f32 %v5924, %v6015
    %v6070 = vadd.f32 %v5925, %v6018
    %v6071 = vadd.f32 %v5926, %v6021
    %v6072 = vadd.f32 %v5927, %v6024
    %v6073 = vadd.f32 %v5928, %v6027
    %v6074 = vadd.f32 %v5929, %v6030
    %v6075 = vadd.f32 %v5930, %v6033
    %v6076 = vadd.f32 %v5931, %v6036
    %v6077 = vadd.f32 %v5932, %v6039
    %v6078 = vadd.f32 %v5933, %v6042
    %v6079 = vadd.f32 %v5934, %v6045
    %v6080 = vadd.f32 %v5935, %v6048
    %v6081 = vperm.slane %v186, 2
    %v6082 = vmul.f32 %v134, %v6081
    %v6083 = vmul.f32 %v135, %v6081
    %v6084 = vmul.f32 %v136, %v6081
    %v6085 = vmul.f32 %v137, %v6081
    %v6086 = vmul.f32 %v138, %v6081
    %v6087 = vmul.f32 %v139, %v6081
    %v6088 = vmul.f32 %v140, %v6081
    %v6089 = vmul.f32 %v141, %v6081
    %v6090 = vmul.f32 %v142, %v6081
    %v6091 = vmul.f32 %v143, %v6081
    %v6092 = vmul.f32 %v144, %v6081
    %v6093 = vmul.f32 %v145, %v6081
    %v6094 = vmul.f32 %v146, %v6081
    %v6095 = vmul.f32 %v147, %v6081
    %v6096 = vmul.f32 %v148, %v6081
    %v6097 = vmul.f32 %v149, %v6081
    %v6098 = vmul.f32 %v162, %v6081
    %v6099 = vmul.f32 %v163, %v6081
    %v6100 = vmul.f32 %v164, %v6081
    %v6101 = vmul.f32 %v165, %v6081
    %v6102 = vmul.f32 %v166, %v6081
    %v6103 = vmul.f32 %v167, %v6081
    %v6104 = vmul.f32 %v168, %v6081
    %v6105 = vmul.f32 %v169, %v6081
    %v6106 = vmul.f32 %v170, %v6081
    %v6107 = vmul.f32 %v171, %v6081
    %v6108 = vmul.f32 %v172, %v6081
    %v6109 = vmul.f32 %v173, %v6081
    %v6110 = vmul.f32 %v174, %v6081
    %v6111 = vmul.f32 %v175, %v6081
    %v6112 = vmul.f32 %v176, %v6081
    %v6113 = vmul.f32 %v177, %v6081
    %v6146 = vrot.slane %v6082, 6
    %v6147 = vrot.slane %v6083, 6
    %v6148 = vsel %vm5565, %v6146, %v6147
    %v6149 = vrot.slane %v6084, 6
    %v6150 = vrot.slane %v6085, 6
    %v6151 = vsel %vm5565, %v6149, %v6150
    %v6152 = vrot.slane %v6086, 6
    %v6153 = vrot.slane %v6087, 6
    %v6154 = vsel %vm5565, %v6152, %v6153
    %v6155 = vrot.slane %v6088, 6
    %v6156 = vrot.slane %v6089, 6
    %v6157 = vsel %vm5565, %v6155, %v6156
    %v6158 = vrot.slane %v6090, 6
    %v6159 = vrot.slane %v6091, 6
    %v6160 = vsel %vm5565, %v6158, %v6159
    %v6161 = vrot.slane %v6092, 6
    %v6162 = vrot.slane %v6093, 6
    %v6163 = vsel %vm5565, %v6161, %v6162
    %v6164 = vrot.slane %v6094, 6
    %v6165 = vrot.slane %v6095, 6
    %v6166 = vsel %vm5565, %v6164, %v6165
    %v6167 = vrot.slane %v6096, 6
    %v6168 = vrot.slane %v6097, 6
    %v6169 = vsel %vm5565, %v6167, %v6168
    %v6170 = vrot.slane %v6098, 6
    %v6171 = vrot.slane %v6099, 6
    %v6172 = vsel %vm5565, %v6170, %v6171
    %v6173 = vrot.slane %v6100, 6
    %v6174 = vrot.slane %v6101, 6
    %v6175 = vsel %vm5565, %v6173, %v6174
    %v6176 = vrot.slane %v6102, 6
    %v6177 = vrot.slane %v6103, 6
    %v6178 = vsel %vm5565, %v6176, %v6177
    %v6179 = vrot.slane %v6104, 6
    %v6180 = vrot.slane %v6105, 6
    %v6181 = vsel %vm5565, %v6179, %v6180
    %v6182 = vrot.slane %v6106, 6
    %v6183 = vrot.slane %v6107, 6
    %v6184 = vsel %vm5565, %v6182, %v6183
    %v6185 = vrot.slane %v6108, 6
    %v6186 = vrot.slane %v6109, 6
    %v6187 = vsel %vm5565, %v6185, %v6186
    %v6188 = vrot.slane %v6110, 6
    %v6189 = vrot.slane %v6111, 6
    %v6190 = vsel %vm5565, %v6188, %v6189
    %v6191 = vrot.slane %v6112, 6
    %v6192 = vrot.slane %v6113, 6
    %v6193 = vsel %vm5565, %v6191, %v6192
    %v6210 = vadd.f32 %v6065, %v6148
    %v6211 = vadd.f32 %v6066, %v6151
    %v6212 = vadd.f32 %v6067, %v6154
    %v6213 = vadd.f32 %v6068, %v6157
    %v6214 = vadd.f32 %v6069, %v6160
    %v6215 = vadd.f32 %v6070, %v6163
    %v6216 = vadd.f32 %v6071, %v6166
    %v6217 = vadd.f32 %v6072, %v6169
    %v6218 = vadd.f32 %v6073, %v6172
    %v6219 = vadd.f32 %v6074, %v6175
    %v6220 = vadd.f32 %v6075, %v6178
    %v6221 = vadd.f32 %v6076, %v6181
    %v6222 = vadd.f32 %v6077, %v6184
    %v6223 = vadd.f32 %v6078, %v6187
    %v6224 = vadd.f32 %v6079, %v6190
    %v6225 = vadd.f32 %v6080, %v6193
    %v6226 = vperm.slane %v187, 1
    %v6227 = vmul.f32 %v136, %v6226
    %v6228 = vmul.f32 %v137, %v6226
    %v6229 = vmul.f32 %v138, %v6226
    %v6230 = vmul.f32 %v139, %v6226
    %v6231 = vmul.f32 %v140, %v6226
    %v6232 = vmul.f32 %v141, %v6226
    %v6233 = vmul.f32 %v142, %v6226
    %v6234 = vmul.f32 %v143, %v6226
    %v6235 = vmul.f32 %v144, %v6226
    %v6236 = vmul.f32 %v145, %v6226
    %v6237 = vmul.f32 %v146, %v6226
    %v6238 = vmul.f32 %v147, %v6226
    %v6239 = vmul.f32 %v148, %v6226
    %v6240 = vmul.f32 %v149, %v6226
    %v6241 = vmul.f32 %v150, %v6226
    %v6242 = vmul.f32 %v151, %v6226
    %v6243 = vmul.f32 %v164, %v6226
    %v6244 = vmul.f32 %v165, %v6226
    %v6245 = vmul.f32 %v166, %v6226
    %v6246 = vmul.f32 %v167, %v6226
    %v6247 = vmul.f32 %v168, %v6226
    %v6248 = vmul.f32 %v169, %v6226
    %v6249 = vmul.f32 %v170, %v6226
    %v6250 = vmul.f32 %v171, %v6226
    %v6251 = vmul.f32 %v172, %v6226
    %v6252 = vmul.f32 %v173, %v6226
    %v6253 = vmul.f32 %v174, %v6226
    %v6254 = vmul.f32 %v175, %v6226
    %v6255 = vmul.f32 %v176, %v6226
    %v6256 = vmul.f32 %v177, %v6226
    %v6257 = vmul.f32 %v178, %v6226
    %v6258 = vmul.f32 %v179, %v6226
    %v6291 = vrot.slane %v6227, 6
    %v6292 = vrot.slane %v6228, 6
    %v6293 = vsel %vm5565, %v6291, %v6292
    %v6294 = vrot.slane %v6229, 6
    %v6295 = vrot.slane %v6230, 6
    %v6296 = vsel %vm5565, %v6294, %v6295
    %v6297 = vrot.slane %v6231, 6
    %v6298 = vrot.slane %v6232, 6
    %v6299 = vsel %vm5565, %v6297, %v6298
    %v6300 = vrot.slane %v6233, 6
    %v6301 = vrot.slane %v6234, 6
    %v6302 = vsel %vm5565, %v6300, %v6301
    %v6303 = vrot.slane %v6235, 6
    %v6304 = vrot.slane %v6236, 6
    %v6305 = vsel %vm5565, %v6303, %v6304
    %v6306 = vrot.slane %v6237, 6
    %v6307 = vrot.slane %v6238, 6
    %v6308 = vsel %vm5565, %v6306, %v6307
    %v6309 = vrot.slane %v6239, 6
    %v6310 = vrot.slane %v6240, 6
    %v6311 = vsel %vm5565, %v6309, %v6310
    %v6312 = vrot.slane %v6241, 6
    %v6313 = vrot.slane %v6242, 6
    %v6314 = vsel %vm5565, %v6312, %v6313
    %v6315 = vrot.slane %v6243, 6
    %v6316 = vrot.slane %v6244, 6
    %v6317 = vsel %vm5565, %v6315, %v6316
    %v6318 = vrot.slane %v6245, 6
    %v6319 = vrot.slane %v6246, 6
    %v6320 = vsel %vm5565, %v6318, %v6319
    %v6321 = vrot.slane %v6247, 6
    %v6322 = vrot.slane %v6248, 6
    %v6323 = vsel %vm5565, %v6321, %v6322
    %v6324 = vrot.slane %v6249, 6
    %v6325 = vrot.slane %v6250, 6
    %v6326 = vsel %vm5565, %v6324, %v6325
    %v6327 = vrot.slane %v6251, 6
    %v6328 = vrot.slane %v6252, 6
    %v6329 = vsel %vm5565, %v6327, %v6328
    %v6330 = vrot.slane %v6253, 6
    %v6331 = vrot.slane %v6254, 6
    %v6332 = vsel %vm5565, %v6330, %v6331
    %v6333 = vrot.slane %v6255, 6
    %v6334 = vrot.slane %v6256, 6
    %v6335 = vsel %vm5565, %v6333, %v6334
    %v6336 = vrot.slane %v6257, 6
    %v6337 = vrot.slane %v6258, 6
    %v6338 = vsel %vm5565, %v6336, %v6337
    %v6355 = vadd.f32 %v6210, %v6293
    %v6356 = vadd.f32 %v6211, %v6296
    %v6357 = vadd.f32 %v6212, %v6299
    %v6358 = vadd.f32 %v6213, %v6302
    %v6359 = vadd.f32 %v6214, %v6305
    %v6360 = vadd.f32 %v6215, %v6308
    %v6361 = vadd.f32 %v6216, %v6311
    %v6362 = vadd.f32 %v6217, %v6314
    %v6363 = vadd.f32 %v6218, %v6317
    %v6364 = vadd.f32 %v6219, %v6320
    %v6365 = vadd.f32 %v6220, %v6323
    %v6366 = vadd.f32 %v6221, %v6326
    %v6367 = vadd.f32 %v6222, %v6329
    %v6368 = vadd.f32 %v6223, %v6332
    %v6369 = vadd.f32 %v6224, %v6335
    %v6370 = vadd.f32 %v6225, %v6338
    %v6371 = vperm.slane %v188, 0
    %v6372 = vmul.f32 %v138, %v6371
    %v6373 = vmul.f32 %v139, %v6371
    %v6374 = vmul.f32 %v140, %v6371
    %v6375 = vmul.f32 %v141, %v6371
    %v6376 = vmul.f32 %v142, %v6371
    %v6377 = vmul.f32 %v143, %v6371
    %v6378 = vmul.f32 %v144, %v6371
    %v6379 = vmul.f32 %v145, %v6371
    %v6380 = vmul.f32 %v146, %v6371
    %v6381 = vmul.f32 %v147, %v6371
    %v6382 = vmul.f32 %v148, %v6371
    %v6383 = vmul.f32 %v149, %v6371
    %v6384 = vmul.f32 %v150, %v6371
    %v6385 = vmul.f32 %v151, %v6371
    %v6386 = vmul.f32 %v152, %v6371
    %v6387 = vmul.f32 %v153, %v6371
    %v6388 = vmul.f32 %v166, %v6371
    %v6389 = vmul.f32 %v167, %v6371
    %v6390 = vmul.f32 %v168, %v6371
    %v6391 = vmul.f32 %v169, %v6371
    %v6392 = vmul.f32 %v170, %v6371
    %v6393 = vmul.f32 %v171, %v6371
    %v6394 = vmul.f32 %v172, %v6371
    %v6395 = vmul.f32 %v173, %v6371
    %v6396 = vmul.f32 %v174, %v6371
    %v6397 = vmul.f32 %v175, %v6371
    %v6398 = vmul.f32 %v176, %v6371
    %v6399 = vmul.f32 %v177, %v6371
    %v6400 = vmul.f32 %v178, %v6371
    %v6401 = vmul.f32 %v179, %v6371
    %v6402 = vmul.f32 %v180, %v6371
    %v6403 = vmul.f32 %v181, %v6371
    %v6436 = vrot.slane %v6372, 6
    %v6437 = vrot.slane %v6373, 6
    %v6438 = vsel %vm5565, %v6436, %v6437
    %v6439 = vrot.slane %v6374, 6
    %v6440 = vrot.slane %v6375, 6
    %v6441 = vsel %vm5565, %v6439, %v6440
    %v6442 = vrot.slane %v6376, 6
    %v6443 = vrot.slane %v6377, 6
    %v6444 = vsel %vm5565, %v6442, %v6443
    %v6445 = vrot.slane %v6378, 6
    %v6446 = vrot.slane %v6379, 6
    %v6447 = vsel %vm5565, %v6445, %v6446
    %v6448 = vrot.slane %v6380, 6
    %v6449 = vrot.slane %v6381, 6
    %v6450 = vsel %vm5565, %v6448, %v6449
    %v6451 = vrot.slane %v6382, 6
    %v6452 = vrot.slane %v6383, 6
    %v6453 = vsel %vm5565, %v6451, %v6452
    %v6454 = vrot.slane %v6384, 6
    %v6455 = vrot.slane %v6385, 6
    %v6456 = vsel %vm5565, %v6454, %v6455
    %v6457 = vrot.slane %v6386, 6
    %v6458 = vrot.slane %v6387, 6
    %v6459 = vsel %vm5565, %v6457, %v6458
    %v6460 = vrot.slane %v6388, 6
    %v6461 = vrot.slane %v6389, 6
    %v6462 = vsel %vm5565, %v6460, %v6461
    %v6463 = vrot.slane %v6390, 6
    %v6464 = vrot.slane %v6391, 6
    %v6465 = vsel %vm5565, %v6463, %v6464
    %v6466 = vrot.slane %v6392, 6
    %v6467 = vrot.slane %v6393, 6
    %v6468 = vsel %vm5565, %v6466, %v6467
    %v6469 = vrot.slane %v6394, 6
    %v6470 = vrot.slane %v6395, 6
    %v6471 = vsel %vm5565, %v6469, %v6470
    %v6472 = vrot.slane %v6396, 6
    %v6473 = vrot.slane %v6397, 6
    %v6474 = vsel %vm5565, %v6472, %v6473
    %v6475 = vrot.slane %v6398, 6
    %v6476 = vrot.slane %v6399, 6
    %v6477 = vsel %vm5565, %v6475, %v6476
    %v6478 = vrot.slane %v6400, 6
    %v6479 = vrot.slane %v6401, 6
    %v6480 = vsel %vm5565, %v6478, %v6479
    %v6481 = vrot.slane %v6402, 6
    %v6482 = vrot.slane %v6403, 6
    %v6483 = vsel %vm5565, %v6481, %v6482
    %v6500 = vadd.f32 %v6355, %v6438
    %v6501 = vadd.f32 %v6356, %v6441
    %v6502 = vadd.f32 %v6357, %v6444
    %v6503 = vadd.f32 %v6358, %v6447
    %v6504 = vadd.f32 %v6359, %v6450
    %v6505 = vadd.f32 %v6360, %v6453
    %v6506 = vadd.f32 %v6361, %v6456
    %v6507 = vadd.f32 %v6362, %v6459
    %v6508 = vadd.f32 %v6363, %v6462
    %v6509 = vadd.f32 %v6364, %v6465
    %v6510 = vadd.f32 %v6365, %v6468
    %v6511 = vadd.f32 %v6366, %v6471
    %v6512 = vadd.f32 %v6367, %v6474
    %v6513 = vadd.f32 %v6368, %v6477
    %v6514 = vadd.f32 %v6369, %v6480
    %v6515 = vadd.f32 %v6370, %v6483
    %v6516 = vld [vmem:[%s2] sm:$0x1]
    %v6518 = vperm.slane %v6516, 0
    %v6520 = vadd.f32 %v6500, %v6518
    %v6521 = vadd.f32 %v6501, %v6518
    %v6522 = vadd.f32 %v6502, %v6518
    %v6523 = vadd.f32 %v6503, %v6518
    %v6524 = vadd.f32 %v6504, %v6518
    %v6525 = vadd.f32 %v6505, %v6518
    %v6526 = vadd.f32 %v6506, %v6518
    %v6527 = vadd.f32 %v6507, %v6518
    %v6528 = vadd.f32 %v6508, %v6518
    %v6529 = vadd.f32 %v6509, %v6518
    %v6530 = vadd.f32 %v6510, %v6518
    %v6531 = vadd.f32 %v6511, %v6518
    %v6532 = vadd.f32 %v6512, %v6518
    %v6533 = vadd.f32 %v6513, %v6518
    %v6534 = vadd.f32 %v6514, %v6518
    %v6535 = vadd.f32 %v6515, %v6518
    %6536 = vadd.xlane.f32.xlu0 %v6520
    %v6537 = vpop.xlane.xlu0 %6536
    %6538 = vadd.xlane.f32.xlu0 %v6521
    %v6539 = vpop.xlane.xlu0 %6538
    %6540 = vadd.xlane.f32.xlu0 %v6522
    %v6541 = vpop.xlane.xlu0 %6540
    %6542 = vadd.xlane.f32.xlu0 %v6523
    %v6543 = vpop.xlane.xlu0 %6542
    %6544 = vadd.xlane.f32.xlu0 %v6524
    %v6545 = vpop.xlane.xlu0 %6544
    %6546 = vadd.xlane.f32.xlu0 %v6525
    %v6547 = vpop.xlane.xlu0 %6546
    %6548 = vadd.xlane.f32.xlu0 %v6526
    %v6549 = vpop.xlane.xlu0 %6548
    %6550 = vadd.xlane.f32.xlu0 %v6527
    %v6551 = vpop.xlane.xlu0 %6550
    %6552 = vadd.xlane.f32.xlu0 %v6528
    %v6553 = vpop.xlane.xlu0 %6552
    %6554 = vadd.xlane.f32.xlu0 %v6529
    %v6555 = vpop.xlane.xlu0 %6554
    %6556 = vadd.xlane.f32.xlu0 %v6530
    %v6557 = vpop.xlane.xlu0 %6556
    %6558 = vadd.xlane.f32.xlu0 %v6531
    %v6559 = vpop.xlane.xlu0 %6558
    %6560 = vadd.xlane.f32.xlu0 %v6532
    %v6561 = vpop.xlane.xlu0 %6560
    %6562 = vadd.xlane.f32.xlu0 %v6533
    %v6563 = vpop.xlane.xlu0 %6562
    %6564 = vadd.xlane.f32.xlu0 %v6534
    %v6565 = vpop.xlane.xlu0 %6564
    %6566 = vadd.xlane.f32.xlu0 %v6535
    %v6567 = vpop.xlane.xlu0 %6566
    %v6568 = vrcp.pop 128.0
    %v6569 = vmul.f32 128.0, %v6568
    %v6570 = vsub.f32 1.0, %v6569
    %v6571 = vmul.f32 %v6568, %v6570
    %v6572 = vadd.f32 %v6568, %v6571
    %vm6573 = vweird.f32 %v6568
    %v6574 = vsel %vm6573, %v6568, %v6572
    %v6575 = vmul.f32 %v6537, %v6574
    %v6576 = vmul.f32 %v6539, %v6574
    %v6577 = vmul.f32 %v6541, %v6574
    %v6578 = vmul.f32 %v6543, %v6574
    %v6579 = vmul.f32 %v6545, %v6574
    %v6580 = vmul.f32 %v6547, %v6574
    %v6581 = vmul.f32 %v6549, %v6574
    %v6582 = vmul.f32 %v6551, %v6574
    %v6583 = vmul.f32 %v6553, %v6574
    %v6584 = vmul.f32 %v6555, %v6574
    %v6585 = vmul.f32 %v6557, %v6574
    %v6586 = vmul.f32 %v6559, %v6574
    %v6587 = vmul.f32 %v6561, %v6574
    %v6588 = vmul.f32 %v6563, %v6574
    %v6589 = vmul.f32 %v6565, %v6574
    %v6590 = vmul.f32 %v6567, %v6574
    %v6591 = vsub.f32 %v6520, %v6575
    %v6592 = vsub.f32 %v6521, %v6576
    %v6593 = vsub.f32 %v6522, %v6577
    %v6594 = vsub.f32 %v6523, %v6578
    %v6595 = vsub.f32 %v6524, %v6579
    %v6596 = vsub.f32 %v6525, %v6580
    %v6597 = vsub.f32 %v6526, %v6581
    %v6598 = vsub.f32 %v6527, %v6582
    %v6599 = vsub.f32 %v6528, %v6583
    %v6600 = vsub.f32 %v6529, %v6584
    %v6601 = vsub.f32 %v6530, %v6585
    %v6602 = vsub.f32 %v6531, %v6586
    %v6603 = vsub.f32 %v6532, %v6587
    %v6604 = vsub.f32 %v6533, %v6588
    %v6605 = vsub.f32 %v6534, %v6589
    %v6606 = vsub.f32 %v6535, %v6590
    %v6607 = vmul.f32 %v6591, %v6591
    %v6608 = vmul.f32 %v6592, %v6592
    %v6609 = vmul.f32 %v6593, %v6593
    %v6610 = vmul.f32 %v6594, %v6594
    %v6611 = vmul.f32 %v6595, %v6595
    %v6612 = vmul.f32 %v6596, %v6596
    %v6613 = vmul.f32 %v6597, %v6597
    %v6614 = vmul.f32 %v6598, %v6598
    %v6615 = vmul.f32 %v6599, %v6599
    %v6616 = vmul.f32 %v6600, %v6600
    %v6617 = vmul.f32 %v6601, %v6601
    %v6618 = vmul.f32 %v6602, %v6602
    %v6619 = vmul.f32 %v6603, %v6603
    %v6620 = vmul.f32 %v6604, %v6604
    %v6621 = vmul.f32 %v6605, %v6605
    %v6622 = vmul.f32 %v6606, %v6606
    %6623 = vadd.xlane.f32.xlu0 %v6607
    %v6624 = vpop.xlane.xlu0 %6623
    %6625 = vadd.xlane.f32.xlu0 %v6608
    %v6626 = vpop.xlane.xlu0 %6625
    %6627 = vadd.xlane.f32.xlu0 %v6609
    %v6628 = vpop.xlane.xlu0 %6627
    %6629 = vadd.xlane.f32.xlu0 %v6610
    %v6630 = vpop.xlane.xlu0 %6629
    %6631 = vadd.xlane.f32.xlu0 %v6611
    %v6632 = vpop.xlane.xlu0 %6631
    %6633 = vadd.xlane.f32.xlu0 %v6612
    %v6634 = vpop.xlane.xlu0 %6633
    %6635 = vadd.xlane.f32.xlu0 %v6613
    %v6636 = vpop.xlane.xlu0 %6635
    %6637 = vadd.xlane.f32.xlu0 %v6614
    %v6638 = vpop.xlane.xlu0 %6637
    %6639 = vadd.xlane.f32.xlu0 %v6615
    %v6640 = vpop.xlane.xlu0 %6639
    %6641 = vadd.xlane.f32.xlu0 %v6616
    %v6642 = vpop.xlane.xlu0 %6641
    %6643 = vadd.xlane.f32.xlu0 %v6617
    %v6644 = vpop.xlane.xlu0 %6643
    %6645 = vadd.xlane.f32.xlu0 %v6618
    %v6646 = vpop.xlane.xlu0 %6645
    %6647 = vadd.xlane.f32.xlu0 %v6619
    %v6648 = vpop.xlane.xlu0 %6647
    %6649 = vadd.xlane.f32.xlu0 %v6620
    %v6650 = vpop.xlane.xlu0 %6649
    %6651 = vadd.xlane.f32.xlu0 %v6621
    %v6652 = vpop.xlane.xlu0 %6651
    %6653 = vadd.xlane.f32.xlu0 %v6622
    %v6654 = vpop.xlane.xlu0 %6653
    %v6655 = vmul.f32 %v6624, %v6574
    %v6656 = vmul.f32 %v6626, %v6574
    %v6657 = vmul.f32 %v6628, %v6574
    %v6658 = vmul.f32 %v6630, %v6574
    %v6659 = vmul.f32 %v6632, %v6574
    %v6660 = vmul.f32 %v6634, %v6574
    %v6661 = vmul.f32 %v6636, %v6574
    %v6662 = vmul.f32 %v6638, %v6574
    %v6663 = vmul.f32 %v6640, %v6574
    %v6664 = vmul.f32 %v6642, %v6574
    %v6665 = vmul.f32 %v6644, %v6574
    %v6666 = vmul.f32 %v6646, %v6574
    %v6667 = vmul.f32 %v6648, %v6574
    %v6668 = vmul.f32 %v6650, %v6574
    %v6669 = vmul.f32 %v6652, %v6574
    %v6670 = vmul.f32 %v6654, %v6574
    %v6671 = vadd.f32 %v6655, 1e-06
    %v6672 = vadd.f32 %v6656, 1e-06
    %v6673 = vadd.f32 %v6657, 1e-06
    %v6674 = vadd.f32 %v6658, 1e-06
    %v6675 = vadd.f32 %v6659, 1e-06
    %v6676 = vadd.f32 %v6660, 1e-06
    %v6677 = vadd.f32 %v6661, 1e-06
    %v6678 = vadd.f32 %v6662, 1e-06
    %v6679 = vadd.f32 %v6663, 1e-06
    %v6680 = vadd.f32 %v6664, 1e-06
    %v6681 = vadd.f32 %v6665, 1e-06
    %v6682 = vadd.f32 %v6666, 1e-06
    %v6683 = vadd.f32 %v6667, 1e-06
    %v6684 = vadd.f32 %v6668, 1e-06
    %v6685 = vadd.f32 %v6669, 1e-06
    %v6686 = vadd.f32 %v6670, 1e-06
    %v6687 = vrsqrt.pop %v6671
    %v6688 = vmul.f32 %v6687, %v6671
    %v6689 = vmul.f32 %v6688, %v6687
    %v6690 = vmul.f32 0.5, %v6689
    %v6691 = vsub.f32 1.5, %v6690
    %v6692 = vmul.f32 %v6687, %v6691
    %vm6693 = vweird.f32 %v6671
    %vm6694 = vweird.f32 %v6687
    %vm6695 = vmor %vm6693, %vm6694
    %v6696 = vsel %vm6695, %v6687, %v6692
    %v6697 = vrsqrt.pop %v6672
    %v6698 = vmul.f32 %v6697, %v6672
    %v6699 = vmul.f32 %v6698, %v6697
    %v6700 = vmul.f32 0.5, %v6699
    %v6701 = vsub.f32 1.5, %v6700
    %v6702 = vmul.f32 %v6697, %v6701
    %vm6703 = vweird.f32 %v6672
    %vm6704 = vweird.f32 %v6697
    %vm6705 = vmor %vm6703, %vm6704
    %v6706 = vsel %vm6705, %v6697, %v6702
    %v6707 = vrsqrt.pop %v6673
    %v6708 = vmul.f32 %v6707, %v6673
    %v6709 = vmul.f32 %v6708, %v6707
    %v6710 = vmul.f32 0.5, %v6709
    %v6711 = vsub.f32 1.5, %v6710
    %v6712 = vmul.f32 %v6707, %v6711
    %vm6713 = vweird.f32 %v6673
    %vm6714 = vweird.f32 %v6707
    %vm6715 = vmor %vm6713, %vm6714
    %v6716 = vsel %vm6715, %v6707, %v6712
    %v6717 = vrsqrt.pop %v6674
    %v6718 = vmul.f32 %v6717, %v6674
    %v6719 = vmul.f32 %v6718, %v6717
    %v6720 = vmul.f32 0.5, %v6719
    %v6721 = vsub.f32 1.5, %v6720
    %v6722 = vmul.f32 %v6717, %v6721
    %vm6723 = vweird.f32 %v6674
    %vm6724 = vweird.f32 %v6717
    %vm6725 = vmor %vm6723, %vm6724
    %v6726 = vsel %vm6725, %v6717, %v6722
    %v6727 = vrsqrt.pop %v6675
    %v6728 = vmul.f32 %v6727, %v6675
    %v6729 = vmul.f32 %v6728, %v6727
    %v6730 = vmul.f32 0.5, %v6729
    %v6731 = vsub.f32 1.5, %v6730
    %v6732 = vmul.f32 %v6727, %v6731
    %vm6733 = vweird.f32 %v6675
    %vm6734 = vweird.f32 %v6727
    %vm6735 = vmor %vm6733, %vm6734
    %v6736 = vsel %vm6735, %v6727, %v6732
    %v6737 = vrsqrt.pop %v6676
    %v6738 = vmul.f32 %v6737, %v6676
    %v6739 = vmul.f32 %v6738, %v6737
    %v6740 = vmul.f32 0.5, %v6739
    %v6741 = vsub.f32 1.5, %v6740
    %v6742 = vmul.f32 %v6737, %v6741
    %vm6743 = vweird.f32 %v6676
    %vm6744 = vweird.f32 %v6737
    %vm6745 = vmor %vm6743, %vm6744
    %v6746 = vsel %vm6745, %v6737, %v6742
    %v6747 = vrsqrt.pop %v6677
    %v6748 = vmul.f32 %v6747, %v6677
    %v6749 = vmul.f32 %v6748, %v6747
    %v6750 = vmul.f32 0.5, %v6749
    %v6751 = vsub.f32 1.5, %v6750
    %v6752 = vmul.f32 %v6747, %v6751
    %vm6753 = vweird.f32 %v6677
    %vm6754 = vweird.f32 %v6747
    %vm6755 = vmor %vm6753, %vm6754
    %v6756 = vsel %vm6755, %v6747, %v6752
    %v6757 = vrsqrt.pop %v6678
    %v6758 = vmul.f32 %v6757, %v6678
    %v6759 = vmul.f32 %v6758, %v6757
    %v6760 = vmul.f32 0.5, %v6759
    %v6761 = vsub.f32 1.5, %v6760
    %v6762 = vmul.f32 %v6757, %v6761
    %vm6763 = vweird.f32 %v6678
    %vm6764 = vweird.f32 %v6757
    %vm6765 = vmor %vm6763, %vm6764
    %v6766 = vsel %vm6765, %v6757, %v6762
    %v6767 = vrsqrt.pop %v6679
    %v6768 = vmul.f32 %v6767, %v6679
    %v6769 = vmul.f32 %v6768, %v6767
    %v6770 = vmul.f32 0.5, %v6769
    %v6771 = vsub.f32 1.5, %v6770
    %v6772 = vmul.f32 %v6767, %v6771
    %vm6773 = vweird.f32 %v6679
    %vm6774 = vweird.f32 %v6767
    %vm6775 = vmor %vm6773, %vm6774
    %v6776 = vsel %vm6775, %v6767, %v6772
    %v6777 = vrsqrt.pop %v6680
    %v6778 = vmul.f32 %v6777, %v6680
    %v6779 = vmul.f32 %v6778, %v6777
    %v6780 = vmul.f32 0.5, %v6779
    %v6781 = vsub.f32 1.5, %v6780
    %v6782 = vmul.f32 %v6777, %v6781
    %vm6783 = vweird.f32 %v6680
    %vm6784 = vweird.f32 %v6777
    %vm6785 = vmor %vm6783, %vm6784
    %v6786 = vsel %vm6785, %v6777, %v6782
    %v6787 = vrsqrt.pop %v6681
    %v6788 = vmul.f32 %v6787, %v6681
    %v6789 = vmul.f32 %v6788, %v6787
    %v6790 = vmul.f32 0.5, %v6789
    %v6791 = vsub.f32 1.5, %v6790
    %v6792 = vmul.f32 %v6787, %v6791
    %vm6793 = vweird.f32 %v6681
    %vm6794 = vweird.f32 %v6787
    %vm6795 = vmor %vm6793, %vm6794
    %v6796 = vsel %vm6795, %v6787, %v6792
    %v6797 = vrsqrt.pop %v6682
    %v6798 = vmul.f32 %v6797, %v6682
    %v6799 = vmul.f32 %v6798, %v6797
    %v6800 = vmul.f32 0.5, %v6799
    %v6801 = vsub.f32 1.5, %v6800
    %v6802 = vmul.f32 %v6797, %v6801
    %vm6803 = vweird.f32 %v6682
    %vm6804 = vweird.f32 %v6797
    %vm6805 = vmor %vm6803, %vm6804
    %v6806 = vsel %vm6805, %v6797, %v6802
    %v6807 = vrsqrt.pop %v6683
    %v6808 = vmul.f32 %v6807, %v6683
    %v6809 = vmul.f32 %v6808, %v6807
    %v6810 = vmul.f32 0.5, %v6809
    %v6811 = vsub.f32 1.5, %v6810
    %v6812 = vmul.f32 %v6807, %v6811
    %vm6813 = vweird.f32 %v6683
    %vm6814 = vweird.f32 %v6807
    %vm6815 = vmor %vm6813, %vm6814
    %v6816 = vsel %vm6815, %v6807, %v6812
    %v6817 = vrsqrt.pop %v6684
    %v6818 = vmul.f32 %v6817, %v6684
    %v6819 = vmul.f32 %v6818, %v6817
    %v6820 = vmul.f32 0.5, %v6819
    %v6821 = vsub.f32 1.5, %v6820
    %v6822 = vmul.f32 %v6817, %v6821
    %vm6823 = vweird.f32 %v6684
    %vm6824 = vweird.f32 %v6817
    %vm6825 = vmor %vm6823, %vm6824
    %v6826 = vsel %vm6825, %v6817, %v6822
    %v6827 = vrsqrt.pop %v6685
    %v6828 = vmul.f32 %v6827, %v6685
    %v6829 = vmul.f32 %v6828, %v6827
    %v6830 = vmul.f32 0.5, %v6829
    %v6831 = vsub.f32 1.5, %v6830
    %v6832 = vmul.f32 %v6827, %v6831
    %vm6833 = vweird.f32 %v6685
    %vm6834 = vweird.f32 %v6827
    %vm6835 = vmor %vm6833, %vm6834
    %v6836 = vsel %vm6835, %v6827, %v6832
    %v6837 = vrsqrt.pop %v6686
    %v6838 = vmul.f32 %v6837, %v6686
    %v6839 = vmul.f32 %v6838, %v6837
    %v6840 = vmul.f32 0.5, %v6839
    %v6841 = vsub.f32 1.5, %v6840
    %v6842 = vmul.f32 %v6837, %v6841
    %vm6843 = vweird.f32 %v6686
    %vm6844 = vweird.f32 %v6837
    %vm6845 = vmor %vm6843, %vm6844
    %v6846 = vsel %vm6845, %v6837, %v6842
    %v6847 = vmul.f32 %v6591, %v6696
    %v6848 = vmul.f32 %v6592, %v6706
    %v6849 = vmul.f32 %v6593, %v6716
    %v6850 = vmul.f32 %v6594, %v6726
    %v6851 = vmul.f32 %v6595, %v6736
    %v6852 = vmul.f32 %v6596, %v6746
    %v6853 = vmul.f32 %v6597, %v6756
    %v6854 = vmul.f32 %v6598, %v6766
    %v6855 = vmul.f32 %v6599, %v6776
    %v6856 = vmul.f32 %v6600, %v6786
    %v6857 = vmul.f32 %v6601, %v6796
    %v6858 = vmul.f32 %v6602, %v6806
    %v6859 = vmul.f32 %v6603, %v6816
    %v6860 = vmul.f32 %v6604, %v6826
    %v6861 = vmul.f32 %v6605, %v6836
    %v6862 = vmul.f32 %v6606, %v6846
    %v6863 = vld [vmem:[%s3] sm:$0x1]
    %v6865 = vperm.slane %v6863, 0
    %v6867 = vmul.f32 %v6847, %v6865
    %v6868 = vmul.f32 %v6848, %v6865
    %v6869 = vmul.f32 %v6849, %v6865
    %v6870 = vmul.f32 %v6850, %v6865
    %v6871 = vmul.f32 %v6851, %v6865
    %v6872 = vmul.f32 %v6852, %v6865
    %v6873 = vmul.f32 %v6853, %v6865
    %v6874 = vmul.f32 %v6854, %v6865
    %v6875 = vmul.f32 %v6855, %v6865
    %v6876 = vmul.f32 %v6856, %v6865
    %v6877 = vmul.f32 %v6857, %v6865
    %v6878 = vmul.f32 %v6858, %v6865
    %v6879 = vmul.f32 %v6859, %v6865
    %v6880 = vmul.f32 %v6860, %v6865
    %v6881 = vmul.f32 %v6861, %v6865
    %v6882 = vmul.f32 %v6862, %v6865
    %v6883 = vld [vmem:[%s4] sm:$0x1]
    %v6885 = vperm.slane %v6883, 0
    %v6887 = vadd.f32 %v6867, %v6885
    %v6888 = vadd.f32 %v6868, %v6885
    %v6889 = vadd.f32 %v6869, %v6885
    %v6890 = vadd.f32 %v6870, %v6885
    %v6891 = vadd.f32 %v6871, %v6885
    %v6892 = vadd.f32 %v6872, %v6885
    %v6893 = vadd.f32 %v6873, %v6885
    %v6894 = vadd.f32 %v6874, %v6885
    %v6895 = vadd.f32 %v6875, %v6885
    %v6896 = vadd.f32 %v6876, %v6885
    %v6897 = vadd.f32 %v6877, %v6885
    %v6898 = vadd.f32 %v6878, %v6885
    %v6899 = vadd.f32 %v6879, %v6885
    %v6900 = vadd.f32 %v6880, %v6885
    %v6901 = vadd.f32 %v6881, %v6885
    %v6902 = vadd.f32 %v6882, %v6885
    %v6903 = vld [vmem:[%s5] sm:$0xff]
    %v6904 = vld [vmem:[%s5 + $0x8] sm:$0xff]
    %v6905 = vld [vmem:[%s5 + $0x10] sm:$0xff]
    %v6906 = vld [vmem:[%s5 + $0x18] sm:$0xff]
    %v6907 = vld [vmem:[%s5 + $0x20] sm:$0xff]
    %v6908 = vld [vmem:[%s5 + $0x28] sm:$0xff]
    %v6909 = vld [vmem:[%s5 + $0x30] sm:$0xff]
    %v6910 = vld [vmem:[%s5 + $0x38] sm:$0xff]
    %v6911 = vld [vmem:[%s5 + $0x40] sm:$0xff]
    %v6912 = vld [vmem:[%s5 + $0x48] sm:$0xff]
    %v6913 = vld [vmem:[%s5 + $0x50] sm:$0xff]
    %v6914 = vld [vmem:[%s5 + $0x58] sm:$0xff]
    %v6915 = vld [vmem:[%s5 + $0x60] sm:$0xff]
    %v6916 = vld [vmem:[%s5 + $0x68] sm:$0xff]
    %v6917 = vld [vmem:[%s5 + $0x70] sm:$0xff]
    %v6918 = vld [vmem:[%s5 + $0x78] sm:$0xff]
    %v6919 = vld [vmem:[%s5 + $0x80] sm:$0xff]
    %v6920 = vld [vmem:[%s5 + $0x88] sm:$0xff]
    %v6921 = vld [vmem:[%s5 + $0x90] sm:$0xff]
    %v6922 = vld [vmem:[%s5 + $0x98] sm:$0xff]
    %v6923 = vld [vmem:[%s5 + $0xa0] sm:$0xff]
    %v6924 = vld [vmem:[%s5 + $0xa8] sm:$0xff]
    %v6925 = vld [vmem:[%s5 + $0xb0] sm:$0xff]
    %v6926 = vld [vmem:[%s5 + $0xb8] sm:$0xff]
    %v6927 = vld [vmem:[%s5 + $0xc0] sm:$0xff]
    %v6928 = vld [vmem:[%s5 + $0xc8] sm:$0xff]
    %v6929 = vld [vmem:[%s5 + $0xd0] sm:$0xff]
    %v6930 = vld [vmem:[%s5 + $0xd8] sm:$0xff]
    %v6931 = vld [vmem:[%s5 + $0xe0] sm:$0xff]
    %v6932 = vld [vmem:[%s5 + $0xe8] sm:$0xff]
    %v6933 = vld [vmem:[%s5 + $0xf0] sm:$0xff]
    %v6934 = vld [vmem:[%s5 + $0xf8] sm:$0xff]
    %v6935 = vld [vmem:[%s5 + $0x100] sm:$0xff]
    %v6936 = vld [vmem:[%s5 + $0x108] sm:$0xff]
    %v6937 = vld [vmem:[%s5 + $0x110] sm:$0xff]
    %v6938 = vld [vmem:[%s5 + $0x118] sm:$0xff]
    %v6939 = vld [vmem:[%s5 + $0x120] sm:$0xff]
    %v6940 = vld [vmem:[%s5 + $0x128] sm:$0xff]
    %v6941 = vld [vmem:[%s5 + $0x130] sm:$0xff]
    %v6942 = vld [vmem:[%s5 + $0x138] sm:$0xff]
    %v6943 = vld [vmem:[%s5 + $0x140] sm:$0xff]
    %v6944 = vld [vmem:[%s5 + $0x148] sm:$0xff]
    %v6945 = vld [vmem:[%s5 + $0x150] sm:$0xff]
    %v6946 = vld [vmem:[%s5 + $0x158] sm:$0xff]
    %v6947 = vld [vmem:[%s5 + $0x160] sm:$0xff]
    %v6948 = vld [vmem:[%s5 + $0x168] sm:$0xff]
    %v6949 = vld [vmem:[%s5 + $0x170] sm:$0xff]
    %v6950 = vld [vmem:[%s5 + $0x178] sm:$0xff]
    %v6951 = vld [vmem:[%s5 + $0x180] sm:$0xff]
    %v6952 = vld [vmem:[%s5 + $0x188] sm:$0xff]
    %v6953 = vld [vmem:[%s5 + $0x190] sm:$0xff]
    %v6954 = vld [vmem:[%s5 + $0x198] sm:$0xff]
    %v6955 = vld [vmem:[%s5 + $0x1a0] sm:$0xff]
    %v6956 = vld [vmem:[%s5 + $0x1a8] sm:$0xff]
    %v6957 = vld [vmem:[%s5 + $0x1b0] sm:$0xff]
    %v6958 = vld [vmem:[%s5 + $0x1b8] sm:$0xff]
    %v6959 = vld [vmem:[%s5 + $0x1c0] sm:$0xff]
    %v6960 = vld [vmem:[%s5 + $0x1c8] sm:$0xff]
    %v6961 = vld [vmem:[%s5 + $0x1d0] sm:$0xff]
    %v6962 = vld [vmem:[%s5 + $0x1d8] sm:$0xff]
    %v6963 = vld [vmem:[%s5 + $0x1e0] sm:$0xff]
    %v6964 = vld [vmem:[%s5 + $0x1e8] sm:$0xff]
    %v6965 = vld [vmem:[%s5 + $0x1f0] sm:$0xff]
    %v6966 = vld [vmem:[%s5 + $0x1f8] sm:$0xff]
    %v6967 = vld [vmem:[%s6] sm:$0xf]
    %v6969 = vperm.slane %v6967, 0
    %v6970 = vperm.slane %v6967, 1
    %v6971 = vperm.slane %v6967, 2
    %v6972 = vperm.slane %v6967, 3
    %6977 = vmatpush.msra.mxu0 %v6963
    %6978 = vmatpush.msra.mxu0 %v6959
    %6979 = vmatpush.msra.mxu0 %v6955
    %6980 = vmatpush.msra.mxu0 %v6951
    %6981 = vmatpush.msra.mxu0 %v6947
    %6982 = vmatpush.msra.mxu0 %v6943
    %6983 = vmatpush.msra.mxu0 %v6939
    %6984 = vmatpush.msra.mxu0 %v6935
    %6985 = vmatpush.msra.mxu0 %v6931
    %6986 = vmatpush.msra.mxu0 %v6927
    %6987 = vmatpush.msra.mxu0 %v6923
    %6988 = vmatpush.msra.mxu0 %v6919
    %6989 = vmatpush.msra.mxu0 %v6915
    %6990 = vmatpush.msra.mxu0 %v6911
    %6991 = vmatpush.msra.mxu0 %v6907
    %6992 = vmatpush.msra.mxu0 %v6903
    %6993 = vmatmul.f32.gmra.mxu0 %v6887
    %v6994 = vpop.f32.mrf.mxu0
    %v6995 = vadd.f32 %v6969, %v6994
    %6996 = vmatmul.f32.gmra.mxu0 %v6888
    %v6997 = vpop.f32.mrf.mxu0
    %v6998 = vadd.f32 %v6969, %v6997
    %6999 = vmatmul.f32.gmra.mxu0 %v6889
    %v7000 = vpop.f32.mrf.mxu0
    %v7001 = vadd.f32 %v6969, %v7000
    %7002 = vmatmul.f32.gmra.mxu0 %v6890
    %v7003 = vpop.f32.mrf.mxu0
    %v7004 = vadd.f32 %v6969, %v7003
    %7005 = vmatmul.f32.gmra.mxu0 %v6891
    %v7006 = vpop.f32.mrf.mxu0
    %v7007 = vadd.f32 %v6969, %v7006
    %7008 = vmatmul.f32.gmra.mxu0 %v6892
    %v7009 = vpop.f32.mrf.mxu0
    %v7010 = vadd.f32 %v6969, %v7009
    %7011 = vmatmul.f32.gmra.mxu0 %v6893
    %v7012 = vpop.f32.mrf.mxu0
    %v7013 = vadd.f32 %v6969, %v7012
    %7014 = vmatmul.f32.gmra.mxu0 %v6894
    %v7015 = vpop.f32.mrf.mxu0
    %v7016 = vadd.f32 %v6969, %v7015
    %7017 = vmatmul.f32.gmra.mxu0 %v6895
    %v7018 = vpop.f32.mrf.mxu0
    %v7019 = vadd.f32 %v6969, %v7018
    %7020 = vmatmul.f32.gmra.mxu0 %v6896
    %v7021 = vpop.f32.mrf.mxu0
    %v7022 = vadd.f32 %v6969, %v7021
    %7023 = vmatmul.f32.gmra.mxu0 %v6897
    %v7024 = vpop.f32.mrf.mxu0
    %v7025 = vadd.f32 %v6969, %v7024
    %7026 = vmatmul.f32.gmra.mxu0 %v6898
    %v7027 = vpop.f32.mrf.mxu0
    %v7028 = vadd.f32 %v6969, %v7027
    %7029 = vmatmul.f32.gmra.mxu0 %v6899
    %v7030 = vpop.f32.mrf.mxu0
    %v7031 = vadd.f32 %v6969, %v7030
    %7032 = vmatmul.f32.gmra.mxu0 %v6900
    %v7033 = vpop.f32.mrf.mxu0
    %v7034 = vadd.f32 %v6969, %v7033
    %7035 = vmatmul.f32.gmra.mxu0 %v6901
    %v7036 = vpop.f32.mrf.mxu0
    %v7037 = vadd.f32 %v6969, %v7036
    %7038 = vmatmul.f32.gmra.mxu0 %v6902
    %v7039 = vpop.f32.mrf.mxu0
    %v7040 = vadd.f32 %v6969, %v7039
    %7041 = vdwg.mxu0
    %7042 = vmatpush.msra.mxu0 %v6964
    %7043 = vmatpush.msra.mxu0 %v6960
    %7044 = vmatpush.msra.mxu0 %v6956
    %7045 = vmatpush.msra.mxu0 %v6952
    %7046 = vmatpush.msra.mxu0 %v6948
    %7047 = vmatpush.msra.mxu0 %v6944
    %7048 = vmatpush.msra.mxu0 %v6940
    %7049 = vmatpush.msra.mxu0 %v6936
    %7050 = vmatpush.msra.mxu0 %v6932
    %7051 = vmatpush.msra.mxu0 %v6928
    %7052 = vmatpush.msra.mxu0 %v6924
    %7053 = vmatpush.msra.mxu0 %v6920
    %7054 = vmatpush.msra.mxu0 %v6916
    %7055 = vmatpush.msra.mxu0 %v6912
    %7056 = vmatpush.msra.mxu0 %v6908
    %7057 = vmatpush.msra.mxu0 %v6904
    %7058 = vmatmul.f32.gmra.mxu0 %v6887
    %v7059 = vpop.f32.mrf.mxu0
    %v7060 = vadd.f32 %v6970, %v7059
    %7061 = vmatmul.f32.gmra.mxu0 %v6888
    %v7062 = vpop.f32.mrf.mxu0
    %v7063 = vadd.f32 %v6970, %v7062
    %7064 = vmatmul.f32.gmra.mxu0 %v6889
    %v7065 = vpop.f32.mrf.mxu0
    %v7066 = vadd.f32 %v6970, %v7065
    %7067 = vmatmul.f32.gmra.mxu0 %v6890
    %v7068 = vpop.f32.mrf.mxu0
    %v7069 = vadd.f32 %v6970, %v7068
    %7070 = vmatmul.f32.gmra.mxu0 %v6891
    %v7071 = vpop.f32.mrf.mxu0
    %v7072 = vadd.f32 %v6970, %v7071
    %7073 = vmatmul.f32.gmra.mxu0 %v6892
    %v7074 = vpop.f32.mrf.mxu0
    %v7075 = vadd.f32 %v6970, %v7074
    %7076 = vmatmul.f32.gmra.mxu0 %v6893
    %v7077 = vpop.f32.mrf.mxu0
    %v7078 = vadd.f32 %v6970, %v7077
    %7079 = vmatmul.f32.gmra.mxu0 %v6894
    %v7080 = vpop.f32.mrf.mxu0
    %v7081 = vadd.f32 %v6970, %v7080
    %7082 = vmatmul.f32.gmra.mxu0 %v6895
    %v7083 = vpop.f32.mrf.mxu0
    %v7084 = vadd.f32 %v6970, %v7083
    %7085 = vmatmul.f32.gmra.mxu0 %v6896
    %v7086 = vpop.f32.mrf.mxu0
    %v7087 = vadd.f32 %v6970, %v7086
    %7088 = vmatmul.f32.gmra.mxu0 %v6897
    %v7089 = vpop.f32.mrf.mxu0
    %v7090 = vadd.f32 %v6970, %v7089
    %7091 = vmatmul.f32.gmra.mxu0 %v6898
    %v7092 = vpop.f32.mrf.mxu0
    %v7093 = vadd.f32 %v6970, %v7092
    %7094 = vmatmul.f32.gmra.mxu0 %v6899
    %v7095 = vpop.f32.mrf.mxu0
    %v7096 = vadd.f32 %v6970, %v7095
    %7097 = vmatmul.f32.gmra.mxu0 %v6900
    %v7098 = vpop.f32.mrf.mxu0
    %v7099 = vadd.f32 %v6970, %v7098
    %7100 = vmatmul.f32.gmra.mxu0 %v6901
    %v7101 = vpop.f32.mrf.mxu0
    %v7102 = vadd.f32 %v6970, %v7101
    %7103 = vmatmul.f32.gmra.mxu0 %v6902
    %v7104 = vpop.f32.mrf.mxu0
    %v7105 = vadd.f32 %v6970, %v7104
    %7106 = vdwg.mxu0
    %7107 = vmatpush.msra.mxu0 %v6965
    %7108 = vmatpush.msra.mxu0 %v6961
    %7109 = vmatpush.msra.mxu0 %v6957
    %7110 = vmatpush.msra.mxu0 %v6953
    %7111 = vmatpush.msra.mxu0 %v6949
    %7112 = vmatpush.msra.mxu0 %v6945
    %7113 = vmatpush.msra.mxu0 %v6941
    %7114 = vmatpush.msra.mxu0 %v6937
    %7115 = vmatpush.msra.mxu0 %v6933
    %7116 = vmatpush.msra.mxu0 %v6929
    %7117 = vmatpush.msra.mxu0 %v6925
    %7118 = vmatpush.msra.mxu0 %v6921
    %7119 = vmatpush.msra.mxu0 %v6917
    %7120 = vmatpush.msra.mxu0 %v6913
    %7121 = vmatpush.msra.mxu0 %v6909
    %7122 = vmatpush.msra.mxu0 %v6905
    %7123 = vmatmul.f32.gmra.mxu0 %v6887
    %v7124 = vpop.f32.mrf.mxu0
    %v7125 = vadd.f32 %v6971, %v7124
    %7126 = vmatmul.f32.gmra.mxu0 %v6888
    %v7127 = vpop.f32.mrf.mxu0
    %v7128 = vadd.f32 %v6971, %v7127
    %7129 = vmatmul.f32.gmra.mxu0 %v6889
    %v7130 = vpop.f32.mrf.mxu0
    %v7131 = vadd.f32 %v6971, %v7130
    %7132 = vmatmul.f32.gmra.mxu0 %v6890
    %v7133 = vpop.f32.mrf.mxu0
    %v7134 = vadd.f32 %v6971, %v7133
    %7135 = vmatmul.f32.gmra.mxu0 %v6891
    %v7136 = vpop.f32.mrf.mxu0
    %v7137 = vadd.f32 %v6971, %v7136
    %7138 = vmatmul.f32.gmra.mxu0 %v6892
    %v7139 = vpop.f32.mrf.mxu0
    %v7140 = vadd.f32 %v6971, %v7139
    %7141 = vmatmul.f32.gmra.mxu0 %v6893
    %v7142 = vpop.f32.mrf.mxu0
    %v7143 = vadd.f32 %v6971, %v7142
    %7144 = vmatmul.f32.gmra.mxu0 %v6894
    %v7145 = vpop.f32.mrf.mxu0
    %v7146 = vadd.f32 %v6971, %v7145
    %7147 = vmatmul.f32.gmra.mxu0 %v6895
    %v7148 = vpop.f32.mrf.mxu0
    %v7149 = vadd.f32 %v6971, %v7148
    %7150 = vmatmul.f32.gmra.mxu0 %v6896
    %v7151 = vpop.f32.mrf.mxu0
    %v7152 = vadd.f32 %v6971, %v7151
    %7153 = vmatmul.f32.gmra.mxu0 %v6897
    %v7154 = vpop.f32.mrf.mxu0
    %v7155 = vadd.f32 %v6971, %v7154
    %7156 = vmatmul.f32.gmra.mxu0 %v6898
    %v7157 = vpop.f32.mrf.mxu0
    %v7158 = vadd.f32 %v6971, %v7157
    %7159 = vmatmul.f32.gmra.mxu0 %v6899
    %v7160 = vpop.f32.mrf.mxu0
    %v7161 = vadd.f32 %v6971, %v7160
    %7162 = vmatmul.f32.gmra.mxu0 %v6900
    %v7163 = vpop.f32.mrf.mxu0
    %v7164 = vadd.f32 %v6971, %v7163
    %7165 = vmatmul.f32.gmra.mxu0 %v6901
    %v7166 = vpop.f32.mrf.mxu0
    %v7167 = vadd.f32 %v6971, %v7166
    %7168 = vmatmul.f32.gmra.mxu0 %v6902
    %v7169 = vpop.f32.mrf.mxu0
    %v7170 = vadd.f32 %v6971, %v7169
    %7171 = vdwg.mxu0
    %7172 = vmatpush.msra.mxu0 %v6966
    %7173 = vmatpush.msra.mxu0 %v6962
    %7174 = vmatpush.msra.mxu0 %v6958
    %7175 = vmatpush.msra.mxu0 %v6954
    %7176 = vmatpush.msra.mxu0 %v6950
    %7177 = vmatpush.msra.mxu0 %v6946
    %7178 = vmatpush.msra.mxu0 %v6942
    %7179 = vmatpush.msra.mxu0 %v6938
    %7180 = vmatpush.msra.mxu0 %v6934
    %7181 = vmatpush.msra.mxu0 %v6930
    %7182 = vmatpush.msra.mxu0 %v6926
    %7183 = vmatpush.msra.mxu0 %v6922
    %7184 = vmatpush.msra.mxu0 %v6918
    %7185 = vmatpush.msra.mxu0 %v6914
    %7186 = vmatpush.msra.mxu0 %v6910
    %7187 = vmatpush.msra.mxu0 %v6906
    %7188 = vmatmul.f32.gmra.mxu0 %v6887
    %v7189 = vpop.f32.mrf.mxu0
    %v7190 = vadd.f32 %v6972, %v7189
    %7191 = vmatmul.f32.gmra.mxu0 %v6888
    %v7192 = vpop.f32.mrf.mxu0
    %v7193 = vadd.f32 %v6972, %v7192
    %7194 = vmatmul.f32.gmra.mxu0 %v6889
    %v7195 = vpop.f32.mrf.mxu0
    %v7196 = vadd.f32 %v6972, %v7195
    %7197 = vmatmul.f32.gmra.mxu0 %v6890
    %v7198 = vpop.f32.mrf.mxu0
    %v7199 = vadd.f32 %v6972, %v7198
    %7200 = vmatmul.f32.gmra.mxu0 %v6891
    %v7201 = vpop.f32.mrf.mxu0
    %v7202 = vadd.f32 %v6972, %v7201
    %7203 = vmatmul.f32.gmra.mxu0 %v6892
    %v7204 = vpop.f32.mrf.mxu0
    %v7205 = vadd.f32 %v6972, %v7204
    %7206 = vmatmul.f32.gmra.mxu0 %v6893
    %v7207 = vpop.f32.mrf.mxu0
    %v7208 = vadd.f32 %v6972, %v7207
    %7209 = vmatmul.f32.gmra.mxu0 %v6894
    %v7210 = vpop.f32.mrf.mxu0
    %v7211 = vadd.f32 %v6972, %v7210
    %7212 = vmatmul.f32.gmra.mxu0 %v6895
    %v7213 = vpop.f32.mrf.mxu0
    %v7214 = vadd.f32 %v6972, %v7213
    %7215 = vmatmul.f32.gmra.mxu0 %v6896
    %v7216 = vpop.f32.mrf.mxu0
    %v7217 = vadd.f32 %v6972, %v7216
    %7218 = vmatmul.f32.gmra.mxu0 %v6897
    %v7219 = vpop.f32.mrf.mxu0
    %v7220 = vadd.f32 %v6972, %v7219
    %7221 = vmatmul.f32.gmra.mxu0 %v6898
    %v7222 = vpop.f32.mrf.mxu0
    %v7223 = vadd.f32 %v6972, %v7222
    %7224 = vmatmul.f32.gmra.mxu0 %v6899
    %v7225 = vpop.f32.mrf.mxu0
    %v7226 = vadd.f32 %v6972, %v7225
    %7227 = vmatmul.f32.gmra.mxu0 %v6900
    %v7228 = vpop.f32.mrf.mxu0
    %v7229 = vadd.f32 %v6972, %v7228
    %7230 = vmatmul.f32.gmra.mxu0 %v6901
    %v7231 = vpop.f32.mrf.mxu0
    %v7232 = vadd.f32 %v6972, %v7231
    %7233 = vmatmul.f32.gmra.mxu0 %v6902
    %v7234 = vpop.f32.mrf.mxu0
    %v7235 = vadd.f32 %v6972, %v7234
    %7236 = vdwg.mxu0
    %v7237 = vmul.f32 %v6995, 0.5
    %v7238 = vmul.f32 %v7060, 0.5
    %v7239 = vmul.f32 %v7125, 0.5
    %v7240 = vmul.f32 %v7190, 0.5
    %v7241 = vmul.f32 %v6998, 0.5
    %v7242 = vmul.f32 %v7063, 0.5
    %v7243 = vmul.f32 %v7128, 0.5
    %v7244 = vmul.f32 %v7193, 0.5
    %v7245 = vmul.f32 %v7001, 0.5
    %v7246 = vmul.f32 %v7066, 0.5
    %v7247 = vmul.f32 %v7131, 0.5
    %v7248 = vmul.f32 %v7196, 0.5
    %v7249 = vmul.f32 %v7004, 0.5
    %v7250 = vmul.f32 %v7069, 0.5
    %v7251 = vmul.f32 %v7134, 0.5
    %v7252 = vmul.f32 %v7199, 0.5
    %v7253 = vmul.f32 %v7007, 0.5
    %v7254 = vmul.f32 %v7072, 0.5
    %v7255 = vmul.f32 %v7137, 0.5
    %v7256 = vmul.f32 %v7202, 0.5
    %v7257 = vmul.f32 %v7010, 0.5
    %v7258 = vmul.f32 %v7075, 0.5
    %v7259 = vmul.f32 %v7140, 0.5
    %v7260 = vmul.f32 %v7205, 0.5
    %v7261 = vmul.f32 %v7013, 0.5
    %v7262 = vmul.f32 %v7078, 0.5
    %v7263 = vmul.f32 %v7143, 0.5
    %v7264 = vmul.f32 %v7208, 0.5
    %v7265 = vmul.f32 %v7016, 0.5
    %v7266 = vmul.f32 %v7081, 0.5
    %v7267 = vmul.f32 %v7146, 0.5
    %v7268 = vmul.f32 %v7211, 0.5
    %v7269 = vmul.f32 %v7019, 0.5
    %v7270 = vmul.f32 %v7084, 0.5
    %v7271 = vmul.f32 %v7149, 0.5
    %v7272 = vmul.f32 %v7214, 0.5
    %v7273 = vmul.f32 %v7022, 0.5
    %v7274 = vmul.f32 %v7087, 0.5
    %v7275 = vmul.f32 %v7152, 0.5
    %v7276 = vmul.f32 %v7217, 0.5
    %v7277 = vmul.f32 %v7025, 0.5
    %v7278 = vmul.f32 %v7090, 0.5
    %v7279 = vmul.f32 %v7155, 0.5
    %v7280 = vmul.f32 %v7220, 0.5
    %v7281 = vmul.f32 %v7028, 0.5
    %v7282 = vmul.f32 %v7093, 0.5
    %v7283 = vmul.f32 %v7158, 0.5
    %v7284 = vmul.f32 %v7223, 0.5
    %v7285 = vmul.f32 %v7031, 0.5
    %v7286 = vmul.f32 %v7096, 0.5
    %v7287 = vmul.f32 %v7161, 0.5
    %v7288 = vmul.f32 %v7226, 0.5
    %v7289 = vmul.f32 %v7034, 0.5
    %v7290 = vmul.f32 %v7099, 0.5
    %v7291 = vmul.f32 %v7164, 0.5
    %v7292 = vmul.f32 %v7229, 0.5
    %v7293 = vmul.f32 %v7037, 0.5
    %v7294 = vmul.f32 %v7102, 0.5
    %v7295 = vmul.f32 %v7167, 0.5
    %v7296 = vmul.f32 %v7232, 0.5
    %v7297 = vmul.f32 %v7040, 0.5
    %v7298 = vmul.f32 %v7105, 0.5
    %v7299 = vmul.f32 %v7170, 0.5
    %v7300 = vmul.f32 %v7235, 0.5
    %v7301 = vmul.f32 %v6995, %v6995
    %v7302 = vmul.f32 %v7060, %v7060
    %v7303 = vmul.f32 %v7125, %v7125
    %v7304 = vmul.f32 %v7190, %v7190
    %v7305 = vmul.f32 %v6998, %v6998
    %v7306 = vmul.f32 %v7063, %v7063
    %v7307 = vmul.f32 %v7128, %v7128
    %v7308 = vmul.f32 %v7193, %v7193
    %v7309 = vmul.f32 %v7001, %v7001
    %v7310 = vmul.f32 %v7066, %v7066
    %v7311 = vmul.f32 %v7131, %v7131
    %v7312 = vmul.f32 %v7196, %v7196
    %v7313 = vmul.f32 %v7004, %v7004
    %v7314 = vmul.f32 %v7069, %v7069
    %v7315 = vmul.f32 %v7134, %v7134
    %v7316 = vmul.f32 %v7199, %v7199
    %v7317 = vmul.f32 %v7007, %v7007
    %v7318 = vmul.f32 %v7072, %v7072
    %v7319 = vmul.f32 %v7137, %v7137
    %v7320 = vmul.f32 %v7202, %v7202
    %v7321 = vmul.f32 %v7010, %v7010
    %v7322 = vmul.f32 %v7075, %v7075
    %v7323 = vmul.f32 %v7140, %v7140
    %v7324 = vmul.f32 %v7205, %v7205
    %v7325 = vmul.f32 %v7013, %v7013
    %v7326 = vmul.f32 %v7078, %v7078
    %v7327 = vmul.f32 %v7143, %v7143
    %v7328 = vmul.f32 %v7208, %v7208
    %v7329 = vmul.f32 %v7016, %v7016
    %v7330 = vmul.f32 %v7081, %v7081
    %v7331 = vmul.f32 %v7146, %v7146
    %v7332 = vmul.f32 %v7211, %v7211
    %v7333 = vmul.f32 %v7019, %v7019
    %v7334 = vmul.f32 %v7084, %v7084
    %v7335 = vmul.f32 %v7149, %v7149
    %v7336 = vmul.f32 %v7214, %v7214
    %v7337 = vmul.f32 %v7022, %v7022
    %v7338 = vmul.f32 %v7087, %v7087
    %v7339 = vmul.f32 %v7152, %v7152
    %v7340 = vmul.f32 %v7217, %v7217
    %v7341 = vmul.f32 %v7025, %v7025
    %v7342 = vmul.f32 %v7090, %v7090
    %v7343 = vmul.f32 %v7155, %v7155
    %v7344 = vmul.f32 %v7220, %v7220
    %v7345 = vmul.f32 %v7028, %v7028
    %v7346 = vmul.f32 %v7093, %v7093
    %v7347 = vmul.f32 %v7158, %v7158
    %v7348 = vmul.f32 %v7223, %v7223
    %v7349 = vmul.f32 %v7031, %v7031
    %v7350 = vmul.f32 %v7096, %v7096
    %v7351 = vmul.f32 %v7161, %v7161
    %v7352 = vmul.f32 %v7226, %v7226
    %v7353 = vmul.f32 %v7034, %v7034
    %v7354 = vmul.f32 %v7099, %v7099
    %v7355 = vmul.f32 %v7164, %v7164
    %v7356 = vmul.f32 %v7229, %v7229
    %v7357 = vmul.f32 %v7037, %v7037
    %v7358 = vmul.f32 %v7102, %v7102
    %v7359 = vmul.f32 %v7167, %v7167
    %v7360 = vmul.f32 %v7232, %v7232
    %v7361 = vmul.f32 %v7040, %v7040
    %v7362 = vmul.f32 %v7105, %v7105
    %v7363 = vmul.f32 %v7170, %v7170
    %v7364 = vmul.f32 %v7235, %v7235
    %v7365 = vmul.f32 %v7301, %v6995
    %v7366 = vmul.f32 %v7302, %v7060
    %v7367 = vmul.f32 %v7303, %v7125
    %v7368 = vmul.f32 %v7304, %v7190
    %v7369 = vmul.f32 %v7305, %v6998
    %v7370 = vmul.f32 %v7306, %v7063
    %v7371 = vmul.f32 %v7307, %v7128
    %v7372 = vmul.f32 %v7308, %v7193
    %v7373 = vmul.f32 %v7309, %v7001
    %v7374 = vmul.f32 %v7310, %v7066
    %v7375 = vmul.f32 %v7311, %v7131
    %v7376 = vmul.f32 %v7312, %v7196
    %v7377 = vmul.f32 %v7313, %v7004
    %v7378 = vmul.f32 %v7314, %v7069
    %v7379 = vmul.f32 %v7315, %v7134
    %v7380 = vmul.f32 %v7316, %v7199
    %v7381 = vmul.f32 %v7317, %v7007
    %v7382 = vmul.f32 %v7318, %v7072
    %v7383 = vmul.f32 %v7319, %v7137
    %v7384 = vmul.f32 %v7320, %v7202
    %v7385 = vmul.f32 %v7321, %v7010
    %v7386 = vmul.f32 %v7322, %v7075
    %v7387 = vmul.f32 %v7323, %v7140
    %v7388 = vmul.f32 %v7324, %v7205
    %v7389 = vmul.f32 %v7325, %v7013
    %v7390 = vmul.f32 %v7326, %v7078
    %v7391 = vmul.f32 %v7327, %v7143
    %v7392 = vmul.f32 %v7328, %v7208
    %v7393 = vmul.f32 %v7329, %v7016
    %v7394 = vmul.f32 %v7330, %v7081
    %v7395 = vmul.f32 %v7331, %v7146
    %v7396 = vmul.f32 %v7332, %v7211
    %v7397 = vmul.f32 %v7333, %v7019
    %v7398 = vmul.f32 %v7334, %v7084
    %v7399 = vmul.f32 %v7335, %v7149
    %v7400 = vmul.f32 %v7336, %v7214
    %v7401 = vmul.f32 %v7337, %v7022
    %v7402 = vmul.f32 %v7338, %v7087
    %v7403 = vmul.f32 %v7339, %v7152
    %v7404 = vmul.f32 %v7340, %v7217
    %v7405 = vmul.f32 %v7341, %v7025
    %v7406 = vmul.f32 %v7342, %v7090
    %v7407 = vmul.f32 %v7343, %v7155
    %v7408 = vmul.f32 %v7344, %v7220
    %v7409 = vmul.f32 %v7345, %v7028
    %v7410 = vmul.f32 %v7346, %v7093
    %v7411 = vmul.f32 %v7347, %v7158
    %v7412 = vmul.f32 %v7348, %v7223
    %v7413 = vmul.f32 %v7349, %v7031
    %v7414 = vmul.f32 %v7350, %v7096
    %v7415 = vmul.f32 %v7351, %v7161
    %v7416 = vmul.f32 %v7352, %v7226
    %v7417 = vmul.f32 %v7353, %v7034
    %v7418 = vmul.f32 %v7354, %v7099
    %v7419 = vmul.f32 %v7355, %v7164
    %v7420 = vmul.f32 %v7356, %v7229
    %v7421 = vmul.f32 %v7357, %v7037
    %v7422 = vmul.f32 %v7358, %v7102
    %v7423 = vmul.f32 %v7359, %v7167
    %v7424 = vmul.f32 %v7360, %v7232
    %v7425 = vmul.f32 %v7361, %v7040
    %v7426 = vmul.f32 %v7362, %v7105
    %v7427 = vmul.f32 %v7363, %v7170
    %v7428 = vmul.f32 %v7364, %v7235
    %v7429 = vmul.f32 %v7365, 0.044715
    %v7430 = vmul.f32 %v7366, 0.044715
    %v7431 = vmul.f32 %v7367, 0.044715
    %v7432 = vmul.f32 %v7368, 0.044715
    %v7433 = vmul.f32 %v7369, 0.044715
    %v7434 = vmul.f32 %v7370, 0.044715
    %v7435 = vmul.f32 %v7371, 0.044715
    %v7436 = vmul.f32 %v7372, 0.044715
    %v7437 = vmul.f32 %v7373, 0.044715
    %v7438 = vmul.f32 %v7374, 0.044715
    %v7439 = vmul.f32 %v7375, 0.044715
    %v7440 = vmul.f32 %v7376, 0.044715
    %v7441 = vmul.f32 %v7377, 0.044715
    %v7442 = vmul.f32 %v7378, 0.044715
    %v7443 = vmul.f32 %v7379, 0.044715
    %v7444 = vmul.f32 %v7380, 0.044715
    %v7445 = vmul.f32 %v7381, 0.044715
    %v7446 = vmul.f32 %v7382, 0.044715
    %v7447 = vmul.f32 %v7383, 0.044715
    %v7448 = vmul.f32 %v7384, 0.044715
    %v7449 = vmul.f32 %v7385, 0.044715
    %v7450 = vmul.f32 %v7386, 0.044715
    %v7451 = vmul.f32 %v7387, 0.044715
    %v7452 = vmul.f32 %v7388, 0.044715
    %v7453 = vmul.f32 %v7389, 0.044715
    %v7454 = vmul.f32 %v7390, 0.044715
    %v7455 = vmul.f32 %v7391, 0.044715
    %v7456 = vmul.f32 %v7392, 0.044715
    %v7457 = vmul.f32 %v7393, 0.044715
    %v7458 = vmul.f32 %v7394, 0.044715
    %v7459 = vmul.f32 %v7395, 0.044715
    %v7460 = vmul.f32 %v7396, 0.044715
    %v7461 = vmul.f32 %v7397, 0.044715
    %v7462 = vmul.f32 %v7398, 0.044715
    %v7463 = vmul.f32 %v7399, 0.044715
    %v7464 = vmul.f32 %v7400, 0.044715
    %v7465 = vmul.f32 %v7401, 0.044715
    %v7466 = vmul.f32 %v7402, 0.044715
    %v7467 = vmul.f32 %v7403, 0.044715
    %v7468 = vmul.f32 %v7404, 0.044715
    %v7469 = vmul.f32 %v7405, 0.044715
    %v7470 = vmul.f32 %v7406, 0.044715
    %v7471 = vmul.f32 %v7407, 0.044715
    %v7472 = vmul.f32 %v7408, 0.044715
    %v7473 = vmul.f32 %v7409, 0.044715
    %v7474 = vmul.f32 %v7410, 0.044715
    %v7475 = vmul.f32 %v7411, 0.044715
    %v7476 = vmul.f32 %v7412, 0.044715
    %v7477 = vmul.f32 %v7413, 0.044715
    %v7478 = vmul.f32 %v7414, 0.044715
    %v7479 = vmul.f32 %v7415, 0.044715
    %v7480 = vmul.f32 %v7416, 0.044715
    %v7481 = vmul.f32 %v7417, 0.044715
    %v7482 = vmul.f32 %v7418, 0.044715
    %v7483 = vmul.f32 %v7419, 0.044715
    %v7484 = vmul.f32 %v7420, 0.044715
    %v7485 = vmul.f32 %v7421, 0.044715
    %v7486 = vmul.f32 %v7422, 0.044715
    %v7487 = vmul.f32 %v7423, 0.044715
    %v7488 = vmul.f32 %v7424, 0.044715
    %v7489 = vmul.f32 %v7425, 0.044715
    %v7490 = vmul.f32 %v7426, 0.044715
    %v7491 = vmul.f32 %v7427, 0.044715
    %v7492 = vmul.f32 %v7428, 0.044715
    %v7493 = vadd.f32 %v6995, %v7429
    %v7494 = vadd.f32 %v7060, %v7430
    %v7495 = vadd.f32 %v7125, %v7431
    %v7496 = vadd.f32 %v7190, %v7432
    %v7497 = vadd.f32 %v6998, %v7433
    %v7498 = vadd.f32 %v7063, %v7434
    %v7499 = vadd.f32 %v7128, %v7435
    %v7500 = vadd.f32 %v7193, %v7436
    %v7501 = vadd.f32 %v7001, %v7437
    %v7502 = vadd.f32 %v7066, %v7438
    %v7503 = vadd.f32 %v7131, %v7439
    %v7504 = vadd.f32 %v7196, %v7440
    %v7505 = vadd.f32 %v7004, %v7441
    %v7506 = vadd.f32 %v7069, %v7442
    %v7507 = vadd.f32 %v7134, %v7443
    %v7508 = vadd.f32 %v7199, %v7444
    %v7509 = vadd.f32 %v7007, %v7445
    %v7510 = vadd.f32 %v7072, %v7446
    %v7511 = vadd.f32 %v7137, %v7447
    %v7512 = vadd.f32 %v7202, %v7448
    %v7513 = vadd.f32 %v7010, %v7449
    %v7514 = vadd.f32 %v7075, %v7450
    %v7515 = vadd.f32 %v7140, %v7451
    %v7516 = vadd.f32 %v7205, %v7452
    %v7517 = vadd.f32 %v7013, %v7453
    %v7518 = vadd.f32 %v7078, %v7454
    %v7519 = vadd.f32 %v7143, %v7455
    %v7520 = vadd.f32 %v7208, %v7456
    %v7521 = vadd.f32 %v7016, %v7457
    %v7522 = vadd.f32 %v7081, %v7458
    %v7523 = vadd.f32 %v7146, %v7459
    %v7524 = vadd.f32 %v7211, %v7460
    %v7525 = vadd.f32 %v7019, %v7461
    %v7526 = vadd.f32 %v7084, %v7462
    %v7527 = vadd.f32 %v7149, %v7463
    %v7528 = vadd.f32 %v7214, %v7464
    %v7529 = vadd.f32 %v7022, %v7465
    %v7530 = vadd.f32 %v7087, %v7466
    %v7531 = vadd.f32 %v7152, %v7467
    %v7532 = vadd.f32 %v7217, %v7468
    %v7533 = vadd.f32 %v7025, %v7469
    %v7534 = vadd.f32 %v7090, %v7470
    %v7535 = vadd.f32 %v7155, %v7471
    %v7536 = vadd.f32 %v7220, %v7472
    %v7537 = vadd.f32 %v7028, %v7473
    %v7538 = vadd.f32 %v7093, %v7474
    %v7539 = vadd.f32 %v7158, %v7475
    %v7540 = vadd.f32 %v7223, %v7476
    %v7541 = vadd.f32 %v7031, %v7477
    %v7542 = vadd.f32 %v7096, %v7478
    %v7543 = vadd.f32 %v7161, %v7479
    %v7544 = vadd.f32 %v7226, %v7480
    %v7545 = vadd.f32 %v7034, %v7481
    %v7546 = vadd.f32 %v7099, %v7482
    %v7547 = vadd.f32 %v7164, %v7483
    %v7548 = vadd.f32 %v7229, %v7484
    %v7549 = vadd.f32 %v7037, %v7485
    %v7550 = vadd.f32 %v7102, %v7486
    %v7551 = vadd.f32 %v7167, %v7487
    %v7552 = vadd.f32 %v7232, %v7488
    %v7553 = vadd.f32 %v7040, %v7489
    %v7554 = vadd.f32 %v7105, %v7490
    %v7555 = vadd.f32 %v7170, %v7491
    %v7556 = vadd.f32 %v7235, %v7492
    %v7557 = vmul.f32 %v7493, 0.7978846
    %v7558 = vmul.f32 %v7494, 0.7978846
    %v7559 = vmul.f32 %v7495, 0.7978846
    %v7560 = vmul.f32 %v7496, 0.7978846
    %v7561 = vmul.f32 %v7497, 0.7978846
    %v7562 = vmul.f32 %v7498, 0.7978846
    %v7563 = vmul.f32 %v7499, 0.7978846
    %v7564 = vmul.f32 %v7500, 0.7978846
    %v7565 = vmul.f32 %v7501, 0.7978846
    %v7566 = vmul.f32 %v7502, 0.7978846
    %v7567 = vmul.f32 %v7503, 0.7978846
    %v7568 = vmul.f32 %v7504, 0.7978846
    %v7569 = vmul.f32 %v7505, 0.7978846
    %v7570 = vmul.f32 %v7506, 0.7978846
    %v7571 = vmul.f32 %v7507, 0.7978846
    %v7572 = vmul.f32 %v7508, 0.7978846
    %v7573 = vmul.f32 %v7509, 0.7978846
    %v7574 = vmul.f32 %v7510, 0.7978846
    %v7575 = vmul.f32 %v7511, 0.7978846
    %v7576 = vmul.f32 %v7512, 0.7978846
    %v7577 = vmul.f32 %v7513, 0.7978846
    %v7578 = vmul.f32 %v7514, 0.7978846
    %v7579 = vmul.f32 %v7515, 0.7978846
    %v7580 = vmul.f32 %v7516, 0.7978846
    %v7581 = vmul.f32 %v7517, 0.7978846
    %v7582 = vmul.f32 %v7518, 0.7978846
    %v7583 = vmul.f32 %v7519, 0.7978846
    %v7584 = vmul.f32 %v7520, 0.7978846
    %v7585 = vmul.f32 %v7521, 0.7978846
    %v7586 = vmul.f32 %v7522, 0.7978846
    %v7587 = vmul.f32 %v7523, 0.7978846
    %v7588 = vmul.f32 %v7524, 0.7978846
    %v7589 = vmul.f32 %v7525, 0.7978846
    %v7590 = vmul.f32 %v7526, 0.7978846
    %v7591 = vmul.f32 %v7527, 0.7978846
    %v7592 = vmul.f32 %v7528, 0.7978846
    %v7593 = vmul.f32 %v7529, 0.7978846
    %v7594 = vmul.f32 %v7530, 0.7978846
    %v7595 = vmul.f32 %v7531, 0.7978846
    %v7596 = vmul.f32 %v7532, 0.7978846
    %v7597 = vmul.f32 %v7533, 0.7978846
    %v7598 = vmul.f32 %v7534, 0.7978846
    %v7599 = vmul.f32 %v7535, 0.7978846
    %v7600 = vmul.f32 %v7536, 0.7978846
    %v7601 = vmul.f32 %v7537, 0.7978846
    %v7602 = vmul.f32 %v7538, 0.7978846
    %v7603 = vmul.f32 %v7539, 0.7978846
    %v7604 = vmul.f32 %v7540, 0.7978846
    %v7605 = vmul.f32 %v7541, 0.7978846
    %v7606 = vmul.f32 %v7542, 0.7978846
    %v7607 = vmul.f32 %v7543, 0.7978846
    %v7608 = vmul.f32 %v7544, 0.7978846
    %v7609 = vmul.f32 %v7545, 0.7978846
    %v7610 = vmul.f32 %v7546, 0.7978846
    %v7611 = vmul.f32 %v7547, 0.7978846
    %v7612 = vmul.f32 %v7548, 0.7978846
    %v7613 = vmul.f32 %v7549, 0.7978846
    %v7614 = vmul.f32 %v7550, 0.7978846
    %v7615 = vmul.f32 %v7551, 0.7978846
    %v7616 = vmul.f32 %v7552, 0.7978846
    %v7617 = vmul.f32 %v7553, 0.7978846
    %v7618 = vmul.f32 %v7554, 0.7978846
    %v7619 = vmul.f32 %v7555, 0.7978846
    %v7620 = vmul.f32 %v7556, 0.7978846
    %v7621 = vtanh.pop %v7557
    %v7622 = vtanh.pop %v7558
    %v7623 = vtanh.pop %v7559
    %v7624 = vtanh.pop %v7560
    %v7625 = vtanh.pop %v7561
    %v7626 = vtanh.pop %v7562
    %v7627 = vtanh.pop %v7563
    %v7628 = vtanh.pop %v7564
    %v7629 = vtanh.pop %v7565
    %v7630 = vtanh.pop %v7566
    %v7631 = vtanh.pop %v7567
    %v7632 = vtanh.pop %v7568
    %v7633 = vtanh.pop %v7569
    %v7634 = vtanh.pop %v7570
    %v7635 = vtanh.pop %v7571
    %v7636 = vtanh.pop %v7572
    %v7637 = vtanh.pop %v7573
    %v7638 = vtanh.pop %v7574
    %v7639 = vtanh.pop %v7575
    %v7640 = vtanh.pop %v7576
    %v7641 = vtanh.pop %v7577
    %v7642 = vtanh.pop %v7578
    %v7643 = vtanh.pop %v7579
    %v7644 = vtanh.pop %v7580
    %v7645 = vtanh.pop %v7581
    %v7646 = vtanh.pop %v7582
    %v7647 = vtanh.pop %v7583
    %v7648 = vtanh.pop %v7584
    %v7649 = vtanh.pop %v7585
    %v7650 = vtanh.pop %v7586
    %v7651 = vtanh.pop %v7587
    %v7652 = vtanh.pop %v7588
    %v7653 = vtanh.pop %v7589
    %v7654 = vtanh.pop %v7590
    %v7655 = vtanh.pop %v7591
    %v7656 = vtanh.pop %v7592
    %v7657 = vtanh.pop %v7593
    %v7658 = vtanh.pop %v7594
    %v7659 = vtanh.pop %v7595
    %v7660 = vtanh.pop %v7596
    %v7661 = vtanh.pop %v7597
    %v7662 = vtanh.pop %v7598
    %v7663 = vtanh.pop %v7599
    %v7664 = vtanh.pop %v7600
    %v7665 = vtanh.pop %v7601
    %v7666 = vtanh.pop %v7602
    %v7667 = vtanh.pop %v7603
    %v7668 = vtanh.pop %v7604
    %v7669 = vtanh.pop %v7605
    %v7670 = vtanh.pop %v7606
    %v7671 = vtanh.pop %v7607
    %v7672 = vtanh.pop %v7608
    %v7673 = vtanh.pop %v7609
    %v7674 = vtanh.pop %v7610
    %v7675 = vtanh.pop %v7611
    %v7676 = vtanh.pop %v7612
    %v7677 = vtanh.pop %v7613
    %v7678 = vtanh.pop %v7614
    %v7679 = vtanh.pop %v7615
    %v7680 = vtanh.pop %v7616
    %v7681 = vtanh.pop %v7617
    %v7682 = vtanh.pop %v7618
    %v7683 = vtanh.pop %v7619
    %v7684 = vtanh.pop %v7620
    %v7685 = vadd.f32 %v7621, 1.0
    %v7686 = vadd.f32 %v7622, 1.0
    %v7687 = vadd.f32 %v7623, 1.0
    %v7688 = vadd.f32 %v7624, 1.0
    %v7689 = vadd.f32 %v7625, 1.0
    %v7690 = vadd.f32 %v7626, 1.0
    %v7691 = vadd.f32 %v7627, 1.0
    %v7692 = vadd.f32 %v7628, 1.0
    %v7693 = vadd.f32 %v7629, 1.0
    %v7694 = vadd.f32 %v7630, 1.0
    %v7695 = vadd.f32 %v7631, 1.0
    %v7696 = vadd.f32 %v7632, 1.0
    %v7697 = vadd.f32 %v7633, 1.0
    %v7698 = vadd.f32 %v7634, 1.0
    %v7699 = vadd.f32 %v7635, 1.0
    %v7700 = vadd.f32 %v7636, 1.0
    %v7701 = vadd.f32 %v7637, 1.0
    %v7702 = vadd.f32 %v7638, 1.0
    %v7703 = vadd.f32 %v7639, 1.0
    %v7704 = vadd.f32 %v7640, 1.0
    %v7705 = vadd.f32 %v7641, 1.0
    %v7706 = vadd.f32 %v7642, 1.0
    %v7707 = vadd.f32 %v7643, 1.0
    %v7708 = vadd.f32 %v7644, 1.0
    %v7709 = vadd.f32 %v7645, 1.0
    %v7710 = vadd.f32 %v7646, 1.0
    %v7711 = vadd.f32 %v7647, 1.0
    %v7712 = vadd.f32 %v7648, 1.0
    %v7713 = vadd.f32 %v7649, 1.0
    %v7714 = vadd.f32 %v7650, 1.0
    %v7715 = vadd.f32 %v7651, 1.0
    %v7716 = vadd.f32 %v7652, 1.0
    %v7717 = vadd.f32 %v7653, 1.0
    %v7718 = vadd.f32 %v7654, 1.0
    %v7719 = vadd.f32 %v7655, 1.0
    %v7720 = vadd.f32 %v7656, 1.0
    %v7721 = vadd.f32 %v7657, 1.0
    %v7722 = vadd.f32 %v7658, 1.0
    %v7723 = vadd.f32 %v7659, 1.0
    %v7724 = vadd.f32 %v7660, 1.0
    %v7725 = vadd.f32 %v7661, 1.0
    %v7726 = vadd.f32 %v7662, 1.0
    %v7727 = vadd.f32 %v7663, 1.0
    %v7728 = vadd.f32 %v7664, 1.0
    %v7729 = vadd.f32 %v7665, 1.0
    %v7730 = vadd.f32 %v7666, 1.0
    %v7731 = vadd.f32 %v7667, 1.0
    %v7732 = vadd.f32 %v7668, 1.0
    %v7733 = vadd.f32 %v7669, 1.0
    %v7734 = vadd.f32 %v7670, 1.0
    %v7735 = vadd.f32 %v7671, 1.0
    %v7736 = vadd.f32 %v7672, 1.0
    %v7737 = vadd.f32 %v7673, 1.0
    %v7738 = vadd.f32 %v7674, 1.0
    %v7739 = vadd.f32 %v7675, 1.0
    %v7740 = vadd.f32 %v7676, 1.0
    %v7741 = vadd.f32 %v7677, 1.0
    %v7742 = vadd.f32 %v7678, 1.0
    %v7743 = vadd.f32 %v7679, 1.0
    %v7744 = vadd.f32 %v7680, 1.0
    %v7745 = vadd.f32 %v7681, 1.0
    %v7746 = vadd.f32 %v7682, 1.0
    %v7747 = vadd.f32 %v7683, 1.0
    %v7748 = vadd.f32 %v7684, 1.0
    %v7749 = vmul.f32 %v7237, %v7685
    %v7750 = vmul.f32 %v7238, %v7686
    %v7751 = vmul.f32 %v7239, %v7687
    %v7752 = vmul.f32 %v7240, %v7688
    %v7753 = vmul.f32 %v7241, %v7689
    %v7754 = vmul.f32 %v7242, %v7690
    %v7755 = vmul.f32 %v7243, %v7691
    %v7756 = vmul.f32 %v7244, %v7692
    %v7757 = vmul.f32 %v7245, %v7693
    %v7758 = vmul.f32 %v7246, %v7694
    %v7759 = vmul.f32 %v7247, %v7695
    %v7760 = vmul.f32 %v7248, %v7696
    %v7761 = vmul.f32 %v7249, %v7697
    %v7762 = vmul.f32 %v7250, %v7698
    %v7763 = vmul.f32 %v7251, %v7699
    %v7764 = vmul.f32 %v7252, %v7700
    %v7765 = vmul.f32 %v7253, %v7701
    %v7766 = vmul.f32 %v7254, %v7702
    %v7767 = vmul.f32 %v7255, %v7703
    %v7768 = vmul.f32 %v7256, %v7704
    %v7769 = vmul.f32 %v7257, %v7705
    %v7770 = vmul.f32 %v7258, %v7706
    %v7771 = vmul.f32 %v7259, %v7707
    %v7772 = vmul.f32 %v7260, %v7708
    %v7773 = vmul.f32 %v7261, %v7709
    %v7774 = vmul.f32 %v7262, %v7710
    %v7775 = vmul.f32 %v7263, %v7711
    %v7776 = vmul.f32 %v7264, %v7712
    %v7777 = vmul.f32 %v7265, %v7713
    %v7778 = vmul.f32 %v7266, %v7714
    %v7779 = vmul.f32 %v7267, %v7715
    %v7780 = vmul.f32 %v7268, %v7716
    %v7781 = vmul.f32 %v7269, %v7717
    %v7782 = vmul.f32 %v7270, %v7718
    %v7783 = vmul.f32 %v7271, %v7719
    %v7784 = vmul.f32 %v7272, %v7720
    %v7785 = vmul.f32 %v7273, %v7721
    %v7786 = vmul.f32 %v7274, %v7722
    %v7787 = vmul.f32 %v7275, %v7723
    %v7788 = vmul.f32 %v7276, %v7724
    %v7789 = vmul.f32 %v7277, %v7725
    %v7790 = vmul.f32 %v7278, %v7726
    %v7791 = vmul.f32 %v7279, %v7727
    %v7792 = vmul.f32 %v7280, %v7728
    %v7793 = vmul.f32 %v7281, %v7729
    %v7794 = vmul.f32 %v7282, %v7730
    %v7795 = vmul.f32 %v7283, %v7731
    %v7796 = vmul.f32 %v7284, %v7732
    %v7797 = vmul.f32 %v7285, %v7733
    %v7798 = vmul.f32 %v7286, %v7734
    %v7799 = vmul.f32 %v7287, %v7735
    %v7800 = vmul.f32 %v7288, %v7736
    %v7801 = vmul.f32 %v7289, %v7737
    %v7802 = vmul.f32 %v7290, %v7738
    %v7803 = vmul.f32 %v7291, %v7739
    %v7804 = vmul.f32 %v7292, %v7740
    %v7805 = vmul.f32 %v7293, %v7741
    %v7806 = vmul.f32 %v7294, %v7742
    %v7807 = vmul.f32 %v7295, %v7743
    %v7808 = vmul.f32 %v7296, %v7744
    %v7809 = vmul.f32 %v7297, %v7745
    %v7810 = vmul.f32 %v7298, %v7746
    %v7811 = vmul.f32 %v7299, %v7747
    %v7812 = vmul.f32 %v7300, %v7748
    %v7813 = vld [vmem:[%s7] sm:$0xff]
    %v7814 = vld [vmem:[%s7 + $0x8] sm:$0xff]
    %v7815 = vld [vmem:[%s7 + $0x10] sm:$0xff]
    %v7816 = vld [vmem:[%s7 + $0x18] sm:$0xff]
    %v7817 = vld [vmem:[%s7 + $0x20] sm:$0xff]
    %v7818 = vld [vmem:[%s7 + $0x28] sm:$0xff]
    %v7819 = vld [vmem:[%s7 + $0x30] sm:$0xff]
    %v7820 = vld [vmem:[%s7 + $0x38] sm:$0xff]
    %v7821 = vld [vmem:[%s7 + $0x40] sm:$0xff]
    %v7822 = vld [vmem:[%s7 + $0x48] sm:$0xff]
    %v7823 = vld [vmem:[%s7 + $0x50] sm:$0xff]
    %v7824 = vld [vmem:[%s7 + $0x58] sm:$0xff]
    %v7825 = vld [vmem:[%s7 + $0x60] sm:$0xff]
    %v7826 = vld [vmem:[%s7 + $0x68] sm:$0xff]
    %v7827 = vld [vmem:[%s7 + $0x70] sm:$0xff]
    %v7828 = vld [vmem:[%s7 + $0x78] sm:$0xff]
    %v7829 = vld [vmem:[%s7 + $0x80] sm:$0xff]
    %v7830 = vld [vmem:[%s7 + $0x88] sm:$0xff]
    %v7831 = vld [vmem:[%s7 + $0x90] sm:$0xff]
    %v7832 = vld [vmem:[%s7 + $0x98] sm:$0xff]
    %v7833 = vld [vmem:[%s7 + $0xa0] sm:$0xff]
    %v7834 = vld [vmem:[%s7 + $0xa8] sm:$0xff]
    %v7835 = vld [vmem:[%s7 + $0xb0] sm:$0xff]
    %v7836 = vld [vmem:[%s7 + $0xb8] sm:$0xff]
    %v7837 = vld [vmem:[%s7 + $0xc0] sm:$0xff]
    %v7838 = vld [vmem:[%s7 + $0xc8] sm:$0xff]
    %v7839 = vld [vmem:[%s7 + $0xd0] sm:$0xff]
    %v7840 = vld [vmem:[%s7 + $0xd8] sm:$0xff]
    %v7841 = vld [vmem:[%s7 + $0xe0] sm:$0xff]
    %v7842 = vld [vmem:[%s7 + $0xe8] sm:$0xff]
    %v7843 = vld [vmem:[%s7 + $0xf0] sm:$0xff]
    %v7844 = vld [vmem:[%s7 + $0xf8] sm:$0xff]
    %v7845 = vld [vmem:[%s7 + $0x100] sm:$0xff]
    %v7846 = vld [vmem:[%s7 + $0x108] sm:$0xff]
    %v7847 = vld [vmem:[%s7 + $0x110] sm:$0xff]
    %v7848 = vld [vmem:[%s7 + $0x118] sm:$0xff]
    %v7849 = vld [vmem:[%s7 + $0x120] sm:$0xff]
    %v7850 = vld [vmem:[%s7 + $0x128] sm:$0xff]
    %v7851 = vld [vmem:[%s7 + $0x130] sm:$0xff]
    %v7852 = vld [vmem:[%s7 + $0x138] sm:$0xff]
    %v7853 = vld [vmem:[%s7 + $0x140] sm:$0xff]
    %v7854 = vld [vmem:[%s7 + $0x148] sm:$0xff]
    %v7855 = vld [vmem:[%s7 + $0x150] sm:$0xff]
    %v7856 = vld [vmem:[%s7 + $0x158] sm:$0xff]
    %v7857 = vld [vmem:[%s7 + $0x160] sm:$0xff]
    %v7858 = vld [vmem:[%s7 + $0x168] sm:$0xff]
    %v7859 = vld [vmem:[%s7 + $0x170] sm:$0xff]
    %v7860 = vld [vmem:[%s7 + $0x178] sm:$0xff]
    %v7861 = vld [vmem:[%s7 + $0x180] sm:$0xff]
    %v7862 = vld [vmem:[%s7 + $0x188] sm:$0xff]
    %v7863 = vld [vmem:[%s7 + $0x190] sm:$0xff]
    %v7864 = vld [vmem:[%s7 + $0x198] sm:$0xff]
    %v7865 = vld [vmem:[%s7 + $0x1a0] sm:$0xff]
    %v7866 = vld [vmem:[%s7 + $0x1a8] sm:$0xff]
    %v7867 = vld [vmem:[%s7 + $0x1b0] sm:$0xff]
    %v7868 = vld [vmem:[%s7 + $0x1b8] sm:$0xff]
    %v7869 = vld [vmem:[%s7 + $0x1c0] sm:$0xff]
    %v7870 = vld [vmem:[%s7 + $0x1c8] sm:$0xff]
    %v7871 = vld [vmem:[%s7 + $0x1d0] sm:$0xff]
    %v7872 = vld [vmem:[%s7 + $0x1d8] sm:$0xff]
    %v7873 = vld [vmem:[%s7 + $0x1e0] sm:$0xff]
    %v7874 = vld [vmem:[%s7 + $0x1e8] sm:$0xff]
    %v7875 = vld [vmem:[%s7 + $0x1f0] sm:$0xff]
    %v7876 = vld [vmem:[%s7 + $0x1f8] sm:$0xff]
    %v7877 = vld [vmem:[%s8] sm:$0x1]
    %v7879 = vperm.slane %v7877, 0
    %7881 = vmatpush.msra.mxu0 %v7828
    %7882 = vmatpush.msra.mxu0 %v7827
    %7883 = vmatpush.msra.mxu0 %v7826
    %7884 = vmatpush.msra.mxu0 %v7825
    %7885 = vmatpush.msra.mxu0 %v7824
    %7886 = vmatpush.msra.mxu0 %v7823
    %7887 = vmatpush.msra.mxu0 %v7822
    %7888 = vmatpush.msra.mxu0 %v7821
    %7889 = vmatpush.msra.mxu0 %v7820
    %7890 = vmatpush.msra.mxu0 %v7819
    %7891 = vmatpush.msra.mxu0 %v7818
    %7892 = vmatpush.msra.mxu0 %v7817
    %7893 = vmatpush.msra.mxu0 %v7816
    %7894 = vmatpush.msra.mxu0 %v7815
    %7895 = vmatpush.msra.mxu0 %v7814
    %7896 = vmatpush.msra.mxu0 %v7813
    %7897 = vmatmul.f32.gmra.mxu0 %v7749
    %v7898 = vpop.f32.mrf.mxu0
    %v7899 = vadd.f32 %v7879, %v7898
    %7900 = vmatmul.f32.gmra.mxu0 %v7753
    %v7901 = vpop.f32.mrf.mxu0
    %v7902 = vadd.f32 %v7879, %v7901
    %7903 = vmatmul.f32.gmra.mxu0 %v7757
    %v7904 = vpop.f32.mrf.mxu0
    %v7905 = vadd.f32 %v7879, %v7904
    %7906 = vmatmul.f32.gmra.mxu0 %v7761
    %v7907 = vpop.f32.mrf.mxu0
    %v7908 = vadd.f32 %v7879, %v7907
    %7909 = vmatmul.f32.gmra.mxu0 %v7765
    %v7910 = vpop.f32.mrf.mxu0
    %v7911 = vadd.f32 %v7879, %v7910
    %7912 = vmatmul.f32.gmra.mxu0 %v7769
    %v7913 = vpop.f32.mrf.mxu0
    %v7914 = vadd.f32 %v7879, %v7913
    %7915 = vmatmul.f32.gmra.mxu0 %v7773
    %v7916 = vpop.f32.mrf.mxu0
    %v7917 = vadd.f32 %v7879, %v7916
    %7918 = vmatmul.f32.gmra.mxu0 %v7777
    %v7919 = vpop.f32.mrf.mxu0
    %v7920 = vadd.f32 %v7879, %v7919
    %7921 = vmatmul.f32.gmra.mxu0 %v7781
    %v7922 = vpop.f32.mrf.mxu0
    %v7923 = vadd.f32 %v7879, %v7922
    %7924 = vmatmul.f32.gmra.mxu0 %v7785
    %v7925 = vpop.f32.mrf.mxu0
    %v7926 = vadd.f32 %v7879, %v7925
    %7927 = vmatmul.f32.gmra.mxu0 %v7789
    %v7928 = vpop.f32.mrf.mxu0
    %v7929 = vadd.f32 %v7879, %v7928
    %7930 = vmatmul.f32.gmra.mxu0 %v7793
    %v7931 = vpop.f32.mrf.mxu0
    %v7932 = vadd.f32 %v7879, %v7931
    %7933 = vmatmul.f32.gmra.mxu0 %v7797
    %v7934 = vpop.f32.mrf.mxu0
    %v7935 = vadd.f32 %v7879, %v7934
    %7936 = vmatmul.f32.gmra.mxu0 %v7801
    %v7937 = vpop.f32.mrf.mxu0
    %v7938 = vadd.f32 %v7879, %v7937
    %7939 = vmatmul.f32.gmra.mxu0 %v7805
    %v7940 = vpop.f32.mrf.mxu0
    %v7941 = vadd.f32 %v7879, %v7940
    %7942 = vmatmul.f32.gmra.mxu0 %v7809
    %v7943 = vpop.f32.mrf.mxu0
    %v7944 = vadd.f32 %v7879, %v7943
    %7945 = vdwg.mxu0
    %7946 = vmatpush.msra.mxu0 %v7844
    %7947 = vmatpush.msra.mxu0 %v7843
    %7948 = vmatpush.msra.mxu0 %v7842
    %7949 = vmatpush.msra.mxu0 %v7841
    %7950 = vmatpush.msra.mxu0 %v7840
    %7951 = vmatpush.msra.mxu0 %v7839
    %7952 = vmatpush.msra.mxu0 %v7838
    %7953 = vmatpush.msra.mxu0 %v7837
    %7954 = vmatpush.msra.mxu0 %v7836
    %7955 = vmatpush.msra.mxu0 %v7835
    %7956 = vmatpush.msra.mxu0 %v7834
    %7957 = vmatpush.msra.mxu0 %v7833
    %7958 = vmatpush.msra.mxu0 %v7832
    %7959 = vmatpush.msra.mxu0 %v7831
    %7960 = vmatpush.msra.mxu0 %v7830
    %7961 = vmatpush.msra.mxu0 %v7829
    %7962 = vmatmul.f32.gmra.mxu0 %v7750
    %v7963 = vpop.f32.mrf.mxu0
    %v7964 = vadd.f32 %v7899, %v7963
    %7965 = vmatmul.f32.gmra.mxu0 %v7754
    %v7966 = vpop.f32.mrf.mxu0
    %v7967 = vadd.f32 %v7902, %v7966
    %7968 = vmatmul.f32.gmra.mxu0 %v7758
    %v7969 = vpop.f32.mrf.mxu0
    %v7970 = vadd.f32 %v7905, %v7969
    %7971 = vmatmul.f32.gmra.mxu0 %v7762
    %v7972 = vpop.f32.mrf.mxu0
    %v7973 = vadd.f32 %v7908, %v7972
    %7974 = vmatmul.f32.gmra.mxu0 %v7766
    %v7975 = vpop.f32.mrf.mxu0
    %v7976 = vadd.f32 %v7911, %v7975
    %7977 = vmatmul.f32.gmra.mxu0 %v7770
    %v7978 = vpop.f32.mrf.mxu0
    %v7979 = vadd.f32 %v7914, %v7978
    %7980 = vmatmul.f32.gmra.mxu0 %v7774
    %v7981 = vpop.f32.mrf.mxu0
    %v7982 = vadd.f32 %v7917, %v7981
    %7983 = vmatmul.f32.gmra.mxu0 %v7778
    %v7984 = vpop.f32.mrf.mxu0
    %v7985 = vadd.f32 %v7920, %v7984
    %7986 = vmatmul.f32.gmra.mxu0 %v7782
    %v7987 = vpop.f32.mrf.mxu0
    %v7988 = vadd.f32 %v7923, %v7987
    %7989 = vmatmul.f32.gmra.mxu0 %v7786
    %v7990 = vpop.f32.mrf.mxu0
    %v7991 = vadd.f32 %v7926, %v7990
    %7992 = vmatmul.f32.gmra.mxu0 %v7790
    %v7993 = vpop.f32.mrf.mxu0
    %v7994 = vadd.f32 %v7929, %v7993
    %7995 = vmatmul.f32.gmra.mxu0 %v7794
    %v7996 = vpop.f32.mrf.mxu0
    %v7997 = vadd.f32 %v7932, %v7996
    %7998 = vmatmul.f32.gmra.mxu0 %v7798
    %v7999 = vpop.f32.mrf.mxu0
    %v8000 = vadd.f32 %v7935, %v7999
    %8001 = vmatmul.f32.gmra.mxu0 %v7802
    %v8002 = vpop.f32.mrf.mxu0
    %v8003 = vadd.f32 %v7938, %v8002
    %8004 = vmatmul.f32.gmra.mxu0 %v7806
    %v8005 = vpop.f32.mrf.mxu0
    %v8006 = vadd.f32 %v7941, %v8005
    %8007 = vmatmul.f32.gmra.mxu0 %v7810
    %v8008 = vpop.f32.mrf.mxu0
    %v8009 = vadd.f32 %v7944, %v8008
    %8010 = vdwg.mxu0
    %8011 = vmatpush.msra.mxu0 %v7860
    %8012 = vmatpush.msra.mxu0 %v7859
    %8013 = vmatpush.msra.mxu0 %v7858
    %8014 = vmatpush.msra.mxu0 %v7857
    %8015 = vmatpush.msra.mxu0 %v7856
    %8016 = vmatpush.msra.mxu0 %v7855
    %8017 = vmatpush.msra.mxu0 %v7854
    %8018 = vmatpush.msra.mxu0 %v7853
    %8019 = vmatpush.msra.mxu0 %v7852
    %8020 = vmatpush.msra.mxu0 %v7851
    %8021 = vmatpush.msra.mxu0 %v7850
    %8022 = vmatpush.msra.mxu0 %v7849
    %8023 = vmatpush.msra.mxu0 %v7848
    %8024 = vmatpush.msra.mxu0 %v7847
    %8025 = vmatpush.msra.mxu0 %v7846
    %8026 = vmatpush.msra.mxu0 %v7845
    %8027 = vmatmul.f32.gmra.mxu0 %v7751
    %v8028 = vpop.f32.mrf.mxu0
    %v8029 = vadd.f32 %v7964, %v8028
    %8030 = vmatmul.f32.gmra.mxu0 %v7755
    %v8031 = vpop.f32.mrf.mxu0
    %v8032 = vadd.f32 %v7967, %v8031
    %8033 = vmatmul.f32.gmra.mxu0 %v7759
    %v8034 = vpop.f32.mrf.mxu0
    %v8035 = vadd.f32 %v7970, %v8034
    %8036 = vmatmul.f32.gmra.mxu0 %v7763
    %v8037 = vpop.f32.mrf.mxu0
    %v8038 = vadd.f32 %v7973, %v8037
    %8039 = vmatmul.f32.gmra.mxu0 %v7767
    %v8040 = vpop.f32.mrf.mxu0
    %v8041 = vadd.f32 %v7976, %v8040
    %8042 = vmatmul.f32.gmra.mxu0 %v7771
    %v8043 = vpop.f32.mrf.mxu0
    %v8044 = vadd.f32 %v7979, %v8043
    %8045 = vmatmul.f32.gmra.mxu0 %v7775
    %v8046 = vpop.f32.mrf.mxu0
    %v8047 = vadd.f32 %v7982, %v8046
    %8048 = vmatmul.f32.gmra.mxu0 %v7779
    %v8049 = vpop.f32.mrf.mxu0
    %v8050 = vadd.f32 %v7985, %v8049
    %8051 = vmatmul.f32.gmra.mxu0 %v7783
    %v8052 = vpop.f32.mrf.mxu0
    %v8053 = vadd.f32 %v7988, %v8052
    %8054 = vmatmul.f32.gmra.mxu0 %v7787
    %v8055 = vpop.f32.mrf.mxu0
    %v8056 = vadd.f32 %v7991, %v8055
    %8057 = vmatmul.f32.gmra.mxu0 %v7791
    %v8058 = vpop.f32.mrf.mxu0
    %v8059 = vadd.f32 %v7994, %v8058
    %8060 = vmatmul.f32.gmra.mxu0 %v7795
    %v8061 = vpop.f32.mrf.mxu0
    %v8062 = vadd.f32 %v7997, %v8061
    %8063 = vmatmul.f32.gmra.mxu0 %v7799
    %v8064 = vpop.f32.mrf.mxu0
    %v8065 = vadd.f32 %v8000, %v8064
    %8066 = vmatmul.f32.gmra.mxu0 %v7803
    %v8067 = vpop.f32.mrf.mxu0
    %v8068 = vadd.f32 %v8003, %v8067
    %8069 = vmatmul.f32.gmra.mxu0 %v7807
    %v8070 = vpop.f32.mrf.mxu0
    %v8071 = vadd.f32 %v8006, %v8070
    %8072 = vmatmul.f32.gmra.mxu0 %v7811
    %v8073 = vpop.f32.mrf.mxu0
    %v8074 = vadd.f32 %v8009, %v8073
    %8075 = vdwg.mxu0
    %8076 = vmatpush.msra.mxu0 %v7876
    %8077 = vmatpush.msra.mxu0 %v7875
    %8078 = vmatpush.msra.mxu0 %v7874
    %8079 = vmatpush.msra.mxu0 %v7873
    %8080 = vmatpush.msra.mxu0 %v7872
    %8081 = vmatpush.msra.mxu0 %v7871
    %8082 = vmatpush.msra.mxu0 %v7870
    %8083 = vmatpush.msra.mxu0 %v7869
    %8084 = vmatpush.msra.mxu0 %v7868
    %8085 = vmatpush.msra.mxu0 %v7867
    %8086 = vmatpush.msra.mxu0 %v7866
    %8087 = vmatpush.msra.mxu0 %v7865
    %8088 = vmatpush.msra.mxu0 %v7864
    %8089 = vmatpush.msra.mxu0 %v7863
    %8090 = vmatpush.msra.mxu0 %v7862
    %8091 = vmatpush.msra.mxu0 %v7861
    %8092 = vmatmul.f32.gmra.mxu0 %v7752
    %v8093 = vpop.f32.mrf.mxu0
    %v8094 = vadd.f32 %v8029, %v8093
    %8095 = vmatmul.f32.gmra.mxu0 %v7756
    %v8096 = vpop.f32.mrf.mxu0
    %v8097 = vadd.f32 %v8032, %v8096
    %8098 = vmatmul.f32.gmra.mxu0 %v7760
    %v8099 = vpop.f32.mrf.mxu0
    %v8100 = vadd.f32 %v8035, %v8099
    %8101 = vmatmul.f32.gmra.mxu0 %v7764
    %v8102 = vpop.f32.mrf.mxu0
    %v8103 = vadd.f32 %v8038, %v8102
    %8104 = vmatmul.f32.gmra.mxu0 %v7768
    %v8105 = vpop.f32.mrf.mxu0
    %v8106 = vadd.f32 %v8041, %v8105
    %8107 = vmatmul.f32.gmra.mxu0 %v7772
    %v8108 = vpop.f32.mrf.mxu0
    %v8109 = vadd.f32 %v8044, %v8108
    %8110 = vmatmul.f32.gmra.mxu0 %v7776
    %v8111 = vpop.f32.mrf.mxu0
    %v8112 = vadd.f32 %v8047, %v8111
    %8113 = vmatmul.f32.gmra.mxu0 %v7780
    %v8114 = vpop.f32.mrf.mxu0
    %v8115 = vadd.f32 %v8050, %v8114
    %8116 = vmatmul.f32.gmra.mxu0 %v7784
    %v8117 = vpop.f32.mrf.mxu0
    %v8118 = vadd.f32 %v8053, %v8117
    %8119 = vmatmul.f32.gmra.mxu0 %v7788
    %v8120 = vpop.f32.mrf.mxu0
    %v8121 = vadd.f32 %v8056, %v8120
    %8122 = vmatmul.f32.gmra.mxu0 %v7792
    %v8123 = vpop.f32.mrf.mxu0
    %v8124 = vadd.f32 %v8059, %v8123
    %8125 = vmatmul.f32.gmra.mxu0 %v7796
    %v8126 = vpop.f32.mrf.mxu0
    %v8127 = vadd.f32 %v8062, %v8126
    %8128 = vmatmul.f32.gmra.mxu0 %v7800
    %v8129 = vpop.f32.mrf.mxu0
    %v8130 = vadd.f32 %v8065, %v8129
    %8131 = vmatmul.f32.gmra.mxu0 %v7804
    %v8132 = vpop.f32.mrf.mxu0
    %v8133 = vadd.f32 %v8068, %v8132
    %8134 = vmatmul.f32.gmra.mxu0 %v7808
    %v8135 = vpop.f32.mrf.mxu0
    %v8136 = vadd.f32 %v8071, %v8135
    %8137 = vmatmul.f32.gmra.mxu0 %v7812
    %v8138 = vpop.f32.mrf.mxu0
    %v8139 = vadd.f32 %v8074, %v8138
    %8140 = vdwg.mxu0
    %v8141 = vld [vmem:[%s9] sm:$0x1]
    %v8143 = vperm.slane %v8141, 0
    %v8145 = vmul.f32 %v8094, %v8143
    %v8146 = vmul.f32 %v8097, %v8143
    %v8147 = vmul.f32 %v8100, %v8143
    %v8148 = vmul.f32 %v8103, %v8143
    %v8149 = vmul.f32 %v8106, %v8143
    %v8150 = vmul.f32 %v8109, %v8143
    %v8151 = vmul.f32 %v8112, %v8143
    %v8152 = vmul.f32 %v8115, %v8143
    %v8153 = vmul.f32 %v8118, %v8143
    %v8154 = vmul.f32 %v8121, %v8143
    %v8155 = vmul.f32 %v8124, %v8143
    %v8156 = vmul.f32 %v8127, %v8143
    %v8157 = vmul.f32 %v8130, %v8143
    %v8158 = vmul.f32 %v8133, %v8143
    %v8159 = vmul.f32 %v8136, %v8143
    %v8160 = vmul.f32 %v8139, %v8143
    %v8161 = vadd.f32 %v36, %v8145
    %v8162 = vadd.f32 %v37, %v8146
    %v8163 = vadd.f32 %v38, %v8147
    %v8164 = vadd.f32 %v39, %v8148
    %v8165 = vadd.f32 %v40, %v8149
    %v8166 = vadd.f32 %v41, %v8150
    %v8167 = vadd.f32 %v42, %v8151
    %v8168 = vadd.f32 %v43, %v8152
    %v8169 = vadd.f32 %v44, %v8153
    %v8170 = vadd.f32 %v45, %v8154
    %v8171 = vadd.f32 %v46, %v8155
    %v8172 = vadd.f32 %v47, %v8156
    %v8173 = vadd.f32 %v48, %v8157
    %v8174 = vadd.f32 %v49, %v8158
    %v8175 = vadd.f32 %v50, %v8159
    %v8176 = vadd.f32 %v51, %v8160
    %8177 = vst [vmem:[#allocation3] sm:$0xff] %v8161
    %8178 = vst [vmem:[#allocation3 + $0x8] sm:$0xff] %v8162
    %8179 = vst [vmem:[#allocation3 + $0x10] sm:$0xff] %v8163
    %8180 = vst [vmem:[#allocation3 + $0x18] sm:$0xff] %v8164
    %8181 = vst [vmem:[#allocation3 + $0x20] sm:$0xff] %v8165
    %8182 = vst [vmem:[#allocation3 + $0x28] sm:$0xff] %v8166
    %8183 = vst [vmem:[#allocation3 + $0x30] sm:$0xff] %v8167
    %8184 = vst [vmem:[#allocation3 + $0x38] sm:$0xff] %v8168
    %8185 = vst [vmem:[#allocation3 + $0x40] sm:$0xff] %v8169
    %8186 = vst [vmem:[#allocation3 + $0x48] sm:$0xff] %v8170
    %8187 = vst [vmem:[#allocation3 + $0x50] sm:$0xff] %v8171
    %8188 = vst [vmem:[#allocation3 + $0x58] sm:$0xff] %v8172
    %8189 = vst [vmem:[#allocation3 + $0x60] sm:$0xff] %v8173
    %8190 = vst [vmem:[#allocation3 + $0x68] sm:$0xff] %v8174
    %8191 = vst [vmem:[#allocation3 + $0x70] sm:$0xff] %v8175
    %8192 = vst [vmem:[#allocation3 + $0x78] sm:$0xff] %v8176
    // Predicated region
    $region42: #{_lambda_.3} parent=1 // pred_check
      _
    $region43: #{_lambda_.3} parent=1 // pred_check_branch
      %8194 = sbr.rel (0) target = $region45
    $region44: #{_lambda_.3} parent=1 // pred_region
      %8196 = vsyncadd [#allocation4], 0
      %s8197 = sshll.u32 [#allocation3], 4
      %s8198 = int_to_ptr.vmem [resolvable:$true] %s8197
      %s8199 = sshll.u32 %s10, 4
      %s8200 = int_to_ptr.hbm [resolvable:$true] %s8199
      %8205 = dma.vmem_to_hbm [thread:$0]  %s8198, 2048, %s8200, [#allocation4], 128, 128, 8
    $region45: #{_lambda_.3} parent=1 // pred_fallthru
      _
    // Predicated region
    $region46: #{_lambda_.3} parent=1 // pred_check
      _
    $region47: #{_lambda_.3} parent=1 // pred_check_branch
      %8207 = sbr.rel (0) target = $region49
    $region48: #{_lambda_.3} parent=1 // pred_region
      %8209 = dma.done [#allocation4], 2048
    $region49: #{_lambda_.3} parent=1 // pred_fallthru
      _
    %8210 = vsyncpa [#allocation4], 1

</llo_original>
